<compile_context>
chip_gen: v6e
topology: v6e:2x2x1
jax: 0.10.0
libtpu: 0.0.40
codegen_flags: <defaults>
</compile_context>

<pallas_src>
import functools

import jax
import jax.numpy as jnp
from jax import lax
from jax.experimental import pallas as pl
from jax.experimental.pallas import tpu as pltpu

VMEM_LIMIT = 48 * 1024 * 1024  # explicit scoped-VMEM budget (safe on v5e/v6e/v7x)


def _round_up(x, m):
    return (x + m - 1) // m * m


# ----------------------------------------------------------------------------
# Pallas kernel 1: fused Conv3d (tap-accumulating matmul) + BatchNorm + ReLU.
#   grid = (N, D_out, kD); kd is the reduction axis (output block resident).
#   x_ref   : (1, 1, L, K)       one padded-plane (rows=padded H*W plane, cols=K)
#   w_ref   : (kD, T, K, Cout)   full weights, constant block
#   scale/shift : (1, Cout) f32  folded BatchNorm affine
#   o_ref   : (1, 1, La, Cout)   output plane rows (may include W-pad junk cols)
#   acc_ref : (La, Cout) f32     accumulator
#   y_ref   : (Ly, Cout) f32     shift-scratch (only when has_shift)
# ----------------------------------------------------------------------------
def _conv_bn_relu_kernel(x_ref, w_ref, scale_ref, shift_ref, o_ref, acc_ref, y_ref,
                         *, shifts, has_shift, apply_relu):
    kd = pl.program_id(2)
    last = pl.num_programs(2) - 1
    L = x_ref.shape[2]
    La = acc_ref.shape[0]

    @pl.when(kd == 0)
    def _init():
        acc_ref[...] = jnp.zeros_like(acc_ref)
        if has_shift:
            y_ref[...] = jnp.zeros_like(y_ref)

    xmat = x_ref[0, 0]  # (L, K) bf16
    for t, s in enumerate(shifts):
        y = jnp.dot(xmat, w_ref[kd, t], preferred_element_type=jnp.float32)  # (L, Cout)
        if not has_shift:
            acc_ref[...] += y
        else:
            y_ref[pl.ds(0, L), :] = y
            acc_ref[...] += y_ref[pl.ds(s, La), :]

    @pl.when(kd == last)
    def _fin():
        out = acc_ref[...] * scale_ref[...] + shift_ref[...]
        if apply_relu:
            out = jnp.maximum(out, 0.0)
        o_ref[0, 0] = out.astype(o_ref.dtype)


def conv_bn_relu(x_planes, w_taps, scale, shift, *, shifts, out_rows, relu=True,
                 out_dtype=jnp.bfloat16):
    """x_planes: (N, Dp, L, K) bf16; w_taps: (kD, T, K, Cout) bf16;
    scale/shift: (Cout,) f32; shifts[t]: row offset of tap t inside the padded plane."""
    N, Dp, L, K = x_planes.shape
    kD, T, K2, Cout = w_taps.shape
    assert K2 == K and T == len(shifts)
    D_out = Dp - (kD - 1)
    has_shift = (out_rows != L) or any(s != 0 for s in shifts)
    Ly = _round_up(max(L, out_rows + max(shifts)), 8) if has_shift else 8

    kernel = functools.partial(_conv_bn_relu_kernel, shifts=tuple(shifts),
                               has_shift=has_shift, apply_relu=relu)

    return pl.pallas_call(
        kernel,
        out_shape=jax.ShapeDtypeStruct((N, D_out, out_rows, Cout), out_dtype),
        grid_spec=pltpu.PrefetchScalarGridSpec(
            num_scalar_prefetch=0,
            grid=(N, D_out, kD),
            in_specs=[
                pl.BlockSpec((1, 1, L, K), lambda n, d, kd: (n, d + kd, 0, 0)),
                pl.BlockSpec((kD, T, K, Cout), lambda n, d, kd: (0, 0, 0, 0)),
                pl.BlockSpec((1, Cout), lambda n, d, kd: (0, 0)),
                pl.BlockSpec((1, Cout), lambda n, d, kd: (0, 0)),
            ],
            out_specs=pl.BlockSpec((1, 1, out_rows, Cout),
                                   lambda n, d, kd: (n, d, 0, 0)),
            scratch_shapes=[pltpu.VMEM((out_rows, Cout), jnp.float32),
                            pltpu.VMEM((Ly, Cout), jnp.float32)],
        ),
        compiler_params=pltpu.CompilerParams(
            dimension_semantics=("parallel", "parallel", "arbitrary"),
            vmem_limit_bytes=VMEM_LIMIT),
    )(x_planes, w_taps,
      scale.reshape(1, Cout).astype(jnp.float32),
      shift.reshape(1, Cout).astype(jnp.float32))


# ----------------------------------------------------------------------------
# Pallas kernel 2: MaxPool3d(kernel=2, stride=2).
#   Input is the conv output viewed as (N, D, H, Ws//2, 2*C) (free reshape): the
#   two W-pair elements sit in the lane dim; D/H pairs are major-axis maxes.
#   Columns w >= 2*Wo of the stored width Ws are junk pad columns and dropped.
# ----------------------------------------------------------------------------
def _maxpool_kernel(x_ref, o_ref):
    _, _, H, Wsh, C2 = x_ref.shape
    _, _, Ho, Wo, C = o_ref.shape
    a = jnp.maximum(x_ref[0, 0], x_ref[0, 1])            # (H, Wsh, 2C)   depth pair
    a = a.reshape(Ho, 2, Wsh, C2)                        # split leading dim (free)
    a = jnp.maximum(a[:, 0], a[:, 1])                    # (Ho, Wsh, 2C)  height pair
    a = a[:, :Wo, :]                                     # drop W-pad pairs
    o_ref[0, 0] = jnp.maximum(a[..., :C], a[..., C:])    # (Ho, Wo, C)    width pair


def maxpool2x2x2_rows(x, *, H, Ws, Wo, C):
    """x: (N, D, H*Ws, C); only w < 2*Wo columns valid. Returns (N, D/2, H/2, Wo, C)."""
    N, D, R, C_ = x.shape
    assert R == H * Ws and C_ == C and Ws % 2 == 0
    xf = x.reshape(N, D, H, Ws // 2, 2 * C)
    Do, Ho = D // 2, H // 2
    return pl.pallas_call(
        _maxpool_kernel,
        out_shape=jax.ShapeDtypeStruct((N, Do, Ho, Wo, C), x.dtype),
        grid_spec=pltpu.PrefetchScalarGridSpec(
            num_scalar_prefetch=0,
            grid=(N, Do),
            in_specs=[pl.BlockSpec((1, 2, H, Ws // 2, 2 * C),
                                   lambda n, i: (n, i, 0, 0, 0))],
            out_specs=pl.BlockSpec((1, 1, Ho, Wo, C), lambda n, i: (n, i, 0, 0, 0)),
        ),
        compiler_params=pltpu.CompilerParams(
            dimension_semantics=("parallel", "parallel"),
            vmem_limit_bytes=VMEM_LIMIT),
    )(xf)


# ----------------------------------------------------------------------------
# Pallas kernel 3: last conv (kernel == spatial extent) == single matmul + bias.
# ----------------------------------------------------------------------------
def _matmul_bias_kernel(x_ref, w_ref, b_ref, o_ref):
    o_ref[...] = (jnp.dot(x_ref[...], w_ref[...],
                          preferred_element_type=jnp.float32) + b_ref[...])


def matmul_bias(x, w, b):
    N, K = x.shape
    K2, C = w.shape
    assert K2 == K
    return pl.pallas_call(
        _matmul_bias_kernel,
        out_shape=jax.ShapeDtypeStruct((N, C), jnp.float32),
        grid_spec=pltpu.PrefetchScalarGridSpec(
            num_scalar_prefetch=0,
            grid=(1,),
            in_specs=[pl.BlockSpec((N, K), lambda i: (0, 0)),
                      pl.BlockSpec((K, C), lambda i: (0, 0)),
                      pl.BlockSpec((1, C), lambda i: (0, 0))],
            out_specs=pl.BlockSpec((N, C), lambda i: (0, 0)),
        ),
        compiler_params=pltpu.CompilerParams(
            dimension_semantics=("arbitrary",), vmem_limit_bytes=VMEM_LIMIT),
    )(x, w, b.reshape(1, C).astype(jnp.float32))


# ----------------------------------------------------------------------------
# Wrapper glue (layout only — no heavy HBM duplication).
# ----------------------------------------------------------------------------
def _plane_patches(x, k, p):
    """conv1 only (Cin tiny): fold in-plane taps into channels.
    x: (N, D, H, W, C) -> (N, D+2p, H*W, k*k*C); D-taps handled by the kernel grid."""
    N, D, H, W, C = x.shape
    xp = jnp.pad(x, ((0, 0), (p, p), (p, p), (p, p), (0, 0)))
    cols = [xp[:, :, kh:kh + H, kw:kw + W, :] for kh in range(k) for kw in range(k)]
    pat = jnp.concatenate(cols, axis=-1)                 # (N, Dp, H, W, k*k*C)
    return pat.reshape(N, D + 2 * p, H * W, k * k * C)


def classifier_forward(x_ncdhw, params, eps=1e-5):
    w1, b1, g1, be1, m1, v1 = params["block1"]
    w2, b2, g2, be2, m2, v2 = params["block2"]
    wl, bl = params["last_w"], params["last_b"]

    x = jnp.transpose(x_ncdhw, (0, 2, 3, 4, 1)).astype(jnp.bfloat16)   # NCDHW -> NDHWC
    N, D, H, W, Cin = x.shape

    # ---- block1: Conv(k=5, p=2) + BN + ReLU (+Dropout=id) ----
    k1, p1, C1 = w1.shape[2], 2, w1.shape[0]
    pat1 = _plane_patches(x, k1, p1)                                   # (N, D+4, H*W, 50)
    wt1 = jnp.transpose(w1, (2, 3, 4, 1, 0)).reshape(
        k1, 1, k1 * k1 * Cin, C1).astype(jnp.bfloat16)
    scale1 = g1 / jnp.sqrt(v1 + eps)
    shift1 = (b1 - m1) * scale1 + be1
    y1 = conv_bn_relu(pat1, wt1, scale1, shift1, shifts=(0,), out_rows=H * W)
    y1p = maxpool2x2x2_rows(y1, H=H, Ws=W, Wo=W // 2, C=C1)            # (N, D/2, H/2, W/2, 128)

    # ---- block2: Conv(k=3, p=1) + BN + ReLU (+Dropout=id) ----
    k2, p2, C2 = w2.shape[2], 1, w2.shape[0]
    N2, D2, H2, W2, C2in = y1p.shape
    xp2 = jnp.pad(y1p, ((0, 0), (p2, p2), (p2, p2), (p2, p2), (0, 0)))
    Hp2, Wp2 = H2 + 2 * p2, W2 + 2 * p2
    xp2 = xp2.reshape(N2, D2 + 2 * p2, Hp2 * Wp2, C2in)                # padded planes, no im2col
    wt2 = jnp.transpose(w2, (2, 3, 4, 1, 0)).reshape(
        k2, k2 * k2, C2in, C2).astype(jnp.bfloat16)
    shifts2 = tuple(kh * Wp2 + kw for kh in range(k2) for kw in range(k2))
    scale2 = g2 / jnp.sqrt(v2 + eps)
    shift2 = (b2 - m2) * scale2 + be2
    y2 = conv_bn_relu(xp2, wt2, scale2, shift2, shifts=shifts2, out_rows=H2 * Wp2)
    y2p = maxpool2x2x2_rows(y2, H=H2, Ws=Wp2, Wo=W2 // 2, C=C2)        # (N, D/4, H/4, W/4, 64)

    # ---- lastcnn: kernel == pooled extent -> dense matmul + bias ----
    N3, D3, H3, W3, C3 = y2p.shape
    xf = y2p.reshape(N3, D3 * H3 * W3 * C3)
    wlm = jnp.transpose(wl, (2, 3, 4, 1, 0)).reshape(
        D3 * H3 * W3 * C3, wl.shape[0]).astype(jnp.bfloat16)
    out = matmul_bias(xf, wlm, bl)                                     # (N, classes) f32
    return out                                                         # matches squeeze/unsqueeze(0)


# ----------------------------------------------------------------------------
# Pure-JAX f32 reference (correctness check only).
# ----------------------------------------------------------------------------
def reference_forward(x, params, eps=1e-5):
    def conv(y, w, b, pad):
        o = lax.conv_general_dilated(
            y, w, window_strides=(1, 1, 1), padding=[(pad, pad)] * 3,
            dimension_numbers=("NCDHW", "OIDHW", "NCDHW"))
        return o + b[None, :, None, None, None]

    def bn(y, g, be, m, v):
        s = g / jnp.sqrt(v + eps)
        return (y - m[None, :, None, None, None]) * s[None, :, None, None, None] \
            + be[None, :, None, None, None]

    def pool(y):
        return lax.reduce_window(y, -jnp.inf, lax.max,
                                 (1, 1, 2, 2, 2), (1, 1, 2, 2, 2), "VALID")

    w1, b1, g1, be1, m1, v1 = params["block1"]
    y = pool(jnp.maximum(bn(conv(x, w1, b1, 2), g1, be1, m1, v1), 0.0))
    w2, b2, g2, be2, m2, v2 = params["block2"]
    y = pool(jnp.maximum(bn(conv(y, w2, b2, 1), g2, be2, m2, v2), 0.0))
    y = conv(y, params["last_w"], params["last_b"], 0)
    y = jnp.squeeze(y)
    return y if y.ndim == 2 else y[None, ...]


# ----------------------------------------------------------------------------
# Deterministic parameter init.
# ----------------------------------------------------------------------------
def init_params(key, in_channels, num_classes, last_kernel):
    keys = jax.random.split(key, 16)

    def conv_w(k, cout, cin, ks):
        return jax.random.normal(k, (cout, cin, ks, ks, ks), jnp.float32) * 0.05

    def bn_params(k, c):
        k1, k2, k3, k4 = jax.random.split(k, 4)
        gamma = 1.0 + 0.1 * jax.random.normal(k1, (c,), jnp.float32)
        beta = 0.1 * jax.random.normal(k2, (c,), jnp.float32)
        mean = 0.1 * jax.random.normal(k3, (c,), jnp.float32)
        var = 1.0 + 0.1 * jnp.abs(jax.random.normal(k4, (c,), jnp.float32))
        return gamma, beta, mean, var

    w1 = conv_w(keys[0], 128, in_channels, 5)
    b1 = 0.05 * jax.random.normal(keys[1], (128,), jnp.float32)
    g1, be1, m1, v1 = bn_params(keys[2], 128)

    w2 = conv_w(keys[3], 64, 128, 3)
    b2 = 0.05 * jax.random.normal(keys[4], (64,), jnp.float32)
    g2, be2, m2, v2 = bn_params(keys[5], 64)

    wl = conv_w(keys[6], num_classes, 64, last_kernel)
    bl = 0.05 * jax.random.normal(keys[7], (num_classes,), jnp.float32)

    return {
        "block1": (w1, b1, g1, be1, m1, v1),
        "block2": (w2, b2, g2, be2, m2, v2),
        "last_w": wl,
        "last_b": bl,
    }


if __name__ == "__main__":
    batch, in_channels, spatial = 2, 2, 16
    num_classes = 4
    last_kernel = spatial // 4  # == 32 when spatial == 128, as in the module

    key = jax.random.PRNGKey(0)
    k_x, k_p = jax.random.split(key)
    x = jax.random.normal(k_x, (batch, in_channels, spatial, spatial, spatial),
                          jnp.float32)
    params = init_params(k_p, in_channels, num_classes, last_kernel)

    out = jax.block_until_ready(jax.jit(classifier_forward)(x, params))
    assert out.shape == (batch, num_classes), out.shape

    ref = jax.block_until_ready(reference_forward(x, params))
    max_err = float(jnp.max(jnp.abs(out - ref)))
    scale = float(jnp.max(jnp.abs(ref))) + 1.0
    assert max_err <= 6e-2 * scale, (max_err, scale)  # bf16 matmul tolerance

    print("KERNEL_OK")
</pallas_src>

<mosaic_0001>
module attributes {stable_mosaic.version = 11 : i64} {
  func.func @_conv_bn_relu_kernel(%arg0: i32, %arg1: i32, %arg2: i32, %arg3: memref<1x1x256x50xbf16, #tpu.memory_space<vmem>>, %arg4: memref<5x1x50x128xbf16, #tpu.memory_space<vmem>>, %arg5: memref<1x128xf32, #tpu.memory_space<vmem>>, %arg6: memref<1x128xf32, #tpu.memory_space<vmem>>, %arg7: memref<1x1x256x128xbf16, #tpu.memory_space<vmem>>, %arg8: memref<256x128xf32, #tpu.memory_space<vmem>>, %arg9: memref<8x128xf32, #tpu.memory_space<vmem>>) attributes {dimension_semantics = [#tpu.dimension_semantics<parallel>, #tpu.dimension_semantics<parallel>, #tpu.dimension_semantics<arbitrary>], iteration_bounds = array<i64: 2, 16, 5>, scalar_prefetch = 0 : i64, scratch_operands = 2 : i64, tpu.core_type = #tpu.core_type<tc>, window_params = [{transform_indices = @transform_0, window_bounds = array<i64: 1, 1, 256, 50>}, {pipeline_mode = #tpu.pipeline_mode<synchronous>, transform_indices = @transform_1, window_bounds = array<i64: 5, 1, 50, 128>}, {pipeline_mode = #tpu.pipeline_mode<synchronous>, transform_indices = @transform_2, window_bounds = array<i64: 1, 128>}, {pipeline_mode = #tpu.pipeline_mode<synchronous>, transform_indices = @transform_3, window_bounds = array<i64: 1, 128>}, {transform_indices = @transform_4, window_bounds = array<i64: 1, 1, 256, 128>}]} {
    %c0_i32 = arith.constant 0 : i32
    %0 = arith.cmpi eq, %arg2, %c0_i32 : i32
    %1 = arith.extui %0 : i1 to i32
    %c0_i32_0 = arith.constant 0 : i32
    %2 = arith.cmpi ne, %1, %c0_i32_0 : i32
    scf.if %2 {
      %cst_12 = arith.constant 0.000000e+00 : f32
      %15 = vector.broadcast %cst_12 : f32 to vector<256x128xf32>
      %c0_13 = arith.constant 0 : index
      %c0_14 = arith.constant 0 : index
      %16 = vector.load %arg8[%c0_13, %c0_14] : memref<256x128xf32, #tpu.memory_space<vmem>>, vector<256x128xf32>
      tpu.vector_store %arg8[%c0_13, %c0_14], %15 {strides = array<i32>} : memref<256x128xf32, #tpu.memory_space<vmem>>, vector<256x128xf32>,
    } else {
    }
    %c0 = arith.constant 0 : index
    %c0_1 = arith.constant 0 : index
    %c0_2 = arith.constant 0 : index
    %c0_3 = arith.constant 0 : index
    %3 = vector.load %arg3[%c0, %c0_1, %c0_2, %c0_3] : memref<1x1x256x50xbf16, #tpu.memory_space<vmem>>, vector<1x1x256x50xbf16>
    %4 = vector.shape_cast %3 : vector<1x1x256x50xbf16> to vector<256x50xbf16>
    %5 = arith.index_cast %arg2 : i32 to index
    %c0_4 = arith.constant 0 : index
    %c0_5 = arith.constant 0 : index
    %c0_6 = arith.constant 0 : index
    %6 = vector.load %arg4[%5, %c0_4, %c0_5, %c0_6] : memref<5x1x50x128xbf16, #tpu.memory_space<vmem>>, vector<1x1x50x128xbf16>
    %7 = vector.shape_cast %6 : vector<1x1x50x128xbf16> to vector<50x128xbf16>
    %cst = arith.constant dense<0.000000e+00> : vector<256x128xf32>
    %8 = tpu.matmul %4, %7, %cst {dimension_numbers = #tpu.dot_dimension_numbers<[1], [0], [0], [1], [0, 0, 1, 1], [], []>} : vector<256x50xbf16>, vector<50x128xbf16>, vector<256x128xf32> -> vector<256x128xf32>
    %c0_7 = arith.constant 0 : index
    %c0_8 = arith.constant 0 : index
    %9 = vector.load %arg8[%c0_7, %c0_8] : memref<256x128xf32, #tpu.memory_space<vmem>>, vector<256x128xf32>
    %10 = arith.addf %9, %8 : vector<256x128xf32>
    %c0_9 = arith.constant 0 : index
    %c0_10 = arith.constant 0 : index
    %11 = vector.load %arg8[%c0_9, %c0_10] : memref<256x128xf32, #tpu.memory_space<vmem>>, vector<256x128xf32>
    tpu.vector_store %arg8[%c0_9, %c0_10], %10 {strides = array<i32>} : memref<256x128xf32, #tpu.memory_space<vmem>>, vector<256x128xf32>,
    %c4_i32 = arith.constant 4 : i32
    %12 = arith.cmpi eq, %arg2, %c4_i32 : i32
    %13 = arith.extui %12 : i1 to i32
    %c0_i32_11 = arith.constant 0 : i32
    %14 = arith.cmpi ne, %13, %c0_i32_11 : i32
    scf.if %14 {
      %c0_12 = arith.constant 0 : index
      %c0_13 = arith.constant 0 : index
      %15 = vector.load %arg8[%c0_12, %c0_13] : memref<256x128xf32, #tpu.memory_space<vmem>>, vector<256x128xf32>
      %c0_14 = arith.constant 0 : index
      %c0_15 = arith.constant 0 : index
      %16 = vector.load %arg5[%c0_14, %c0_15] : memref<1x128xf32, #tpu.memory_space<vmem>>, vector<1x128xf32>
      %17 = vector.broadcast %16 : vector<1x128xf32> to vector<256x128xf32>
      %18 = arith.mulf %15, %17 : vector<256x128xf32>
      %c0_16 = arith.constant 0 : index
      %c0_17 = arith.constant 0 : index
      %19 = vector.load %arg6[%c0_16, %c0_17] : memref<1x128xf32, #tpu.memory_space<vmem>>, vector<1x128xf32>
      %20 = vector.broadcast %19 : vector<1x128xf32> to vector<256x128xf32>
      %21 = arith.addf %18, %20 : vector<256x128xf32>
      %cst_18 = arith.constant 0.000000e+00 : f32
      %22 = vector.broadcast %cst_18 : f32 to vector<256x128xf32>
      %23 = arith.maximumf %21, %22 : vector<256x128xf32>
      %24 = arith.truncf %23 : vector<256x128xf32> to vector<256x128xbf16>
      %c0_19 = arith.constant 0 : index
      %c0_20 = arith.constant 0 : index
      %c0_21 = arith.constant 0 : index
      %c0_22 = arith.constant 0 : index
      %25 = vector.load %arg7[%c0_19, %c0_20, %c0_21, %c0_22] : memref<1x1x256x128xbf16, #tpu.memory_space<vmem>>, vector<1x1x256x128xbf16>
      %26 = vector.shape_cast %25 : vector<1x1x256x128xbf16> to vector<256x128xbf16>
      %27 = vector.shape_cast %24 : vector<256x128xbf16> to vector<1x1x256x128xbf16>
      tpu.vector_store %arg7[%c0_19, %c0_20, %c0_21, %c0_22], %27 {strides = array<i32>} : memref<1x1x256x128xbf16, #tpu.memory_space<vmem>>, vector<1x1x256x128xbf16>,
    } else {
    }
    return
  }
  func.func @transform_0(%arg0: i32, %arg1: i32, %arg2: i32) -> (i32, i32, i32, i32) {
    %0 = arith.addi %arg1, %arg2 : i32
    %c0_i32 = arith.constant 0 : i32
    %c0_i32_0 = arith.constant 0 : i32
    %c0_i32_1 = arith.constant 0 : i32
    return %arg0, %0, %c0_i32, %c0_i32_0 : i32, i32, i32, i32
  }
  func.func @transform_1(%arg0: i32, %arg1: i32, %arg2: i32) -> (i32, i32, i32, i32) {
    %c0_i32 = arith.constant 0 : i32
    %c0_i32_0 = arith.constant 0 : i32
    %c0_i32_1 = arith.constant 0 : i32
    %c0_i32_2 = arith.constant 0 : i32
    %c0_i32_3 = arith.constant 0 : i32
    return %c0_i32, %c0_i32_0, %c0_i32_1, %c0_i32_2 : i32, i32, i32, i32
  }
  func.func @transform_2(%arg0: i32, %arg1: i32, %arg2: i32) -> (i32, i32) {
    %c0_i32 = arith.constant 0 : i32
    %c0_i32_0 = arith.constant 0 : i32
    %c0_i32_1 = arith.constant 0 : i32
    return %c0_i32, %c0_i32_0 : i32, i32
  }
  func.func @transform_3(%arg0: i32, %arg1: i32, %arg2: i32) -> (i32, i32) {
    %c0_i32 = arith.constant 0 : i32
    %c0_i32_0 = arith.constant 0 : i32
    %c0_i32_1 = arith.constant 0 : i32
    return %c0_i32, %c0_i32_0 : i32, i32
  }
  func.func @transform_4(%arg0: i32, %arg1: i32, %arg2: i32) -> (i32, i32, i32, i32) {
    %c0_i32 = arith.constant 0 : i32
    %c0_i32_0 = arith.constant 0 : i32
    %c0_i32_1 = arith.constant 0 : i32
    return %arg0, %arg1, %c0_i32, %c0_i32_0 : i32, i32, i32, i32
  }
}

module attributes {stable_mosaic.version = 11 : i64} {
  func.func @_maxpool_kernel(%arg0: i32, %arg1: i32, %arg2: memref<1x2x16x8x256xbf16, #tpu.memory_space<vmem>>, %arg3: memref<1x1x8x8x128xbf16, #tpu.memory_space<vmem>>) attributes {dimension_semantics = [#tpu.dimension_semantics<parallel>, #tpu.dimension_semantics<parallel>], iteration_bounds = array<i64: 2, 8>, scalar_prefetch = 0 : i64, scratch_operands = 0 : i64, tpu.core_type = #tpu.core_type<tc>, window_params = [{transform_indices = @transform_0, window_bounds = array<i64: 1, 2, 16, 8, 256>}, {transform_indices = @transform_1, window_bounds = array<i64: 1, 1, 8, 8, 128>}]} {
    %c0 = arith.constant 0 : index
    %c0_0 = arith.constant 0 : index
    %c0_1 = arith.constant 0 : index
    %c0_2 = arith.constant 0 : index
    %c0_3 = arith.constant 0 : index
    %0 = vector.load %arg2[%c0, %c0_0, %c0_1, %c0_2, %c0_3] : memref<1x2x16x8x256xbf16, #tpu.memory_space<vmem>>, vector<1x1x16x8x256xbf16>
    %1 = vector.shape_cast %0 : vector<1x1x16x8x256xbf16> to vector<16x8x256xbf16>
    %c0_4 = arith.constant 0 : index
    %c1 = arith.constant 1 : index
    %c0_5 = arith.constant 0 : index
    %c0_6 = arith.constant 0 : index
    %c0_7 = arith.constant 0 : index
    %2 = vector.load %arg2[%c0_4, %c1, %c0_5, %c0_6, %c0_7] : memref<1x2x16x8x256xbf16, #tpu.memory_space<vmem>>, vector<1x1x16x8x256xbf16>
    %3 = vector.shape_cast %2 : vector<1x1x16x8x256xbf16> to vector<16x8x256xbf16>
    %4 = arith.maximumf %1, %3 : vector<16x8x256xbf16>
    %5 = vector.shape_cast %4 : vector<16x8x256xbf16> to vector<8x2x8x256xbf16>
    %6 = vector.extract_strided_slice %5 {offsets = [0, 0, 0, 0], sizes = [8, 1, 8, 256], strides = [1, 1, 1, 1]} : vector<8x2x8x256xbf16> to vector<8x1x8x256xbf16>
    %7 = vector.shape_cast %6 : vector<8x1x8x256xbf16> to vector<8x8x256xbf16>
    %8 = vector.extract_strided_slice %5 {offsets = [0, 1, 0, 0], sizes = [8, 1, 8, 256], strides = [1, 1, 1, 1]} : vector<8x2x8x256xbf16> to vector<8x1x8x256xbf16>
    %9 = vector.shape_cast %8 : vector<8x1x8x256xbf16> to vector<8x8x256xbf16>
    %10 = arith.maximumf %7, %9 : vector<8x8x256xbf16>
    %11 = vector.extract_strided_slice %10 {offsets = [0, 0, 0], sizes = [8, 8, 128], strides = [1, 1, 1]} : vector<8x8x256xbf16> to vector<8x8x128xbf16>
    %12 = vector.extract_strided_slice %10 {offsets = [0, 0, 128], sizes = [8, 8, 128], strides = [1, 1, 1]} : vector<8x8x256xbf16> to vector<8x8x128xbf16>
    %13 = arith.maximumf %11, %12 : vector<8x8x128xbf16>
    %c0_8 = arith.constant 0 : index
    %c0_9 = arith.constant 0 : index
    %c0_10 = arith.constant 0 : index
    %c0_11 = arith.constant 0 : index
    %c0_12 = arith.constant 0 : index
    %14 = vector.load %arg3[%c0_8, %c0_9, %c0_10, %c0_11, %c0_12] : memref<1x1x8x8x128xbf16, #tpu.memory_space<vmem>>, vector<1x1x8x8x128xbf16>
    %15 = vector.shape_cast %14 : vector<1x1x8x8x128xbf16> to vector<8x8x128xbf16>
    %16 = vector.shape_cast %13 : vector<8x8x128xbf16> to vector<1x1x8x8x128xbf16>
    tpu.vector_store %arg3[%c0_8, %c0_9, %c0_10, %c0_11, %c0_12], %16 {strides = array<i32>} : memref<1x1x8x8x128xbf16, #tpu.memory_space<vmem>>, vector<1x1x8x8x128xbf16>,
    return
  }
  func.func @transform_0(%arg0: i32, %arg1: i32) -> (i32, i32, i32, i32, i32) {
    %c0_i32 = arith.constant 0 : i32
    %c0_i32_0 = arith.constant 0 : i32
    %c0_i32_1 = arith.constant 0 : i32
    %c0_i32_2 = arith.constant 0 : i32
    return %arg0, %arg1, %c0_i32, %c0_i32_0, %c0_i32_1 : i32, i32, i32, i32, i32
  }
  func.func @transform_1(%arg0: i32, %arg1: i32) -> (i32, i32, i32, i32, i32) {
    %c0_i32 = arith.constant 0 : i32
    %c0_i32_0 = arith.constant 0 : i32
    %c0_i32_1 = arith.constant 0 : i32
    %c0_i32_2 = arith.constant 0 : i32
    return %arg0, %arg1, %c0_i32, %c0_i32_0, %c0_i32_1 : i32, i32, i32, i32, i32
  }
}

module attributes {stable_mosaic.version = 11 : i64} {
  func.func @_conv_bn_relu_kernel(%arg0: i32, %arg1: i32, %arg2: i32, %arg3: memref<1x1x100x128xbf16, #tpu.memory_space<vmem>>, %arg4: memref<3x9x128x64xbf16, #tpu.memory_space<vmem>>, %arg5: memref<1x64xf32, #tpu.memory_space<vmem>>, %arg6: memref<1x64xf32, #tpu.memory_space<vmem>>, %arg7: memref<1x1x80x64xbf16, #tpu.memory_space<vmem>>, %arg8: memref<80x64xf32, #tpu.memory_space<vmem>>, %arg9: memref<104x64xf32, #tpu.memory_space<vmem>>) attributes {dimension_semantics = [#tpu.dimension_semantics<parallel>, #tpu.dimension_semantics<parallel>, #tpu.dimension_semantics<arbitrary>], iteration_bounds = array<i64: 2, 8, 3>, scalar_prefetch = 0 : i64, scratch_operands = 2 : i64, tpu.core_type = #tpu.core_type<tc>, window_params = [{transform_indices = @transform_0, window_bounds = array<i64: 1, 1, 100, 128>}, {pipeline_mode = #tpu.pipeline_mode<synchronous>, transform_indices = @transform_1, window_bounds = array<i64: 3, 9, 128, 64>}, {pipeline_mode = #tpu.pipeline_mode<synchronous>, transform_indices = @transform_2, window_bounds = array<i64: 1, 64>}, {pipeline_mode = #tpu.pipeline_mode<synchronous>, transform_indices = @transform_3, window_bounds = array<i64: 1, 64>}, {transform_indices = @transform_4, window_bounds = array<i64: 1, 1, 80, 64>}]} {
    %c0_i32 = arith.constant 0 : i32
    %0 = arith.cmpi eq, %arg2, %c0_i32 : i32
    %1 = arith.extui %0 : i1 to i32
    %c0_i32_0 = arith.constant 0 : i32
    %2 = arith.cmpi ne, %1, %c0_i32_0 : i32
    scf.if %2 {
      %cst_98 = arith.constant 0.000000e+00 : f32
      %89 = vector.broadcast %cst_98 : f32 to vector<80x64xf32>
      %c0_99 = arith.constant 0 : index
      %c0_100 = arith.constant 0 : index
      %90 = vector.load %arg8[%c0_99, %c0_100] : memref<80x64xf32, #tpu.memory_space<vmem>>, vector<80x64xf32>
      tpu.vector_store %arg8[%c0_99, %c0_100], %89 {strides = array<i32>} : memref<80x64xf32, #tpu.memory_space<vmem>>, vector<80x64xf32>,
      %cst_101 = arith.constant 0.000000e+00 : f32
      %91 = vector.broadcast %cst_101 : f32 to vector<104x64xf32>
      %c0_102 = arith.constant 0 : index
      %c0_103 = arith.constant 0 : index
      %92 = vector.load %arg9[%c0_102, %c0_103] : memref<104x64xf32, #tpu.memory_space<vmem>>, vector<104x64xf32>
      tpu.vector_store %arg9[%c0_102, %c0_103], %91 {strides = array<i32>} : memref<104x64xf32, #tpu.memory_space<vmem>>, vector<104x64xf32>,
    } else {
    }
    %c0 = arith.constant 0 : index
    %c0_1 = arith.constant 0 : index
    %c0_2 = arith.constant 0 : index
    %c0_3 = arith.constant 0 : index
    %3 = vector.load %arg3[%c0, %c0_1, %c0_2, %c0_3] : memref<1x1x100x128xbf16, #tpu.memory_space<vmem>>, vector<1x1x100x128xbf16>
    %4 = vector.shape_cast %3 : vector<1x1x100x128xbf16> to vector<100x128xbf16>
    %5 = arith.index_cast %arg2 : i32 to index
    %c0_4 = arith.constant 0 : index
    %c0_5 = arith.constant 0 : index
    %c0_6 = arith.constant 0 : index
    %6 = vector.load %arg4[%5, %c0_4, %c0_5, %c0_6] : memref<3x9x128x64xbf16, #tpu.memory_space<vmem>>, vector<1x1x128x64xbf16>
    %7 = vector.shape_cast %6 : vector<1x1x128x64xbf16> to vector<128x64xbf16>
    %cst = arith.constant dense<0.000000e+00> : vector<100x64xf32>
    %8 = tpu.matmul %4, %7, %cst {dimension_numbers = #tpu.dot_dimension_numbers<[1], [0], [0], [1], [0, 0, 1, 1], [], []>} : vector<100x128xbf16>, vector<128x64xbf16>, vector<100x64xf32> -> vector<100x64xf32>
    %c0_7 = arith.constant 0 : index
    %c0_8 = arith.constant 0 : index
    %9 = vector.load %arg9[%c0_7, %c0_8] : memref<104x64xf32, #tpu.memory_space<vmem>>, vector<100x64xf32>
    tpu.vector_store %arg9[%c0_7, %c0_8], %8 {strides = array<i32>} : memref<104x64xf32, #tpu.memory_space<vmem>>, vector<100x64xf32>,
    %c0_9 = arith.constant 0 : index
    %c0_10 = arith.constant 0 : index
    %10 = vector.load %arg8[%c0_9, %c0_10] : memref<80x64xf32, #tpu.memory_space<vmem>>, vector<80x64xf32>
    %c0_11 = arith.constant 0 : index
    %c0_12 = arith.constant 0 : index
    %11 = vector.load %arg9[%c0_11, %c0_12] : memref<104x64xf32, #tpu.memory_space<vmem>>, vector<80x64xf32>
    %12 = arith.addf %10, %11 : vector<80x64xf32>
    %c0_13 = arith.constant 0 : index
    %c0_14 = arith.constant 0 : index
    %13 = vector.load %arg8[%c0_13, %c0_14] : memref<80x64xf32, #tpu.memory_space<vmem>>, vector<80x64xf32>
    tpu.vector_store %arg8[%c0_13, %c0_14], %12 {strides = array<i32>} : memref<80x64xf32, #tpu.memory_space<vmem>>, vector<80x64xf32>,
    %14 = arith.index_cast %arg2 : i32 to index
    %c1 = arith.constant 1 : index
    %c0_15 = arith.constant 0 : index
    %c0_16 = arith.constant 0 : index
    %15 = vector.load %arg4[%14, %c1, %c0_15, %c0_16] : memref<3x9x128x64xbf16, #tpu.memory_space<vmem>>, vector<1x1x128x64xbf16>
    %16 = vector.shape_cast %15 : vector<1x1x128x64xbf16> to vector<128x64xbf16>
    %cst_17 = arith.constant dense<0.000000e+00> : vector<100x64xf32>
    %17 = tpu.matmul %4, %16, %cst_17 {dimension_numbers = #tpu.dot_dimension_numbers<[1], [0], [0], [1], [0, 0, 1, 1], [], []>} : vector<100x128xbf16>, vector<128x64xbf16>, vector<100x64xf32> -> vector<100x64xf32>
    %c0_18 = arith.constant 0 : index
    %c0_19 = arith.constant 0 : index
    %18 = vector.load %arg9[%c0_18, %c0_19] : memref<104x64xf32, #tpu.memory_space<vmem>>, vector<100x64xf32>
    tpu.vector_store %arg9[%c0_18, %c0_19], %17 {strides = array<i32>} : memref<104x64xf32, #tpu.memory_space<vmem>>, vector<100x64xf32>,
    %c0_20 = arith.constant 0 : index
    %c0_21 = arith.constant 0 : index
    %19 = vector.load %arg8[%c0_20, %c0_21] : memref<80x64xf32, #tpu.memory_space<vmem>>, vector<80x64xf32>
    %c1_22 = arith.constant 1 : index
    %c0_23 = arith.constant 0 : index
    %20 = vector.load %arg9[%c1_22, %c0_23] : memref<104x64xf32, #tpu.memory_space<vmem>>, vector<80x64xf32>
    %21 = arith.addf %19, %20 : vector<80x64xf32>
    %c0_24 = arith.constant 0 : index
    %c0_25 = arith.constant 0 : index
    %22 = vector.load %arg8[%c0_24, %c0_25] : memref<80x64xf32, #tpu.memory_space<vmem>>, vector<80x64xf32>
    tpu.vector_store %arg8[%c0_24, %c0_25], %21 {strides = array<i32>} : memref<80x64xf32, #tpu.memory_space<vmem>>, vector<80x64xf32>,
    %23 = arith.index_cast %arg2 : i32 to index
    %c2 = arith.constant 2 : index
    %c0_26 = arith.constant 0 : index
    %c0_27 = arith.constant 0 : index
    %24 = vector.load %arg4[%23, %c2, %c0_26, %c0_27] : memref<3x9x128x64xbf16, #tpu.memory_space<vmem>>, vector<1x1x128x64xbf16>
    %25 = vector.shape_cast %24 : vector<1x1x128x64xbf16> to vector<128x64xbf16>
    %cst_28 = arith.constant dense<0.000000e+00> : vector<100x64xf32>
    %26 = tpu.matmul %4, %25, %cst_28 {dimension_numbers = #tpu.dot_dimension_numbers<[1], [0], [0], [1], [0, 0, 1, 1], [], []>} : vector<100x128xbf16>, vector<128x64xbf16>, vector<100x64xf32> -> vector<100x64xf32>
    %c0_29 = arith.constant 0 : index
    %c0_30 = arith.constant 0 : index
    %27 = vector.load %arg9[%c0_29, %c0_30] : memref<104x64xf32, #tpu.memory_space<vmem>>, vector<100x64xf32>
    tpu.vector_store %arg9[%c0_29, %c0_30], %26 {strides = array<i32>} : memref<104x64xf32, #tpu.memory_space<vmem>>, vector<100x64xf32>,
    %c0_31 = arith.constant 0 : index
    %c0_32 = arith.constant 0 : index
    %28 = vector.load %arg8[%c0_31, %c0_32] : memref<80x64xf32, #tpu.memory_space<vmem>>, vector<80x64xf32>
    %c2_33 = arith.constant 2 : index
    %c0_34 = arith.constant 0 : index
    %29 = vector.load %arg9[%c2_33, %c0_34] : memref<104x64xf32, #tpu.memory_space<vmem>>, vector<80x64xf32>
    %30 = arith.addf %28, %29 : vector<80x64xf32>
    %c0_35 = arith.constant 0 : index
    %c0_36 = arith.constant 0 : index
    %31 = vector.load %arg8[%c0_35, %c0_36] : memref<80x64xf32, #tpu.memory_space<vmem>>, vector<80x64xf32>
    tpu.vector_store %arg8[%c0_35, %c0_36], %30 {strides = array<i32>} : memref<80x64xf32, #tpu.memory_space<vmem>>, vector<80x64xf32>,
    %32 = arith.index_cast %arg2 : i32 to index
    %c3 = arith.constant 3 : index
    %c0_37 = arith.constant 0 : index
    %c0_38 = arith.constant 0 : index
    %33 = vector.load %arg4[%32, %c3, %c0_37, %c0_38] : memref<3x9x128x64xbf16, #tpu.memory_space<vmem>>, vector<1x1x128x64xbf16>
    %34 = vector.shape_cast %33 : vector<1x1x128x64xbf16> to vector<128x64xbf16>
    %cst_39 = arith.constant dense<0.000000e+00> : vector<100x64xf32>
    %35 = tpu.matmul %4, %34, %cst_39 {dimension_numbers = #tpu.dot_dimension_numbers<[1], [0], [0], [1], [0, 0, 1, 1], [], []>} : vector<100x128xbf16>, vector<128x64xbf16>, vector<100x64xf32> -> vector<100x64xf32>
    %c0_40 = arith.constant 0 : index
    %c0_41 = arith.constant 0 : index
    %36 = vector.load %arg9[%c0_40, %c0_41] : memref<104x64xf32, #tpu.memory_space<vmem>>, vector<100x64xf32>
    tpu.vector_store %arg9[%c0_40, %c0_41], %35 {strides = array<i32>} : memref<104x64xf32, #tpu.memory_space<vmem>>, vector<100x64xf32>,
    %c0_42 = arith.constant 0 : index
    %c0_43 = arith.constant 0 : index
    %37 = vector.load %arg8[%c0_42, %c0_43] : memref<80x64xf32, #tpu.memory_space<vmem>>, vector<80x64xf32>
    %c10 = arith.constant 10 : index
    %c0_44 = arith.constant 0 : index
    %38 = vector.load %arg9[%c10, %c0_44] : memref<104x64xf32, #tpu.memory_space<vmem>>, vector<80x64xf32>
    %39 = arith.addf %37, %38 : vector<80x64xf32>
    %c0_45 = arith.constant 0 : index
    %c0_46 = arith.constant 0 : index
    %40 = vector.load %arg8[%c0_45, %c0_46] : memref<80x64xf32, #tpu.memory_space<vmem>>, vector<80x64xf32>
    tpu.vector_store %arg8[%c0_45, %c0_46], %39 {strides = array<i32>} : memref<80x64xf32, #tpu.memory_space<vmem>>, vector<80x64xf32>,
    %41 = arith.index_cast %arg2 : i32 to index
    %c4 = arith.constant 4 : index
    %c0_47 = arith.constant 0 : index
    %c0_48 = arith.constant 0 : index
    %42 = vector.load %arg4[%41, %c4, %c0_47, %c0_48] : memref<3x9x128x64xbf16, #tpu.memory_space<vmem>>, vector<1x1x128x64xbf16>
    %43 = vector.shape_cast %42 : vector<1x1x128x64xbf16> to vector<128x64xbf16>
    %cst_49 = arith.constant dense<0.000000e+00> : vector<100x64xf32>
    %44 = tpu.matmul %4, %43, %cst_49 {dimension_numbers = #tpu.dot_dimension_numbers<[1], [0], [0], [1], [0, 0, 1, 1], [], []>} : vector<100x128xbf16>, vector<128x64xbf16>, vector<100x64xf32> -> vector<100x64xf32>
    %c0_50 = arith.constant 0 : index
    %c0_51 = arith.constant 0 : index
    %45 = vector.load %arg9[%c0_50, %c0_51] : memref<104x64xf32, #tpu.memory_space<vmem>>, vector<100x64xf32>
    tpu.vector_store %arg9[%c0_50, %c0_51], %44 {strides = array<i32>} : memref<104x64xf32, #tpu.memory_space<vmem>>, vector<100x64xf32>,
    %c0_52 = arith.constant 0 : index
    %c0_53 = arith.constant 0 : index
    %46 = vector.load %arg8[%c0_52, %c0_53] : memref<80x64xf32, #tpu.memory_space<vmem>>, vector<80x64xf32>
    %c11 = arith.constant 11 : index
    %c0_54 = arith.constant 0 : index
    %47 = vector.load %arg9[%c11, %c0_54] : memref<104x64xf32, #tpu.memory_space<vmem>>, vector<80x64xf32>
    %48 = arith.addf %46, %47 : vector<80x64xf32>
    %c0_55 = arith.constant 0 : index
    %c0_56 = arith.constant 0 : index
    %49 = vector.load %arg8[%c0_55, %c0_56] : memref<80x64xf32, #tpu.memory_space<vmem>>, vector<80x64xf32>
    tpu.vector_store %arg8[%c0_55, %c0_56], %48 {strides = array<i32>} : memref<80x64xf32, #tpu.memory_space<vmem>>, vector<80x64xf32>,
    %50 = arith.index_cast %arg2 : i32 to index
    %c5 = arith.constant 5 : index
    %c0_57 = arith.constant 0 : index
    %c0_58 = arith.constant 0 : index
    %51 = vector.load %arg4[%50, %c5, %c0_57, %c0_58] : memref<3x9x128x64xbf16, #tpu.memory_space<vmem>>, vector<1x1x128x64xbf16>
    %52 = vector.shape_cast %51 : vector<1x1x128x64xbf16> to vector<128x64xbf16>
    %cst_59 = arith.constant dense<0.000000e+00> : vector<100x64xf32>
    %53 = tpu.matmul %4, %52, %cst_59 {dimension_numbers = #tpu.dot_dimension_numbers<[1], [0], [0], [1], [0, 0, 1, 1], [], []>} : vector<100x128xbf16>, vector<128x64xbf16>, vector<100x64xf32> -> vector<100x64xf32>
    %c0_60 = arith.constant 0 : index
    %c0_61 = arith.constant 0 : index
    %54 = vector.load %arg9[%c0_60, %c0_61] : memref<104x64xf32, #tpu.memory_space<vmem>>, vector<100x64xf32>
    tpu.vector_store %arg9[%c0_60, %c0_61], %53 {strides = array<i32>} : memref<104x64xf32, #tpu.memory_space<vmem>>, vector<100x64xf32>,
    %c0_62 = arith.constant 0 : index
    %c0_63 = arith.constant 0 : index
    %55 = vector.load %arg8[%c0_62, %c0_63] : memref<80x64xf32, #tpu.memory_space<vmem>>, vector<80x64xf32>
    %c12 = arith.constant 12 : index
    %c0_64 = arith.constant 0 : index
    %56 = vector.load %arg9[%c12, %c0_64] : memref<104x64xf32, #tpu.memory_space<vmem>>, vector<80x64xf32>
    %57 = arith.addf %55, %56 : vector<80x64xf32>
    %c0_65 = arith.constant 0 : index
    %c0_66 = arith.constant 0 : index
    %58 = vector.load %arg8[%c0_65, %c0_66] : memref<80x64xf32, #tpu.memory_space<vmem>>, vector<80x64xf32>
    tpu.vector_store %arg8[%c0_65, %c0_66], %57 {strides = array<i32>} : memref<80x64xf32, #tpu.memory_space<vmem>>, vector<80x64xf32>,
    %59 = arith.index_cast %arg2 : i32 to index
    %c6 = arith.constant 6 : index
    %c0_67 = arith.constant 0 : index
    %c0_68 = arith.constant 0 : index
    %60 = vector.load %arg4[%59, %c6, %c0_67, %c0_68] : memref<3x9x128x64xbf16, #tpu.memory_space<vmem>>, vector<1x1x128x64xbf16>
    %61 = vector.shape_cast %60 : vector<1x1x128x64xbf16> to vector<128x64xbf16>
    %cst_69 = arith.constant dense<0.000000e+00> : vector<100x64xf32>
    %62 = tpu.matmul %4, %61, %cst_69 {dimension_numbers = #tpu.dot_dimension_numbers<[1], [0], [0], [1], [0, 0, 1, 1], [], []>} : vector<100x128xbf16>, vector<128x64xbf16>, vector<100x64xf32> -> vector<100x64xf32>
    %c0_70 = arith.constant 0 : index
    %c0_71 = arith.constant 0 : index
    %63 = vector.load %arg9[%c0_70, %c0_71] : memref<104x64xf32, #tpu.memory_space<vmem>>, vector<100x64xf32>
    tpu.vector_store %arg9[%c0_70, %c0_71], %62 {strides = array<i32>} : memref<104x64xf32, #tpu.memory_space<vmem>>, vector<100x64xf32>,
    %c0_72 = arith.constant 0 : index
    %c0_73 = arith.constant 0 : index
    %64 = vector.load %arg8[%c0_72, %c0_73] : memref<80x64xf32, #tpu.memory_space<vmem>>, vector<80x64xf32>
    %c20 = arith.constant 20 : index
    %c0_74 = arith.constant 0 : index
    %65 = vector.load %arg9[%c20, %c0_74] : memref<104x64xf32, #tpu.memory_space<vmem>>, vector<80x64xf32>
    %66 = arith.addf %64, %65 : vector<80x64xf32>
    %c0_75 = arith.constant 0 : index
    %c0_76 = arith.constant 0 : index
    %67 = vector.load %arg8[%c0_75, %c0_76] : memref<80x64xf32, #tpu.memory_space<vmem>>, vector<80x64xf32>
    tpu.vector_store %arg8[%c0_75, %c0_76], %66 {strides = array<i32>} : memref<80x64xf32, #tpu.memory_space<vmem>>, vector<80x64xf32>,
    %68 = arith.index_cast %arg2 : i32 to index
    %c7 = arith.constant 7 : index
    %c0_77 = arith.constant 0 : index
    %c0_78 = arith.constant 0 : index
    %69 = vector.load %arg4[%68, %c7, %c0_77, %c0_78] : memref<3x9x128x64xbf16, #tpu.memory_space<vmem>>, vector<1x1x128x64xbf16>
    %70 = vector.shape_cast %69 : vector<1x1x128x64xbf16> to vector<128x64xbf16>
    %cst_79 = arith.constant dense<0.000000e+00> : vector<100x64xf32>
    %71 = tpu.matmul %4, %70, %cst_79 {dimension_numbers = #tpu.dot_dimension_numbers<[1], [0], [0], [1], [0, 0, 1, 1], [], []>} : vector<100x128xbf16>, vector<128x64xbf16>, vector<100x64xf32> -> vector<100x64xf32>
    %c0_80 = arith.constant 0 : index
    %c0_81 = arith.constant 0 : index
    %72 = vector.load %arg9[%c0_80, %c0_81] : memref<104x64xf32, #tpu.memory_space<vmem>>, vector<100x64xf32>
    tpu.vector_store %arg9[%c0_80, %c0_81], %71 {strides = array<i32>} : memref<104x64xf32, #tpu.memory_space<vmem>>, vector<100x64xf32>,
    %c0_82 = arith.constant 0 : index
    %c0_83 = arith.constant 0 : index
    %73 = vector.load %arg8[%c0_82, %c0_83] : memref<80x64xf32, #tpu.memory_space<vmem>>, vector<80x64xf32>
    %c21 = arith.constant 21 : index
    %c0_84 = arith.constant 0 : index
    %74 = vector.load %arg9[%c21, %c0_84] : memref<104x64xf32, #tpu.memory_space<vmem>>, vector<80x64xf32>
    %75 = arith.addf %73, %74 : vector<80x64xf32>
    %c0_85 = arith.constant 0 : index
    %c0_86 = arith.constant 0 : index
    %76 = vector.load %arg8[%c0_85, %c0_86] : memref<80x64xf32, #tpu.memory_space<vmem>>, vector<80x64xf32>
    tpu.vector_store %arg8[%c0_85, %c0_86], %75 {strides = array<i32>} : memref<80x64xf32, #tpu.memory_space<vmem>>, vector<80x64xf32>,
    %77 = arith.index_cast %arg2 : i32 to index
    %c8 = arith.constant 8 : index
    %c0_87 = arith.constant 0 : index
    %c0_88 = arith.constant 0 : index
    %78 = vector.load %arg4[%77, %c8, %c0_87, %c0_88] : memref<3x9x128x64xbf16, #tpu.memory_space<vmem>>, vector<1x1x128x64xbf16>
    %79 = vector.shape_cast %78 : vector<1x1x128x64xbf16> to vector<128x64xbf16>
    %cst_89 = arith.constant dense<0.000000e+00> : vector<100x64xf32>
    %80 = tpu.matmul %4, %79, %cst_89 {dimension_numbers = #tpu.dot_dimension_numbers<[1], [0], [0], [1], [0, 0, 1, 1], [], []>} : vector<100x128xbf16>, vector<128x64xbf16>, vector<100x64xf32> -> vector<100x64xf32>
    %c0_90 = arith.constant 0 : index
    %c0_91 = arith.constant 0 : index
    %81 = vector.load %arg9[%c0_90, %c0_91] : memref<104x64xf32, #tpu.memory_space<vmem>>, vector<100x64xf32>
    tpu.vector_store %arg9[%c0_90, %c0_91], %80 {strides = array<i32>} : memref<104x64xf32, #tpu.memory_space<vmem>>, vector<100x64xf32>,
    %c0_92 = arith.constant 0 : index
    %c0_93 = arith.constant 0 : index
    %82 = vector.load %arg8[%c0_92, %c0_93] : memref<80x64xf32, #tpu.memory_space<vmem>>, vector<80x64xf32>
    %c22 = arith.constant 22 : index
    %c0_94 = arith.constant 0 : index
    %83 = vector.load %arg9[%c22, %c0_94] : memref<104x64xf32, #tpu.memory_space<vmem>>, vector<80x64xf32>
    %84 = arith.addf %82, %83 : vector<80x64xf32>
    %c0_95 = arith.constant 0 : index
    %c0_96 = arith.constant 0 : index
    %85 = vector.load %arg8[%c0_95, %c0_96] : memref<80x64xf32, #tpu.memory_space<vmem>>, vector<80x64xf32>
    tpu.vector_store %arg8[%c0_95, %c0_96], %84 {strides = array<i32>} : memref<80x64xf32, #tpu.memory_space<vmem>>, vector<80x64xf32>,
    %c2_i32 = arith.constant 2 : i32
    %86 = arith.cmpi eq, %arg2, %c2_i32 : i32
    %87 = arith.extui %86 : i1 to i32
    %c0_i32_97 = arith.constant 0 : i32
    %88 = arith.cmpi ne, %87, %c0_i32_97 : i32
    scf.if %88 {
      %c0_98 = arith.constant 0 : index
      %c0_99 = arith.constant 0 : index
      %89 = vector.load %arg8[%c0_98, %c0_99] : memref<80x64xf32, #tpu.memory_space<vmem>>, vector<80x64xf32>
      %c0_100 = arith.constant 0 : index
      %c0_101 = arith.constant 0 : index
      %90 = vector.load %arg5[%c0_100, %c0_101] : memref<1x64xf32, #tpu.memory_space<vmem>>, vector<1x64xf32>
      %91 = vector.broadcast %90 : vector<1x64xf32> to vector<80x64xf32>
      %92 = arith.mulf %89, %91 : vector<80x64xf32>
      %c0_102 = arith.constant 0 : index
      %c0_103 = arith.constant 0 : index
      %93 = vector.load %arg6[%c0_102, %c0_103] : memref<1x64xf32, #tpu.memory_space<vmem>>, vector<1x64xf32>
      %94 = vector.broadcast %93 : vector<1x64xf32> to vector<80x64xf32>
      %95 = arith.addf %92, %94 : vector<80x64xf32>
      %cst_104 = arith.constant 0.000000e+00 : f32
      %96 = vector.broadcast %cst_104 : f32 to vector<80x64xf32>
      %97 = arith.maximumf %95, %96 : vector<80x64xf32>
      %98 = arith.truncf %97 : vector<80x64xf32> to vector<80x64xbf16>
      %c0_105 = arith.constant 0 : index
      %c0_106 = arith.constant 0 : index
      %c0_107 = arith.constant 0 : index
      %c0_108 = arith.constant 0 : index
      %99 = vector.load %arg7[%c0_105, %c0_106, %c0_107, %c0_108] : memref<1x1x80x64xbf16, #tpu.memory_space<vmem>>, vector<1x1x80x64xbf16>
      %100 = vector.shape_cast %99 : vector<1x1x80x64xbf16> to vector<80x64xbf16>
      %101 = vector.shape_cast %98 : vector<80x64xbf16> to vector<1x1x80x64xbf16>
      tpu.vector_store %arg7[%c0_105, %c0_106, %c0_107, %c0_108], %101 {strides = array<i32>} : memref<1x1x80x64xbf16, #tpu.memory_space<vmem>>, vector<1x1x80x64xbf16>,
    } else {
    }
    return
  }
  func.func @transform_0(%arg0: i32, %arg1: i32, %arg2: i32) -> (i32, i32, i32, i32) {
    %0 = arith.addi %arg1, %arg2 : i32
    %c0_i32 = arith.constant 0 : i32
    %c0_i32_0 = arith.constant 0 : i32
    %c0_i32_1 = arith.constant 0 : i32
    return %arg0, %0, %c0_i32, %c0_i32_0 : i32, i32, i32, i32
  }
  func.func @transform_1(%arg0: i32, %arg1: i32, %arg2: i32) -> (i32, i32, i32, i32) {
    %c0_i32 = arith.constant 0 : i32
    %c0_i32_0 = arith.constant 0 : i32
    %c0_i32_1 = arith.constant 0 : i32
    %c0_i32_2 = arith.constant 0 : i32
    %c0_i32_3 = arith.constant 0 : i32
    return %c0_i32, %c0_i32_0, %c0_i32_1, %c0_i32_2 : i32, i32, i32, i32
  }
  func.func @transform_2(%arg0: i32, %arg1: i32, %arg2: i32) -> (i32, i32) {
    %c0_i32 = arith.constant 0 : i32
    %c0_i32_0 = arith.constant 0 : i32
    %c0_i32_1 = arith.constant 0 : i32
    return %c0_i32, %c0_i32_0 : i32, i32
  }
  func.func @transform_3(%arg0: i32, %arg1: i32, %arg2: i32) -> (i32, i32) {
    %c0_i32 = arith.constant 0 : i32
    %c0_i32_0 = arith.constant 0 : i32
    %c0_i32_1 = arith.constant 0 : i32
    return %c0_i32, %c0_i32_0 : i32, i32
  }
  func.func @transform_4(%arg0: i32, %arg1: i32, %arg2: i32) -> (i32, i32, i32, i32) {
    %c0_i32 = arith.constant 0 : i32
    %c0_i32_0 = arith.constant 0 : i32
    %c0_i32_1 = arith.constant 0 : i32
    return %arg0, %arg1, %c0_i32, %c0_i32_0 : i32, i32, i32, i32
  }
}

module attributes {stable_mosaic.version = 11 : i64} {
  func.func @_maxpool_kernel(%arg0: i32, %arg1: i32, %arg2: memref<1x2x8x5x128xbf16, #tpu.memory_space<vmem>>, %arg3: memref<1x1x4x4x64xbf16, #tpu.memory_space<vmem>>) attributes {dimension_semantics = [#tpu.dimension_semantics<parallel>, #tpu.dimension_semantics<parallel>], iteration_bounds = array<i64: 2, 4>, scalar_prefetch = 0 : i64, scratch_operands = 0 : i64, tpu.core_type = #tpu.core_type<tc>, window_params = [{transform_indices = @transform_0, window_bounds = array<i64: 1, 2, 8, 5, 128>}, {transform_indices = @transform_1, window_bounds = array<i64: 1, 1, 4, 4, 64>}]} {
    %c0 = arith.constant 0 : index
    %c0_0 = arith.constant 0 : index
    %c0_1 = arith.constant 0 : index
    %c0_2 = arith.constant 0 : index
    %c0_3 = arith.constant 0 : index
    %0 = vector.load %arg2[%c0, %c0_0, %c0_1, %c0_2, %c0_3] : memref<1x2x8x5x128xbf16, #tpu.memory_space<vmem>>, vector<1x1x8x5x128xbf16>
    %1 = vector.shape_cast %0 : vector<1x1x8x5x128xbf16> to vector<8x5x128xbf16>
    %c0_4 = arith.constant 0 : index
    %c1 = arith.constant 1 : index
    %c0_5 = arith.constant 0 : index
    %c0_6 = arith.constant 0 : index
    %c0_7 = arith.constant 0 : index
    %2 = vector.load %arg2[%c0_4, %c1, %c0_5, %c0_6, %c0_7] : memref<1x2x8x5x128xbf16, #tpu.memory_space<vmem>>, vector<1x1x8x5x128xbf16>
    %3 = vector.shape_cast %2 : vector<1x1x8x5x128xbf16> to vector<8x5x128xbf16>
    %4 = arith.maximumf %1, %3 : vector<8x5x128xbf16>
    %5 = vector.shape_cast %4 : vector<8x5x128xbf16> to vector<4x2x5x128xbf16>
    %6 = vector.extract_strided_slice %5 {offsets = [0, 0, 0, 0], sizes = [4, 1, 5, 128], strides = [1, 1, 1, 1]} : vector<4x2x5x128xbf16> to vector<4x1x5x128xbf16>
    %7 = vector.shape_cast %6 : vector<4x1x5x128xbf16> to vector<4x5x128xbf16>
    %8 = vector.extract_strided_slice %5 {offsets = [0, 1, 0, 0], sizes = [4, 1, 5, 128], strides = [1, 1, 1, 1]} : vector<4x2x5x128xbf16> to vector<4x1x5x128xbf16>
    %9 = vector.shape_cast %8 : vector<4x1x5x128xbf16> to vector<4x5x128xbf16>
    %10 = arith.maximumf %7, %9 : vector<4x5x128xbf16>
    %11 = vector.extract_strided_slice %10 {offsets = [0, 0, 0], sizes = [4, 4, 128], strides = [1, 1, 1]} : vector<4x5x128xbf16> to vector<4x4x128xbf16>
    %12 = vector.extract_strided_slice %11 {offsets = [0, 0, 0], sizes = [4, 4, 64], strides = [1, 1, 1]} : vector<4x4x128xbf16> to vector<4x4x64xbf16>
    %13 = vector.extract_strided_slice %11 {offsets = [0, 0, 64], sizes = [4, 4, 64], strides = [1, 1, 1]} : vector<4x4x128xbf16> to vector<4x4x64xbf16>
    %14 = arith.maximumf %12, %13 : vector<4x4x64xbf16>
    %c0_8 = arith.constant 0 : index
    %c0_9 = arith.constant 0 : index
    %c0_10 = arith.constant 0 : index
    %c0_11 = arith.constant 0 : index
    %c0_12 = arith.constant 0 : index
    %15 = vector.load %arg3[%c0_8, %c0_9, %c0_10, %c0_11, %c0_12] : memref<1x1x4x4x64xbf16, #tpu.memory_space<vmem>>, vector<1x1x4x4x64xbf16>
    %16 = vector.shape_cast %15 : vector<1x1x4x4x64xbf16> to vector<4x4x64xbf16>
    %17 = vector.shape_cast %14 : vector<4x4x64xbf16> to vector<1x1x4x4x64xbf16>
    tpu.vector_store %arg3[%c0_8, %c0_9, %c0_10, %c0_11, %c0_12], %17 {strides = array<i32>} : memref<1x1x4x4x64xbf16, #tpu.memory_space<vmem>>, vector<1x1x4x4x64xbf16>,
    return
  }
  func.func @transform_0(%arg0: i32, %arg1: i32) -> (i32, i32, i32, i32, i32) {
    %c0_i32 = arith.constant 0 : i32
    %c0_i32_0 = arith.constant 0 : i32
    %c0_i32_1 = arith.constant 0 : i32
    %c0_i32_2 = arith.constant 0 : i32
    return %arg0, %arg1, %c0_i32, %c0_i32_0, %c0_i32_1 : i32, i32, i32, i32, i32
  }
  func.func @transform_1(%arg0: i32, %arg1: i32) -> (i32, i32, i32, i32, i32) {
    %c0_i32 = arith.constant 0 : i32
    %c0_i32_0 = arith.constant 0 : i32
    %c0_i32_1 = arith.constant 0 : i32
    %c0_i32_2 = arith.constant 0 : i32
    return %arg0, %arg1, %c0_i32, %c0_i32_0, %c0_i32_1 : i32, i32, i32, i32, i32
  }
}

module attributes {stable_mosaic.version = 11 : i64} {
  func.func @_matmul_bias_kernel(%arg0: i32, %arg1: memref<2x4096xbf16, #tpu.memory_space<vmem>>, %arg2: memref<4096x4xbf16, #tpu.memory_space<vmem>>, %arg3: memref<1x4xf32, #tpu.memory_space<vmem>>, %arg4: memref<2x4xf32, #tpu.memory_space<vmem>>) attributes {dimension_semantics = [#tpu.dimension_semantics<arbitrary>], iteration_bounds = array<i64: 1>, scalar_prefetch = 0 : i64, scratch_operands = 0 : i64, tpu.core_type = #tpu.core_type<tc>, window_params = [{pipeline_mode = #tpu.pipeline_mode<synchronous>, transform_indices = @transform_0, window_bounds = array<i64: 2, 4096>}, {pipeline_mode = #tpu.pipeline_mode<synchronous>, transform_indices = @transform_1, window_bounds = array<i64: 4096, 4>}, {pipeline_mode = #tpu.pipeline_mode<synchronous>, transform_indices = @transform_2, window_bounds = array<i64: 1, 4>}, {pipeline_mode = #tpu.pipeline_mode<synchronous>, transform_indices = @transform_3, window_bounds = array<i64: 2, 4>}]} {
    %c0 = arith.constant 0 : index
    %c0_0 = arith.constant 0 : index
    %0 = vector.load %arg1[%c0, %c0_0] : memref<2x4096xbf16, #tpu.memory_space<vmem>>, vector<2x4096xbf16>
    %c0_1 = arith.constant 0 : index
    %c0_2 = arith.constant 0 : index
    %1 = vector.load %arg2[%c0_1, %c0_2] : memref<4096x4xbf16, #tpu.memory_space<vmem>>, vector<4096x4xbf16>
    %cst = arith.constant dense<0.000000e+00> : vector<2x4xf32>
    %2 = tpu.matmul %0, %1, %cst {dimension_numbers = #tpu.dot_dimension_numbers<[1], [0], [0], [1], [0, 0, 1, 1], [], []>} : vector<2x4096xbf16>, vector<4096x4xbf16>, vector<2x4xf32> -> vector<2x4xf32>
    %c0_3 = arith.constant 0 : index
    %c0_4 = arith.constant 0 : index
    %3 = vector.load %arg3[%c0_3, %c0_4] : memref<1x4xf32, #tpu.memory_space<vmem>>, vector<1x4xf32>
    %4 = vector.broadcast %3 : vector<1x4xf32> to vector<2x4xf32>
    %5 = arith.addf %2, %4 : vector<2x4xf32>
    %c0_5 = arith.constant 0 : index
    %c0_6 = arith.constant 0 : index
    %6 = vector.load %arg4[%c0_5, %c0_6] : memref<2x4xf32, #tpu.memory_space<vmem>>, vector<2x4xf32>
    tpu.vector_store %arg4[%c0_5, %c0_6], %5 {strides = array<i32>} : memref<2x4xf32, #tpu.memory_space<vmem>>, vector<2x4xf32>,
    return
  }
  func.func @transform_0(%arg0: i32) -> (i32, i32) {
    %c0_i32 = arith.constant 0 : i32
    %c0_i32_0 = arith.constant 0 : i32
    %c0_i32_1 = arith.constant 0 : i32
    return %c0_i32, %c0_i32_0 : i32, i32
  }
  func.func @transform_1(%arg0: i32) -> (i32, i32) {
    %c0_i32 = arith.constant 0 : i32
    %c0_i32_0 = arith.constant 0 : i32
    %c0_i32_1 = arith.constant 0 : i32
    return %c0_i32, %c0_i32_0 : i32, i32
  }
  func.func @transform_2(%arg0: i32) -> (i32, i32) {
    %c0_i32 = arith.constant 0 : i32
    %c0_i32_0 = arith.constant 0 : i32
    %c0_i32_1 = arith.constant 0 : i32
    return %c0_i32, %c0_i32_0 : i32, i32
  }
  func.func @transform_3(%arg0: i32) -> (i32, i32) {
    %c0_i32 = arith.constant 0 : i32
    %c0_i32_0 = arith.constant 0 : i32
    %c0_i32_1 = arith.constant 0 : i32
    return %c0_i32, %c0_i32_0 : i32, i32
  }
}

</mosaic_0001>

<llo_original>
// kernel: classifier_forward.5
$region0: #{classifier_forward.5}
  #allocation0 [shape = 'u32[]', space=smem, size = 0x4, offset = 0x4, fixed_abs, tag = 'smem constant byte address 0x4 - core index']
  #allocation1 [shape = 'u32[144,128]{1,0:T(1,128)}', space=vmem, size = 0x12000, scoped, tag = 'internal scratch']
  #allocation2 [shape = 'f32[256,128]{1,0:T(8,128)}', space=vmem, size = 0x20000, scoped, tag = 'scratch operand']
  #allocation3 [shape = 'f32[8,128]{1,0:T(8,128)}', space=vmem, size = 0x1000, scoped, tag = 'scratch operand']
  %s0 = inlined_call_operand.vmem [shape: bf16[2,20,256,50], index: 0, kind: input, shape index: {}]
  %s1 = inlined_call_operand.vmem [shape: bf16[5,1,50,128], index: 1, kind: input, shape index: {}]
  %s2 = inlined_call_operand.vmem [shape: f32[1,128], index: 2, kind: input, shape index: {}]
  %s3 = inlined_call_operand.vmem [shape: f32[1,128], index: 3, kind: input, shape index: {}]
  %s4 = inlined_call_operand.vmem [shape: bf16[2,16,256,128], index: 4, kind: output, shape index: {}]
  %s5 = sld [smem:[#allocation0]]
  $region57: #{classifier_forward.5} parent=0
    _
  %s7 = ssub.s32 1, %s5
  %s8 = scalar_select 0, %s7, %s5
  loop: start=0, step=1, limit=162
  $region2: #{classifier_forward.5} parent=0 // loop_pre_header
    _
  $region3: #{classifier_forward.5} parent=0 // loop_header
    %s10 = sphi 0, %s14
    %p11 = scmp.ge.s32.totalorder %s10, 162
    %s17 = sphi 0, %s36
    %s18 = sphi 0, %s32
    %s19 = sphi 0, %s28
    %s20 = sphi 0, %s17
    %s21 = sphi 0, %s18
    %s22 = sphi 0, %s19
    %s23 = sphi 0, %s20
    %s24 = sphi 0, %s21
    %s25 = sphi 0, %s22
    %s43 = sphi 0, %s45
    %s46 = sphi 0, %s43
    %s47 = sphi 0, %s46
    %s63 = sphi 0, %s47
    %s67 = sphi 0, %s67
    %s69 = sphi 0, %s67
    %s70 = sphi 0, %s69
    %s84 = sphi 0, %s70
    %s88 = sphi 0, %s88
    %s90 = sphi 0, %s88
    %s91 = sphi 0, %s90
    %s105 = sphi 0, %s91
    %s109 = sphi 0, %s109
    %s111 = sphi 0, %s109
    %s112 = sphi 0, %s111
    %s126 = sphi 0, %s112
    %s134 = sphi 0, %s136
    %s137 = sphi 0, %s134
    %s138 = sphi 0, %s137
    %s154 = sphi 0, %s138
  $region4: #{classifier_forward.5} parent=0 // loop_header_branch
    %13 = sbr.rel (%p11) target = $region8
  $region5: #{classifier_forward.5} parent=0 // loop_body
    %s15 = ssub.s32 %s10, 1
    %s16 = ssub.s32 %s10, 2
    %s26 = sadd.s32 1, %s19
    %p27 = scmp.ge.s32.totalorder %s26, 5
    %s28 = scalar_select %p27, 0, %s26
    %s29 = sadd.s32 1, %s18
    %s30 = scalar_select %p27, %s29, %s18
    %p31 = scmp.ge.s32.totalorder %s30, 16
    %s32 = scalar_select %p31, 0, %s30
    %s33 = sadd.s32 1, %s17
    %s34 = scalar_select %p31, %s33, %s17
    %p35 = scmp.ge.s32.totalorder %s34, 2
    %s36 = scalar_select %p35, 0, %s34
    %s37 = sadd.s32 %s18, %s19
    %s38 = sadd.s32 %s32, %s28
    %s39 = ssub.s32 %s17, %s36
    %s40 = ssub.s32 %s37, %s38
    %s41 = sor.u32 %s39, %s40
    %p42 = scmp.eq.s32.totalorder %s41, 0
    %s44 = sadd.s32 %s43, 1
    %s45 = scalar_select %p42, %s43, %s44
    %p48 = pneg %p42
    %p49 = scmp.eq.s32.totalorder %s10, 159
    %p50 = por %p48, %p49
    %p51 = scmp.ne.s32.totalorder %s43, %s46
    %p52 = scmp.eq.s32.totalorder %s10, 0
    %p53 = por %p51, %p52
    %p54 = scmp.ne.s32.totalorder %s43, %s46
    %p55 = scmp.eq.s32.totalorder %s15, 159
    %p56 = por %p54, %p55
    %p57 = scmp.ne.s32.totalorder %s46, %s47
    %p58 = scmp.eq.s32.totalorder %s15, 0
    %p59 = por %p57, %p58
    %p60 = scmp.ne.s32.totalorder %s46, %s47
    %p61 = scmp.eq.s32.totalorder %s16, 159
    %p62 = por %p60, %p61
    %p64 = scmp.ne.s32.totalorder %s47, %s63
    %p65 = scmp.eq.s32.totalorder %s16, 0
    %p66 = por %p64, %p65
    %s68 = sadd.s32 %s67, 1
    %p71 = scmp.eq.s32.totalorder %s10, 159
    %p72 = scmp.ne.s32.totalorder %s67, %s69
    %p73 = scmp.eq.s32.totalorder %s10, 0
    %p74 = por %p72, %p73
    %p75 = scmp.ne.s32.totalorder %s67, %s69
    %p76 = scmp.eq.s32.totalorder %s15, 159
    %p77 = por %p75, %p76
    %p78 = scmp.ne.s32.totalorder %s69, %s70
    %p79 = scmp.eq.s32.totalorder %s15, 0
    %p80 = por %p78, %p79
    %p81 = scmp.ne.s32.totalorder %s69, %s70
    %p82 = scmp.eq.s32.totalorder %s16, 159
    %p83 = por %p81, %p82
    %p85 = scmp.ne.s32.totalorder %s70, %s84
    %p86 = scmp.eq.s32.totalorder %s16, 0
    %p87 = por %p85, %p86
    %s89 = sadd.s32 %s88, 1
    %p92 = scmp.eq.s32.totalorder %s10, 159
    %p93 = scmp.ne.s32.totalorder %s88, %s90
    %p94 = scmp.eq.s32.totalorder %s10, 0
    %p95 = por %p93, %p94
    %p96 = scmp.ne.s32.totalorder %s88, %s90
    %p97 = scmp.eq.s32.totalorder %s15, 159
    %p98 = por %p96, %p97
    %p99 = scmp.ne.s32.totalorder %s90, %s91
    %p100 = scmp.eq.s32.totalorder %s15, 0
    %p101 = por %p99, %p100
    %p102 = scmp.ne.s32.totalorder %s90, %s91
    %p103 = scmp.eq.s32.totalorder %s16, 159
    %p104 = por %p102, %p103
    %p106 = scmp.ne.s32.totalorder %s91, %s105
    %p107 = scmp.eq.s32.totalorder %s16, 0
    %p108 = por %p106, %p107
    %s110 = sadd.s32 %s109, 1
    %p113 = scmp.eq.s32.totalorder %s10, 159
    %p114 = scmp.ne.s32.totalorder %s109, %s111
    %p115 = scmp.eq.s32.totalorder %s10, 0
    %p116 = por %p114, %p115
    %p117 = scmp.ne.s32.totalorder %s109, %s111
    %p118 = scmp.eq.s32.totalorder %s15, 159
    %p119 = por %p117, %p118
    %p120 = scmp.ne.s32.totalorder %s111, %s112
    %p121 = scmp.eq.s32.totalorder %s15, 0
    %p122 = por %p120, %p121
    %p123 = scmp.ne.s32.totalorder %s111, %s112
    %p124 = scmp.eq.s32.totalorder %s16, 159
    %p125 = por %p123, %p124
    %p127 = scmp.ne.s32.totalorder %s112, %s126
    %p128 = scmp.eq.s32.totalorder %s16, 0
    %p129 = por %p127, %p128
    %s130 = ssub.s32 %s17, %s36
    %s131 = ssub.s32 %s18, %s32
    %s132 = sor.u32 %s130, %s131
    %p133 = scmp.eq.s32.totalorder %s132, 0
    %s135 = sadd.s32 %s134, 1
    %s136 = scalar_select %p133, %s134, %s135
    %p139 = pneg %p133
    %p140 = scmp.eq.s32.totalorder %s10, 159
    %p141 = por %p139, %p140
    %p142 = scmp.ne.s32.totalorder %s134, %s137
    %p143 = scmp.eq.s32.totalorder %s10, 0
    %p144 = por %p142, %p143
    %p145 = scmp.ne.s32.totalorder %s134, %s137
    %p146 = scmp.eq.s32.totalorder %s15, 159
    %p147 = por %p145, %p146
    %p148 = scmp.ne.s32.totalorder %s137, %s138
    %p149 = scmp.eq.s32.totalorder %s15, 0
    %p150 = por %p148, %p149
    %p151 = scmp.ne.s32.totalorder %s137, %s138
    %p152 = scmp.eq.s32.totalorder %s16, 159
    %p153 = por %p151, %p152
    %p155 = scmp.ne.s32.totalorder %s138, %s154
    %p156 = scmp.eq.s32.totalorder %s16, 0
    %p157 = por %p155, %p156
    %p158 = scmp.le.s32.totalorder 1, %s10
    %p159 = scmp.lt.s32.totalorder %s10, 161
    %p160 = pnand %p158, %p159
    %p161 = pneg %p160
    // Predicated region
    $region9: #{classifier_forward.5} parent=5 // pred_check
      _
    $region10: #{classifier_forward.5} parent=5 // pred_check_branch
      %163 = sbr.rel (%p160) target = $region12
    $region11: #{classifier_forward.5} parent=5 // pred_region
      %s164 = ssub.s32 %s10, 1
      // Predicated region
      $region13: #{classifier_forward.5} parent=11 // pred_check
        %p165 = pneg %p80
      $region14: #{classifier_forward.5} parent=11 // pred_check_branch
        %167 = sbr.rel (%p165) target = $region16
      $region15: #{classifier_forward.5} parent=11 // pred_region
        _
      $region16: #{classifier_forward.5} parent=11 // pred_fallthru
        _
      // Predicated region
      $region17: #{classifier_forward.5} parent=11 // pred_check
        %p168 = pneg %p101
      $region18: #{classifier_forward.5} parent=11 // pred_check_branch
        %170 = sbr.rel (%p168) target = $region20
      $region19: #{classifier_forward.5} parent=11 // pred_region
        _
      $region20: #{classifier_forward.5} parent=11 // pred_fallthru
        _
      // Predicated region
      $region21: #{classifier_forward.5} parent=11 // pred_check
        %p171 = pneg %p122
      $region22: #{classifier_forward.5} parent=11 // pred_check_branch
        %173 = sbr.rel (%p171) target = $region24
      $region23: #{classifier_forward.5} parent=11 // pred_region
        _
      $region24: #{classifier_forward.5} parent=11 // pred_fallthru
        _
    $region12: #{classifier_forward.5} parent=5 // pred_fallthru
      _
    %p174 = scmp.lt.s32.totalorder %s10, 160
    // Predicated region
    $region25: #{classifier_forward.5} parent=5 // pred_check
      %p175 = pneg %p174
    $region26: #{classifier_forward.5} parent=5 // pred_check_branch
      %177 = sbr.rel (%p175) target = $region28
    $region27: #{classifier_forward.5} parent=5 // pred_region
      // Predicated region
      $region29: #{classifier_forward.5} parent=27 // pred_check
        %p178 = pneg %p53
      $region30: #{classifier_forward.5} parent=27 // pred_check_branch
        %180 = sbr.rel (%p178) target = $region32
      $region31: #{classifier_forward.5} parent=27 // pred_region
        %s181 = sadd.s32 %s18, %s19
        %p182 = scmp.lt.s32.totalorder %s17, 1
        %s183 = scalar_select %p182, %s17, 1
        %p184 = scmp.lt.s32.totalorder %s181, 19
        %s185 = scalar_select %p184, %s181, 19
        %s186 = smul.addr %s185, 32
        %s187 = smul.addr %s183, 640
        %s188 = sadd.s32 %s186, %s187
        %s189 = smul.addr %s188, 4
        %s190 = scalar_lea.vmem %s0, %s189
        %s191 = sadd.s32 %s18, %s19
      $region32: #{classifier_forward.5} parent=27 // pred_fallthru
        _
    $region28: #{classifier_forward.5} parent=5 // pred_fallthru
      _
    %p192 = scmp.le.s32.totalorder 1, %s10
    %p193 = scmp.lt.s32.totalorder %s10, 161
    %p194 = pnand %p192, %p193
    %p195 = pneg %p194
    // Predicated region
    $region33: #{classifier_forward.5} parent=5 // pred_check
      _
    $region34: #{classifier_forward.5} parent=5 // pred_check_branch
      %197 = sbr.rel (%p194) target = $region36
    $region35: #{classifier_forward.5} parent=5 // pred_region
      %s198 = ssub.s32 %s10, 1
      %s199 = sadd.s32 %s21, %s22
      %p200 = scmp.lt.s32.totalorder %s20, 1
      %s201 = scalar_select %p200, %s20, 1
      %p202 = scmp.lt.s32.totalorder %s199, 19
      %s203 = scalar_select %p202, %s199, 19
      %s204 = smul.addr %s203, 32
      %s205 = smul.addr %s201, 640
      %s206 = sadd.s32 %s204, %s205
      %s207 = smul.addr %s206, 4
      %s208 = scalar_lea.vmem %s0, %s207
      %p209 = pneg %p59
      %p210 = pneg %p56
      %p211 = pneg %p80
      %p212 = pneg %p77
      %p213 = pneg %p101
      %p214 = pneg %p98
      %p215 = pneg %p122
      %p216 = pneg %p119
      %p217 = pneg %p150
      %p218 = pneg %p147
      %p219 = scmp.lt.s32.totalorder %s20, 1
      %s220 = scalar_select %p219, %s20, 1
      %p221 = scmp.lt.s32.totalorder %s21, 15
      %s222 = scalar_select %p221, %s21, 15
      %s223 = smul.addr %s222, 32
      %s224 = smul.addr %s220, 512
      %s225 = sadd.s32 %s223, %s224
      %s226 = smul.addr %s225, 4
      %s227 = scalar_lea.vmem %s4, %s226
      %s228 = sadd.s32 %s21, %s22
      %p229 = scmp.lt.s32.totalorder %s20, 1
      %s230 = scalar_select %p229, %s20, 1
      %p231 = scmp.lt.s32.totalorder %s228, 19
      %s232 = scalar_select %p231, %s228, 19
      %s233 = smul.addr %s232, 32
      %s234 = smul.addr %s230, 640
      %s235 = sadd.s32 %s233, %s234
      %s236 = smul.addr %s235, 4
      %s237 = scalar_lea.vmem %s0, %s236
      %s238 = sadd.s32 %s21, %s22
      %p239 = scmp.lt.s32.totalorder %s20, 1
      %s240 = scalar_select %p239, %s20, 1
      %p241 = scmp.lt.s32.totalorder %s21, 15
      %s242 = scalar_select %p241, %s21, 15
      %s243 = smul.addr %s242, 32
      %s244 = smul.addr %s240, 512
      %s245 = sadd.s32 %s243, %s244
      %s246 = smul.addr %s245, 4
      %s247 = scalar_lea.vmem %s4, %s246
      %p249 = scmp.eq.s32.totalorder %s22, 0
      // Predicated region
      $region37: #{classifier_forward.5} parent=35 // pred_check
        %p250 = pneg %p249
      $region38: #{classifier_forward.5} parent=35 // pred_check_branch
        %252 = sbr.rel (%p250) target = $region40
      $region39: #{classifier_forward.5} parent=35 // pred_region
        %253 = vst [vmem:[#allocation2] sm:$0xff] 0.0
        %254 = vst [vmem:[#allocation2 + $0x8] sm:$0xff] 0.0
        %255 = vst [vmem:[#allocation2 + $0x10] sm:$0xff] 0.0
        %256 = vst [vmem:[#allocation2 + $0x18] sm:$0xff] 0.0
        %257 = vst [vmem:[#allocation2 + $0x20] sm:$0xff] 0.0
        %258 = vst [vmem:[#allocation2 + $0x28] sm:$0xff] 0.0
        %259 = vst [vmem:[#allocation2 + $0x30] sm:$0xff] 0.0
        %260 = vst [vmem:[#allocation2 + $0x38] sm:$0xff] 0.0
        %261 = vst [vmem:[#allocation2 + $0x40] sm:$0xff] 0.0
        %262 = vst [vmem:[#allocation2 + $0x48] sm:$0xff] 0.0
        %263 = vst [vmem:[#allocation2 + $0x50] sm:$0xff] 0.0
        %264 = vst [vmem:[#allocation2 + $0x58] sm:$0xff] 0.0
        %265 = vst [vmem:[#allocation2 + $0x60] sm:$0xff] 0.0
        %266 = vst [vmem:[#allocation2 + $0x68] sm:$0xff] 0.0
        %267 = vst [vmem:[#allocation2 + $0x70] sm:$0xff] 0.0
        %268 = vst [vmem:[#allocation2 + $0x78] sm:$0xff] 0.0
        %269 = vst [vmem:[#allocation2 + $0x80] sm:$0xff] 0.0
        %270 = vst [vmem:[#allocation2 + $0x88] sm:$0xff] 0.0
        %271 = vst [vmem:[#allocation2 + $0x90] sm:$0xff] 0.0
        %272 = vst [vmem:[#allocation2 + $0x98] sm:$0xff] 0.0
        %273 = vst [vmem:[#allocation2 + $0xa0] sm:$0xff] 0.0
        %274 = vst [vmem:[#allocation2 + $0xa8] sm:$0xff] 0.0
        %275 = vst [vmem:[#allocation2 + $0xb0] sm:$0xff] 0.0
        %276 = vst [vmem:[#allocation2 + $0xb8] sm:$0xff] 0.0
        %277 = vst [vmem:[#allocation2 + $0xc0] sm:$0xff] 0.0
        %278 = vst [vmem:[#allocation2 + $0xc8] sm:$0xff] 0.0
        %279 = vst [vmem:[#allocation2 + $0xd0] sm:$0xff] 0.0
        %280 = vst [vmem:[#allocation2 + $0xd8] sm:$0xff] 0.0
        %281 = vst [vmem:[#allocation2 + $0xe0] sm:$0xff] 0.0
        %282 = vst [vmem:[#allocation2 + $0xe8] sm:$0xff] 0.0
        %283 = vst [vmem:[#allocation2 + $0xf0] sm:$0xff] 0.0
        %284 = vst [vmem:[#allocation2 + $0xf8] sm:$0xff] 0.0
      $region40: #{classifier_forward.5} parent=35 // pred_fallthru
        _
      %v285 = vld [vmem:[%s237] sm:$0xf]
      %v286 = vld [vmem:[%s237 + $0x4] sm:$0xf]
      %v287 = vld [vmem:[%s237 + $0x8] sm:$0xf]
      %v288 = vld [vmem:[%s237 + $0xc] sm:$0xf]
      %v289 = vld [vmem:[%s237 + $0x10] sm:$0xf]
      %v290 = vld [vmem:[%s237 + $0x14] sm:$0xf]
      %v291 = vld [vmem:[%s237 + $0x18] sm:$0xf]
      %v292 = vld [vmem:[%s237 + $0x1c] sm:$0xf]
      %v293 = vld [vmem:[%s237 + $0x20] sm:$0xf]
      %v294 = vld [vmem:[%s237 + $0x24] sm:$0xf]
      %v295 = vld [vmem:[%s237 + $0x28] sm:$0xf]
      %v296 = vld [vmem:[%s237 + $0x2c] sm:$0xf]
      %v297 = vld [vmem:[%s237 + $0x30] sm:$0xf]
      %v298 = vld [vmem:[%s237 + $0x34] sm:$0xf]
      %v299 = vld [vmem:[%s237 + $0x38] sm:$0xf]
      %v300 = vld [vmem:[%s237 + $0x3c] sm:$0xf]
      %v301 = vld [vmem:[%s237 + $0x40] sm:$0xf]
      %v302 = vld [vmem:[%s237 + $0x44] sm:$0xf]
      %v303 = vld [vmem:[%s237 + $0x48] sm:$0xf]
      %v304 = vld [vmem:[%s237 + $0x4c] sm:$0xf]
      %v305 = vld [vmem:[%s237 + $0x50] sm:$0xf]
      %v306 = vld [vmem:[%s237 + $0x54] sm:$0xf]
      %v307 = vld [vmem:[%s237 + $0x58] sm:$0xf]
      %v308 = vld [vmem:[%s237 + $0x5c] sm:$0xf]
      %v309 = vld [vmem:[%s237 + $0x60] sm:$0xf]
      %v310 = vld [vmem:[%s237 + $0x64] sm:$0xf]
      %v311 = vld [vmem:[%s237 + $0x68] sm:$0xf]
      %v312 = vld [vmem:[%s237 + $0x6c] sm:$0xf]
      %v313 = vld [vmem:[%s237 + $0x70] sm:$0xf]
      %v314 = vld [vmem:[%s237 + $0x74] sm:$0xf]
      %v315 = vld [vmem:[%s237 + $0x78] sm:$0xf]
      %v316 = vld [vmem:[%s237 + $0x7c] sm:$0xf]
      %s317 = smul.u32 %s22, 7
      %s318 = smul.addr %s317, 4
      %s319 = scalar_lea.vmem %s1, %s318
      %v320 = vld [vmem:[%s319] sm:$0xf]
      %v321 = vld [vmem:[%s319 + $0x4] sm:$0xf]
      %v322 = vld [vmem:[%s319 + $0x8] sm:$0xf]
      %v323 = vld [vmem:[%s319 + $0xc] sm:$0xf]
      %v324 = vld [vmem:[%s319 + $0x10] sm:$0xf]
      %v325 = vld [vmem:[%s319 + $0x14] sm:$0xf]
      %v326 = vld [vmem:[%s319 + $0x18] sm:$0x1]
      %v359 = vunpack.c.l.b16 %v285
      %v360 = vunpack.c.l.b16 %v286
      %v361 = vunpack.c.l.b16 %v287
      %v362 = vunpack.c.l.b16 %v288
      %v363 = vunpack.c.l.b16 %v289
      %v364 = vunpack.c.l.b16 %v290
      %v365 = vunpack.c.l.b16 %v291
      %v366 = vunpack.c.l.b16 %v292
      %v367 = vunpack.c.l.b16 %v293
      %v368 = vunpack.c.l.b16 %v294
      %v369 = vunpack.c.l.b16 %v295
      %v370 = vunpack.c.l.b16 %v296
      %v371 = vunpack.c.l.b16 %v297
      %v372 = vunpack.c.l.b16 %v298
      %v373 = vunpack.c.l.b16 %v299
      %v374 = vunpack.c.l.b16 %v300
      %v375 = vunpack.c.l.b16 %v301
      %v376 = vunpack.c.l.b16 %v302
      %v377 = vunpack.c.l.b16 %v303
      %v378 = vunpack.c.l.b16 %v304
      %v379 = vunpack.c.l.b16 %v305
      %v380 = vunpack.c.l.b16 %v306
      %v381 = vunpack.c.l.b16 %v307
      %v382 = vunpack.c.l.b16 %v308
      %v383 = vunpack.c.l.b16 %v309
      %v384 = vunpack.c.l.b16 %v310
      %v385 = vunpack.c.l.b16 %v311
      %v386 = vunpack.c.l.b16 %v312
      %v387 = vunpack.c.l.b16 %v313
      %v388 = vunpack.c.l.b16 %v314
      %v389 = vunpack.c.l.b16 %v315
      %v390 = vunpack.c.l.b16 %v316
      %v391 = vpack.c.b16 %v360, %v359
      %v392 = vpack.c.b16 %v362, %v361
      %v393 = vpack.c.b16 %v364, %v363
      %v394 = vpack.c.b16 %v366, %v365
      %v395 = vpack.c.b16 %v368, %v367
      %v396 = vpack.c.b16 %v370, %v369
      %v397 = vpack.c.b16 %v372, %v371
      %v398 = vpack.c.b16 %v374, %v373
      %v399 = vpack.c.b16 %v376, %v375
      %v400 = vpack.c.b16 %v378, %v377
      %v401 = vpack.c.b16 %v380, %v379
      %v402 = vpack.c.b16 %v382, %v381
      %v403 = vpack.c.b16 %v384, %v383
      %v404 = vpack.c.b16 %v386, %v385
      %v405 = vpack.c.b16 %v388, %v387
      %v406 = vpack.c.b16 %v390, %v389
      %v414 = vunpack.c.l.b16 %v320
      %v415 = vunpack.c.l.b16 %v321
      %v416 = vunpack.c.l.b16 %v322
      %v417 = vunpack.c.l.b16 %v323
      %v418 = vunpack.c.l.b16 %v324
      %v419 = vunpack.c.l.b16 %v325
      %v420 = vunpack.c.l.b16 %v326
      %v421 = vpack.c.b16 %v415, %v414
      %v422 = vpack.c.b16 %v417, %v416
      %v423 = vpack.c.b16 %v419, %v418
      %v424 = vpack.c.b16 %v420, %v420
      %vm428 = vcmask 408576
      %v430 = vsel %vm428, %v391, 0
      %v433 = vsel %vm428, %v392, 0
      %v436 = vsel %vm428, %v393, 0
      %v439 = vsel %vm428, %v394, 0
      %v442 = vsel %vm428, %v395, 0
      %v445 = vsel %vm428, %v396, 0
      %v448 = vsel %vm428, %v397, 0
      %v451 = vsel %vm428, %v398, 0
      %v454 = vsel %vm428, %v399, 0
      %v457 = vsel %vm428, %v400, 0
      %v460 = vsel %vm428, %v401, 0
      %v463 = vsel %vm428, %v402, 0
      %v466 = vsel %vm428, %v403, 0
      %v469 = vsel %vm428, %v404, 0
      %v472 = vsel %vm428, %v405, 0
      %v475 = vsel %vm428, %v406, 0
      %vm477 = vcmask 1040384
      %v479 = vsel %vm477, %v424, 0
      %481 = vmatprep.subr.bf16.mxu0 0
      %482 = vmatpush1.bf16.msra.mxu0 0
      %483 = vmatprep.subr.bf16.mxu0 0
      %484 = vmatpush1.bf16.msra.mxu0 0
      %485 = vmatprep.subr.bf16.mxu0 0
      %486 = vmatpush1.bf16.msra.mxu0 0
      %487 = vmatprep.subr.bf16.mxu0 0
      %488 = vmatpush1.bf16.msra.mxu0 0
      %489 = vmatprep.subr.bf16.mxu0 0
      %490 = vmatpush1.bf16.msra.mxu0 %v479
      %491 = vmatprep.subr.bf16.mxu0 0
      %492 = vmatpush1.bf16.msra.mxu0 %v423
      %493 = vmatprep.subr.bf16.mxu0 0
      %494 = vmatpush1.bf16.msra.mxu0 %v422
      %495 = vmatprep.subr.bf16.mxu0 0
      %496 = vmatpush1.bf16.msra.mxu0 %v421
      %497 = vmatprep.subr.bf16.mxu0 0
      %498 = vmatpush2.bf16.msra.mxu0 0
      %499 = vmatprep.subr.bf16.mxu0 0
      %500 = vmatpush2.bf16.msra.mxu0 0
      %501 = vmatprep.subr.bf16.mxu0 0
      %502 = vmatpush2.bf16.msra.mxu0 0
      %503 = vmatprep.subr.bf16.mxu0 0
      %504 = vmatpush2.bf16.msra.mxu0 0
      %505 = vmatprep.subr.bf16.mxu0 0
      %506 = vmatpush2.bf16.msra.mxu0 0
      %507 = vmatprep.subr.bf16.mxu0 0
      %508 = vmatpush2.bf16.msra.mxu0 0
      %509 = vmatprep.subr.bf16.mxu0 0
      %510 = vmatpush2.bf16.msra.mxu0 0
      %511 = vmatprep.subr.bf16.mxu0 0
      %512 = vmatpush2.bf16.msra.mxu0 0
      %513 = vmatprep.mubr.bf16.mxu0 0
      %514 = vmatmul.mubr.bf16.gmra.mxu0 %v430
      %v515 = vpop.f32.mrf.mxu0
      %v516 = vadd.f32 0.0, %v515
      %v517 = vpop.f32.mrf.mxu0
      %v518 = vpop.f32.mrf.mxu0
      %v519 = vadd.f32 0.0, %v518
      %v520 = vpop.f32.mrf.mxu0
      %521 = vmatprep.mubr.bf16.mxu0 0
      %522 = vmatmul.mubr.bf16.gmra.mxu0 %v433
      %v523 = vpop.f32.mrf.mxu0
      %v524 = vadd.f32 0.0, %v523
      %v525 = vpop.f32.mrf.mxu0
      %v526 = vpop.f32.mrf.mxu0
      %v527 = vadd.f32 0.0, %v526
      %v528 = vpop.f32.mrf.mxu0
      %529 = vmatprep.mubr.bf16.mxu0 0
      %530 = vmatmul.mubr.bf16.gmra.mxu0 %v436
      %v531 = vpop.f32.mrf.mxu0
      %v532 = vadd.f32 0.0, %v531
      %v533 = vpop.f32.mrf.mxu0
      %v534 = vpop.f32.mrf.mxu0
      %v535 = vadd.f32 0.0, %v534
      %v536 = vpop.f32.mrf.mxu0
      %537 = vmatprep.mubr.bf16.mxu0 0
      %538 = vmatmul.mubr.bf16.gmra.mxu0 %v439
      %v539 = vpop.f32.mrf.mxu0
      %v540 = vadd.f32 0.0, %v539
      %v541 = vpop.f32.mrf.mxu0
      %v542 = vpop.f32.mrf.mxu0
      %v543 = vadd.f32 0.0, %v542
      %v544 = vpop.f32.mrf.mxu0
      %545 = vmatprep.mubr.bf16.mxu0 0
      %546 = vmatmul.mubr.bf16.gmra.mxu0 %v442
      %v547 = vpop.f32.mrf.mxu0
      %v548 = vadd.f32 0.0, %v547
      %v549 = vpop.f32.mrf.mxu0
      %v550 = vpop.f32.mrf.mxu0
      %v551 = vadd.f32 0.0, %v550
      %v552 = vpop.f32.mrf.mxu0
      %553 = vmatprep.mubr.bf16.mxu0 0
      %554 = vmatmul.mubr.bf16.gmra.mxu0 %v445
      %v555 = vpop.f32.mrf.mxu0
      %v556 = vadd.f32 0.0, %v555
      %v557 = vpop.f32.mrf.mxu0
      %v558 = vpop.f32.mrf.mxu0
      %v559 = vadd.f32 0.0, %v558
      %v560 = vpop.f32.mrf.mxu0
      %561 = vmatprep.mubr.bf16.mxu0 0
      %562 = vmatmul.mubr.bf16.gmra.mxu0 %v448
      %v563 = vpop.f32.mrf.mxu0
      %v564 = vadd.f32 0.0, %v563
      %v565 = vpop.f32.mrf.mxu0
      %v566 = vpop.f32.mrf.mxu0
      %v567 = vadd.f32 0.0, %v566
      %v568 = vpop.f32.mrf.mxu0
      %569 = vmatprep.mubr.bf16.mxu0 0
      %570 = vmatmul.mubr.bf16.gmra.mxu0 %v451
      %v571 = vpop.f32.mrf.mxu0
      %v572 = vadd.f32 0.0, %v571
      %v573 = vpop.f32.mrf.mxu0
      %v574 = vpop.f32.mrf.mxu0
      %v575 = vadd.f32 0.0, %v574
      %v576 = vpop.f32.mrf.mxu0
      %577 = vmatprep.mubr.bf16.mxu0 0
      %578 = vmatmul.mubr.bf16.gmra.mxu0 %v454
      %v579 = vpop.f32.mrf.mxu0
      %v580 = vadd.f32 0.0, %v579
      %v581 = vpop.f32.mrf.mxu0
      %v582 = vpop.f32.mrf.mxu0
      %v583 = vadd.f32 0.0, %v582
      %v584 = vpop.f32.mrf.mxu0
      %585 = vmatprep.mubr.bf16.mxu0 0
      %586 = vmatmul.mubr.bf16.gmra.mxu0 %v457
      %v587 = vpop.f32.mrf.mxu0
      %v588 = vadd.f32 0.0, %v587
      %v589 = vpop.f32.mrf.mxu0
      %v590 = vpop.f32.mrf.mxu0
      %v591 = vadd.f32 0.0, %v590
      %v592 = vpop.f32.mrf.mxu0
      %593 = vmatprep.mubr.bf16.mxu0 0
      %594 = vmatmul.mubr.bf16.gmra.mxu0 %v460
      %v595 = vpop.f32.mrf.mxu0
      %v596 = vadd.f32 0.0, %v595
      %v597 = vpop.f32.mrf.mxu0
      %v598 = vpop.f32.mrf.mxu0
      %v599 = vadd.f32 0.0, %v598
      %v600 = vpop.f32.mrf.mxu0
      %601 = vmatprep.mubr.bf16.mxu0 0
      %602 = vmatmul.mubr.bf16.gmra.mxu0 %v463
      %v603 = vpop.f32.mrf.mxu0
      %v604 = vadd.f32 0.0, %v603
      %v605 = vpop.f32.mrf.mxu0
      %v606 = vpop.f32.mrf.mxu0
      %v607 = vadd.f32 0.0, %v606
      %v608 = vpop.f32.mrf.mxu0
      %609 = vmatprep.mubr.bf16.mxu0 0
      %610 = vmatmul.mubr.bf16.gmra.mxu0 %v466
      %v611 = vpop.f32.mrf.mxu0
      %v612 = vadd.f32 0.0, %v611
      %v613 = vpop.f32.mrf.mxu0
      %v614 = vpop.f32.mrf.mxu0
      %v615 = vadd.f32 0.0, %v614
      %v616 = vpop.f32.mrf.mxu0
      %617 = vmatprep.mubr.bf16.mxu0 0
      %618 = vmatmul.mubr.bf16.gmra.mxu0 %v469
      %v619 = vpop.f32.mrf.mxu0
      %v620 = vadd.f32 0.0, %v619
      %v621 = vpop.f32.mrf.mxu0
      %v622 = vpop.f32.mrf.mxu0
      %v623 = vadd.f32 0.0, %v622
      %v624 = vpop.f32.mrf.mxu0
      %625 = vmatprep.mubr.bf16.mxu0 0
      %626 = vmatmul.mubr.bf16.gmra.mxu0 %v472
      %v627 = vpop.f32.mrf.mxu0
      %v628 = vadd.f32 0.0, %v627
      %v629 = vpop.f32.mrf.mxu0
      %v630 = vpop.f32.mrf.mxu0
      %v631 = vadd.f32 0.0, %v630
      %v632 = vpop.f32.mrf.mxu0
      %633 = vmatprep.mubr.bf16.mxu0 0
      %634 = vmatmul.mubr.bf16.gmra.mxu0 %v475
      %v635 = vpop.f32.mrf.mxu0
      %v636 = vadd.f32 0.0, %v635
      %v637 = vpop.f32.mrf.mxu0
      %v638 = vpop.f32.mrf.mxu0
      %v639 = vadd.f32 0.0, %v638
      %v640 = vpop.f32.mrf.mxu0
      %641 = vdwg.mxu0
      %v642 = vld [vmem:[#allocation2] sm:$0xff]
      %v643 = vld [vmem:[#allocation2 + $0x8] sm:$0xff]
      %v644 = vld [vmem:[#allocation2 + $0x10] sm:$0xff]
      %v645 = vld [vmem:[#allocation2 + $0x18] sm:$0xff]
      %v646 = vld [vmem:[#allocation2 + $0x20] sm:$0xff]
      %v647 = vld [vmem:[#allocation2 + $0x28] sm:$0xff]
      %v648 = vld [vmem:[#allocation2 + $0x30] sm:$0xff]
      %v649 = vld [vmem:[#allocation2 + $0x38] sm:$0xff]
      %v650 = vld [vmem:[#allocation2 + $0x40] sm:$0xff]
      %v651 = vld [vmem:[#allocation2 + $0x48] sm:$0xff]
      %v652 = vld [vmem:[#allocation2 + $0x50] sm:$0xff]
      %v653 = vld [vmem:[#allocation2 + $0x58] sm:$0xff]
      %v654 = vld [vmem:[#allocation2 + $0x60] sm:$0xff]
      %v655 = vld [vmem:[#allocation2 + $0x68] sm:$0xff]
      %v656 = vld [vmem:[#allocation2 + $0x70] sm:$0xff]
      %v657 = vld [vmem:[#allocation2 + $0x78] sm:$0xff]
      %v658 = vld [vmem:[#allocation2 + $0x80] sm:$0xff]
      %v659 = vld [vmem:[#allocation2 + $0x88] sm:$0xff]
      %v660 = vld [vmem:[#allocation2 + $0x90] sm:$0xff]
      %v661 = vld [vmem:[#allocation2 + $0x98] sm:$0xff]
      %v662 = vld [vmem:[#allocation2 + $0xa0] sm:$0xff]
      %v663 = vld [vmem:[#allocation2 + $0xa8] sm:$0xff]
      %v664 = vld [vmem:[#allocation2 + $0xb0] sm:$0xff]
      %v665 = vld [vmem:[#allocation2 + $0xb8] sm:$0xff]
      %v666 = vld [vmem:[#allocation2 + $0xc0] sm:$0xff]
      %v667 = vld [vmem:[#allocation2 + $0xc8] sm:$0xff]
      %v668 = vld [vmem:[#allocation2 + $0xd0] sm:$0xff]
      %v669 = vld [vmem:[#allocation2 + $0xd8] sm:$0xff]
      %v670 = vld [vmem:[#allocation2 + $0xe0] sm:$0xff]
      %v671 = vld [vmem:[#allocation2 + $0xe8] sm:$0xff]
      %v672 = vld [vmem:[#allocation2 + $0xf0] sm:$0xff]
      %v673 = vld [vmem:[#allocation2 + $0xf8] sm:$0xff]
      %v674 = vadd.f32 %v642, %v516
      %v675 = vadd.f32 %v643, %v519
      %v676 = vadd.f32 %v644, %v524
      %v677 = vadd.f32 %v645, %v527
      %v678 = vadd.f32 %v646, %v532
      %v679 = vadd.f32 %v647, %v535
      %v680 = vadd.f32 %v648, %v540
      %v681 = vadd.f32 %v649, %v543
      %v682 = vadd.f32 %v650, %v548
      %v683 = vadd.f32 %v651, %v551
      %v684 = vadd.f32 %v652, %v556
      %v685 = vadd.f32 %v653, %v559
      %v686 = vadd.f32 %v654, %v564
      %v687 = vadd.f32 %v655, %v567
      %v688 = vadd.f32 %v656, %v572
      %v689 = vadd.f32 %v657, %v575
      %v690 = vadd.f32 %v658, %v580
      %v691 = vadd.f32 %v659, %v583
      %v692 = vadd.f32 %v660, %v588
      %v693 = vadd.f32 %v661, %v591
      %v694 = vadd.f32 %v662, %v596
      %v695 = vadd.f32 %v663, %v599
      %v696 = vadd.f32 %v664, %v604
      %v697 = vadd.f32 %v665, %v607
      %v698 = vadd.f32 %v666, %v612
      %v699 = vadd.f32 %v667, %v615
      %v700 = vadd.f32 %v668, %v620
      %v701 = vadd.f32 %v669, %v623
      %v702 = vadd.f32 %v670, %v628
      %v703 = vadd.f32 %v671, %v631
      %v704 = vadd.f32 %v672, %v636
      %v705 = vadd.f32 %v673, %v639
      %706 = vst [vmem:[#allocation2] sm:$0xff] %v674
      %707 = vst [vmem:[#allocation2 + $0x8] sm:$0xff] %v675
      %708 = vst [vmem:[#allocation2 + $0x10] sm:$0xff] %v676
      %709 = vst [vmem:[#allocation2 + $0x18] sm:$0xff] %v677
      %710 = vst [vmem:[#allocation2 + $0x20] sm:$0xff] %v678
      %711 = vst [vmem:[#allocation2 + $0x28] sm:$0xff] %v679
      %712 = vst [vmem:[#allocation2 + $0x30] sm:$0xff] %v680
      %713 = vst [vmem:[#allocation2 + $0x38] sm:$0xff] %v681
      %714 = vst [vmem:[#allocation2 + $0x40] sm:$0xff] %v682
      %715 = vst [vmem:[#allocation2 + $0x48] sm:$0xff] %v683
      %716 = vst [vmem:[#allocation2 + $0x50] sm:$0xff] %v684
      %717 = vst [vmem:[#allocation2 + $0x58] sm:$0xff] %v685
      %718 = vst [vmem:[#allocation2 + $0x60] sm:$0xff] %v686
      %719 = vst [vmem:[#allocation2 + $0x68] sm:$0xff] %v687
      %720 = vst [vmem:[#allocation2 + $0x70] sm:$0xff] %v688
      %721 = vst [vmem:[#allocation2 + $0x78] sm:$0xff] %v689
      %722 = vst [vmem:[#allocation2 + $0x80] sm:$0xff] %v690
      %723 = vst [vmem:[#allocation2 + $0x88] sm:$0xff] %v691
      %724 = vst [vmem:[#allocation2 + $0x90] sm:$0xff] %v692
      %725 = vst [vmem:[#allocation2 + $0x98] sm:$0xff] %v693
      %726 = vst [vmem:[#allocation2 + $0xa0] sm:$0xff] %v694
      %727 = vst [vmem:[#allocation2 + $0xa8] sm:$0xff] %v695
      %728 = vst [vmem:[#allocation2 + $0xb0] sm:$0xff] %v696
      %729 = vst [vmem:[#allocation2 + $0xb8] sm:$0xff] %v697
      %730 = vst [vmem:[#allocation2 + $0xc0] sm:$0xff] %v698
      %731 = vst [vmem:[#allocation2 + $0xc8] sm:$0xff] %v699
      %732 = vst [vmem:[#allocation2 + $0xd0] sm:$0xff] %v700
      %733 = vst [vmem:[#allocation2 + $0xd8] sm:$0xff] %v701
      %734 = vst [vmem:[#allocation2 + $0xe0] sm:$0xff] %v702
      %735 = vst [vmem:[#allocation2 + $0xe8] sm:$0xff] %v703
      %736 = vst [vmem:[#allocation2 + $0xf0] sm:$0xff] %v704
      %737 = vst [vmem:[#allocation2 + $0xf8] sm:$0xff] %v705
      %p738 = scmp.eq.s32.totalorder %s22, 4
      // Predicated region
      $region41: #{classifier_forward.5} parent=35 // pred_check
        %p739 = pneg %p738
      $region42: #{classifier_forward.5} parent=35 // pred_check_branch
        %741 = sbr.rel (%p739) target = $region44
      $region43: #{classifier_forward.5} parent=35 // pred_region
        %v742 = vld [vmem:[#allocation2] sm:$0xff]
        %v743 = vld [vmem:[#allocation2 + $0x8] sm:$0xff]
        %v744 = vld [vmem:[#allocation2 + $0x10] sm:$0xff]
        %v745 = vld [vmem:[#allocation2 + $0x18] sm:$0xff]
        %v746 = vld [vmem:[#allocation2 + $0x20] sm:$0xff]
        %v747 = vld [vmem:[#allocation2 + $0x28] sm:$0xff]
        %v748 = vld [vmem:[#allocation2 + $0x30] sm:$0xff]
        %v749 = vld [vmem:[#allocation2 + $0x38] sm:$0xff]
        %v750 = vld [vmem:[#allocation2 + $0x40] sm:$0xff]
        %v751 = vld [vmem:[#allocation2 + $0x48] sm:$0xff]
        %v752 = vld [vmem:[#allocation2 + $0x50] sm:$0xff]
        %v753 = vld [vmem:[#allocation2 + $0x58] sm:$0xff]
        %v754 = vld [vmem:[#allocation2 + $0x60] sm:$0xff]
        %v755 = vld [vmem:[#allocation2 + $0x68] sm:$0xff]
        %v756 = vld [vmem:[#allocation2 + $0x70] sm:$0xff]
        %v757 = vld [vmem:[#allocation2 + $0x78] sm:$0xff]
        %v758 = vld [vmem:[#allocation2 + $0x80] sm:$0xff]
        %v759 = vld [vmem:[#allocation2 + $0x88] sm:$0xff]
        %v760 = vld [vmem:[#allocation2 + $0x90] sm:$0xff]
        %v761 = vld [vmem:[#allocation2 + $0x98] sm:$0xff]
        %v762 = vld [vmem:[#allocation2 + $0xa0] sm:$0xff]
        %v763 = vld [vmem:[#allocation2 + $0xa8] sm:$0xff]
        %v764 = vld [vmem:[#allocation2 + $0xb0] sm:$0xff]
        %v765 = vld [vmem:[#allocation2 + $0xb8] sm:$0xff]
        %v766 = vld [vmem:[#allocation2 + $0xc0] sm:$0xff]
        %v767 = vld [vmem:[#allocation2 + $0xc8] sm:$0xff]
        %v768 = vld [vmem:[#allocation2 + $0xd0] sm:$0xff]
        %v769 = vld [vmem:[#allocation2 + $0xd8] sm:$0xff]
        %v770 = vld [vmem:[#allocation2 + $0xe0] sm:$0xff]
        %v771 = vld [vmem:[#allocation2 + $0xe8] sm:$0xff]
        %v772 = vld [vmem:[#allocation2 + $0xf0] sm:$0xff]
        %v773 = vld [vmem:[#allocation2 + $0xf8] sm:$0xff]
        %v774 = vld [vmem:[%s2] sm:$0x1]
        %v776 = vlaneseq
        %v777 = vshrl.u32 %v776, 7
        %v778 = vsub.s32 0, %v777
        %v779 = vrot.slane %v774, %v778
        %v781 = vmul.f32 %v742, %v779
        %v782 = vmul.f32 %v743, %v779
        %v783 = vmul.f32 %v744, %v779
        %v784 = vmul.f32 %v745, %v779
        %v785 = vmul.f32 %v746, %v779
        %v786 = vmul.f32 %v747, %v779
        %v787 = vmul.f32 %v748, %v779
        %v788 = vmul.f32 %v749, %v779
        %v789 = vmul.f32 %v750, %v779
        %v790 = vmul.f32 %v751, %v779
        %v791 = vmul.f32 %v752, %v779
        %v792 = vmul.f32 %v753, %v779
        %v793 = vmul.f32 %v754, %v779
        %v794 = vmul.f32 %v755, %v779
        %v795 = vmul.f32 %v756, %v779
        %v796 = vmul.f32 %v757, %v779
        %v797 = vmul.f32 %v758, %v779
        %v798 = vmul.f32 %v759, %v779
        %v799 = vmul.f32 %v760, %v779
        %v800 = vmul.f32 %v761, %v779
        %v801 = vmul.f32 %v762, %v779
        %v802 = vmul.f32 %v763, %v779
        %v803 = vmul.f32 %v764, %v779
        %v804 = vmul.f32 %v765, %v779
        %v805 = vmul.f32 %v766, %v779
        %v806 = vmul.f32 %v767, %v779
        %v807 = vmul.f32 %v768, %v779
        %v808 = vmul.f32 %v769, %v779
        %v809 = vmul.f32 %v770, %v779
        %v810 = vmul.f32 %v771, %v779
        %v811 = vmul.f32 %v772, %v779
        %v812 = vmul.f32 %v773, %v779
        %v813 = vld [vmem:[%s3] sm:$0x1]
        %v815 = vlaneseq
        %v816 = vshrl.u32 %v815, 7
        %v817 = vsub.s32 0, %v816
        %v818 = vrot.slane %v813, %v817
        %v820 = vadd.f32 %v781, %v818
        %v821 = vadd.f32 %v782, %v818
        %v822 = vadd.f32 %v783, %v818
        %v823 = vadd.f32 %v784, %v818
        %v824 = vadd.f32 %v785, %v818
        %v825 = vadd.f32 %v786, %v818
        %v826 = vadd.f32 %v787, %v818
        %v827 = vadd.f32 %v788, %v818
        %v828 = vadd.f32 %v789, %v818
        %v829 = vadd.f32 %v790, %v818
        %v830 = vadd.f32 %v791, %v818
        %v831 = vadd.f32 %v792, %v818
        %v832 = vadd.f32 %v793, %v818
        %v833 = vadd.f32 %v794, %v818
        %v834 = vadd.f32 %v795, %v818
        %v835 = vadd.f32 %v796, %v818
        %v836 = vadd.f32 %v797, %v818
        %v837 = vadd.f32 %v798, %v818
        %v838 = vadd.f32 %v799, %v818
        %v839 = vadd.f32 %v800, %v818
        %v840 = vadd.f32 %v801, %v818
        %v841 = vadd.f32 %v802, %v818
        %v842 = vadd.f32 %v803, %v818
        %v843 = vadd.f32 %v804, %v818
        %v844 = vadd.f32 %v805, %v818
        %v845 = vadd.f32 %v806, %v818
        %v846 = vadd.f32 %v807, %v818
        %v847 = vadd.f32 %v808, %v818
        %v848 = vadd.f32 %v809, %v818
        %v849 = vadd.f32 %v810, %v818
        %v850 = vadd.f32 %v811, %v818
        %v851 = vadd.f32 %v812, %v818
        %v852 = vmax.f32 %v820, 0.0
        %v853 = vmax.f32 %v821, 0.0
        %v854 = vmax.f32 %v822, 0.0
        %v855 = vmax.f32 %v823, 0.0
        %v856 = vmax.f32 %v824, 0.0
        %v857 = vmax.f32 %v825, 0.0
        %v858 = vmax.f32 %v826, 0.0
        %v859 = vmax.f32 %v827, 0.0
        %v860 = vmax.f32 %v828, 0.0
        %v861 = vmax.f32 %v829, 0.0
        %v862 = vmax.f32 %v830, 0.0
        %v863 = vmax.f32 %v831, 0.0
        %v864 = vmax.f32 %v832, 0.0
        %v865 = vmax.f32 %v833, 0.0
        %v866 = vmax.f32 %v834, 0.0
        %v867 = vmax.f32 %v835, 0.0
        %v868 = vmax.f32 %v836, 0.0
        %v869 = vmax.f32 %v837, 0.0
        %v870 = vmax.f32 %v838, 0.0
        %v871 = vmax.f32 %v839, 0.0
        %v872 = vmax.f32 %v840, 0.0
        %v873 = vmax.f32 %v841, 0.0
        %v874 = vmax.f32 %v842, 0.0
        %v875 = vmax.f32 %v843, 0.0
        %v876 = vmax.f32 %v844, 0.0
        %v877 = vmax.f32 %v845, 0.0
        %v878 = vmax.f32 %v846, 0.0
        %v879 = vmax.f32 %v847, 0.0
        %v880 = vmax.f32 %v848, 0.0
        %v881 = vmax.f32 %v849, 0.0
        %v882 = vmax.f32 %v850, 0.0
        %v883 = vmax.f32 %v851, 0.0
        %v884 = vpack.c.bf16 %v853, %v852
        %v885 = vpack.c.bf16 %v855, %v854
        %v886 = vpack.c.bf16 %v857, %v856
        %v887 = vpack.c.bf16 %v859, %v858
        %v888 = vpack.c.bf16 %v861, %v860
        %v889 = vpack.c.bf16 %v863, %v862
        %v890 = vpack.c.bf16 %v865, %v864
        %v891 = vpack.c.bf16 %v867, %v866
        %v892 = vpack.c.bf16 %v869, %v868
        %v893 = vpack.c.bf16 %v871, %v870
        %v894 = vpack.c.bf16 %v873, %v872
        %v895 = vpack.c.bf16 %v875, %v874
        %v896 = vpack.c.bf16 %v877, %v876
        %v897 = vpack.c.bf16 %v879, %v878
        %v898 = vpack.c.bf16 %v881, %v880
        %v899 = vpack.c.bf16 %v883, %v882
        %v916 = vunpack.c.l.b16 %v884
        %v917 = vunpack.c.h.b16 %v884
        %v918 = vunpack.c.l.b16 %v885
        %v919 = vunpack.c.h.b16 %v885
        %v920 = vunpack.c.l.b16 %v886
        %v921 = vunpack.c.h.b16 %v886
        %v922 = vunpack.c.l.b16 %v887
        %v923 = vunpack.c.h.b16 %v887
        %v924 = vunpack.c.l.b16 %v888
        %v925 = vunpack.c.h.b16 %v888
        %v926 = vunpack.c.l.b16 %v889
        %v927 = vunpack.c.h.b16 %v889
        %v928 = vunpack.c.l.b16 %v890
        %v929 = vunpack.c.h.b16 %v890
        %v930 = vunpack.c.l.b16 %v891
        %v931 = vunpack.c.h.b16 %v891
        %v932 = vunpack.c.l.b16 %v892
        %v933 = vunpack.c.h.b16 %v892
        %v934 = vunpack.c.l.b16 %v893
        %v935 = vunpack.c.h.b16 %v893
        %v936 = vunpack.c.l.b16 %v894
        %v937 = vunpack.c.h.b16 %v894
        %v938 = vunpack.c.l.b16 %v895
        %v939 = vunpack.c.h.b16 %v895
        %v940 = vunpack.c.l.b16 %v896
        %v941 = vunpack.c.h.b16 %v896
        %v942 = vunpack.c.l.b16 %v897
        %v943 = vunpack.c.h.b16 %v897
        %v944 = vunpack.c.l.b16 %v898
        %v945 = vunpack.c.h.b16 %v898
        %v946 = vunpack.c.l.b16 %v899
        %v947 = vunpack.c.h.b16 %v899
        %v948 = vpack.c.b16 %v916, %v916
        %v949 = vpack.c.b16 %v917, %v917
        %v950 = vpack.c.b16 %v918, %v918
        %v951 = vpack.c.b16 %v919, %v919
        %v952 = vpack.c.b16 %v920, %v920
        %v953 = vpack.c.b16 %v921, %v921
        %v954 = vpack.c.b16 %v922, %v922
        %v955 = vpack.c.b16 %v923, %v923
        %v956 = vpack.c.b16 %v924, %v924
        %v957 = vpack.c.b16 %v925, %v925
        %v958 = vpack.c.b16 %v926, %v926
        %v959 = vpack.c.b16 %v927, %v927
        %v960 = vpack.c.b16 %v928, %v928
        %v961 = vpack.c.b16 %v929, %v929
        %v962 = vpack.c.b16 %v930, %v930
        %v963 = vpack.c.b16 %v931, %v931
        %v964 = vpack.c.b16 %v932, %v932
        %v965 = vpack.c.b16 %v933, %v933
        %v966 = vpack.c.b16 %v934, %v934
        %v967 = vpack.c.b16 %v935, %v935
        %v968 = vpack.c.b16 %v936, %v936
        %v969 = vpack.c.b16 %v937, %v937
        %v970 = vpack.c.b16 %v938, %v938
        %v971 = vpack.c.b16 %v939, %v939
        %v972 = vpack.c.b16 %v940, %v940
        %v973 = vpack.c.b16 %v941, %v941
        %v974 = vpack.c.b16 %v942, %v942
        %v975 = vpack.c.b16 %v943, %v943
        %v976 = vpack.c.b16 %v944, %v944
        %v977 = vpack.c.b16 %v945, %v945
        %v978 = vpack.c.b16 %v946, %v946
        %v979 = vpack.c.b16 %v947, %v947
        %1012 = vst [vmem:[%s247] sm:$0xf] %v948
        %1013 = vst [vmem:[%s247 + $0x4] sm:$0xf] %v949
        %1014 = vst [vmem:[%s247 + $0x8] sm:$0xf] %v950
        %1015 = vst [vmem:[%s247 + $0xc] sm:$0xf] %v951
        %1016 = vst [vmem:[%s247 + $0x10] sm:$0xf] %v952
        %1017 = vst [vmem:[%s247 + $0x14] sm:$0xf] %v953
        %1018 = vst [vmem:[%s247 + $0x18] sm:$0xf] %v954
        %1019 = vst [vmem:[%s247 + $0x1c] sm:$0xf] %v955
        %1020 = vst [vmem:[%s247 + $0x20] sm:$0xf] %v956
        %1021 = vst [vmem:[%s247 + $0x24] sm:$0xf] %v957
        %1022 = vst [vmem:[%s247 + $0x28] sm:$0xf] %v958
        %1023 = vst [vmem:[%s247 + $0x2c] sm:$0xf] %v959
        %1024 = vst [vmem:[%s247 + $0x30] sm:$0xf] %v960
        %1025 = vst [vmem:[%s247 + $0x34] sm:$0xf] %v961
        %1026 = vst [vmem:[%s247 + $0x38] sm:$0xf] %v962
        %1027 = vst [vmem:[%s247 + $0x3c] sm:$0xf] %v963
        %1028 = vst [vmem:[%s247 + $0x40] sm:$0xf] %v964
        %1029 = vst [vmem:[%s247 + $0x44] sm:$0xf] %v965
        %1030 = vst [vmem:[%s247 + $0x48] sm:$0xf] %v966
        %1031 = vst [vmem:[%s247 + $0x4c] sm:$0xf] %v967
        %1032 = vst [vmem:[%s247 + $0x50] sm:$0xf] %v968
        %1033 = vst [vmem:[%s247 + $0x54] sm:$0xf] %v969
        %1034 = vst [vmem:[%s247 + $0x58] sm:$0xf] %v970
        %1035 = vst [vmem:[%s247 + $0x5c] sm:$0xf] %v971
        %1036 = vst [vmem:[%s247 + $0x60] sm:$0xf] %v972
        %1037 = vst [vmem:[%s247 + $0x64] sm:$0xf] %v973
        %1038 = vst [vmem:[%s247 + $0x68] sm:$0xf] %v974
        %1039 = vst [vmem:[%s247 + $0x6c] sm:$0xf] %v975
        %1040 = vst [vmem:[%s247 + $0x70] sm:$0xf] %v976
        %1041 = vst [vmem:[%s247 + $0x74] sm:$0xf] %v977
        %1042 = vst [vmem:[%s247 + $0x78] sm:$0xf] %v978
        %1043 = vst [vmem:[%s247 + $0x7c] sm:$0xf] %v979
      $region44: #{classifier_forward.5} parent=35 // pred_fallthru
        _
      %p1044 = scmp.lt.s32.totalorder %s20, 1
      %s1045 = scalar_select %p1044, %s20, 1
      %p1046 = scmp.lt.s32.totalorder %s21, 15
      %s1047 = scalar_select %p1046, %s21, 15
      %s1048 = smul.addr %s1047, 32
      %s1049 = smul.addr %s1045, 512
      %s1050 = sadd.s32 %s1048, %s1049
      %s1051 = smul.addr %s1050, 4
      %s1052 = scalar_lea.vmem %s4, %s1051
      // Predicated region
      $region45: #{classifier_forward.5} parent=35 // pred_check
        %p1053 = pneg %p147
      $region46: #{classifier_forward.5} parent=35 // pred_check_branch
        %1055 = sbr.rel (%p1053) target = $region48
      $region47: #{classifier_forward.5} parent=35 // pred_region
        _
      $region48: #{classifier_forward.5} parent=35 // pred_fallthru
        _
    $region36: #{classifier_forward.5} parent=5 // pred_fallthru
      _
    %p1056 = scmp.le.s32.totalorder 2, %s10
    // Predicated region
    $region49: #{classifier_forward.5} parent=5 // pred_check
      %p1057 = pneg %p1056
    $region50: #{classifier_forward.5} parent=5 // pred_check_branch
      %1059 = sbr.rel (%p1057) target = $region52
    $region51: #{classifier_forward.5} parent=5 // pred_region
      %s1060 = ssub.s32 %s10, 2
      // Predicated region
      $region53: #{classifier_forward.5} parent=51 // pred_check
        %p1061 = pneg %p153
      $region54: #{classifier_forward.5} parent=51 // pred_check_branch
        %1063 = sbr.rel (%p1061) target = $region56
      $region55: #{classifier_forward.5} parent=51 // pred_region
        %p1064 = scmp.lt.s32.totalorder %s23, 1
        %s1065 = scalar_select %p1064, %s23, 1
        %p1066 = scmp.lt.s32.totalorder %s24, 15
        %s1067 = scalar_select %p1066, %s24, 15
        %s1068 = smul.addr %s1067, 32
        %s1069 = smul.addr %s1065, 512
        %s1070 = sadd.s32 %s1068, %s1069
        %s1071 = smul.addr %s1070, 4
        %s1072 = scalar_lea.vmem %s4, %s1071
      $region56: #{classifier_forward.5} parent=51 // pred_fallthru
        _
    $region52: #{classifier_forward.5} parent=5 // pred_fallthru
      _
  $region6: #{classifier_forward.5} parent=0 // loop_footer
    %s14 = sadd.s32 1, %s10
  $region7: #{classifier_forward.5} parent=0 // loop_footer_branch
    %9 = sbr.rel target = $region3
  $region8: #{classifier_forward.5} parent=0 // loop_exit
    _

// kernel: classifier_forward.6
$region0: #{classifier_forward.6}
  #allocation0 [shape = 'u32[]', space=smem, size = 0x4, offset = 0x4, fixed_abs, tag = 'smem constant byte address 0x4 - core index']
  #allocation1 [shape = 'u32[144,128]{1,0:T(1,128)}', space=vmem, size = 0x12000, scoped, tag = 'internal scratch']
  %s0 = inlined_call_operand.vmem [shape: bf16[2,16,16,8,256], index: 0, kind: input, shape index: {}]
  %s1 = inlined_call_operand.vmem [shape: bf16[2,8,8,8,128], index: 1, kind: output, shape index: {}]
  %s2 = sld [smem:[#allocation0]]
  $region37: #{classifier_forward.6} parent=0
    _
  %s4 = ssub.s32 1, %s2
  %s5 = scalar_select 0, %s4, %s2
  loop: start=0, step=1, limit=18
  $region2: #{classifier_forward.6} parent=0 // loop_pre_header
    _
  $region3: #{classifier_forward.6} parent=0 // loop_header
    %s7 = sphi 0, %s11
    %p8 = scmp.ge.s32.totalorder %s7, 18
    %s14 = sphi 0, %s26
    %s15 = sphi 0, %s22
    %s16 = sphi 0, %s14
    %s17 = sphi 0, %s15
    %s18 = sphi 0, %s16
    %s19 = sphi 0, %s17
    %s31 = sphi 0, %s33
    %s34 = sphi 0, %s31
    %s35 = sphi 0, %s34
    %s51 = sphi 0, %s35
    %s59 = sphi 0, %s61
    %s62 = sphi 0, %s59
    %s63 = sphi 0, %s62
    %s79 = sphi 0, %s63
  $region4: #{classifier_forward.6} parent=0 // loop_header_branch
    %10 = sbr.rel (%p8) target = $region8
  $region5: #{classifier_forward.6} parent=0 // loop_body
    %s12 = ssub.s32 %s7, 1
    %s13 = ssub.s32 %s7, 2
    %s20 = sadd.s32 1, %s15
    %p21 = scmp.ge.s32.totalorder %s20, 8
    %s22 = scalar_select %p21, 0, %s20
    %s23 = sadd.s32 1, %s14
    %s24 = scalar_select %p21, %s23, %s14
    %p25 = scmp.ge.s32.totalorder %s24, 2
    %s26 = scalar_select %p25, 0, %s24
    %s27 = ssub.s32 %s14, %s26
    %s28 = ssub.s32 %s15, %s22
    %s29 = sor.u32 %s27, %s28
    %p30 = scmp.eq.s32.totalorder %s29, 0
    %s32 = sadd.s32 %s31, 1
    %s33 = scalar_select %p30, %s31, %s32
    %p36 = pneg %p30
    %p37 = scmp.eq.s32.totalorder %s7, 15
    %p38 = por %p36, %p37
    %p39 = scmp.ne.s32.totalorder %s31, %s34
    %p40 = scmp.eq.s32.totalorder %s7, 0
    %p41 = por %p39, %p40
    %p42 = scmp.ne.s32.totalorder %s31, %s34
    %p43 = scmp.eq.s32.totalorder %s12, 15
    %p44 = por %p42, %p43
    %p45 = scmp.ne.s32.totalorder %s34, %s35
    %p46 = scmp.eq.s32.totalorder %s12, 0
    %p47 = por %p45, %p46
    %p48 = scmp.ne.s32.totalorder %s34, %s35
    %p49 = scmp.eq.s32.totalorder %s13, 15
    %p50 = por %p48, %p49
    %p52 = scmp.ne.s32.totalorder %s35, %s51
    %p53 = scmp.eq.s32.totalorder %s13, 0
    %p54 = por %p52, %p53
    %s55 = ssub.s32 %s14, %s26
    %s56 = ssub.s32 %s15, %s22
    %s57 = sor.u32 %s55, %s56
    %p58 = scmp.eq.s32.totalorder %s57, 0
    %s60 = sadd.s32 %s59, 1
    %s61 = scalar_select %p58, %s59, %s60
    %p64 = pneg %p58
    %p65 = scmp.eq.s32.totalorder %s7, 15
    %p66 = por %p64, %p65
    %p67 = scmp.ne.s32.totalorder %s59, %s62
    %p68 = scmp.eq.s32.totalorder %s7, 0
    %p69 = por %p67, %p68
    %p70 = scmp.ne.s32.totalorder %s59, %s62
    %p71 = scmp.eq.s32.totalorder %s12, 15
    %p72 = por %p70, %p71
    %p73 = scmp.ne.s32.totalorder %s62, %s63
    %p74 = scmp.eq.s32.totalorder %s12, 0
    %p75 = por %p73, %p74
    %p76 = scmp.ne.s32.totalorder %s62, %s63
    %p77 = scmp.eq.s32.totalorder %s13, 15
    %p78 = por %p76, %p77
    %p80 = scmp.ne.s32.totalorder %s63, %s79
    %p81 = scmp.eq.s32.totalorder %s13, 0
    %p82 = por %p80, %p81
    %p83 = scmp.le.s32.totalorder 1, %s7
    %p84 = scmp.lt.s32.totalorder %s7, 17
    %p85 = pnand %p83, %p84
    %p86 = pneg %p85
    // Predicated region
    $region9: #{classifier_forward.6} parent=5 // pred_check
      _
    $region10: #{classifier_forward.6} parent=5 // pred_check_branch
      %88 = sbr.rel (%p85) target = $region12
    $region11: #{classifier_forward.6} parent=5 // pred_region
      %s89 = ssub.s32 %s7, 1
    $region12: #{classifier_forward.6} parent=5 // pred_fallthru
      _
    %p90 = scmp.lt.s32.totalorder %s7, 16
    // Predicated region
    $region13: #{classifier_forward.6} parent=5 // pred_check
      %p91 = pneg %p90
    $region14: #{classifier_forward.6} parent=5 // pred_check_branch
      %93 = sbr.rel (%p91) target = $region16
    $region15: #{classifier_forward.6} parent=5 // pred_region
      // Predicated region
      $region17: #{classifier_forward.6} parent=15 // pred_check
        %p94 = pneg %p41
      $region18: #{classifier_forward.6} parent=15 // pred_check_branch
        %96 = sbr.rel (%p94) target = $region20
      $region19: #{classifier_forward.6} parent=15 // pred_region
        %s97 = smul.u32 2, %s15
        %p98 = scmp.lt.s32.totalorder %s14, 1
        %s99 = scalar_select %p98, %s14, 1
        %p100 = scmp.lt.s32.totalorder %s97, 15
        %s101 = scalar_select %p100, %s97, 15
        %s102 = smul.addr %s101, 32
        %s103 = smul.addr %s99, 512
        %s104 = sadd.s32 %s102, %s103
        %s105 = smul.addr %s104, 4
        %s106 = scalar_lea.vmem %s0, %s105
        %s107 = smul.u32 2, %s15
      $region20: #{classifier_forward.6} parent=15 // pred_fallthru
        _
    $region16: #{classifier_forward.6} parent=5 // pred_fallthru
      _
    %p108 = scmp.le.s32.totalorder 1, %s7
    %p109 = scmp.lt.s32.totalorder %s7, 17
    %p110 = pnand %p108, %p109
    %p111 = pneg %p110
    // Predicated region
    $region21: #{classifier_forward.6} parent=5 // pred_check
      _
    $region22: #{classifier_forward.6} parent=5 // pred_check_branch
      %113 = sbr.rel (%p110) target = $region24
    $region23: #{classifier_forward.6} parent=5 // pred_region
      %s114 = ssub.s32 %s7, 1
      %s115 = smul.u32 2, %s17
      %p116 = scmp.lt.s32.totalorder %s16, 1
      %s117 = scalar_select %p116, %s16, 1
      %p118 = scmp.lt.s32.totalorder %s115, 15
      %s119 = scalar_select %p118, %s115, 15
      %s120 = smul.addr %s119, 32
      %s121 = smul.addr %s117, 512
      %s122 = sadd.s32 %s120, %s121
      %s123 = smul.addr %s122, 4
      %s124 = scalar_lea.vmem %s0, %s123
      %p125 = pneg %p47
      %p126 = pneg %p44
      %p127 = pneg %p75
      %p128 = pneg %p72
      %p129 = scmp.lt.s32.totalorder %s16, 1
      %s130 = scalar_select %p129, %s16, 1
      %p131 = scmp.lt.s32.totalorder %s17, 7
      %s132 = scalar_select %p131, %s17, 7
      %s133 = smul.addr %s132, 8
      %s134 = smul.addr %s130, 64
      %s135 = sadd.s32 %s133, %s134
      %s136 = smul.addr %s135, 4
      %s137 = scalar_lea.vmem %s1, %s136
      %s138 = smul.u32 2, %s17
      %p139 = scmp.lt.s32.totalorder %s16, 1
      %s140 = scalar_select %p139, %s16, 1
      %p141 = scmp.lt.s32.totalorder %s138, 15
      %s142 = scalar_select %p141, %s138, 15
      %s143 = smul.addr %s142, 32
      %s144 = smul.addr %s140, 512
      %s145 = sadd.s32 %s143, %s144
      %s146 = smul.addr %s145, 4
      %s147 = scalar_lea.vmem %s0, %s146
      %s148 = smul.u32 2, %s17
      %p149 = scmp.lt.s32.totalorder %s16, 1
      %s150 = scalar_select %p149, %s16, 1
      %p151 = scmp.lt.s32.totalorder %s17, 7
      %s152 = scalar_select %p151, %s17, 7
      %s153 = smul.addr %s152, 8
      %s154 = smul.addr %s150, 64
      %s155 = sadd.s32 %s153, %s154
      %s156 = smul.addr %s155, 4
      %s157 = scalar_lea.vmem %s1, %s156
      %v158 = vld [vmem:[%s147] sm:$0xff]
      %v159 = vld [vmem:[%s147 + $0x8] sm:$0xff]
      %v160 = vld [vmem:[%s147 + $0x10] sm:$0xff]
      %v161 = vld [vmem:[%s147 + $0x18] sm:$0xff]
      %v162 = vld [vmem:[%s147 + $0x20] sm:$0xff]
      %v163 = vld [vmem:[%s147 + $0x28] sm:$0xff]
      %v164 = vld [vmem:[%s147 + $0x30] sm:$0xff]
      %v165 = vld [vmem:[%s147 + $0x38] sm:$0xff]
      %v166 = vld [vmem:[%s147 + $0x40] sm:$0xff]
      %v167 = vld [vmem:[%s147 + $0x48] sm:$0xff]
      %v168 = vld [vmem:[%s147 + $0x50] sm:$0xff]
      %v169 = vld [vmem:[%s147 + $0x58] sm:$0xff]
      %v170 = vld [vmem:[%s147 + $0x60] sm:$0xff]
      %v171 = vld [vmem:[%s147 + $0x68] sm:$0xff]
      %v172 = vld [vmem:[%s147 + $0x70] sm:$0xff]
      %v173 = vld [vmem:[%s147 + $0x78] sm:$0xff]
      %s174 = scalar_lea.vmem %s147, 128
      %v175 = vld [vmem:[%s174] sm:$0xff]
      %v176 = vld [vmem:[%s174 + $0x8] sm:$0xff]
      %v177 = vld [vmem:[%s174 + $0x10] sm:$0xff]
      %v178 = vld [vmem:[%s174 + $0x18] sm:$0xff]
      %v179 = vld [vmem:[%s174 + $0x20] sm:$0xff]
      %v180 = vld [vmem:[%s174 + $0x28] sm:$0xff]
      %v181 = vld [vmem:[%s174 + $0x30] sm:$0xff]
      %v182 = vld [vmem:[%s174 + $0x38] sm:$0xff]
      %v183 = vld [vmem:[%s174 + $0x40] sm:$0xff]
      %v184 = vld [vmem:[%s174 + $0x48] sm:$0xff]
      %v185 = vld [vmem:[%s174 + $0x50] sm:$0xff]
      %v186 = vld [vmem:[%s174 + $0x58] sm:$0xff]
      %v187 = vld [vmem:[%s174 + $0x60] sm:$0xff]
      %v188 = vld [vmem:[%s174 + $0x68] sm:$0xff]
      %v189 = vld [vmem:[%s174 + $0x70] sm:$0xff]
      %v190 = vld [vmem:[%s174 + $0x78] sm:$0xff]
      %v191 = vmax.bf16 %v158, %v175
      %v192 = vmax.bf16 %v159, %v176
      %v193 = vmax.bf16 %v160, %v177
      %v194 = vmax.bf16 %v161, %v178
      %v195 = vmax.bf16 %v162, %v179
      %v196 = vmax.bf16 %v163, %v180
      %v197 = vmax.bf16 %v164, %v181
      %v198 = vmax.bf16 %v165, %v182
      %v199 = vmax.bf16 %v166, %v183
      %v200 = vmax.bf16 %v167, %v184
      %v201 = vmax.bf16 %v168, %v185
      %v202 = vmax.bf16 %v169, %v186
      %v203 = vmax.bf16 %v170, %v187
      %v204 = vmax.bf16 %v171, %v188
      %v205 = vmax.bf16 %v172, %v189
      %v206 = vmax.bf16 %v173, %v190
      %v207 = vmax.bf16 %v191, %v192
      %v208 = vmax.bf16 %v193, %v194
      %v209 = vmax.bf16 %v195, %v196
      %v210 = vmax.bf16 %v197, %v198
      %v211 = vmax.bf16 %v199, %v200
      %v212 = vmax.bf16 %v201, %v202
      %v213 = vmax.bf16 %v203, %v204
      %v214 = vmax.bf16 %v205, %v206
      %v223 = vrot.slane %v207, 4
      %v224 = vrot.slane %v208, 4
      %v225 = vrot.slane %v209, 4
      %v226 = vrot.slane %v210, 4
      %v227 = vrot.slane %v211, 4
      %v228 = vrot.slane %v212, 4
      %v229 = vrot.slane %v213, 4
      %v230 = vrot.slane %v214, 4
      %v239 = vmax.bf16 %v207, %v223
      %v240 = vmax.bf16 %v208, %v224
      %v241 = vmax.bf16 %v209, %v225
      %v242 = vmax.bf16 %v210, %v226
      %v243 = vmax.bf16 %v211, %v227
      %v244 = vmax.bf16 %v212, %v228
      %v245 = vmax.bf16 %v213, %v229
      %v246 = vmax.bf16 %v214, %v230
      %247 = vst [vmem:[%s157] sm:$0xf] %v239
      %248 = vst [vmem:[%s157 + $0x4] sm:$0xf] %v240
      %249 = vst [vmem:[%s157 + $0x8] sm:$0xf] %v241
      %250 = vst [vmem:[%s157 + $0xc] sm:$0xf] %v242
      %251 = vst [vmem:[%s157 + $0x10] sm:$0xf] %v243
      %252 = vst [vmem:[%s157 + $0x14] sm:$0xf] %v244
      %253 = vst [vmem:[%s157 + $0x18] sm:$0xf] %v245
      %254 = vst [vmem:[%s157 + $0x1c] sm:$0xf] %v246
      %p255 = scmp.lt.s32.totalorder %s16, 1
      %s256 = scalar_select %p255, %s16, 1
      %p257 = scmp.lt.s32.totalorder %s17, 7
      %s258 = scalar_select %p257, %s17, 7
      %s259 = smul.addr %s258, 8
      %s260 = smul.addr %s256, 64
      %s261 = sadd.s32 %s259, %s260
      %s262 = smul.addr %s261, 4
      %s263 = scalar_lea.vmem %s1, %s262
      // Predicated region
      $region25: #{classifier_forward.6} parent=23 // pred_check
        %p264 = pneg %p72
      $region26: #{classifier_forward.6} parent=23 // pred_check_branch
        %266 = sbr.rel (%p264) target = $region28
      $region27: #{classifier_forward.6} parent=23 // pred_region
        _
      $region28: #{classifier_forward.6} parent=23 // pred_fallthru
        _
    $region24: #{classifier_forward.6} parent=5 // pred_fallthru
      _
    %p267 = scmp.le.s32.totalorder 2, %s7
    // Predicated region
    $region29: #{classifier_forward.6} parent=5 // pred_check
      %p268 = pneg %p267
    $region30: #{classifier_forward.6} parent=5 // pred_check_branch
      %270 = sbr.rel (%p268) target = $region32
    $region31: #{classifier_forward.6} parent=5 // pred_region
      %s271 = ssub.s32 %s7, 2
      // Predicated region
      $region33: #{classifier_forward.6} parent=31 // pred_check
        %p272 = pneg %p78
      $region34: #{classifier_forward.6} parent=31 // pred_check_branch
        %274 = sbr.rel (%p272) target = $region36
      $region35: #{classifier_forward.6} parent=31 // pred_region
        %p275 = scmp.lt.s32.totalorder %s18, 1
        %s276 = scalar_select %p275, %s18, 1
        %p277 = scmp.lt.s32.totalorder %s19, 7
        %s278 = scalar_select %p277, %s19, 7
        %s279 = smul.addr %s278, 8
        %s280 = smul.addr %s276, 64
        %s281 = sadd.s32 %s279, %s280
        %s282 = smul.addr %s281, 4
        %s283 = scalar_lea.vmem %s1, %s282
      $region36: #{classifier_forward.6} parent=31 // pred_fallthru
        _
    $region32: #{classifier_forward.6} parent=5 // pred_fallthru
      _
  $region6: #{classifier_forward.6} parent=0 // loop_footer
    %s11 = sadd.s32 1, %s7
  $region7: #{classifier_forward.6} parent=0 // loop_footer_branch
    %6 = sbr.rel target = $region3
  $region8: #{classifier_forward.6} parent=0 // loop_exit
    _

// kernel: classifier_forward.7
$region0: #{classifier_forward.7}
  #allocation0 [shape = 'u32[]', space=smem, size = 0x4, offset = 0x4, fixed_abs, tag = 'smem constant byte address 0x4 - core index']
  #allocation1 [shape = 'u32[144,128]{1,0:T(1,128)}', space=vmem, size = 0x12000, scoped, tag = 'internal scratch']
  #allocation2 [shape = 'f32[80,64]{1,0:T(8,128)}', space=vmem, size = 0xa000, scoped, tag = 'scratch operand']
  #allocation3 [shape = 'f32[104,64]{1,0:T(8,128)}', space=vmem, size = 0xd000, scoped, tag = 'scratch operand']
  %s0 = inlined_call_operand.vmem [shape: bf16[2,10,100,128], index: 0, kind: input, shape index: {}]
  %s1 = inlined_call_operand.vmem [shape: bf16[3,9,128,64], index: 1, kind: input, shape index: {}]
  %s2 = inlined_call_operand.vmem [shape: f32[1,64], index: 2, kind: input, shape index: {}]
  %s3 = inlined_call_operand.vmem [shape: f32[1,64], index: 3, kind: input, shape index: {}]
  %s4 = inlined_call_operand.vmem [shape: bf16[2,8,80,64], index: 4, kind: output, shape index: {}]
  %s5 = sld [smem:[#allocation0]]
  $region57: #{classifier_forward.7} parent=0
    _
  %s7 = ssub.s32 1, %s5
  %s8 = scalar_select 0, %s7, %s5
  loop: start=0, step=1, limit=50
  $region2: #{classifier_forward.7} parent=0 // loop_pre_header
    _
  $region3: #{classifier_forward.7} parent=0 // loop_header
    %s10 = sphi 0, %s14
    %p11 = scmp.ge.s32.totalorder %s10, 50
    %s17 = sphi 0, %s36
    %s18 = sphi 0, %s32
    %s19 = sphi 0, %s28
    %s20 = sphi 0, %s17
    %s21 = sphi 0, %s18
    %s22 = sphi 0, %s19
    %s23 = sphi 0, %s20
    %s24 = sphi 0, %s21
    %s25 = sphi 0, %s22
    %s43 = sphi 0, %s45
    %s46 = sphi 0, %s43
    %s47 = sphi 0, %s46
    %s63 = sphi 0, %s47
    %s67 = sphi 0, %s67
    %s69 = sphi 0, %s67
    %s70 = sphi 0, %s69
    %s84 = sphi 0, %s70
    %s88 = sphi 0, %s88
    %s90 = sphi 0, %s88
    %s91 = sphi 0, %s90
    %s105 = sphi 0, %s91
    %s109 = sphi 0, %s109
    %s111 = sphi 0, %s109
    %s112 = sphi 0, %s111
    %s126 = sphi 0, %s112
    %s134 = sphi 0, %s136
    %s137 = sphi 0, %s134
    %s138 = sphi 0, %s137
    %s154 = sphi 0, %s138
  $region4: #{classifier_forward.7} parent=0 // loop_header_branch
    %13 = sbr.rel (%p11) target = $region8
  $region5: #{classifier_forward.7} parent=0 // loop_body
    %s15 = ssub.s32 %s10, 1
    %s16 = ssub.s32 %s10, 2
    %s26 = sadd.s32 1, %s19
    %p27 = scmp.ge.s32.totalorder %s26, 3
    %s28 = scalar_select %p27, 0, %s26
    %s29 = sadd.s32 1, %s18
    %s30 = scalar_select %p27, %s29, %s18
    %p31 = scmp.ge.s32.totalorder %s30, 8
    %s32 = scalar_select %p31, 0, %s30
    %s33 = sadd.s32 1, %s17
    %s34 = scalar_select %p31, %s33, %s17
    %p35 = scmp.ge.s32.totalorder %s34, 2
    %s36 = scalar_select %p35, 0, %s34
    %s37 = sadd.s32 %s18, %s19
    %s38 = sadd.s32 %s32, %s28
    %s39 = ssub.s32 %s17, %s36
    %s40 = ssub.s32 %s37, %s38
    %s41 = sor.u32 %s39, %s40
    %p42 = scmp.eq.s32.totalorder %s41, 0
    %s44 = sadd.s32 %s43, 1
    %s45 = scalar_select %p42, %s43, %s44
    %p48 = pneg %p42
    %p49 = scmp.eq.s32.totalorder %s10, 47
    %p50 = por %p48, %p49
    %p51 = scmp.ne.s32.totalorder %s43, %s46
    %p52 = scmp.eq.s32.totalorder %s10, 0
    %p53 = por %p51, %p52
    %p54 = scmp.ne.s32.totalorder %s43, %s46
    %p55 = scmp.eq.s32.totalorder %s15, 47
    %p56 = por %p54, %p55
    %p57 = scmp.ne.s32.totalorder %s46, %s47
    %p58 = scmp.eq.s32.totalorder %s15, 0
    %p59 = por %p57, %p58
    %p60 = scmp.ne.s32.totalorder %s46, %s47
    %p61 = scmp.eq.s32.totalorder %s16, 47
    %p62 = por %p60, %p61
    %p64 = scmp.ne.s32.totalorder %s47, %s63
    %p65 = scmp.eq.s32.totalorder %s16, 0
    %p66 = por %p64, %p65
    %s68 = sadd.s32 %s67, 1
    %p71 = scmp.eq.s32.totalorder %s10, 47
    %p72 = scmp.ne.s32.totalorder %s67, %s69
    %p73 = scmp.eq.s32.totalorder %s10, 0
    %p74 = por %p72, %p73
    %p75 = scmp.ne.s32.totalorder %s67, %s69
    %p76 = scmp.eq.s32.totalorder %s15, 47
    %p77 = por %p75, %p76
    %p78 = scmp.ne.s32.totalorder %s69, %s70
    %p79 = scmp.eq.s32.totalorder %s15, 0
    %p80 = por %p78, %p79
    %p81 = scmp.ne.s32.totalorder %s69, %s70
    %p82 = scmp.eq.s32.totalorder %s16, 47
    %p83 = por %p81, %p82
    %p85 = scmp.ne.s32.totalorder %s70, %s84
    %p86 = scmp.eq.s32.totalorder %s16, 0
    %p87 = por %p85, %p86
    %s89 = sadd.s32 %s88, 1
    %p92 = scmp.eq.s32.totalorder %s10, 47
    %p93 = scmp.ne.s32.totalorder %s88, %s90
    %p94 = scmp.eq.s32.totalorder %s10, 0
    %p95 = por %p93, %p94
    %p96 = scmp.ne.s32.totalorder %s88, %s90
    %p97 = scmp.eq.s32.totalorder %s15, 47
    %p98 = por %p96, %p97
    %p99 = scmp.ne.s32.totalorder %s90, %s91
    %p100 = scmp.eq.s32.totalorder %s15, 0
    %p101 = por %p99, %p100
    %p102 = scmp.ne.s32.totalorder %s90, %s91
    %p103 = scmp.eq.s32.totalorder %s16, 47
    %p104 = por %p102, %p103
    %p106 = scmp.ne.s32.totalorder %s91, %s105
    %p107 = scmp.eq.s32.totalorder %s16, 0
    %p108 = por %p106, %p107
    %s110 = sadd.s32 %s109, 1
    %p113 = scmp.eq.s32.totalorder %s10, 47
    %p114 = scmp.ne.s32.totalorder %s109, %s111
    %p115 = scmp.eq.s32.totalorder %s10, 0
    %p116 = por %p114, %p115
    %p117 = scmp.ne.s32.totalorder %s109, %s111
    %p118 = scmp.eq.s32.totalorder %s15, 47
    %p119 = por %p117, %p118
    %p120 = scmp.ne.s32.totalorder %s111, %s112
    %p121 = scmp.eq.s32.totalorder %s15, 0
    %p122 = por %p120, %p121
    %p123 = scmp.ne.s32.totalorder %s111, %s112
    %p124 = scmp.eq.s32.totalorder %s16, 47
    %p125 = por %p123, %p124
    %p127 = scmp.ne.s32.totalorder %s112, %s126
    %p128 = scmp.eq.s32.totalorder %s16, 0
    %p129 = por %p127, %p128
    %s130 = ssub.s32 %s17, %s36
    %s131 = ssub.s32 %s18, %s32
    %s132 = sor.u32 %s130, %s131
    %p133 = scmp.eq.s32.totalorder %s132, 0
    %s135 = sadd.s32 %s134, 1
    %s136 = scalar_select %p133, %s134, %s135
    %p139 = pneg %p133
    %p140 = scmp.eq.s32.totalorder %s10, 47
    %p141 = por %p139, %p140
    %p142 = scmp.ne.s32.totalorder %s134, %s137
    %p143 = scmp.eq.s32.totalorder %s10, 0
    %p144 = por %p142, %p143
    %p145 = scmp.ne.s32.totalorder %s134, %s137
    %p146 = scmp.eq.s32.totalorder %s15, 47
    %p147 = por %p145, %p146
    %p148 = scmp.ne.s32.totalorder %s137, %s138
    %p149 = scmp.eq.s32.totalorder %s15, 0
    %p150 = por %p148, %p149
    %p151 = scmp.ne.s32.totalorder %s137, %s138
    %p152 = scmp.eq.s32.totalorder %s16, 47
    %p153 = por %p151, %p152
    %p155 = scmp.ne.s32.totalorder %s138, %s154
    %p156 = scmp.eq.s32.totalorder %s16, 0
    %p157 = por %p155, %p156
    %p158 = scmp.le.s32.totalorder 1, %s10
    %p159 = scmp.lt.s32.totalorder %s10, 49
    %p160 = pnand %p158, %p159
    %p161 = pneg %p160
    // Predicated region
    $region9: #{classifier_forward.7} parent=5 // pred_check
      _
    $region10: #{classifier_forward.7} parent=5 // pred_check_branch
      %163 = sbr.rel (%p160) target = $region12
    $region11: #{classifier_forward.7} parent=5 // pred_region
      %s164 = ssub.s32 %s10, 1
      // Predicated region
      $region13: #{classifier_forward.7} parent=11 // pred_check
        %p165 = pneg %p80
      $region14: #{classifier_forward.7} parent=11 // pred_check_branch
        %167 = sbr.rel (%p165) target = $region16
      $region15: #{classifier_forward.7} parent=11 // pred_region
        _
      $region16: #{classifier_forward.7} parent=11 // pred_fallthru
        _
      // Predicated region
      $region17: #{classifier_forward.7} parent=11 // pred_check
        %p168 = pneg %p101
      $region18: #{classifier_forward.7} parent=11 // pred_check_branch
        %170 = sbr.rel (%p168) target = $region20
      $region19: #{classifier_forward.7} parent=11 // pred_region
        _
      $region20: #{classifier_forward.7} parent=11 // pred_fallthru
        _
      // Predicated region
      $region21: #{classifier_forward.7} parent=11 // pred_check
        %p171 = pneg %p122
      $region22: #{classifier_forward.7} parent=11 // pred_check_branch
        %173 = sbr.rel (%p171) target = $region24
      $region23: #{classifier_forward.7} parent=11 // pred_region
        _
      $region24: #{classifier_forward.7} parent=11 // pred_fallthru
        _
    $region12: #{classifier_forward.7} parent=5 // pred_fallthru
      _
    %p174 = scmp.lt.s32.totalorder %s10, 48
    // Predicated region
    $region25: #{classifier_forward.7} parent=5 // pred_check
      %p175 = pneg %p174
    $region26: #{classifier_forward.7} parent=5 // pred_check_branch
      %177 = sbr.rel (%p175) target = $region28
    $region27: #{classifier_forward.7} parent=5 // pred_region
      // Predicated region
      $region29: #{classifier_forward.7} parent=27 // pred_check
        %p178 = pneg %p53
      $region30: #{classifier_forward.7} parent=27 // pred_check_branch
        %180 = sbr.rel (%p178) target = $region32
      $region31: #{classifier_forward.7} parent=27 // pred_region
        %s181 = sadd.s32 %s18, %s19
        %p182 = scmp.lt.s32.totalorder %s17, 1
        %s183 = scalar_select %p182, %s17, 1
        %p184 = scmp.lt.s32.totalorder %s181, 9
        %s185 = scalar_select %p184, %s181, 9
        %s186 = smul.addr %s185, 13
        %s187 = smul.addr %s183, 130
        %s188 = sadd.s32 %s186, %s187
        %s189 = smul.addr %s188, 4
        %s190 = scalar_lea.vmem %s0, %s189
        %s191 = sadd.s32 %s18, %s19
      $region32: #{classifier_forward.7} parent=27 // pred_fallthru
        _
    $region28: #{classifier_forward.7} parent=5 // pred_fallthru
      _
    %p192 = scmp.le.s32.totalorder 1, %s10
    %p193 = scmp.lt.s32.totalorder %s10, 49
    %p194 = pnand %p192, %p193
    %p195 = pneg %p194
    // Predicated region
    $region33: #{classifier_forward.7} parent=5 // pred_check
      _
    $region34: #{classifier_forward.7} parent=5 // pred_check_branch
      %197 = sbr.rel (%p194) target = $region36
    $region35: #{classifier_forward.7} parent=5 // pred_region
      %s198 = ssub.s32 %s10, 1
      %s199 = sadd.s32 %s21, %s22
      %p200 = scmp.lt.s32.totalorder %s20, 1
      %s201 = scalar_select %p200, %s20, 1
      %p202 = scmp.lt.s32.totalorder %s199, 9
      %s203 = scalar_select %p202, %s199, 9
      %s204 = smul.addr %s203, 13
      %s205 = smul.addr %s201, 130
      %s206 = sadd.s32 %s204, %s205
      %s207 = smul.addr %s206, 4
      %s208 = scalar_lea.vmem %s0, %s207
      %p209 = pneg %p59
      %p210 = pneg %p56
      %p211 = pneg %p80
      %p212 = pneg %p77
      %p213 = pneg %p101
      %p214 = pneg %p98
      %p215 = pneg %p122
      %p216 = pneg %p119
      %p217 = pneg %p150
      %p218 = pneg %p147
      %p219 = scmp.lt.s32.totalorder %s20, 1
      %s220 = scalar_select %p219, %s20, 1
      %p221 = scmp.lt.s32.totalorder %s21, 7
      %s222 = scalar_select %p221, %s21, 7
      %s223 = smul.addr %s222, 10
      %s224 = smul.addr %s220, 80
      %s225 = sadd.s32 %s223, %s224
      %s226 = smul.addr %s225, 4
      %s227 = scalar_lea.vmem %s4, %s226
      %s228 = sadd.s32 %s21, %s22
      %p229 = scmp.lt.s32.totalorder %s20, 1
      %s230 = scalar_select %p229, %s20, 1
      %p231 = scmp.lt.s32.totalorder %s228, 9
      %s232 = scalar_select %p231, %s228, 9
      %s233 = smul.addr %s232, 13
      %s234 = smul.addr %s230, 130
      %s235 = sadd.s32 %s233, %s234
      %s236 = smul.addr %s235, 4
      %s237 = scalar_lea.vmem %s0, %s236
      %s238 = sadd.s32 %s21, %s22
      %p239 = scmp.lt.s32.totalorder %s20, 1
      %s240 = scalar_select %p239, %s20, 1
      %p241 = scmp.lt.s32.totalorder %s21, 7
      %s242 = scalar_select %p241, %s21, 7
      %s243 = smul.addr %s242, 10
      %s244 = smul.addr %s240, 80
      %s245 = sadd.s32 %s243, %s244
      %s246 = smul.addr %s245, 4
      %s247 = scalar_lea.vmem %s4, %s246
      %p249 = scmp.eq.s32.totalorder %s22, 0
      // Predicated region
      $region37: #{classifier_forward.7} parent=35 // pred_check
        %p250 = pneg %p249
      $region38: #{classifier_forward.7} parent=35 // pred_check_branch
        %252 = sbr.rel (%p250) target = $region40
      $region39: #{classifier_forward.7} parent=35 // pred_region
        %vm253 = vcmask 523264
        %254 = vst.msk [vmem:[#allocation2] sm:$0xff] %vm253, 0.0
        %255 = vst.msk [vmem:[#allocation2 + $0x8] sm:$0xff] %vm253, 0.0
        %256 = vst.msk [vmem:[#allocation2 + $0x10] sm:$0xff] %vm253, 0.0
        %257 = vst.msk [vmem:[#allocation2 + $0x18] sm:$0xff] %vm253, 0.0
        %258 = vst.msk [vmem:[#allocation2 + $0x20] sm:$0xff] %vm253, 0.0
        %259 = vst.msk [vmem:[#allocation2 + $0x28] sm:$0xff] %vm253, 0.0
        %260 = vst.msk [vmem:[#allocation2 + $0x30] sm:$0xff] %vm253, 0.0
        %261 = vst.msk [vmem:[#allocation2 + $0x38] sm:$0xff] %vm253, 0.0
        %262 = vst.msk [vmem:[#allocation2 + $0x40] sm:$0xff] %vm253, 0.0
        %263 = vst.msk [vmem:[#allocation2 + $0x48] sm:$0xff] %vm253, 0.0
        %264 = vst.msk [vmem:[#allocation3] sm:$0xff] %vm253, 0.0
        %265 = vst.msk [vmem:[#allocation3 + $0x8] sm:$0xff] %vm253, 0.0
        %266 = vst.msk [vmem:[#allocation3 + $0x10] sm:$0xff] %vm253, 0.0
        %267 = vst.msk [vmem:[#allocation3 + $0x18] sm:$0xff] %vm253, 0.0
        %268 = vst.msk [vmem:[#allocation3 + $0x20] sm:$0xff] %vm253, 0.0
        %269 = vst.msk [vmem:[#allocation3 + $0x28] sm:$0xff] %vm253, 0.0
        %270 = vst.msk [vmem:[#allocation3 + $0x30] sm:$0xff] %vm253, 0.0
        %271 = vst.msk [vmem:[#allocation3 + $0x38] sm:$0xff] %vm253, 0.0
        %272 = vst.msk [vmem:[#allocation3 + $0x40] sm:$0xff] %vm253, 0.0
        %273 = vst.msk [vmem:[#allocation3 + $0x48] sm:$0xff] %vm253, 0.0
        %274 = vst.msk [vmem:[#allocation3 + $0x50] sm:$0xff] %vm253, 0.0
        %275 = vst.msk [vmem:[#allocation3 + $0x58] sm:$0xff] %vm253, 0.0
        %276 = vst.msk [vmem:[#allocation3 + $0x60] sm:$0xff] %vm253, 0.0
      $region40: #{classifier_forward.7} parent=35 // pred_fallthru
        _
      %v277 = vld [vmem:[%s237] sm:$0xf]
      %v278 = vld [vmem:[%s237 + $0x4] sm:$0xf]
      %v279 = vld [vmem:[%s237 + $0x8] sm:$0xf]
      %v280 = vld [vmem:[%s237 + $0xc] sm:$0xf]
      %v281 = vld [vmem:[%s237 + $0x10] sm:$0xf]
      %v282 = vld [vmem:[%s237 + $0x14] sm:$0xf]
      %v283 = vld [vmem:[%s237 + $0x18] sm:$0xf]
      %v284 = vld [vmem:[%s237 + $0x1c] sm:$0xf]
      %v285 = vld [vmem:[%s237 + $0x20] sm:$0xf]
      %v286 = vld [vmem:[%s237 + $0x24] sm:$0xf]
      %v287 = vld [vmem:[%s237 + $0x28] sm:$0xf]
      %v288 = vld [vmem:[%s237 + $0x2c] sm:$0xf]
      %v289 = vld [vmem:[%s237 + $0x30] sm:$0x3]
      %s290 = smul.u32 %s22, 144
      %s291 = smul.addr %s290, 4
      %s292 = scalar_lea.vmem %s1, %s291
      %v293 = vld [vmem:[%s292] sm:$0xf]
      %v294 = vld [vmem:[%s292 + $0x4] sm:$0xf]
      %v295 = vld [vmem:[%s292 + $0x8] sm:$0xf]
      %v296 = vld [vmem:[%s292 + $0xc] sm:$0xf]
      %v297 = vld [vmem:[%s292 + $0x10] sm:$0xf]
      %v298 = vld [vmem:[%s292 + $0x14] sm:$0xf]
      %v299 = vld [vmem:[%s292 + $0x18] sm:$0xf]
      %v300 = vld [vmem:[%s292 + $0x1c] sm:$0xf]
      %v301 = vld [vmem:[%s292 + $0x20] sm:$0xf]
      %v302 = vld [vmem:[%s292 + $0x24] sm:$0xf]
      %v303 = vld [vmem:[%s292 + $0x28] sm:$0xf]
      %v304 = vld [vmem:[%s292 + $0x2c] sm:$0xf]
      %v305 = vld [vmem:[%s292 + $0x30] sm:$0xf]
      %v306 = vld [vmem:[%s292 + $0x34] sm:$0xf]
      %v307 = vld [vmem:[%s292 + $0x38] sm:$0xf]
      %v308 = vld [vmem:[%s292 + $0x3c] sm:$0xf]
      %v322 = vunpack.c.l.b16 %v277
      %v323 = vunpack.c.l.b16 %v278
      %v324 = vunpack.c.l.b16 %v279
      %v325 = vunpack.c.l.b16 %v280
      %v326 = vunpack.c.l.b16 %v281
      %v327 = vunpack.c.l.b16 %v282
      %v328 = vunpack.c.l.b16 %v283
      %v329 = vunpack.c.l.b16 %v284
      %v330 = vunpack.c.l.b16 %v285
      %v331 = vunpack.c.l.b16 %v286
      %v332 = vunpack.c.l.b16 %v287
      %v333 = vunpack.c.l.b16 %v288
      %v334 = vunpack.c.l.b16 %v289
      %v335 = vpack.c.b16 %v323, %v322
      %v336 = vpack.c.b16 %v325, %v324
      %v337 = vpack.c.b16 %v327, %v326
      %v338 = vpack.c.b16 %v329, %v328
      %v339 = vpack.c.b16 %v331, %v330
      %v340 = vpack.c.b16 %v333, %v332
      %v341 = vpack.c.b16 %v334, %v334
      %v365 = vunpack.c.l.b16 %v293
      %v366 = vunpack.c.l.b16 %v294
      %v367 = vunpack.c.l.b16 %v295
      %v368 = vunpack.c.l.b16 %v296
      %v369 = vunpack.c.l.b16 %v297
      %v370 = vunpack.c.l.b16 %v298
      %v371 = vunpack.c.l.b16 %v299
      %v372 = vunpack.c.l.b16 %v300
      %v373 = vunpack.c.l.b16 %v301
      %v374 = vunpack.c.l.b16 %v302
      %v375 = vunpack.c.l.b16 %v303
      %v376 = vunpack.c.l.b16 %v304
      %v377 = vunpack.c.l.b16 %v305
      %v378 = vunpack.c.l.b16 %v306
      %v379 = vunpack.c.l.b16 %v307
      %v380 = vunpack.c.l.b16 %v308
      %v381 = vpack.c.b16 %v366, %v365
      %v382 = vpack.c.b16 %v368, %v367
      %v383 = vpack.c.b16 %v370, %v369
      %v384 = vpack.c.b16 %v372, %v371
      %v385 = vpack.c.b16 %v374, %v373
      %v386 = vpack.c.b16 %v376, %v375
      %v387 = vpack.c.b16 %v378, %v377
      %v388 = vpack.c.b16 %v380, %v379
      %397 = vmatprep.subr.bf16.mxu0 0
      %398 = vmatpush1.bf16.msra.mxu0 %v388
      %399 = vmatprep.subr.bf16.mxu0 0
      %400 = vmatpush1.bf16.msra.mxu0 %v387
      %401 = vmatprep.subr.bf16.mxu0 0
      %402 = vmatpush1.bf16.msra.mxu0 %v386
      %403 = vmatprep.subr.bf16.mxu0 0
      %404 = vmatpush1.bf16.msra.mxu0 %v385
      %405 = vmatprep.subr.bf16.mxu0 0
      %406 = vmatpush1.bf16.msra.mxu0 %v384
      %407 = vmatprep.subr.bf16.mxu0 0
      %408 = vmatpush1.bf16.msra.mxu0 %v383
      %409 = vmatprep.subr.bf16.mxu0 0
      %410 = vmatpush1.bf16.msra.mxu0 %v382
      %411 = vmatprep.subr.bf16.mxu0 0
      %412 = vmatpush1.bf16.msra.mxu0 %v381
      %413 = vmatprep.subr.bf16.mxu0 0
      %414 = vmatpush2.bf16.msra.mxu0 0
      %415 = vmatprep.subr.bf16.mxu0 0
      %416 = vmatpush2.bf16.msra.mxu0 0
      %417 = vmatprep.subr.bf16.mxu0 0
      %418 = vmatpush2.bf16.msra.mxu0 0
      %419 = vmatprep.subr.bf16.mxu0 0
      %420 = vmatpush2.bf16.msra.mxu0 0
      %421 = vmatprep.subr.bf16.mxu0 0
      %422 = vmatpush2.bf16.msra.mxu0 0
      %423 = vmatprep.subr.bf16.mxu0 0
      %424 = vmatpush2.bf16.msra.mxu0 0
      %425 = vmatprep.subr.bf16.mxu0 0
      %426 = vmatpush2.bf16.msra.mxu0 0
      %427 = vmatprep.subr.bf16.mxu0 0
      %428 = vmatpush2.bf16.msra.mxu0 0
      %429 = vmatprep.mubr.bf16.mxu0 0
      %430 = vmatmul.mubr.bf16.gmra.mxu0 %v335
      %v431 = vpop.f32.mrf.mxu0
      %v432 = vadd.f32 0.0, %v431
      %v433 = vpop.f32.mrf.mxu0
      %v434 = vpop.f32.mrf.mxu0
      %v435 = vadd.f32 0.0, %v434
      %v436 = vpop.f32.mrf.mxu0
      %437 = vmatprep.mubr.bf16.mxu0 0
      %438 = vmatmul.mubr.bf16.gmra.mxu0 %v336
      %v439 = vpop.f32.mrf.mxu0
      %v440 = vadd.f32 0.0, %v439
      %v441 = vpop.f32.mrf.mxu0
      %v442 = vpop.f32.mrf.mxu0
      %v443 = vadd.f32 0.0, %v442
      %v444 = vpop.f32.mrf.mxu0
      %445 = vmatprep.mubr.bf16.mxu0 0
      %446 = vmatmul.mubr.bf16.gmra.mxu0 %v337
      %v447 = vpop.f32.mrf.mxu0
      %v448 = vadd.f32 0.0, %v447
      %v449 = vpop.f32.mrf.mxu0
      %v450 = vpop.f32.mrf.mxu0
      %v451 = vadd.f32 0.0, %v450
      %v452 = vpop.f32.mrf.mxu0
      %453 = vmatprep.mubr.bf16.mxu0 0
      %454 = vmatmul.mubr.bf16.gmra.mxu0 %v338
      %v455 = vpop.f32.mrf.mxu0
      %v456 = vadd.f32 0.0, %v455
      %v457 = vpop.f32.mrf.mxu0
      %v458 = vpop.f32.mrf.mxu0
      %v459 = vadd.f32 0.0, %v458
      %v460 = vpop.f32.mrf.mxu0
      %461 = vmatprep.mubr.bf16.mxu0 0
      %462 = vmatmul.mubr.bf16.gmra.mxu0 %v339
      %v463 = vpop.f32.mrf.mxu0
      %v464 = vadd.f32 0.0, %v463
      %v465 = vpop.f32.mrf.mxu0
      %v466 = vpop.f32.mrf.mxu0
      %v467 = vadd.f32 0.0, %v466
      %v468 = vpop.f32.mrf.mxu0
      %469 = vmatprep.mubr.bf16.mxu0 0
      %470 = vmatmul.mubr.bf16.gmra.mxu0 %v340
      %v471 = vpop.f32.mrf.mxu0
      %v472 = vadd.f32 0.0, %v471
      %v473 = vpop.f32.mrf.mxu0
      %v474 = vpop.f32.mrf.mxu0
      %v475 = vadd.f32 0.0, %v474
      %v476 = vpop.f32.mrf.mxu0
      %477 = vmatprep.mubr.bf16.mxu0 0
      %478 = vmatmul.mubr.bf16.gmra.mxu0 %v341
      %v479 = vpop.f32.mrf.mxu0
      %v480 = vadd.f32 0.0, %v479
      %v481 = vpop.f32.mrf.mxu0
      %v482 = vpop.f32.mrf.mxu0
      %v483 = vpop.f32.mrf.mxu0
      %484 = vdwg.mxu0
      %vm485 = vcmask 523264
      %486 = vst.msk [vmem:[#allocation3] sm:$0xff] %vm485, %v432
      %487 = vst.msk [vmem:[#allocation3 + $0x8] sm:$0xff] %vm485, %v435
      %488 = vst.msk [vmem:[#allocation3 + $0x10] sm:$0xff] %vm485, %v440
      %489 = vst.msk [vmem:[#allocation3 + $0x18] sm:$0xff] %vm485, %v443
      %490 = vst.msk [vmem:[#allocation3 + $0x20] sm:$0xff] %vm485, %v448
      %491 = vst.msk [vmem:[#allocation3 + $0x28] sm:$0xff] %vm485, %v451
      %492 = vst.msk [vmem:[#allocation3 + $0x30] sm:$0xff] %vm485, %v456
      %493 = vst.msk [vmem:[#allocation3 + $0x38] sm:$0xff] %vm485, %v459
      %494 = vst.msk [vmem:[#allocation3 + $0x40] sm:$0xff] %vm485, %v464
      %495 = vst.msk [vmem:[#allocation3 + $0x48] sm:$0xff] %vm485, %v467
      %496 = vst.msk [vmem:[#allocation3 + $0x50] sm:$0xff] %vm485, %v472
      %497 = vst.msk [vmem:[#allocation3 + $0x58] sm:$0xff] %vm485, %v475
      %vm498 = vcmask 519168
      %499 = vst.msk [vmem:[#allocation3 + $0x60] sm:$0xf] %vm498, %v480
      %v500 = vld [vmem:[#allocation2] sm:$0xff]
      %v501 = vld [vmem:[#allocation2 + $0x8] sm:$0xff]
      %v502 = vld [vmem:[#allocation2 + $0x10] sm:$0xff]
      %v503 = vld [vmem:[#allocation2 + $0x18] sm:$0xff]
      %v504 = vld [vmem:[#allocation2 + $0x20] sm:$0xff]
      %v505 = vld [vmem:[#allocation2 + $0x28] sm:$0xff]
      %v506 = vld [vmem:[#allocation2 + $0x30] sm:$0xff]
      %v507 = vld [vmem:[#allocation2 + $0x38] sm:$0xff]
      %v508 = vld [vmem:[#allocation2 + $0x40] sm:$0xff]
      %v509 = vld [vmem:[#allocation2 + $0x48] sm:$0xff]
      %v510 = vld [vmem:[#allocation3] sm:$0xff]
      %v511 = vld [vmem:[#allocation3 + $0x8] sm:$0xff]
      %v512 = vld [vmem:[#allocation3 + $0x10] sm:$0xff]
      %v513 = vld [vmem:[#allocation3 + $0x18] sm:$0xff]
      %v514 = vld [vmem:[#allocation3 + $0x20] sm:$0xff]
      %v515 = vld [vmem:[#allocation3 + $0x28] sm:$0xff]
      %v516 = vld [vmem:[#allocation3 + $0x30] sm:$0xff]
      %v517 = vld [vmem:[#allocation3 + $0x38] sm:$0xff]
      %v518 = vld [vmem:[#allocation3 + $0x40] sm:$0xff]
      %v519 = vld [vmem:[#allocation3 + $0x48] sm:$0xff]
      %v520 = vadd.f32 %v500, %v510
      %v521 = vadd.f32 %v501, %v511
      %v522 = vadd.f32 %v502, %v512
      %v523 = vadd.f32 %v503, %v513
      %v524 = vadd.f32 %v504, %v514
      %v525 = vadd.f32 %v505, %v515
      %v526 = vadd.f32 %v506, %v516
      %v527 = vadd.f32 %v507, %v517
      %v528 = vadd.f32 %v508, %v518
      %v529 = vadd.f32 %v509, %v519
      %530 = vst.msk [vmem:[#allocation2] sm:$0xff] %vm485, %v520
      %531 = vst.msk [vmem:[#allocation2 + $0x8] sm:$0xff] %vm485, %v521
      %532 = vst.msk [vmem:[#allocation2 + $0x10] sm:$0xff] %vm485, %v522
      %533 = vst.msk [vmem:[#allocation2 + $0x18] sm:$0xff] %vm485, %v523
      %534 = vst.msk [vmem:[#allocation2 + $0x20] sm:$0xff] %vm485, %v524
      %535 = vst.msk [vmem:[#allocation2 + $0x28] sm:$0xff] %vm485, %v525
      %536 = vst.msk [vmem:[#allocation2 + $0x30] sm:$0xff] %vm485, %v526
      %537 = vst.msk [vmem:[#allocation2 + $0x38] sm:$0xff] %vm485, %v527
      %538 = vst.msk [vmem:[#allocation2 + $0x40] sm:$0xff] %vm485, %v528
      %539 = vst.msk [vmem:[#allocation2 + $0x48] sm:$0xff] %vm485, %v529
      %s540 = sadd.s32 16, %s290
      %s541 = smul.addr %s540, 4
      %s542 = scalar_lea.vmem %s1, %s541
      %v543 = vld [vmem:[%s542] sm:$0xf]
      %v544 = vld [vmem:[%s542 + $0x4] sm:$0xf]
      %v545 = vld [vmem:[%s542 + $0x8] sm:$0xf]
      %v546 = vld [vmem:[%s542 + $0xc] sm:$0xf]
      %v547 = vld [vmem:[%s542 + $0x10] sm:$0xf]
      %v548 = vld [vmem:[%s542 + $0x14] sm:$0xf]
      %v549 = vld [vmem:[%s542 + $0x18] sm:$0xf]
      %v550 = vld [vmem:[%s542 + $0x1c] sm:$0xf]
      %v551 = vld [vmem:[%s542 + $0x20] sm:$0xf]
      %v552 = vld [vmem:[%s542 + $0x24] sm:$0xf]
      %v553 = vld [vmem:[%s542 + $0x28] sm:$0xf]
      %v554 = vld [vmem:[%s542 + $0x2c] sm:$0xf]
      %v555 = vld [vmem:[%s542 + $0x30] sm:$0xf]
      %v556 = vld [vmem:[%s542 + $0x34] sm:$0xf]
      %v557 = vld [vmem:[%s542 + $0x38] sm:$0xf]
      %v558 = vld [vmem:[%s542 + $0x3c] sm:$0xf]
      %v575 = vunpack.c.l.b16 %v543
      %v576 = vunpack.c.l.b16 %v544
      %v577 = vunpack.c.l.b16 %v545
      %v578 = vunpack.c.l.b16 %v546
      %v579 = vunpack.c.l.b16 %v547
      %v580 = vunpack.c.l.b16 %v548
      %v581 = vunpack.c.l.b16 %v549
      %v582 = vunpack.c.l.b16 %v550
      %v583 = vunpack.c.l.b16 %v551
      %v584 = vunpack.c.l.b16 %v552
      %v585 = vunpack.c.l.b16 %v553
      %v586 = vunpack.c.l.b16 %v554
      %v587 = vunpack.c.l.b16 %v555
      %v588 = vunpack.c.l.b16 %v556
      %v589 = vunpack.c.l.b16 %v557
      %v590 = vunpack.c.l.b16 %v558
      %v591 = vpack.c.b16 %v576, %v575
      %v592 = vpack.c.b16 %v578, %v577
      %v593 = vpack.c.b16 %v580, %v579
      %v594 = vpack.c.b16 %v582, %v581
      %v595 = vpack.c.b16 %v584, %v583
      %v596 = vpack.c.b16 %v586, %v585
      %v597 = vpack.c.b16 %v588, %v587
      %v598 = vpack.c.b16 %v590, %v589
      %607 = vmatprep.subr.bf16.mxu0 0
      %608 = vmatpush1.bf16.msra.mxu0 %v598
      %609 = vmatprep.subr.bf16.mxu0 0
      %610 = vmatpush1.bf16.msra.mxu0 %v597
      %611 = vmatprep.subr.bf16.mxu0 0
      %612 = vmatpush1.bf16.msra.mxu0 %v596
      %613 = vmatprep.subr.bf16.mxu0 0
      %614 = vmatpush1.bf16.msra.mxu0 %v595
      %615 = vmatprep.subr.bf16.mxu0 0
      %616 = vmatpush1.bf16.msra.mxu0 %v594
      %617 = vmatprep.subr.bf16.mxu0 0
      %618 = vmatpush1.bf16.msra.mxu0 %v593
      %619 = vmatprep.subr.bf16.mxu0 0
      %620 = vmatpush1.bf16.msra.mxu0 %v592
      %621 = vmatprep.subr.bf16.mxu0 0
      %622 = vmatpush1.bf16.msra.mxu0 %v591
      %623 = vmatprep.subr.bf16.mxu0 0
      %624 = vmatpush2.bf16.msra.mxu0 0
      %625 = vmatprep.subr.bf16.mxu0 0
      %626 = vmatpush2.bf16.msra.mxu0 0
      %627 = vmatprep.subr.bf16.mxu0 0
      %628 = vmatpush2.bf16.msra.mxu0 0
      %629 = vmatprep.subr.bf16.mxu0 0
      %630 = vmatpush2.bf16.msra.mxu0 0
      %631 = vmatprep.subr.bf16.mxu0 0
      %632 = vmatpush2.bf16.msra.mxu0 0
      %633 = vmatprep.subr.bf16.mxu0 0
      %634 = vmatpush2.bf16.msra.mxu0 0
      %635 = vmatprep.subr.bf16.mxu0 0
      %636 = vmatpush2.bf16.msra.mxu0 0
      %637 = vmatprep.subr.bf16.mxu0 0
      %638 = vmatpush2.bf16.msra.mxu0 0
      %639 = vmatprep.mubr.bf16.mxu0 0
      %640 = vmatmul.mubr.bf16.gmra.mxu0 %v335
      %v641 = vpop.f32.mrf.mxu0
      %v642 = vadd.f32 0.0, %v641
      %v643 = vpop.f32.mrf.mxu0
      %v644 = vpop.f32.mrf.mxu0
      %v645 = vadd.f32 0.0, %v644
      %v646 = vpop.f32.mrf.mxu0
      %647 = vmatprep.mubr.bf16.mxu0 0
      %648 = vmatmul.mubr.bf16.gmra.mxu0 %v336
      %v649 = vpop.f32.mrf.mxu0
      %v650 = vadd.f32 0.0, %v649
      %v651 = vpop.f32.mrf.mxu0
      %v652 = vpop.f32.mrf.mxu0
      %v653 = vadd.f32 0.0, %v652
      %v654 = vpop.f32.mrf.mxu0
      %655 = vmatprep.mubr.bf16.mxu0 0
      %656 = vmatmul.mubr.bf16.gmra.mxu0 %v337
      %v657 = vpop.f32.mrf.mxu0
      %v658 = vadd.f32 0.0, %v657
      %v659 = vpop.f32.mrf.mxu0
      %v660 = vpop.f32.mrf.mxu0
      %v661 = vadd.f32 0.0, %v660
      %v662 = vpop.f32.mrf.mxu0
      %663 = vmatprep.mubr.bf16.mxu0 0
      %664 = vmatmul.mubr.bf16.gmra.mxu0 %v338
      %v665 = vpop.f32.mrf.mxu0
      %v666 = vadd.f32 0.0, %v665
      %v667 = vpop.f32.mrf.mxu0
      %v668 = vpop.f32.mrf.mxu0
      %v669 = vadd.f32 0.0, %v668
      %v670 = vpop.f32.mrf.mxu0
      %671 = vmatprep.mubr.bf16.mxu0 0
      %672 = vmatmul.mubr.bf16.gmra.mxu0 %v339
      %v673 = vpop.f32.mrf.mxu0
      %v674 = vadd.f32 0.0, %v673
      %v675 = vpop.f32.mrf.mxu0
      %v676 = vpop.f32.mrf.mxu0
      %v677 = vadd.f32 0.0, %v676
      %v678 = vpop.f32.mrf.mxu0
      %679 = vmatprep.mubr.bf16.mxu0 0
      %680 = vmatmul.mubr.bf16.gmra.mxu0 %v340
      %v681 = vpop.f32.mrf.mxu0
      %v682 = vadd.f32 0.0, %v681
      %v683 = vpop.f32.mrf.mxu0
      %v684 = vpop.f32.mrf.mxu0
      %v685 = vadd.f32 0.0, %v684
      %v686 = vpop.f32.mrf.mxu0
      %687 = vmatprep.mubr.bf16.mxu0 0
      %688 = vmatmul.mubr.bf16.gmra.mxu0 %v341
      %v689 = vpop.f32.mrf.mxu0
      %v690 = vadd.f32 0.0, %v689
      %v691 = vpop.f32.mrf.mxu0
      %v692 = vpop.f32.mrf.mxu0
      %v693 = vpop.f32.mrf.mxu0
      %694 = vdwg.mxu0
      %695 = vst.msk [vmem:[#allocation3] sm:$0xff] %vm485, %v642
      %696 = vst.msk [vmem:[#allocation3 + $0x8] sm:$0xff] %vm485, %v645
      %697 = vst.msk [vmem:[#allocation3 + $0x10] sm:$0xff] %vm485, %v650
      %698 = vst.msk [vmem:[#allocation3 + $0x18] sm:$0xff] %vm485, %v653
      %699 = vst.msk [vmem:[#allocation3 + $0x20] sm:$0xff] %vm485, %v658
      %700 = vst.msk [vmem:[#allocation3 + $0x28] sm:$0xff] %vm485, %v661
      %701 = vst.msk [vmem:[#allocation3 + $0x30] sm:$0xff] %vm485, %v666
      %702 = vst.msk [vmem:[#allocation3 + $0x38] sm:$0xff] %vm485, %v669
      %703 = vst.msk [vmem:[#allocation3 + $0x40] sm:$0xff] %vm485, %v674
      %704 = vst.msk [vmem:[#allocation3 + $0x48] sm:$0xff] %vm485, %v677
      %705 = vst.msk [vmem:[#allocation3 + $0x50] sm:$0xff] %vm485, %v682
      %706 = vst.msk [vmem:[#allocation3 + $0x58] sm:$0xff] %vm485, %v685
      %707 = vst.msk [vmem:[#allocation3 + $0x60] sm:$0xf] %vm498, %v690
      %v708 = vld [vmem:[#allocation2] sm:$0xff]
      %v709 = vld [vmem:[#allocation2 + $0x8] sm:$0xff]
      %v710 = vld [vmem:[#allocation2 + $0x10] sm:$0xff]
      %v711 = vld [vmem:[#allocation2 + $0x18] sm:$0xff]
      %v712 = vld [vmem:[#allocation2 + $0x20] sm:$0xff]
      %v713 = vld [vmem:[#allocation2 + $0x28] sm:$0xff]
      %v714 = vld [vmem:[#allocation2 + $0x30] sm:$0xff]
      %v715 = vld [vmem:[#allocation2 + $0x38] sm:$0xff]
      %v716 = vld [vmem:[#allocation2 + $0x40] sm:$0xff]
      %v717 = vld [vmem:[#allocation2 + $0x48] sm:$0xff]
      %v718 = vld [vmem:[#allocation3 + $0x1] sm:$0xff]
      %v719 = vld [vmem:[#allocation3 + $0x9] sm:$0xff]
      %v720 = vld [vmem:[#allocation3 + $0x11] sm:$0xff]
      %v721 = vld [vmem:[#allocation3 + $0x19] sm:$0xff]
      %v722 = vld [vmem:[#allocation3 + $0x21] sm:$0xff]
      %v723 = vld [vmem:[#allocation3 + $0x29] sm:$0xff]
      %v724 = vld [vmem:[#allocation3 + $0x31] sm:$0xff]
      %v725 = vld [vmem:[#allocation3 + $0x39] sm:$0xff]
      %v726 = vld [vmem:[#allocation3 + $0x41] sm:$0xff]
      %v727 = vld [vmem:[#allocation3 + $0x49] sm:$0xff]
      %v728 = vadd.f32 %v708, %v718
      %v729 = vadd.f32 %v709, %v719
      %v730 = vadd.f32 %v710, %v720
      %v731 = vadd.f32 %v711, %v721
      %v732 = vadd.f32 %v712, %v722
      %v733 = vadd.f32 %v713, %v723
      %v734 = vadd.f32 %v714, %v724
      %v735 = vadd.f32 %v715, %v725
      %v736 = vadd.f32 %v716, %v726
      %v737 = vadd.f32 %v717, %v727
      %738 = vst.msk [vmem:[#allocation2] sm:$0xff] %vm485, %v728
      %739 = vst.msk [vmem:[#allocation2 + $0x8] sm:$0xff] %vm485, %v729
      %740 = vst.msk [vmem:[#allocation2 + $0x10] sm:$0xff] %vm485, %v730
      %741 = vst.msk [vmem:[#allocation2 + $0x18] sm:$0xff] %vm485, %v731
      %742 = vst.msk [vmem:[#allocation2 + $0x20] sm:$0xff] %vm485, %v732
      %743 = vst.msk [vmem:[#allocation2 + $0x28] sm:$0xff] %vm485, %v733
      %744 = vst.msk [vmem:[#allocation2 + $0x30] sm:$0xff] %vm485, %v734
      %745 = vst.msk [vmem:[#allocation2 + $0x38] sm:$0xff] %vm485, %v735
      %746 = vst.msk [vmem:[#allocation2 + $0x40] sm:$0xff] %vm485, %v736
      %747 = vst.msk [vmem:[#allocation2 + $0x48] sm:$0xff] %vm485, %v737
      %s748 = sadd.s32 32, %s290
      %s749 = smul.addr %s748, 4
      %s750 = scalar_lea.vmem %s1, %s749
      %v751 = vld [vmem:[%s750] sm:$0xf]
      %v752 = vld [vmem:[%s750 + $0x4] sm:$0xf]
      %v753 = vld [vmem:[%s750 + $0x8] sm:$0xf]
      %v754 = vld [vmem:[%s750 + $0xc] sm:$0xf]
      %v755 = vld [vmem:[%s750 + $0x10] sm:$0xf]
      %v756 = vld [vmem:[%s750 + $0x14] sm:$0xf]
      %v757 = vld [vmem:[%s750 + $0x18] sm:$0xf]
      %v758 = vld [vmem:[%s750 + $0x1c] sm:$0xf]
      %v759 = vld [vmem:[%s750 + $0x20] sm:$0xf]
      %v760 = vld [vmem:[%s750 + $0x24] sm:$0xf]
      %v761 = vld [vmem:[%s750 + $0x28] sm:$0xf]
      %v762 = vld [vmem:[%s750 + $0x2c] sm:$0xf]
      %v763 = vld [vmem:[%s750 + $0x30] sm:$0xf]
      %v764 = vld [vmem:[%s750 + $0x34] sm:$0xf]
      %v765 = vld [vmem:[%s750 + $0x38] sm:$0xf]
      %v766 = vld [vmem:[%s750 + $0x3c] sm:$0xf]
      %v783 = vunpack.c.l.b16 %v751
      %v784 = vunpack.c.l.b16 %v752
      %v785 = vunpack.c.l.b16 %v753
      %v786 = vunpack.c.l.b16 %v754
      %v787 = vunpack.c.l.b16 %v755
      %v788 = vunpack.c.l.b16 %v756
      %v789 = vunpack.c.l.b16 %v757
      %v790 = vunpack.c.l.b16 %v758
      %v791 = vunpack.c.l.b16 %v759
      %v792 = vunpack.c.l.b16 %v760
      %v793 = vunpack.c.l.b16 %v761
      %v794 = vunpack.c.l.b16 %v762
      %v795 = vunpack.c.l.b16 %v763
      %v796 = vunpack.c.l.b16 %v764
      %v797 = vunpack.c.l.b16 %v765
      %v798 = vunpack.c.l.b16 %v766
      %v799 = vpack.c.b16 %v784, %v783
      %v800 = vpack.c.b16 %v786, %v785
      %v801 = vpack.c.b16 %v788, %v787
      %v802 = vpack.c.b16 %v790, %v789
      %v803 = vpack.c.b16 %v792, %v791
      %v804 = vpack.c.b16 %v794, %v793
      %v805 = vpack.c.b16 %v796, %v795
      %v806 = vpack.c.b16 %v798, %v797
      %815 = vmatprep.subr.bf16.mxu0 0
      %816 = vmatpush1.bf16.msra.mxu0 %v806
      %817 = vmatprep.subr.bf16.mxu0 0
      %818 = vmatpush1.bf16.msra.mxu0 %v805
      %819 = vmatprep.subr.bf16.mxu0 0
      %820 = vmatpush1.bf16.msra.mxu0 %v804
      %821 = vmatprep.subr.bf16.mxu0 0
      %822 = vmatpush1.bf16.msra.mxu0 %v803
      %823 = vmatprep.subr.bf16.mxu0 0
      %824 = vmatpush1.bf16.msra.mxu0 %v802
      %825 = vmatprep.subr.bf16.mxu0 0
      %826 = vmatpush1.bf16.msra.mxu0 %v801
      %827 = vmatprep.subr.bf16.mxu0 0
      %828 = vmatpush1.bf16.msra.mxu0 %v800
      %829 = vmatprep.subr.bf16.mxu0 0
      %830 = vmatpush1.bf16.msra.mxu0 %v799
      %831 = vmatprep.subr.bf16.mxu0 0
      %832 = vmatpush2.bf16.msra.mxu0 0
      %833 = vmatprep.subr.bf16.mxu0 0
      %834 = vmatpush2.bf16.msra.mxu0 0
      %835 = vmatprep.subr.bf16.mxu0 0
      %836 = vmatpush2.bf16.msra.mxu0 0
      %837 = vmatprep.subr.bf16.mxu0 0
      %838 = vmatpush2.bf16.msra.mxu0 0
      %839 = vmatprep.subr.bf16.mxu0 0
      %840 = vmatpush2.bf16.msra.mxu0 0
      %841 = vmatprep.subr.bf16.mxu0 0
      %842 = vmatpush2.bf16.msra.mxu0 0
      %843 = vmatprep.subr.bf16.mxu0 0
      %844 = vmatpush2.bf16.msra.mxu0 0
      %845 = vmatprep.subr.bf16.mxu0 0
      %846 = vmatpush2.bf16.msra.mxu0 0
      %847 = vmatprep.mubr.bf16.mxu0 0
      %848 = vmatmul.mubr.bf16.gmra.mxu0 %v335
      %v849 = vpop.f32.mrf.mxu0
      %v850 = vadd.f32 0.0, %v849
      %v851 = vpop.f32.mrf.mxu0
      %v852 = vpop.f32.mrf.mxu0
      %v853 = vadd.f32 0.0, %v852
      %v854 = vpop.f32.mrf.mxu0
      %855 = vmatprep.mubr.bf16.mxu0 0
      %856 = vmatmul.mubr.bf16.gmra.mxu0 %v336
      %v857 = vpop.f32.mrf.mxu0
      %v858 = vadd.f32 0.0, %v857
      %v859 = vpop.f32.mrf.mxu0
      %v860 = vpop.f32.mrf.mxu0
      %v861 = vadd.f32 0.0, %v860
      %v862 = vpop.f32.mrf.mxu0
      %863 = vmatprep.mubr.bf16.mxu0 0
      %864 = vmatmul.mubr.bf16.gmra.mxu0 %v337
      %v865 = vpop.f32.mrf.mxu0
      %v866 = vadd.f32 0.0, %v865
      %v867 = vpop.f32.mrf.mxu0
      %v868 = vpop.f32.mrf.mxu0
      %v869 = vadd.f32 0.0, %v868
      %v870 = vpop.f32.mrf.mxu0
      %871 = vmatprep.mubr.bf16.mxu0 0
      %872 = vmatmul.mubr.bf16.gmra.mxu0 %v338
      %v873 = vpop.f32.mrf.mxu0
      %v874 = vadd.f32 0.0, %v873
      %v875 = vpop.f32.mrf.mxu0
      %v876 = vpop.f32.mrf.mxu0
      %v877 = vadd.f32 0.0, %v876
      %v878 = vpop.f32.mrf.mxu0
      %879 = vmatprep.mubr.bf16.mxu0 0
      %880 = vmatmul.mubr.bf16.gmra.mxu0 %v339
      %v881 = vpop.f32.mrf.mxu0
      %v882 = vadd.f32 0.0, %v881
      %v883 = vpop.f32.mrf.mxu0
      %v884 = vpop.f32.mrf.mxu0
      %v885 = vadd.f32 0.0, %v884
      %v886 = vpop.f32.mrf.mxu0
      %887 = vmatprep.mubr.bf16.mxu0 0
      %888 = vmatmul.mubr.bf16.gmra.mxu0 %v340
      %v889 = vpop.f32.mrf.mxu0
      %v890 = vadd.f32 0.0, %v889
      %v891 = vpop.f32.mrf.mxu0
      %v892 = vpop.f32.mrf.mxu0
      %v893 = vadd.f32 0.0, %v892
      %v894 = vpop.f32.mrf.mxu0
      %895 = vmatprep.mubr.bf16.mxu0 0
      %896 = vmatmul.mubr.bf16.gmra.mxu0 %v341
      %v897 = vpop.f32.mrf.mxu0
      %v898 = vadd.f32 0.0, %v897
      %v899 = vpop.f32.mrf.mxu0
      %v900 = vpop.f32.mrf.mxu0
      %v901 = vpop.f32.mrf.mxu0
      %902 = vdwg.mxu0
      %903 = vst.msk [vmem:[#allocation3] sm:$0xff] %vm485, %v850
      %904 = vst.msk [vmem:[#allocation3 + $0x8] sm:$0xff] %vm485, %v853
      %905 = vst.msk [vmem:[#allocation3 + $0x10] sm:$0xff] %vm485, %v858
      %906 = vst.msk [vmem:[#allocation3 + $0x18] sm:$0xff] %vm485, %v861
      %907 = vst.msk [vmem:[#allocation3 + $0x20] sm:$0xff] %vm485, %v866
      %908 = vst.msk [vmem:[#allocation3 + $0x28] sm:$0xff] %vm485, %v869
      %909 = vst.msk [vmem:[#allocation3 + $0x30] sm:$0xff] %vm485, %v874
      %910 = vst.msk [vmem:[#allocation3 + $0x38] sm:$0xff] %vm485, %v877
      %911 = vst.msk [vmem:[#allocation3 + $0x40] sm:$0xff] %vm485, %v882
      %912 = vst.msk [vmem:[#allocation3 + $0x48] sm:$0xff] %vm485, %v885
      %913 = vst.msk [vmem:[#allocation3 + $0x50] sm:$0xff] %vm485, %v890
      %914 = vst.msk [vmem:[#allocation3 + $0x58] sm:$0xff] %vm485, %v893
      %915 = vst.msk [vmem:[#allocation3 + $0x60] sm:$0xf] %vm498, %v898
      %v916 = vld [vmem:[#allocation2] sm:$0xff]
      %v917 = vld [vmem:[#allocation2 + $0x8] sm:$0xff]
      %v918 = vld [vmem:[#allocation2 + $0x10] sm:$0xff]
      %v919 = vld [vmem:[#allocation2 + $0x18] sm:$0xff]
      %v920 = vld [vmem:[#allocation2 + $0x20] sm:$0xff]
      %v921 = vld [vmem:[#allocation2 + $0x28] sm:$0xff]
      %v922 = vld [vmem:[#allocation2 + $0x30] sm:$0xff]
      %v923 = vld [vmem:[#allocation2 + $0x38] sm:$0xff]
      %v924 = vld [vmem:[#allocation2 + $0x40] sm:$0xff]
      %v925 = vld [vmem:[#allocation2 + $0x48] sm:$0xff]
      %v926 = vld [vmem:[#allocation3 + $0x2] sm:$0xff]
      %v927 = vld [vmem:[#allocation3 + $0xa] sm:$0xff]
      %v928 = vld [vmem:[#allocation3 + $0x12] sm:$0xff]
      %v929 = vld [vmem:[#allocation3 + $0x1a] sm:$0xff]
      %v930 = vld [vmem:[#allocation3 + $0x22] sm:$0xff]
      %v931 = vld [vmem:[#allocation3 + $0x2a] sm:$0xff]
      %v932 = vld [vmem:[#allocation3 + $0x32] sm:$0xff]
      %v933 = vld [vmem:[#allocation3 + $0x3a] sm:$0xff]
      %v934 = vld [vmem:[#allocation3 + $0x42] sm:$0xff]
      %v935 = vld [vmem:[#allocation3 + $0x4a] sm:$0xff]
      %v936 = vadd.f32 %v916, %v926
      %v937 = vadd.f32 %v917, %v927
      %v938 = vadd.f32 %v918, %v928
      %v939 = vadd.f32 %v919, %v929
      %v940 = vadd.f32 %v920, %v930
      %v941 = vadd.f32 %v921, %v931
      %v942 = vadd.f32 %v922, %v932
      %v943 = vadd.f32 %v923, %v933
      %v944 = vadd.f32 %v924, %v934
      %v945 = vadd.f32 %v925, %v935
      %946 = vst.msk [vmem:[#allocation2] sm:$0xff] %vm485, %v936
      %947 = vst.msk [vmem:[#allocation2 + $0x8] sm:$0xff] %vm485, %v937
      %948 = vst.msk [vmem:[#allocation2 + $0x10] sm:$0xff] %vm485, %v938
      %949 = vst.msk [vmem:[#allocation2 + $0x18] sm:$0xff] %vm485, %v939
      %950 = vst.msk [vmem:[#allocation2 + $0x20] sm:$0xff] %vm485, %v940
      %951 = vst.msk [vmem:[#allocation2 + $0x28] sm:$0xff] %vm485, %v941
      %952 = vst.msk [vmem:[#allocation2 + $0x30] sm:$0xff] %vm485, %v942
      %953 = vst.msk [vmem:[#allocation2 + $0x38] sm:$0xff] %vm485, %v943
      %954 = vst.msk [vmem:[#allocation2 + $0x40] sm:$0xff] %vm485, %v944
      %955 = vst.msk [vmem:[#allocation2 + $0x48] sm:$0xff] %vm485, %v945
      %s956 = sadd.s32 48, %s290
      %s957 = smul.addr %s956, 4
      %s958 = scalar_lea.vmem %s1, %s957
      %v959 = vld [vmem:[%s958] sm:$0xf]
      %v960 = vld [vmem:[%s958 + $0x4] sm:$0xf]
      %v961 = vld [vmem:[%s958 + $0x8] sm:$0xf]
      %v962 = vld [vmem:[%s958 + $0xc] sm:$0xf]
      %v963 = vld [vmem:[%s958 + $0x10] sm:$0xf]
      %v964 = vld [vmem:[%s958 + $0x14] sm:$0xf]
      %v965 = vld [vmem:[%s958 + $0x18] sm:$0xf]
      %v966 = vld [vmem:[%s958 + $0x1c] sm:$0xf]
      %v967 = vld [vmem:[%s958 + $0x20] sm:$0xf]
      %v968 = vld [vmem:[%s958 + $0x24] sm:$0xf]
      %v969 = vld [vmem:[%s958 + $0x28] sm:$0xf]
      %v970 = vld [vmem:[%s958 + $0x2c] sm:$0xf]
      %v971 = vld [vmem:[%s958 + $0x30] sm:$0xf]
      %v972 = vld [vmem:[%s958 + $0x34] sm:$0xf]
      %v973 = vld [vmem:[%s958 + $0x38] sm:$0xf]
      %v974 = vld [vmem:[%s958 + $0x3c] sm:$0xf]
      %v991 = vunpack.c.l.b16 %v959
      %v992 = vunpack.c.l.b16 %v960
      %v993 = vunpack.c.l.b16 %v961
      %v994 = vunpack.c.l.b16 %v962
      %v995 = vunpack.c.l.b16 %v963
      %v996 = vunpack.c.l.b16 %v964
      %v997 = vunpack.c.l.b16 %v965
      %v998 = vunpack.c.l.b16 %v966
      %v999 = vunpack.c.l.b16 %v967
      %v1000 = vunpack.c.l.b16 %v968
      %v1001 = vunpack.c.l.b16 %v969
      %v1002 = vunpack.c.l.b16 %v970
      %v1003 = vunpack.c.l.b16 %v971
      %v1004 = vunpack.c.l.b16 %v972
      %v1005 = vunpack.c.l.b16 %v973
      %v1006 = vunpack.c.l.b16 %v974
      %v1007 = vpack.c.b16 %v992, %v991
      %v1008 = vpack.c.b16 %v994, %v993
      %v1009 = vpack.c.b16 %v996, %v995
      %v1010 = vpack.c.b16 %v998, %v997
      %v1011 = vpack.c.b16 %v1000, %v999
      %v1012 = vpack.c.b16 %v1002, %v1001
      %v1013 = vpack.c.b16 %v1004, %v1003
      %v1014 = vpack.c.b16 %v1006, %v1005
      %1023 = vmatprep.subr.bf16.mxu0 0
      %1024 = vmatpush1.bf16.msra.mxu0 %v1014
      %1025 = vmatprep.subr.bf16.mxu0 0
      %1026 = vmatpush1.bf16.msra.mxu0 %v1013
      %1027 = vmatprep.subr.bf16.mxu0 0
      %1028 = vmatpush1.bf16.msra.mxu0 %v1012
      %1029 = vmatprep.subr.bf16.mxu0 0
      %1030 = vmatpush1.bf16.msra.mxu0 %v1011
      %1031 = vmatprep.subr.bf16.mxu0 0
      %1032 = vmatpush1.bf16.msra.mxu0 %v1010
      %1033 = vmatprep.subr.bf16.mxu0 0
      %1034 = vmatpush1.bf16.msra.mxu0 %v1009
      %1035 = vmatprep.subr.bf16.mxu0 0
      %1036 = vmatpush1.bf16.msra.mxu0 %v1008
      %1037 = vmatprep.subr.bf16.mxu0 0
      %1038 = vmatpush1.bf16.msra.mxu0 %v1007
      %1039 = vmatprep.subr.bf16.mxu0 0
      %1040 = vmatpush2.bf16.msra.mxu0 0
      %1041 = vmatprep.subr.bf16.mxu0 0
      %1042 = vmatpush2.bf16.msra.mxu0 0
      %1043 = vmatprep.subr.bf16.mxu0 0
      %1044 = vmatpush2.bf16.msra.mxu0 0
      %1045 = vmatprep.subr.bf16.mxu0 0
      %1046 = vmatpush2.bf16.msra.mxu0 0
      %1047 = vmatprep.subr.bf16.mxu0 0
      %1048 = vmatpush2.bf16.msra.mxu0 0
      %1049 = vmatprep.subr.bf16.mxu0 0
      %1050 = vmatpush2.bf16.msra.mxu0 0
      %1051 = vmatprep.subr.bf16.mxu0 0
      %1052 = vmatpush2.bf16.msra.mxu0 0
      %1053 = vmatprep.subr.bf16.mxu0 0
      %1054 = vmatpush2.bf16.msra.mxu0 0
      %1055 = vmatprep.mubr.bf16.mxu0 0
      %1056 = vmatmul.mubr.bf16.gmra.mxu0 %v335
      %v1057 = vpop.f32.mrf.mxu0
      %v1058 = vadd.f32 0.0, %v1057
      %v1059 = vpop.f32.mrf.mxu0
      %v1060 = vpop.f32.mrf.mxu0
      %v1061 = vadd.f32 0.0, %v1060
      %v1062 = vpop.f32.mrf.mxu0
      %1063 = vmatprep.mubr.bf16.mxu0 0
      %1064 = vmatmul.mubr.bf16.gmra.mxu0 %v336
      %v1065 = vpop.f32.mrf.mxu0
      %v1066 = vadd.f32 0.0, %v1065
      %v1067 = vpop.f32.mrf.mxu0
      %v1068 = vpop.f32.mrf.mxu0
      %v1069 = vadd.f32 0.0, %v1068
      %v1070 = vpop.f32.mrf.mxu0
      %1071 = vmatprep.mubr.bf16.mxu0 0
      %1072 = vmatmul.mubr.bf16.gmra.mxu0 %v337
      %v1073 = vpop.f32.mrf.mxu0
      %v1074 = vadd.f32 0.0, %v1073
      %v1075 = vpop.f32.mrf.mxu0
      %v1076 = vpop.f32.mrf.mxu0
      %v1077 = vadd.f32 0.0, %v1076
      %v1078 = vpop.f32.mrf.mxu0
      %1079 = vmatprep.mubr.bf16.mxu0 0
      %1080 = vmatmul.mubr.bf16.gmra.mxu0 %v338
      %v1081 = vpop.f32.mrf.mxu0
      %v1082 = vadd.f32 0.0, %v1081
      %v1083 = vpop.f32.mrf.mxu0
      %v1084 = vpop.f32.mrf.mxu0
      %v1085 = vadd.f32 0.0, %v1084
      %v1086 = vpop.f32.mrf.mxu0
      %1087 = vmatprep.mubr.bf16.mxu0 0
      %1088 = vmatmul.mubr.bf16.gmra.mxu0 %v339
      %v1089 = vpop.f32.mrf.mxu0
      %v1090 = vadd.f32 0.0, %v1089
      %v1091 = vpop.f32.mrf.mxu0
      %v1092 = vpop.f32.mrf.mxu0
      %v1093 = vadd.f32 0.0, %v1092
      %v1094 = vpop.f32.mrf.mxu0
      %1095 = vmatprep.mubr.bf16.mxu0 0
      %1096 = vmatmul.mubr.bf16.gmra.mxu0 %v340
      %v1097 = vpop.f32.mrf.mxu0
      %v1098 = vadd.f32 0.0, %v1097
      %v1099 = vpop.f32.mrf.mxu0
      %v1100 = vpop.f32.mrf.mxu0
      %v1101 = vadd.f32 0.0, %v1100
      %v1102 = vpop.f32.mrf.mxu0
      %1103 = vmatprep.mubr.bf16.mxu0 0
      %1104 = vmatmul.mubr.bf16.gmra.mxu0 %v341
      %v1105 = vpop.f32.mrf.mxu0
      %v1106 = vadd.f32 0.0, %v1105
      %v1107 = vpop.f32.mrf.mxu0
      %v1108 = vpop.f32.mrf.mxu0
      %v1109 = vpop.f32.mrf.mxu0
      %1110 = vdwg.mxu0
      %1111 = vst.msk [vmem:[#allocation3] sm:$0xff] %vm485, %v1058
      %1112 = vst.msk [vmem:[#allocation3 + $0x8] sm:$0xff] %vm485, %v1061
      %1113 = vst.msk [vmem:[#allocation3 + $0x10] sm:$0xff] %vm485, %v1066
      %1114 = vst.msk [vmem:[#allocation3 + $0x18] sm:$0xff] %vm485, %v1069
      %1115 = vst.msk [vmem:[#allocation3 + $0x20] sm:$0xff] %vm485, %v1074
      %1116 = vst.msk [vmem:[#allocation3 + $0x28] sm:$0xff] %vm485, %v1077
      %1117 = vst.msk [vmem:[#allocation3 + $0x30] sm:$0xff] %vm485, %v1082
      %1118 = vst.msk [vmem:[#allocation3 + $0x38] sm:$0xff] %vm485, %v1085
      %1119 = vst.msk [vmem:[#allocation3 + $0x40] sm:$0xff] %vm485, %v1090
      %1120 = vst.msk [vmem:[#allocation3 + $0x48] sm:$0xff] %vm485, %v1093
      %1121 = vst.msk [vmem:[#allocation3 + $0x50] sm:$0xff] %vm485, %v1098
      %1122 = vst.msk [vmem:[#allocation3 + $0x58] sm:$0xff] %vm485, %v1101
      %1123 = vst.msk [vmem:[#allocation3 + $0x60] sm:$0xf] %vm498, %v1106
      %v1124 = vld [vmem:[#allocation2] sm:$0xff]
      %v1125 = vld [vmem:[#allocation2 + $0x8] sm:$0xff]
      %v1126 = vld [vmem:[#allocation2 + $0x10] sm:$0xff]
      %v1127 = vld [vmem:[#allocation2 + $0x18] sm:$0xff]
      %v1128 = vld [vmem:[#allocation2 + $0x20] sm:$0xff]
      %v1129 = vld [vmem:[#allocation2 + $0x28] sm:$0xff]
      %v1130 = vld [vmem:[#allocation2 + $0x30] sm:$0xff]
      %v1131 = vld [vmem:[#allocation2 + $0x38] sm:$0xff]
      %v1132 = vld [vmem:[#allocation2 + $0x40] sm:$0xff]
      %v1133 = vld [vmem:[#allocation2 + $0x48] sm:$0xff]
      %v1134 = vld [vmem:[#allocation3 + $0xa] sm:$0xff]
      %v1135 = vld [vmem:[#allocation3 + $0x12] sm:$0xff]
      %v1136 = vld [vmem:[#allocation3 + $0x1a] sm:$0xff]
      %v1137 = vld [vmem:[#allocation3 + $0x22] sm:$0xff]
      %v1138 = vld [vmem:[#allocation3 + $0x2a] sm:$0xff]
      %v1139 = vld [vmem:[#allocation3 + $0x32] sm:$0xff]
      %v1140 = vld [vmem:[#allocation3 + $0x3a] sm:$0xff]
      %v1141 = vld [vmem:[#allocation3 + $0x42] sm:$0xff]
      %v1142 = vld [vmem:[#allocation3 + $0x4a] sm:$0xff]
      %v1143 = vld [vmem:[#allocation3 + $0x52] sm:$0xff]
      %v1144 = vadd.f32 %v1124, %v1134
      %v1145 = vadd.f32 %v1125, %v1135
      %v1146 = vadd.f32 %v1126, %v1136
      %v1147 = vadd.f32 %v1127, %v1137
      %v1148 = vadd.f32 %v1128, %v1138
      %v1149 = vadd.f32 %v1129, %v1139
      %v1150 = vadd.f32 %v1130, %v1140
      %v1151 = vadd.f32 %v1131, %v1141
      %v1152 = vadd.f32 %v1132, %v1142
      %v1153 = vadd.f32 %v1133, %v1143
      %1154 = vst.msk [vmem:[#allocation2] sm:$0xff] %vm485, %v1144
      %1155 = vst.msk [vmem:[#allocation2 + $0x8] sm:$0xff] %vm485, %v1145
      %1156 = vst.msk [vmem:[#allocation2 + $0x10] sm:$0xff] %vm485, %v1146
      %1157 = vst.msk [vmem:[#allocation2 + $0x18] sm:$0xff] %vm485, %v1147
      %1158 = vst.msk [vmem:[#allocation2 + $0x20] sm:$0xff] %vm485, %v1148
      %1159 = vst.msk [vmem:[#allocation2 + $0x28] sm:$0xff] %vm485, %v1149
      %1160 = vst.msk [vmem:[#allocation2 + $0x30] sm:$0xff] %vm485, %v1150
      %1161 = vst.msk [vmem:[#allocation2 + $0x38] sm:$0xff] %vm485, %v1151
      %1162 = vst.msk [vmem:[#allocation2 + $0x40] sm:$0xff] %vm485, %v1152
      %1163 = vst.msk [vmem:[#allocation2 + $0x48] sm:$0xff] %vm485, %v1153
      %s1164 = sadd.s32 64, %s290
      %s1165 = smul.addr %s1164, 4
      %s1166 = scalar_lea.vmem %s1, %s1165
      %v1167 = vld [vmem:[%s1166] sm:$0xf]
      %v1168 = vld [vmem:[%s1166 + $0x4] sm:$0xf]
      %v1169 = vld [vmem:[%s1166 + $0x8] sm:$0xf]
      %v1170 = vld [vmem:[%s1166 + $0xc] sm:$0xf]
      %v1171 = vld [vmem:[%s1166 + $0x10] sm:$0xf]
      %v1172 = vld [vmem:[%s1166 + $0x14] sm:$0xf]
      %v1173 = vld [vmem:[%s1166 + $0x18] sm:$0xf]
      %v1174 = vld [vmem:[%s1166 + $0x1c] sm:$0xf]
      %v1175 = vld [vmem:[%s1166 + $0x20] sm:$0xf]
      %v1176 = vld [vmem:[%s1166 + $0x24] sm:$0xf]
      %v1177 = vld [vmem:[%s1166 + $0x28] sm:$0xf]
      %v1178 = vld [vmem:[%s1166 + $0x2c] sm:$0xf]
      %v1179 = vld [vmem:[%s1166 + $0x30] sm:$0xf]
      %v1180 = vld [vmem:[%s1166 + $0x34] sm:$0xf]
      %v1181 = vld [vmem:[%s1166 + $0x38] sm:$0xf]
      %v1182 = vld [vmem:[%s1166 + $0x3c] sm:$0xf]
      %v1199 = vunpack.c.l.b16 %v1167
      %v1200 = vunpack.c.l.b16 %v1168
      %v1201 = vunpack.c.l.b16 %v1169
      %v1202 = vunpack.c.l.b16 %v1170
      %v1203 = vunpack.c.l.b16 %v1171
      %v1204 = vunpack.c.l.b16 %v1172
      %v1205 = vunpack.c.l.b16 %v1173
      %v1206 = vunpack.c.l.b16 %v1174
      %v1207 = vunpack.c.l.b16 %v1175
      %v1208 = vunpack.c.l.b16 %v1176
      %v1209 = vunpack.c.l.b16 %v1177
      %v1210 = vunpack.c.l.b16 %v1178
      %v1211 = vunpack.c.l.b16 %v1179
      %v1212 = vunpack.c.l.b16 %v1180
      %v1213 = vunpack.c.l.b16 %v1181
      %v1214 = vunpack.c.l.b16 %v1182
      %v1215 = vpack.c.b16 %v1200, %v1199
      %v1216 = vpack.c.b16 %v1202, %v1201
      %v1217 = vpack.c.b16 %v1204, %v1203
      %v1218 = vpack.c.b16 %v1206, %v1205
      %v1219 = vpack.c.b16 %v1208, %v1207
      %v1220 = vpack.c.b16 %v1210, %v1209
      %v1221 = vpack.c.b16 %v1212, %v1211
      %v1222 = vpack.c.b16 %v1214, %v1213
      %1231 = vmatprep.subr.bf16.mxu0 0
      %1232 = vmatpush1.bf16.msra.mxu0 %v1222
      %1233 = vmatprep.subr.bf16.mxu0 0
      %1234 = vmatpush1.bf16.msra.mxu0 %v1221
      %1235 = vmatprep.subr.bf16.mxu0 0
      %1236 = vmatpush1.bf16.msra.mxu0 %v1220
      %1237 = vmatprep.subr.bf16.mxu0 0
      %1238 = vmatpush1.bf16.msra.mxu0 %v1219
      %1239 = vmatprep.subr.bf16.mxu0 0
      %1240 = vmatpush1.bf16.msra.mxu0 %v1218
      %1241 = vmatprep.subr.bf16.mxu0 0
      %1242 = vmatpush1.bf16.msra.mxu0 %v1217
      %1243 = vmatprep.subr.bf16.mxu0 0
      %1244 = vmatpush1.bf16.msra.mxu0 %v1216
      %1245 = vmatprep.subr.bf16.mxu0 0
      %1246 = vmatpush1.bf16.msra.mxu0 %v1215
      %1247 = vmatprep.subr.bf16.mxu0 0
      %1248 = vmatpush2.bf16.msra.mxu0 0
      %1249 = vmatprep.subr.bf16.mxu0 0
      %1250 = vmatpush2.bf16.msra.mxu0 0
      %1251 = vmatprep.subr.bf16.mxu0 0
      %1252 = vmatpush2.bf16.msra.mxu0 0
      %1253 = vmatprep.subr.bf16.mxu0 0
      %1254 = vmatpush2.bf16.msra.mxu0 0
      %1255 = vmatprep.subr.bf16.mxu0 0
      %1256 = vmatpush2.bf16.msra.mxu0 0
      %1257 = vmatprep.subr.bf16.mxu0 0
      %1258 = vmatpush2.bf16.msra.mxu0 0
      %1259 = vmatprep.subr.bf16.mxu0 0
      %1260 = vmatpush2.bf16.msra.mxu0 0
      %1261 = vmatprep.subr.bf16.mxu0 0
      %1262 = vmatpush2.bf16.msra.mxu0 0
      %1263 = vmatprep.mubr.bf16.mxu0 0
      %1264 = vmatmul.mubr.bf16.gmra.mxu0 %v335
      %v1265 = vpop.f32.mrf.mxu0
      %v1266 = vadd.f32 0.0, %v1265
      %v1267 = vpop.f32.mrf.mxu0
      %v1268 = vpop.f32.mrf.mxu0
      %v1269 = vadd.f32 0.0, %v1268
      %v1270 = vpop.f32.mrf.mxu0
      %1271 = vmatprep.mubr.bf16.mxu0 0
      %1272 = vmatmul.mubr.bf16.gmra.mxu0 %v336
      %v1273 = vpop.f32.mrf.mxu0
      %v1274 = vadd.f32 0.0, %v1273
      %v1275 = vpop.f32.mrf.mxu0
      %v1276 = vpop.f32.mrf.mxu0
      %v1277 = vadd.f32 0.0, %v1276
      %v1278 = vpop.f32.mrf.mxu0
      %1279 = vmatprep.mubr.bf16.mxu0 0
      %1280 = vmatmul.mubr.bf16.gmra.mxu0 %v337
      %v1281 = vpop.f32.mrf.mxu0
      %v1282 = vadd.f32 0.0, %v1281
      %v1283 = vpop.f32.mrf.mxu0
      %v1284 = vpop.f32.mrf.mxu0
      %v1285 = vadd.f32 0.0, %v1284
      %v1286 = vpop.f32.mrf.mxu0
      %1287 = vmatprep.mubr.bf16.mxu0 0
      %1288 = vmatmul.mubr.bf16.gmra.mxu0 %v338
      %v1289 = vpop.f32.mrf.mxu0
      %v1290 = vadd.f32 0.0, %v1289
      %v1291 = vpop.f32.mrf.mxu0
      %v1292 = vpop.f32.mrf.mxu0
      %v1293 = vadd.f32 0.0, %v1292
      %v1294 = vpop.f32.mrf.mxu0
      %1295 = vmatprep.mubr.bf16.mxu0 0
      %1296 = vmatmul.mubr.bf16.gmra.mxu0 %v339
      %v1297 = vpop.f32.mrf.mxu0
      %v1298 = vadd.f32 0.0, %v1297
      %v1299 = vpop.f32.mrf.mxu0
      %v1300 = vpop.f32.mrf.mxu0
      %v1301 = vadd.f32 0.0, %v1300
      %v1302 = vpop.f32.mrf.mxu0
      %1303 = vmatprep.mubr.bf16.mxu0 0
      %1304 = vmatmul.mubr.bf16.gmra.mxu0 %v340
      %v1305 = vpop.f32.mrf.mxu0
      %v1306 = vadd.f32 0.0, %v1305
      %v1307 = vpop.f32.mrf.mxu0
      %v1308 = vpop.f32.mrf.mxu0
      %v1309 = vadd.f32 0.0, %v1308
      %v1310 = vpop.f32.mrf.mxu0
      %1311 = vmatprep.mubr.bf16.mxu0 0
      %1312 = vmatmul.mubr.bf16.gmra.mxu0 %v341
      %v1313 = vpop.f32.mrf.mxu0
      %v1314 = vadd.f32 0.0, %v1313
      %v1315 = vpop.f32.mrf.mxu0
      %v1316 = vpop.f32.mrf.mxu0
      %v1317 = vpop.f32.mrf.mxu0
      %1318 = vdwg.mxu0
      %1319 = vst.msk [vmem:[#allocation3] sm:$0xff] %vm485, %v1266
      %1320 = vst.msk [vmem:[#allocation3 + $0x8] sm:$0xff] %vm485, %v1269
      %1321 = vst.msk [vmem:[#allocation3 + $0x10] sm:$0xff] %vm485, %v1274
      %1322 = vst.msk [vmem:[#allocation3 + $0x18] sm:$0xff] %vm485, %v1277
      %1323 = vst.msk [vmem:[#allocation3 + $0x20] sm:$0xff] %vm485, %v1282
      %1324 = vst.msk [vmem:[#allocation3 + $0x28] sm:$0xff] %vm485, %v1285
      %1325 = vst.msk [vmem:[#allocation3 + $0x30] sm:$0xff] %vm485, %v1290
      %1326 = vst.msk [vmem:[#allocation3 + $0x38] sm:$0xff] %vm485, %v1293
      %1327 = vst.msk [vmem:[#allocation3 + $0x40] sm:$0xff] %vm485, %v1298
      %1328 = vst.msk [vmem:[#allocation3 + $0x48] sm:$0xff] %vm485, %v1301
      %1329 = vst.msk [vmem:[#allocation3 + $0x50] sm:$0xff] %vm485, %v1306
      %1330 = vst.msk [vmem:[#allocation3 + $0x58] sm:$0xff] %vm485, %v1309
      %1331 = vst.msk [vmem:[#allocation3 + $0x60] sm:$0xf] %vm498, %v1314
      %v1332 = vld [vmem:[#allocation2] sm:$0xff]
      %v1333 = vld [vmem:[#allocation2 + $0x8] sm:$0xff]
      %v1334 = vld [vmem:[#allocation2 + $0x10] sm:$0xff]
      %v1335 = vld [vmem:[#allocation2 + $0x18] sm:$0xff]
      %v1336 = vld [vmem:[#allocation2 + $0x20] sm:$0xff]
      %v1337 = vld [vmem:[#allocation2 + $0x28] sm:$0xff]
      %v1338 = vld [vmem:[#allocation2 + $0x30] sm:$0xff]
      %v1339 = vld [vmem:[#allocation2 + $0x38] sm:$0xff]
      %v1340 = vld [vmem:[#allocation2 + $0x40] sm:$0xff]
      %v1341 = vld [vmem:[#allocation2 + $0x48] sm:$0xff]
      %v1342 = vld [vmem:[#allocation3 + $0xb] sm:$0xff]
      %v1343 = vld [vmem:[#allocation3 + $0x13] sm:$0xff]
      %v1344 = vld [vmem:[#allocation3 + $0x1b] sm:$0xff]
      %v1345 = vld [vmem:[#allocation3 + $0x23] sm:$0xff]
      %v1346 = vld [vmem:[#allocation3 + $0x2b] sm:$0xff]
      %v1347 = vld [vmem:[#allocation3 + $0x33] sm:$0xff]
      %v1348 = vld [vmem:[#allocation3 + $0x3b] sm:$0xff]
      %v1349 = vld [vmem:[#allocation3 + $0x43] sm:$0xff]
      %v1350 = vld [vmem:[#allocation3 + $0x4b] sm:$0xff]
      %v1351 = vld [vmem:[#allocation3 + $0x53] sm:$0xff]
      %v1352 = vadd.f32 %v1332, %v1342
      %v1353 = vadd.f32 %v1333, %v1343
      %v1354 = vadd.f32 %v1334, %v1344
      %v1355 = vadd.f32 %v1335, %v1345
      %v1356 = vadd.f32 %v1336, %v1346
      %v1357 = vadd.f32 %v1337, %v1347
      %v1358 = vadd.f32 %v1338, %v1348
      %v1359 = vadd.f32 %v1339, %v1349
      %v1360 = vadd.f32 %v1340, %v1350
      %v1361 = vadd.f32 %v1341, %v1351
      %1362 = vst.msk [vmem:[#allocation2] sm:$0xff] %vm485, %v1352
      %1363 = vst.msk [vmem:[#allocation2 + $0x8] sm:$0xff] %vm485, %v1353
      %1364 = vst.msk [vmem:[#allocation2 + $0x10] sm:$0xff] %vm485, %v1354
      %1365 = vst.msk [vmem:[#allocation2 + $0x18] sm:$0xff] %vm485, %v1355
      %1366 = vst.msk [vmem:[#allocation2 + $0x20] sm:$0xff] %vm485, %v1356
      %1367 = vst.msk [vmem:[#allocation2 + $0x28] sm:$0xff] %vm485, %v1357
      %1368 = vst.msk [vmem:[#allocation2 + $0x30] sm:$0xff] %vm485, %v1358
      %1369 = vst.msk [vmem:[#allocation2 + $0x38] sm:$0xff] %vm485, %v1359
      %1370 = vst.msk [vmem:[#allocation2 + $0x40] sm:$0xff] %vm485, %v1360
      %1371 = vst.msk [vmem:[#allocation2 + $0x48] sm:$0xff] %vm485, %v1361
      %s1372 = sadd.s32 80, %s290
      %s1373 = smul.addr %s1372, 4
      %s1374 = scalar_lea.vmem %s1, %s1373
      %v1375 = vld [vmem:[%s1374] sm:$0xf]
      %v1376 = vld [vmem:[%s1374 + $0x4] sm:$0xf]
      %v1377 = vld [vmem:[%s1374 + $0x8] sm:$0xf]
      %v1378 = vld [vmem:[%s1374 + $0xc] sm:$0xf]
      %v1379 = vld [vmem:[%s1374 + $0x10] sm:$0xf]
      %v1380 = vld [vmem:[%s1374 + $0x14] sm:$0xf]
      %v1381 = vld [vmem:[%s1374 + $0x18] sm:$0xf]
      %v1382 = vld [vmem:[%s1374 + $0x1c] sm:$0xf]
      %v1383 = vld [vmem:[%s1374 + $0x20] sm:$0xf]
      %v1384 = vld [vmem:[%s1374 + $0x24] sm:$0xf]
      %v1385 = vld [vmem:[%s1374 + $0x28] sm:$0xf]
      %v1386 = vld [vmem:[%s1374 + $0x2c] sm:$0xf]
      %v1387 = vld [vmem:[%s1374 + $0x30] sm:$0xf]
      %v1388 = vld [vmem:[%s1374 + $0x34] sm:$0xf]
      %v1389 = vld [vmem:[%s1374 + $0x38] sm:$0xf]
      %v1390 = vld [vmem:[%s1374 + $0x3c] sm:$0xf]
      %v1407 = vunpack.c.l.b16 %v1375
      %v1408 = vunpack.c.l.b16 %v1376
      %v1409 = vunpack.c.l.b16 %v1377
      %v1410 = vunpack.c.l.b16 %v1378
      %v1411 = vunpack.c.l.b16 %v1379
      %v1412 = vunpack.c.l.b16 %v1380
      %v1413 = vunpack.c.l.b16 %v1381
      %v1414 = vunpack.c.l.b16 %v1382
      %v1415 = vunpack.c.l.b16 %v1383
      %v1416 = vunpack.c.l.b16 %v1384
      %v1417 = vunpack.c.l.b16 %v1385
      %v1418 = vunpack.c.l.b16 %v1386
      %v1419 = vunpack.c.l.b16 %v1387
      %v1420 = vunpack.c.l.b16 %v1388
      %v1421 = vunpack.c.l.b16 %v1389
      %v1422 = vunpack.c.l.b16 %v1390
      %v1423 = vpack.c.b16 %v1408, %v1407
      %v1424 = vpack.c.b16 %v1410, %v1409
      %v1425 = vpack.c.b16 %v1412, %v1411
      %v1426 = vpack.c.b16 %v1414, %v1413
      %v1427 = vpack.c.b16 %v1416, %v1415
      %v1428 = vpack.c.b16 %v1418, %v1417
      %v1429 = vpack.c.b16 %v1420, %v1419
      %v1430 = vpack.c.b16 %v1422, %v1421
      %1439 = vmatprep.subr.bf16.mxu0 0
      %1440 = vmatpush1.bf16.msra.mxu0 %v1430
      %1441 = vmatprep.subr.bf16.mxu0 0
      %1442 = vmatpush1.bf16.msra.mxu0 %v1429
      %1443 = vmatprep.subr.bf16.mxu0 0
      %1444 = vmatpush1.bf16.msra.mxu0 %v1428
      %1445 = vmatprep.subr.bf16.mxu0 0
      %1446 = vmatpush1.bf16.msra.mxu0 %v1427
      %1447 = vmatprep.subr.bf16.mxu0 0
      %1448 = vmatpush1.bf16.msra.mxu0 %v1426
      %1449 = vmatprep.subr.bf16.mxu0 0
      %1450 = vmatpush1.bf16.msra.mxu0 %v1425
      %1451 = vmatprep.subr.bf16.mxu0 0
      %1452 = vmatpush1.bf16.msra.mxu0 %v1424
      %1453 = vmatprep.subr.bf16.mxu0 0
      %1454 = vmatpush1.bf16.msra.mxu0 %v1423
      %1455 = vmatprep.subr.bf16.mxu0 0
      %1456 = vmatpush2.bf16.msra.mxu0 0
      %1457 = vmatprep.subr.bf16.mxu0 0
      %1458 = vmatpush2.bf16.msra.mxu0 0
      %1459 = vmatprep.subr.bf16.mxu0 0
      %1460 = vmatpush2.bf16.msra.mxu0 0
      %1461 = vmatprep.subr.bf16.mxu0 0
      %1462 = vmatpush2.bf16.msra.mxu0 0
      %1463 = vmatprep.subr.bf16.mxu0 0
      %1464 = vmatpush2.bf16.msra.mxu0 0
      %1465 = vmatprep.subr.bf16.mxu0 0
      %1466 = vmatpush2.bf16.msra.mxu0 0
      %1467 = vmatprep.subr.bf16.mxu0 0
      %1468 = vmatpush2.bf16.msra.mxu0 0
      %1469 = vmatprep.subr.bf16.mxu0 0
      %1470 = vmatpush2.bf16.msra.mxu0 0
      %1471 = vmatprep.mubr.bf16.mxu0 0
      %1472 = vmatmul.mubr.bf16.gmra.mxu0 %v335
      %v1473 = vpop.f32.mrf.mxu0
      %v1474 = vadd.f32 0.0, %v1473
      %v1475 = vpop.f32.mrf.mxu0
      %v1476 = vpop.f32.mrf.mxu0
      %v1477 = vadd.f32 0.0, %v1476
      %v1478 = vpop.f32.mrf.mxu0
      %1479 = vmatprep.mubr.bf16.mxu0 0
      %1480 = vmatmul.mubr.bf16.gmra.mxu0 %v336
      %v1481 = vpop.f32.mrf.mxu0
      %v1482 = vadd.f32 0.0, %v1481
      %v1483 = vpop.f32.mrf.mxu0
      %v1484 = vpop.f32.mrf.mxu0
      %v1485 = vadd.f32 0.0, %v1484
      %v1486 = vpop.f32.mrf.mxu0
      %1487 = vmatprep.mubr.bf16.mxu0 0
      %1488 = vmatmul.mubr.bf16.gmra.mxu0 %v337
      %v1489 = vpop.f32.mrf.mxu0
      %v1490 = vadd.f32 0.0, %v1489
      %v1491 = vpop.f32.mrf.mxu0
      %v1492 = vpop.f32.mrf.mxu0
      %v1493 = vadd.f32 0.0, %v1492
      %v1494 = vpop.f32.mrf.mxu0
      %1495 = vmatprep.mubr.bf16.mxu0 0
      %1496 = vmatmul.mubr.bf16.gmra.mxu0 %v338
      %v1497 = vpop.f32.mrf.mxu0
      %v1498 = vadd.f32 0.0, %v1497
      %v1499 = vpop.f32.mrf.mxu0
      %v1500 = vpop.f32.mrf.mxu0
      %v1501 = vadd.f32 0.0, %v1500
      %v1502 = vpop.f32.mrf.mxu0
      %1503 = vmatprep.mubr.bf16.mxu0 0
      %1504 = vmatmul.mubr.bf16.gmra.mxu0 %v339
      %v1505 = vpop.f32.mrf.mxu0
      %v1506 = vadd.f32 0.0, %v1505
      %v1507 = vpop.f32.mrf.mxu0
      %v1508 = vpop.f32.mrf.mxu0
      %v1509 = vadd.f32 0.0, %v1508
      %v1510 = vpop.f32.mrf.mxu0
      %1511 = vmatprep.mubr.bf16.mxu0 0
      %1512 = vmatmul.mubr.bf16.gmra.mxu0 %v340
      %v1513 = vpop.f32.mrf.mxu0
      %v1514 = vadd.f32 0.0, %v1513
      %v1515 = vpop.f32.mrf.mxu0
      %v1516 = vpop.f32.mrf.mxu0
      %v1517 = vadd.f32 0.0, %v1516
      %v1518 = vpop.f32.mrf.mxu0
      %1519 = vmatprep.mubr.bf16.mxu0 0
      %1520 = vmatmul.mubr.bf16.gmra.mxu0 %v341
      %v1521 = vpop.f32.mrf.mxu0
      %v1522 = vadd.f32 0.0, %v1521
      %v1523 = vpop.f32.mrf.mxu0
      %v1524 = vpop.f32.mrf.mxu0
      %v1525 = vpop.f32.mrf.mxu0
      %1526 = vdwg.mxu0
      %1527 = vst.msk [vmem:[#allocation3] sm:$0xff] %vm485, %v1474
      %1528 = vst.msk [vmem:[#allocation3 + $0x8] sm:$0xff] %vm485, %v1477
      %1529 = vst.msk [vmem:[#allocation3 + $0x10] sm:$0xff] %vm485, %v1482
      %1530 = vst.msk [vmem:[#allocation3 + $0x18] sm:$0xff] %vm485, %v1485
      %1531 = vst.msk [vmem:[#allocation3 + $0x20] sm:$0xff] %vm485, %v1490
      %1532 = vst.msk [vmem:[#allocation3 + $0x28] sm:$0xff] %vm485, %v1493
      %1533 = vst.msk [vmem:[#allocation3 + $0x30] sm:$0xff] %vm485, %v1498
      %1534 = vst.msk [vmem:[#allocation3 + $0x38] sm:$0xff] %vm485, %v1501
      %1535 = vst.msk [vmem:[#allocation3 + $0x40] sm:$0xff] %vm485, %v1506
      %1536 = vst.msk [vmem:[#allocation3 + $0x48] sm:$0xff] %vm485, %v1509
      %1537 = vst.msk [vmem:[#allocation3 + $0x50] sm:$0xff] %vm485, %v1514
      %1538 = vst.msk [vmem:[#allocation3 + $0x58] sm:$0xff] %vm485, %v1517
      %1539 = vst.msk [vmem:[#allocation3 + $0x60] sm:$0xf] %vm498, %v1522
      %v1540 = vld [vmem:[#allocation2] sm:$0xff]
      %v1541 = vld [vmem:[#allocation2 + $0x8] sm:$0xff]
      %v1542 = vld [vmem:[#allocation2 + $0x10] sm:$0xff]
      %v1543 = vld [vmem:[#allocation2 + $0x18] sm:$0xff]
      %v1544 = vld [vmem:[#allocation2 + $0x20] sm:$0xff]
      %v1545 = vld [vmem:[#allocation2 + $0x28] sm:$0xff]
      %v1546 = vld [vmem:[#allocation2 + $0x30] sm:$0xff]
      %v1547 = vld [vmem:[#allocation2 + $0x38] sm:$0xff]
      %v1548 = vld [vmem:[#allocation2 + $0x40] sm:$0xff]
      %v1549 = vld [vmem:[#allocation2 + $0x48] sm:$0xff]
      %v1550 = vld [vmem:[#allocation3 + $0xc] sm:$0xff]
      %v1551 = vld [vmem:[#allocation3 + $0x14] sm:$0xff]
      %v1552 = vld [vmem:[#allocation3 + $0x1c] sm:$0xff]
      %v1553 = vld [vmem:[#allocation3 + $0x24] sm:$0xff]
      %v1554 = vld [vmem:[#allocation3 + $0x2c] sm:$0xff]
      %v1555 = vld [vmem:[#allocation3 + $0x34] sm:$0xff]
      %v1556 = vld [vmem:[#allocation3 + $0x3c] sm:$0xff]
      %v1557 = vld [vmem:[#allocation3 + $0x44] sm:$0xff]
      %v1558 = vld [vmem:[#allocation3 + $0x4c] sm:$0xff]
      %v1559 = vld [vmem:[#allocation3 + $0x54] sm:$0xff]
      %v1560 = vadd.f32 %v1540, %v1550
      %v1561 = vadd.f32 %v1541, %v1551
      %v1562 = vadd.f32 %v1542, %v1552
      %v1563 = vadd.f32 %v1543, %v1553
      %v1564 = vadd.f32 %v1544, %v1554
      %v1565 = vadd.f32 %v1545, %v1555
      %v1566 = vadd.f32 %v1546, %v1556
      %v1567 = vadd.f32 %v1547, %v1557
      %v1568 = vadd.f32 %v1548, %v1558
      %v1569 = vadd.f32 %v1549, %v1559
      %1570 = vst.msk [vmem:[#allocation2] sm:$0xff] %vm485, %v1560
      %1571 = vst.msk [vmem:[#allocation2 + $0x8] sm:$0xff] %vm485, %v1561
      %1572 = vst.msk [vmem:[#allocation2 + $0x10] sm:$0xff] %vm485, %v1562
      %1573 = vst.msk [vmem:[#allocation2 + $0x18] sm:$0xff] %vm485, %v1563
      %1574 = vst.msk [vmem:[#allocation2 + $0x20] sm:$0xff] %vm485, %v1564
      %1575 = vst.msk [vmem:[#allocation2 + $0x28] sm:$0xff] %vm485, %v1565
      %1576 = vst.msk [vmem:[#allocation2 + $0x30] sm:$0xff] %vm485, %v1566
      %1577 = vst.msk [vmem:[#allocation2 + $0x38] sm:$0xff] %vm485, %v1567
      %1578 = vst.msk [vmem:[#allocation2 + $0x40] sm:$0xff] %vm485, %v1568
      %1579 = vst.msk [vmem:[#allocation2 + $0x48] sm:$0xff] %vm485, %v1569
      %s1580 = sadd.s32 96, %s290
      %s1581 = smul.addr %s1580, 4
      %s1582 = scalar_lea.vmem %s1, %s1581
      %v1583 = vld [vmem:[%s1582] sm:$0xf]
      %v1584 = vld [vmem:[%s1582 + $0x4] sm:$0xf]
      %v1585 = vld [vmem:[%s1582 + $0x8] sm:$0xf]
      %v1586 = vld [vmem:[%s1582 + $0xc] sm:$0xf]
      %v1587 = vld [vmem:[%s1582 + $0x10] sm:$0xf]
      %v1588 = vld [vmem:[%s1582 + $0x14] sm:$0xf]
      %v1589 = vld [vmem:[%s1582 + $0x18] sm:$0xf]
      %v1590 = vld [vmem:[%s1582 + $0x1c] sm:$0xf]
      %v1591 = vld [vmem:[%s1582 + $0x20] sm:$0xf]
      %v1592 = vld [vmem:[%s1582 + $0x24] sm:$0xf]
      %v1593 = vld [vmem:[%s1582 + $0x28] sm:$0xf]
      %v1594 = vld [vmem:[%s1582 + $0x2c] sm:$0xf]
      %v1595 = vld [vmem:[%s1582 + $0x30] sm:$0xf]
      %v1596 = vld [vmem:[%s1582 + $0x34] sm:$0xf]
      %v1597 = vld [vmem:[%s1582 + $0x38] sm:$0xf]
      %v1598 = vld [vmem:[%s1582 + $0x3c] sm:$0xf]
      %v1615 = vunpack.c.l.b16 %v1583
      %v1616 = vunpack.c.l.b16 %v1584
      %v1617 = vunpack.c.l.b16 %v1585
      %v1618 = vunpack.c.l.b16 %v1586
      %v1619 = vunpack.c.l.b16 %v1587
      %v1620 = vunpack.c.l.b16 %v1588
      %v1621 = vunpack.c.l.b16 %v1589
      %v1622 = vunpack.c.l.b16 %v1590
      %v1623 = vunpack.c.l.b16 %v1591
      %v1624 = vunpack.c.l.b16 %v1592
      %v1625 = vunpack.c.l.b16 %v1593
      %v1626 = vunpack.c.l.b16 %v1594
      %v1627 = vunpack.c.l.b16 %v1595
      %v1628 = vunpack.c.l.b16 %v1596
      %v1629 = vunpack.c.l.b16 %v1597
      %v1630 = vunpack.c.l.b16 %v1598
      %v1631 = vpack.c.b16 %v1616, %v1615
      %v1632 = vpack.c.b16 %v1618, %v1617
      %v1633 = vpack.c.b16 %v1620, %v1619
      %v1634 = vpack.c.b16 %v1622, %v1621
      %v1635 = vpack.c.b16 %v1624, %v1623
      %v1636 = vpack.c.b16 %v1626, %v1625
      %v1637 = vpack.c.b16 %v1628, %v1627
      %v1638 = vpack.c.b16 %v1630, %v1629
      %1647 = vmatprep.subr.bf16.mxu0 0
      %1648 = vmatpush1.bf16.msra.mxu0 %v1638
      %1649 = vmatprep.subr.bf16.mxu0 0
      %1650 = vmatpush1.bf16.msra.mxu0 %v1637
      %1651 = vmatprep.subr.bf16.mxu0 0
      %1652 = vmatpush1.bf16.msra.mxu0 %v1636
      %1653 = vmatprep.subr.bf16.mxu0 0
      %1654 = vmatpush1.bf16.msra.mxu0 %v1635
      %1655 = vmatprep.subr.bf16.mxu0 0
      %1656 = vmatpush1.bf16.msra.mxu0 %v1634
      %1657 = vmatprep.subr.bf16.mxu0 0
      %1658 = vmatpush1.bf16.msra.mxu0 %v1633
      %1659 = vmatprep.subr.bf16.mxu0 0
      %1660 = vmatpush1.bf16.msra.mxu0 %v1632
      %1661 = vmatprep.subr.bf16.mxu0 0
      %1662 = vmatpush1.bf16.msra.mxu0 %v1631
      %1663 = vmatprep.subr.bf16.mxu0 0
      %1664 = vmatpush2.bf16.msra.mxu0 0
      %1665 = vmatprep.subr.bf16.mxu0 0
      %1666 = vmatpush2.bf16.msra.mxu0 0
      %1667 = vmatprep.subr.bf16.mxu0 0
      %1668 = vmatpush2.bf16.msra.mxu0 0
      %1669 = vmatprep.subr.bf16.mxu0 0
      %1670 = vmatpush2.bf16.msra.mxu0 0
      %1671 = vmatprep.subr.bf16.mxu0 0
      %1672 = vmatpush2.bf16.msra.mxu0 0
      %1673 = vmatprep.subr.bf16.mxu0 0
      %1674 = vmatpush2.bf16.msra.mxu0 0
      %1675 = vmatprep.subr.bf16.mxu0 0
      %1676 = vmatpush2.bf16.msra.mxu0 0
      %1677 = vmatprep.subr.bf16.mxu0 0
      %1678 = vmatpush2.bf16.msra.mxu0 0
      %1679 = vmatprep.mubr.bf16.mxu0 0
      %1680 = vmatmul.mubr.bf16.gmra.mxu0 %v335
      %v1681 = vpop.f32.mrf.mxu0
      %v1682 = vadd.f32 0.0, %v1681
      %v1683 = vpop.f32.mrf.mxu0
      %v1684 = vpop.f32.mrf.mxu0
      %v1685 = vadd.f32 0.0, %v1684
      %v1686 = vpop.f32.mrf.mxu0
      %1687 = vmatprep.mubr.bf16.mxu0 0
      %1688 = vmatmul.mubr.bf16.gmra.mxu0 %v336
      %v1689 = vpop.f32.mrf.mxu0
      %v1690 = vadd.f32 0.0, %v1689
      %v1691 = vpop.f32.mrf.mxu0
      %v1692 = vpop.f32.mrf.mxu0
      %v1693 = vadd.f32 0.0, %v1692
      %v1694 = vpop.f32.mrf.mxu0
      %1695 = vmatprep.mubr.bf16.mxu0 0
      %1696 = vmatmul.mubr.bf16.gmra.mxu0 %v337
      %v1697 = vpop.f32.mrf.mxu0
      %v1698 = vadd.f32 0.0, %v1697
      %v1699 = vpop.f32.mrf.mxu0
      %v1700 = vpop.f32.mrf.mxu0
      %v1701 = vadd.f32 0.0, %v1700
      %v1702 = vpop.f32.mrf.mxu0
      %1703 = vmatprep.mubr.bf16.mxu0 0
      %1704 = vmatmul.mubr.bf16.gmra.mxu0 %v338
      %v1705 = vpop.f32.mrf.mxu0
      %v1706 = vadd.f32 0.0, %v1705
      %v1707 = vpop.f32.mrf.mxu0
      %v1708 = vpop.f32.mrf.mxu0
      %v1709 = vadd.f32 0.0, %v1708
      %v1710 = vpop.f32.mrf.mxu0
      %1711 = vmatprep.mubr.bf16.mxu0 0
      %1712 = vmatmul.mubr.bf16.gmra.mxu0 %v339
      %v1713 = vpop.f32.mrf.mxu0
      %v1714 = vadd.f32 0.0, %v1713
      %v1715 = vpop.f32.mrf.mxu0
      %v1716 = vpop.f32.mrf.mxu0
      %v1717 = vadd.f32 0.0, %v1716
      %v1718 = vpop.f32.mrf.mxu0
      %1719 = vmatprep.mubr.bf16.mxu0 0
      %1720 = vmatmul.mubr.bf16.gmra.mxu0 %v340
      %v1721 = vpop.f32.mrf.mxu0
      %v1722 = vadd.f32 0.0, %v1721
      %v1723 = vpop.f32.mrf.mxu0
      %v1724 = vpop.f32.mrf.mxu0
      %v1725 = vadd.f32 0.0, %v1724
      %v1726 = vpop.f32.mrf.mxu0
      %1727 = vmatprep.mubr.bf16.mxu0 0
      %1728 = vmatmul.mubr.bf16.gmra.mxu0 %v341
      %v1729 = vpop.f32.mrf.mxu0
      %v1730 = vadd.f32 0.0, %v1729
      %v1731 = vpop.f32.mrf.mxu0
      %v1732 = vpop.f32.mrf.mxu0
      %v1733 = vpop.f32.mrf.mxu0
      %1734 = vdwg.mxu0
      %1735 = vst.msk [vmem:[#allocation3] sm:$0xff] %vm485, %v1682
      %1736 = vst.msk [vmem:[#allocation3 + $0x8] sm:$0xff] %vm485, %v1685
      %1737 = vst.msk [vmem:[#allocation3 + $0x10] sm:$0xff] %vm485, %v1690
      %1738 = vst.msk [vmem:[#allocation3 + $0x18] sm:$0xff] %vm485, %v1693
      %1739 = vst.msk [vmem:[#allocation3 + $0x20] sm:$0xff] %vm485, %v1698
      %1740 = vst.msk [vmem:[#allocation3 + $0x28] sm:$0xff] %vm485, %v1701
      %1741 = vst.msk [vmem:[#allocation3 + $0x30] sm:$0xff] %vm485, %v1706
      %1742 = vst.msk [vmem:[#allocation3 + $0x38] sm:$0xff] %vm485, %v1709
      %1743 = vst.msk [vmem:[#allocation3 + $0x40] sm:$0xff] %vm485, %v1714
      %1744 = vst.msk [vmem:[#allocation3 + $0x48] sm:$0xff] %vm485, %v1717
      %1745 = vst.msk [vmem:[#allocation3 + $0x50] sm:$0xff] %vm485, %v1722
      %1746 = vst.msk [vmem:[#allocation3 + $0x58] sm:$0xff] %vm485, %v1725
      %1747 = vst.msk [vmem:[#allocation3 + $0x60] sm:$0xf] %vm498, %v1730
      %v1748 = vld [vmem:[#allocation2] sm:$0xff]
      %v1749 = vld [vmem:[#allocation2 + $0x8] sm:$0xff]
      %v1750 = vld [vmem:[#allocation2 + $0x10] sm:$0xff]
      %v1751 = vld [vmem:[#allocation2 + $0x18] sm:$0xff]
      %v1752 = vld [vmem:[#allocation2 + $0x20] sm:$0xff]
      %v1753 = vld [vmem:[#allocation2 + $0x28] sm:$0xff]
      %v1754 = vld [vmem:[#allocation2 + $0x30] sm:$0xff]
      %v1755 = vld [vmem:[#allocation2 + $0x38] sm:$0xff]
      %v1756 = vld [vmem:[#allocation2 + $0x40] sm:$0xff]
      %v1757 = vld [vmem:[#allocation2 + $0x48] sm:$0xff]
      %v1758 = vld [vmem:[#allocation3 + $0x14] sm:$0xff]
      %v1759 = vld [vmem:[#allocation3 + $0x1c] sm:$0xff]
      %v1760 = vld [vmem:[#allocation3 + $0x24] sm:$0xff]
      %v1761 = vld [vmem:[#allocation3 + $0x2c] sm:$0xff]
      %v1762 = vld [vmem:[#allocation3 + $0x34] sm:$0xff]
      %v1763 = vld [vmem:[#allocation3 + $0x3c] sm:$0xff]
      %v1764 = vld [vmem:[#allocation3 + $0x44] sm:$0xff]
      %v1765 = vld [vmem:[#allocation3 + $0x4c] sm:$0xff]
      %v1766 = vld [vmem:[#allocation3 + $0x54] sm:$0xff]
      %v1767 = vld [vmem:[#allocation3 + $0x5c] sm:$0xff]
      %v1768 = vadd.f32 %v1748, %v1758
      %v1769 = vadd.f32 %v1749, %v1759
      %v1770 = vadd.f32 %v1750, %v1760
      %v1771 = vadd.f32 %v1751, %v1761
      %v1772 = vadd.f32 %v1752, %v1762
      %v1773 = vadd.f32 %v1753, %v1763
      %v1774 = vadd.f32 %v1754, %v1764
      %v1775 = vadd.f32 %v1755, %v1765
      %v1776 = vadd.f32 %v1756, %v1766
      %v1777 = vadd.f32 %v1757, %v1767
      %1778 = vst.msk [vmem:[#allocation2] sm:$0xff] %vm485, %v1768
      %1779 = vst.msk [vmem:[#allocation2 + $0x8] sm:$0xff] %vm485, %v1769
      %1780 = vst.msk [vmem:[#allocation2 + $0x10] sm:$0xff] %vm485, %v1770
      %1781 = vst.msk [vmem:[#allocation2 + $0x18] sm:$0xff] %vm485, %v1771
      %1782 = vst.msk [vmem:[#allocation2 + $0x20] sm:$0xff] %vm485, %v1772
      %1783 = vst.msk [vmem:[#allocation2 + $0x28] sm:$0xff] %vm485, %v1773
      %1784 = vst.msk [vmem:[#allocation2 + $0x30] sm:$0xff] %vm485, %v1774
      %1785 = vst.msk [vmem:[#allocation2 + $0x38] sm:$0xff] %vm485, %v1775
      %1786 = vst.msk [vmem:[#allocation2 + $0x40] sm:$0xff] %vm485, %v1776
      %1787 = vst.msk [vmem:[#allocation2 + $0x48] sm:$0xff] %vm485, %v1777
      %s1788 = sadd.s32 112, %s290
      %s1789 = smul.addr %s1788, 4
      %s1790 = scalar_lea.vmem %s1, %s1789
      %v1791 = vld [vmem:[%s1790] sm:$0xf]
      %v1792 = vld [vmem:[%s1790 + $0x4] sm:$0xf]
      %v1793 = vld [vmem:[%s1790 + $0x8] sm:$0xf]
      %v1794 = vld [vmem:[%s1790 + $0xc] sm:$0xf]
      %v1795 = vld [vmem:[%s1790 + $0x10] sm:$0xf]
      %v1796 = vld [vmem:[%s1790 + $0x14] sm:$0xf]
      %v1797 = vld [vmem:[%s1790 + $0x18] sm:$0xf]
      %v1798 = vld [vmem:[%s1790 + $0x1c] sm:$0xf]
      %v1799 = vld [vmem:[%s1790 + $0x20] sm:$0xf]
      %v1800 = vld [vmem:[%s1790 + $0x24] sm:$0xf]
      %v1801 = vld [vmem:[%s1790 + $0x28] sm:$0xf]
      %v1802 = vld [vmem:[%s1790 + $0x2c] sm:$0xf]
      %v1803 = vld [vmem:[%s1790 + $0x30] sm:$0xf]
      %v1804 = vld [vmem:[%s1790 + $0x34] sm:$0xf]
      %v1805 = vld [vmem:[%s1790 + $0x38] sm:$0xf]
      %v1806 = vld [vmem:[%s1790 + $0x3c] sm:$0xf]
      %v1823 = vunpack.c.l.b16 %v1791
      %v1824 = vunpack.c.l.b16 %v1792
      %v1825 = vunpack.c.l.b16 %v1793
      %v1826 = vunpack.c.l.b16 %v1794
      %v1827 = vunpack.c.l.b16 %v1795
      %v1828 = vunpack.c.l.b16 %v1796
      %v1829 = vunpack.c.l.b16 %v1797
      %v1830 = vunpack.c.l.b16 %v1798
      %v1831 = vunpack.c.l.b16 %v1799
      %v1832 = vunpack.c.l.b16 %v1800
      %v1833 = vunpack.c.l.b16 %v1801
      %v1834 = vunpack.c.l.b16 %v1802
      %v1835 = vunpack.c.l.b16 %v1803
      %v1836 = vunpack.c.l.b16 %v1804
      %v1837 = vunpack.c.l.b16 %v1805
      %v1838 = vunpack.c.l.b16 %v1806
      %v1839 = vpack.c.b16 %v1824, %v1823
      %v1840 = vpack.c.b16 %v1826, %v1825
      %v1841 = vpack.c.b16 %v1828, %v1827
      %v1842 = vpack.c.b16 %v1830, %v1829
      %v1843 = vpack.c.b16 %v1832, %v1831
      %v1844 = vpack.c.b16 %v1834, %v1833
      %v1845 = vpack.c.b16 %v1836, %v1835
      %v1846 = vpack.c.b16 %v1838, %v1837
      %1855 = vmatprep.subr.bf16.mxu0 0
      %1856 = vmatpush1.bf16.msra.mxu0 %v1846
      %1857 = vmatprep.subr.bf16.mxu0 0
      %1858 = vmatpush1.bf16.msra.mxu0 %v1845
      %1859 = vmatprep.subr.bf16.mxu0 0
      %1860 = vmatpush1.bf16.msra.mxu0 %v1844
      %1861 = vmatprep.subr.bf16.mxu0 0
      %1862 = vmatpush1.bf16.msra.mxu0 %v1843
      %1863 = vmatprep.subr.bf16.mxu0 0
      %1864 = vmatpush1.bf16.msra.mxu0 %v1842
      %1865 = vmatprep.subr.bf16.mxu0 0
      %1866 = vmatpush1.bf16.msra.mxu0 %v1841
      %1867 = vmatprep.subr.bf16.mxu0 0
      %1868 = vmatpush1.bf16.msra.mxu0 %v1840
      %1869 = vmatprep.subr.bf16.mxu0 0
      %1870 = vmatpush1.bf16.msra.mxu0 %v1839
      %1871 = vmatprep.subr.bf16.mxu0 0
      %1872 = vmatpush2.bf16.msra.mxu0 0
      %1873 = vmatprep.subr.bf16.mxu0 0
      %1874 = vmatpush2.bf16.msra.mxu0 0
      %1875 = vmatprep.subr.bf16.mxu0 0
      %1876 = vmatpush2.bf16.msra.mxu0 0
      %1877 = vmatprep.subr.bf16.mxu0 0
      %1878 = vmatpush2.bf16.msra.mxu0 0
      %1879 = vmatprep.subr.bf16.mxu0 0
      %1880 = vmatpush2.bf16.msra.mxu0 0
      %1881 = vmatprep.subr.bf16.mxu0 0
      %1882 = vmatpush2.bf16.msra.mxu0 0
      %1883 = vmatprep.subr.bf16.mxu0 0
      %1884 = vmatpush2.bf16.msra.mxu0 0
      %1885 = vmatprep.subr.bf16.mxu0 0
      %1886 = vmatpush2.bf16.msra.mxu0 0
      %1887 = vmatprep.mubr.bf16.mxu0 0
      %1888 = vmatmul.mubr.bf16.gmra.mxu0 %v335
      %v1889 = vpop.f32.mrf.mxu0
      %v1890 = vadd.f32 0.0, %v1889
      %v1891 = vpop.f32.mrf.mxu0
      %v1892 = vpop.f32.mrf.mxu0
      %v1893 = vadd.f32 0.0, %v1892
      %v1894 = vpop.f32.mrf.mxu0
      %1895 = vmatprep.mubr.bf16.mxu0 0
      %1896 = vmatmul.mubr.bf16.gmra.mxu0 %v336
      %v1897 = vpop.f32.mrf.mxu0
      %v1898 = vadd.f32 0.0, %v1897
      %v1899 = vpop.f32.mrf.mxu0
      %v1900 = vpop.f32.mrf.mxu0
      %v1901 = vadd.f32 0.0, %v1900
      %v1902 = vpop.f32.mrf.mxu0
      %1903 = vmatprep.mubr.bf16.mxu0 0
      %1904 = vmatmul.mubr.bf16.gmra.mxu0 %v337
      %v1905 = vpop.f32.mrf.mxu0
      %v1906 = vadd.f32 0.0, %v1905
      %v1907 = vpop.f32.mrf.mxu0
      %v1908 = vpop.f32.mrf.mxu0
      %v1909 = vadd.f32 0.0, %v1908
      %v1910 = vpop.f32.mrf.mxu0
      %1911 = vmatprep.mubr.bf16.mxu0 0
      %1912 = vmatmul.mubr.bf16.gmra.mxu0 %v338
      %v1913 = vpop.f32.mrf.mxu0
      %v1914 = vadd.f32 0.0, %v1913
      %v1915 = vpop.f32.mrf.mxu0
      %v1916 = vpop.f32.mrf.mxu0
      %v1917 = vadd.f32 0.0, %v1916
      %v1918 = vpop.f32.mrf.mxu0
      %1919 = vmatprep.mubr.bf16.mxu0 0
      %1920 = vmatmul.mubr.bf16.gmra.mxu0 %v339
      %v1921 = vpop.f32.mrf.mxu0
      %v1922 = vadd.f32 0.0, %v1921
      %v1923 = vpop.f32.mrf.mxu0
      %v1924 = vpop.f32.mrf.mxu0
      %v1925 = vadd.f32 0.0, %v1924
      %v1926 = vpop.f32.mrf.mxu0
      %1927 = vmatprep.mubr.bf16.mxu0 0
      %1928 = vmatmul.mubr.bf16.gmra.mxu0 %v340
      %v1929 = vpop.f32.mrf.mxu0
      %v1930 = vadd.f32 0.0, %v1929
      %v1931 = vpop.f32.mrf.mxu0
      %v1932 = vpop.f32.mrf.mxu0
      %v1933 = vadd.f32 0.0, %v1932
      %v1934 = vpop.f32.mrf.mxu0
      %1935 = vmatprep.mubr.bf16.mxu0 0
      %1936 = vmatmul.mubr.bf16.gmra.mxu0 %v341
      %v1937 = vpop.f32.mrf.mxu0
      %v1938 = vadd.f32 0.0, %v1937
      %v1939 = vpop.f32.mrf.mxu0
      %v1940 = vpop.f32.mrf.mxu0
      %v1941 = vpop.f32.mrf.mxu0
      %1942 = vdwg.mxu0
      %1943 = vst.msk [vmem:[#allocation3] sm:$0xff] %vm485, %v1890
      %1944 = vst.msk [vmem:[#allocation3 + $0x8] sm:$0xff] %vm485, %v1893
      %1945 = vst.msk [vmem:[#allocation3 + $0x10] sm:$0xff] %vm485, %v1898
      %1946 = vst.msk [vmem:[#allocation3 + $0x18] sm:$0xff] %vm485, %v1901
      %1947 = vst.msk [vmem:[#allocation3 + $0x20] sm:$0xff] %vm485, %v1906
      %1948 = vst.msk [vmem:[#allocation3 + $0x28] sm:$0xff] %vm485, %v1909
      %1949 = vst.msk [vmem:[#allocation3 + $0x30] sm:$0xff] %vm485, %v1914
      %1950 = vst.msk [vmem:[#allocation3 + $0x38] sm:$0xff] %vm485, %v1917
      %1951 = vst.msk [vmem:[#allocation3 + $0x40] sm:$0xff] %vm485, %v1922
      %1952 = vst.msk [vmem:[#allocation3 + $0x48] sm:$0xff] %vm485, %v1925
      %1953 = vst.msk [vmem:[#allocation3 + $0x50] sm:$0xff] %vm485, %v1930
      %1954 = vst.msk [vmem:[#allocation3 + $0x58] sm:$0xff] %vm485, %v1933
      %1955 = vst.msk [vmem:[#allocation3 + $0x60] sm:$0xf] %vm498, %v1938
      %v1956 = vld [vmem:[#allocation2] sm:$0xff]
      %v1957 = vld [vmem:[#allocation2 + $0x8] sm:$0xff]
      %v1958 = vld [vmem:[#allocation2 + $0x10] sm:$0xff]
      %v1959 = vld [vmem:[#allocation2 + $0x18] sm:$0xff]
      %v1960 = vld [vmem:[#allocation2 + $0x20] sm:$0xff]
      %v1961 = vld [vmem:[#allocation2 + $0x28] sm:$0xff]
      %v1962 = vld [vmem:[#allocation2 + $0x30] sm:$0xff]
      %v1963 = vld [vmem:[#allocation2 + $0x38] sm:$0xff]
      %v1964 = vld [vmem:[#allocation2 + $0x40] sm:$0xff]
      %v1965 = vld [vmem:[#allocation2 + $0x48] sm:$0xff]
      %v1966 = vld [vmem:[#allocation3 + $0x15] sm:$0xff]
      %v1967 = vld [vmem:[#allocation3 + $0x1d] sm:$0xff]
      %v1968 = vld [vmem:[#allocation3 + $0x25] sm:$0xff]
      %v1969 = vld [vmem:[#allocation3 + $0x2d] sm:$0xff]
      %v1970 = vld [vmem:[#allocation3 + $0x35] sm:$0xff]
      %v1971 = vld [vmem:[#allocation3 + $0x3d] sm:$0xff]
      %v1972 = vld [vmem:[#allocation3 + $0x45] sm:$0xff]
      %v1973 = vld [vmem:[#allocation3 + $0x4d] sm:$0xff]
      %v1974 = vld [vmem:[#allocation3 + $0x55] sm:$0xff]
      %v1975 = vld [vmem:[#allocation3 + $0x5d] sm:$0xff]
      %v1976 = vadd.f32 %v1956, %v1966
      %v1977 = vadd.f32 %v1957, %v1967
      %v1978 = vadd.f32 %v1958, %v1968
      %v1979 = vadd.f32 %v1959, %v1969
      %v1980 = vadd.f32 %v1960, %v1970
      %v1981 = vadd.f32 %v1961, %v1971
      %v1982 = vadd.f32 %v1962, %v1972
      %v1983 = vadd.f32 %v1963, %v1973
      %v1984 = vadd.f32 %v1964, %v1974
      %v1985 = vadd.f32 %v1965, %v1975
      %1986 = vst.msk [vmem:[#allocation2] sm:$0xff] %vm485, %v1976
      %1987 = vst.msk [vmem:[#allocation2 + $0x8] sm:$0xff] %vm485, %v1977
      %1988 = vst.msk [vmem:[#allocation2 + $0x10] sm:$0xff] %vm485, %v1978
      %1989 = vst.msk [vmem:[#allocation2 + $0x18] sm:$0xff] %vm485, %v1979
      %1990 = vst.msk [vmem:[#allocation2 + $0x20] sm:$0xff] %vm485, %v1980
      %1991 = vst.msk [vmem:[#allocation2 + $0x28] sm:$0xff] %vm485, %v1981
      %1992 = vst.msk [vmem:[#allocation2 + $0x30] sm:$0xff] %vm485, %v1982
      %1993 = vst.msk [vmem:[#allocation2 + $0x38] sm:$0xff] %vm485, %v1983
      %1994 = vst.msk [vmem:[#allocation2 + $0x40] sm:$0xff] %vm485, %v1984
      %1995 = vst.msk [vmem:[#allocation2 + $0x48] sm:$0xff] %vm485, %v1985
      %s1996 = sadd.s32 128, %s290
      %s1997 = smul.addr %s1996, 4
      %s1998 = scalar_lea.vmem %s1, %s1997
      %v1999 = vld [vmem:[%s1998] sm:$0xf]
      %v2000 = vld [vmem:[%s1998 + $0x4] sm:$0xf]
      %v2001 = vld [vmem:[%s1998 + $0x8] sm:$0xf]
      %v2002 = vld [vmem:[%s1998 + $0xc] sm:$0xf]
      %v2003 = vld [vmem:[%s1998 + $0x10] sm:$0xf]
      %v2004 = vld [vmem:[%s1998 + $0x14] sm:$0xf]
      %v2005 = vld [vmem:[%s1998 + $0x18] sm:$0xf]
      %v2006 = vld [vmem:[%s1998 + $0x1c] sm:$0xf]
      %v2007 = vld [vmem:[%s1998 + $0x20] sm:$0xf]
      %v2008 = vld [vmem:[%s1998 + $0x24] sm:$0xf]
      %v2009 = vld [vmem:[%s1998 + $0x28] sm:$0xf]
      %v2010 = vld [vmem:[%s1998 + $0x2c] sm:$0xf]
      %v2011 = vld [vmem:[%s1998 + $0x30] sm:$0xf]
      %v2012 = vld [vmem:[%s1998 + $0x34] sm:$0xf]
      %v2013 = vld [vmem:[%s1998 + $0x38] sm:$0xf]
      %v2014 = vld [vmem:[%s1998 + $0x3c] sm:$0xf]
      %v2031 = vunpack.c.l.b16 %v1999
      %v2032 = vunpack.c.l.b16 %v2000
      %v2033 = vunpack.c.l.b16 %v2001
      %v2034 = vunpack.c.l.b16 %v2002
      %v2035 = vunpack.c.l.b16 %v2003
      %v2036 = vunpack.c.l.b16 %v2004
      %v2037 = vunpack.c.l.b16 %v2005
      %v2038 = vunpack.c.l.b16 %v2006
      %v2039 = vunpack.c.l.b16 %v2007
      %v2040 = vunpack.c.l.b16 %v2008
      %v2041 = vunpack.c.l.b16 %v2009
      %v2042 = vunpack.c.l.b16 %v2010
      %v2043 = vunpack.c.l.b16 %v2011
      %v2044 = vunpack.c.l.b16 %v2012
      %v2045 = vunpack.c.l.b16 %v2013
      %v2046 = vunpack.c.l.b16 %v2014
      %v2047 = vpack.c.b16 %v2032, %v2031
      %v2048 = vpack.c.b16 %v2034, %v2033
      %v2049 = vpack.c.b16 %v2036, %v2035
      %v2050 = vpack.c.b16 %v2038, %v2037
      %v2051 = vpack.c.b16 %v2040, %v2039
      %v2052 = vpack.c.b16 %v2042, %v2041
      %v2053 = vpack.c.b16 %v2044, %v2043
      %v2054 = vpack.c.b16 %v2046, %v2045
      %2063 = vmatprep.subr.bf16.mxu0 0
      %2064 = vmatpush1.bf16.msra.mxu0 %v2054
      %2065 = vmatprep.subr.bf16.mxu0 0
      %2066 = vmatpush1.bf16.msra.mxu0 %v2053
      %2067 = vmatprep.subr.bf16.mxu0 0
      %2068 = vmatpush1.bf16.msra.mxu0 %v2052
      %2069 = vmatprep.subr.bf16.mxu0 0
      %2070 = vmatpush1.bf16.msra.mxu0 %v2051
      %2071 = vmatprep.subr.bf16.mxu0 0
      %2072 = vmatpush1.bf16.msra.mxu0 %v2050
      %2073 = vmatprep.subr.bf16.mxu0 0
      %2074 = vmatpush1.bf16.msra.mxu0 %v2049
      %2075 = vmatprep.subr.bf16.mxu0 0
      %2076 = vmatpush1.bf16.msra.mxu0 %v2048
      %2077 = vmatprep.subr.bf16.mxu0 0
      %2078 = vmatpush1.bf16.msra.mxu0 %v2047
      %2079 = vmatprep.subr.bf16.mxu0 0
      %2080 = vmatpush2.bf16.msra.mxu0 0
      %2081 = vmatprep.subr.bf16.mxu0 0
      %2082 = vmatpush2.bf16.msra.mxu0 0
      %2083 = vmatprep.subr.bf16.mxu0 0
      %2084 = vmatpush2.bf16.msra.mxu0 0
      %2085 = vmatprep.subr.bf16.mxu0 0
      %2086 = vmatpush2.bf16.msra.mxu0 0
      %2087 = vmatprep.subr.bf16.mxu0 0
      %2088 = vmatpush2.bf16.msra.mxu0 0
      %2089 = vmatprep.subr.bf16.mxu0 0
      %2090 = vmatpush2.bf16.msra.mxu0 0
      %2091 = vmatprep.subr.bf16.mxu0 0
      %2092 = vmatpush2.bf16.msra.mxu0 0
      %2093 = vmatprep.subr.bf16.mxu0 0
      %2094 = vmatpush2.bf16.msra.mxu0 0
      %2095 = vmatprep.mubr.bf16.mxu0 0
      %2096 = vmatmul.mubr.bf16.gmra.mxu0 %v335
      %v2097 = vpop.f32.mrf.mxu0
      %v2098 = vadd.f32 0.0, %v2097
      %v2099 = vpop.f32.mrf.mxu0
      %v2100 = vpop.f32.mrf.mxu0
      %v2101 = vadd.f32 0.0, %v2100
      %v2102 = vpop.f32.mrf.mxu0
      %2103 = vmatprep.mubr.bf16.mxu0 0
      %2104 = vmatmul.mubr.bf16.gmra.mxu0 %v336
      %v2105 = vpop.f32.mrf.mxu0
      %v2106 = vadd.f32 0.0, %v2105
      %v2107 = vpop.f32.mrf.mxu0
      %v2108 = vpop.f32.mrf.mxu0
      %v2109 = vadd.f32 0.0, %v2108
      %v2110 = vpop.f32.mrf.mxu0
      %2111 = vmatprep.mubr.bf16.mxu0 0
      %2112 = vmatmul.mubr.bf16.gmra.mxu0 %v337
      %v2113 = vpop.f32.mrf.mxu0
      %v2114 = vadd.f32 0.0, %v2113
      %v2115 = vpop.f32.mrf.mxu0
      %v2116 = vpop.f32.mrf.mxu0
      %v2117 = vadd.f32 0.0, %v2116
      %v2118 = vpop.f32.mrf.mxu0
      %2119 = vmatprep.mubr.bf16.mxu0 0
      %2120 = vmatmul.mubr.bf16.gmra.mxu0 %v338
      %v2121 = vpop.f32.mrf.mxu0
      %v2122 = vadd.f32 0.0, %v2121
      %v2123 = vpop.f32.mrf.mxu0
      %v2124 = vpop.f32.mrf.mxu0
      %v2125 = vadd.f32 0.0, %v2124
      %v2126 = vpop.f32.mrf.mxu0
      %2127 = vmatprep.mubr.bf16.mxu0 0
      %2128 = vmatmul.mubr.bf16.gmra.mxu0 %v339
      %v2129 = vpop.f32.mrf.mxu0
      %v2130 = vadd.f32 0.0, %v2129
      %v2131 = vpop.f32.mrf.mxu0
      %v2132 = vpop.f32.mrf.mxu0
      %v2133 = vadd.f32 0.0, %v2132
      %v2134 = vpop.f32.mrf.mxu0
      %2135 = vmatprep.mubr.bf16.mxu0 0
      %2136 = vmatmul.mubr.bf16.gmra.mxu0 %v340
      %v2137 = vpop.f32.mrf.mxu0
      %v2138 = vadd.f32 0.0, %v2137
      %v2139 = vpop.f32.mrf.mxu0
      %v2140 = vpop.f32.mrf.mxu0
      %v2141 = vadd.f32 0.0, %v2140
      %v2142 = vpop.f32.mrf.mxu0
      %2143 = vmatprep.mubr.bf16.mxu0 0
      %2144 = vmatmul.mubr.bf16.gmra.mxu0 %v341
      %v2145 = vpop.f32.mrf.mxu0
      %v2146 = vadd.f32 0.0, %v2145
      %v2147 = vpop.f32.mrf.mxu0
      %v2148 = vpop.f32.mrf.mxu0
      %v2149 = vpop.f32.mrf.mxu0
      %2150 = vdwg.mxu0
      %2151 = vst.msk [vmem:[#allocation3] sm:$0xff] %vm485, %v2098
      %2152 = vst.msk [vmem:[#allocation3 + $0x8] sm:$0xff] %vm485, %v2101
      %2153 = vst.msk [vmem:[#allocation3 + $0x10] sm:$0xff] %vm485, %v2106
      %2154 = vst.msk [vmem:[#allocation3 + $0x18] sm:$0xff] %vm485, %v2109
      %2155 = vst.msk [vmem:[#allocation3 + $0x20] sm:$0xff] %vm485, %v2114
      %2156 = vst.msk [vmem:[#allocation3 + $0x28] sm:$0xff] %vm485, %v2117
      %2157 = vst.msk [vmem:[#allocation3 + $0x30] sm:$0xff] %vm485, %v2122
      %2158 = vst.msk [vmem:[#allocation3 + $0x38] sm:$0xff] %vm485, %v2125
      %2159 = vst.msk [vmem:[#allocation3 + $0x40] sm:$0xff] %vm485, %v2130
      %2160 = vst.msk [vmem:[#allocation3 + $0x48] sm:$0xff] %vm485, %v2133
      %2161 = vst.msk [vmem:[#allocation3 + $0x50] sm:$0xff] %vm485, %v2138
      %2162 = vst.msk [vmem:[#allocation3 + $0x58] sm:$0xff] %vm485, %v2141
      %2163 = vst.msk [vmem:[#allocation3 + $0x60] sm:$0xf] %vm498, %v2146
      %v2164 = vld [vmem:[#allocation2] sm:$0xff]
      %v2165 = vld [vmem:[#allocation2 + $0x8] sm:$0xff]
      %v2166 = vld [vmem:[#allocation2 + $0x10] sm:$0xff]
      %v2167 = vld [vmem:[#allocation2 + $0x18] sm:$0xff]
      %v2168 = vld [vmem:[#allocation2 + $0x20] sm:$0xff]
      %v2169 = vld [vmem:[#allocation2 + $0x28] sm:$0xff]
      %v2170 = vld [vmem:[#allocation2 + $0x30] sm:$0xff]
      %v2171 = vld [vmem:[#allocation2 + $0x38] sm:$0xff]
      %v2172 = vld [vmem:[#allocation2 + $0x40] sm:$0xff]
      %v2173 = vld [vmem:[#allocation2 + $0x48] sm:$0xff]
      %v2174 = vld [vmem:[#allocation3 + $0x16] sm:$0xff]
      %v2175 = vld [vmem:[#allocation3 + $0x1e] sm:$0xff]
      %v2176 = vld [vmem:[#allocation3 + $0x26] sm:$0xff]
      %v2177 = vld [vmem:[#allocation3 + $0x2e] sm:$0xff]
      %v2178 = vld [vmem:[#allocation3 + $0x36] sm:$0xff]
      %v2179 = vld [vmem:[#allocation3 + $0x3e] sm:$0xff]
      %v2180 = vld [vmem:[#allocation3 + $0x46] sm:$0xff]
      %v2181 = vld [vmem:[#allocation3 + $0x4e] sm:$0xff]
      %v2182 = vld [vmem:[#allocation3 + $0x56] sm:$0xff]
      %v2183 = vld [vmem:[#allocation3 + $0x5e] sm:$0xff]
      %v2184 = vadd.f32 %v2164, %v2174
      %v2185 = vadd.f32 %v2165, %v2175
      %v2186 = vadd.f32 %v2166, %v2176
      %v2187 = vadd.f32 %v2167, %v2177
      %v2188 = vadd.f32 %v2168, %v2178
      %v2189 = vadd.f32 %v2169, %v2179
      %v2190 = vadd.f32 %v2170, %v2180
      %v2191 = vadd.f32 %v2171, %v2181
      %v2192 = vadd.f32 %v2172, %v2182
      %v2193 = vadd.f32 %v2173, %v2183
      %2194 = vst.msk [vmem:[#allocation2] sm:$0xff] %vm485, %v2184
      %2195 = vst.msk [vmem:[#allocation2 + $0x8] sm:$0xff] %vm485, %v2185
      %2196 = vst.msk [vmem:[#allocation2 + $0x10] sm:$0xff] %vm485, %v2186
      %2197 = vst.msk [vmem:[#allocation2 + $0x18] sm:$0xff] %vm485, %v2187
      %2198 = vst.msk [vmem:[#allocation2 + $0x20] sm:$0xff] %vm485, %v2188
      %2199 = vst.msk [vmem:[#allocation2 + $0x28] sm:$0xff] %vm485, %v2189
      %2200 = vst.msk [vmem:[#allocation2 + $0x30] sm:$0xff] %vm485, %v2190
      %2201 = vst.msk [vmem:[#allocation2 + $0x38] sm:$0xff] %vm485, %v2191
      %2202 = vst.msk [vmem:[#allocation2 + $0x40] sm:$0xff] %vm485, %v2192
      %2203 = vst.msk [vmem:[#allocation2 + $0x48] sm:$0xff] %vm485, %v2193
      %p2204 = scmp.eq.s32.totalorder %s22, 2
      // Predicated region
      $region41: #{classifier_forward.7} parent=35 // pred_check
        %p2205 = pneg %p2204
      $region42: #{classifier_forward.7} parent=35 // pred_check_branch
        %2207 = sbr.rel (%p2205) target = $region44
      $region43: #{classifier_forward.7} parent=35 // pred_region
        %v2208 = vld [vmem:[#allocation2] sm:$0xff]
        %v2209 = vld [vmem:[#allocation2 + $0x8] sm:$0xff]
        %v2210 = vld [vmem:[#allocation2 + $0x10] sm:$0xff]
        %v2211 = vld [vmem:[#allocation2 + $0x18] sm:$0xff]
        %v2212 = vld [vmem:[#allocation2 + $0x20] sm:$0xff]
        %v2213 = vld [vmem:[#allocation2 + $0x28] sm:$0xff]
        %v2214 = vld [vmem:[#allocation2 + $0x30] sm:$0xff]
        %v2215 = vld [vmem:[#allocation2 + $0x38] sm:$0xff]
        %v2216 = vld [vmem:[#allocation2 + $0x40] sm:$0xff]
        %v2217 = vld [vmem:[#allocation2 + $0x48] sm:$0xff]
        %v2218 = vld [vmem:[%s2] sm:$0x1]
        %v2220 = vlaneseq
        %v2221 = vshrl.u32 %v2220, 7
        %v2222 = vsub.s32 0, %v2221
        %v2223 = vrot.slane %v2218, %v2222
        %v2225 = vmul.f32 %v2208, %v2223
        %v2226 = vmul.f32 %v2209, %v2223
        %v2227 = vmul.f32 %v2210, %v2223
        %v2228 = vmul.f32 %v2211, %v2223
        %v2229 = vmul.f32 %v2212, %v2223
        %v2230 = vmul.f32 %v2213, %v2223
        %v2231 = vmul.f32 %v2214, %v2223
        %v2232 = vmul.f32 %v2215, %v2223
        %v2233 = vmul.f32 %v2216, %v2223
        %v2234 = vmul.f32 %v2217, %v2223
        %v2235 = vld [vmem:[%s3] sm:$0x1]
        %v2237 = vlaneseq
        %v2238 = vshrl.u32 %v2237, 7
        %v2239 = vsub.s32 0, %v2238
        %v2240 = vrot.slane %v2235, %v2239
        %v2242 = vadd.f32 %v2225, %v2240
        %v2243 = vadd.f32 %v2226, %v2240
        %v2244 = vadd.f32 %v2227, %v2240
        %v2245 = vadd.f32 %v2228, %v2240
        %v2246 = vadd.f32 %v2229, %v2240
        %v2247 = vadd.f32 %v2230, %v2240
        %v2248 = vadd.f32 %v2231, %v2240
        %v2249 = vadd.f32 %v2232, %v2240
        %v2250 = vadd.f32 %v2233, %v2240
        %v2251 = vadd.f32 %v2234, %v2240
        %v2252 = vmax.f32 %v2242, 0.0
        %v2253 = vmax.f32 %v2243, 0.0
        %v2254 = vmax.f32 %v2244, 0.0
        %v2255 = vmax.f32 %v2245, 0.0
        %v2256 = vmax.f32 %v2246, 0.0
        %v2257 = vmax.f32 %v2247, 0.0
        %v2258 = vmax.f32 %v2248, 0.0
        %v2259 = vmax.f32 %v2249, 0.0
        %v2260 = vmax.f32 %v2250, 0.0
        %v2261 = vmax.f32 %v2251, 0.0
        %v2262 = vpack.c.bf16 %v2253, %v2252
        %v2263 = vpack.c.bf16 %v2255, %v2254
        %v2264 = vpack.c.bf16 %v2257, %v2256
        %v2265 = vpack.c.bf16 %v2259, %v2258
        %v2266 = vpack.c.bf16 %v2261, %v2260
        %v2272 = vunpack.c.l.b16 %v2262
        %v2273 = vunpack.c.h.b16 %v2262
        %v2274 = vunpack.c.l.b16 %v2263
        %v2275 = vunpack.c.h.b16 %v2263
        %v2276 = vunpack.c.l.b16 %v2264
        %v2277 = vunpack.c.h.b16 %v2264
        %v2278 = vunpack.c.l.b16 %v2265
        %v2279 = vunpack.c.h.b16 %v2265
        %v2280 = vunpack.c.l.b16 %v2266
        %v2281 = vunpack.c.h.b16 %v2266
        %v2282 = vpack.c.b16 %v2272, %v2272
        %v2283 = vpack.c.b16 %v2273, %v2273
        %v2284 = vpack.c.b16 %v2274, %v2274
        %v2285 = vpack.c.b16 %v2275, %v2275
        %v2286 = vpack.c.b16 %v2276, %v2276
        %v2287 = vpack.c.b16 %v2277, %v2277
        %v2288 = vpack.c.b16 %v2278, %v2278
        %v2289 = vpack.c.b16 %v2279, %v2279
        %v2290 = vpack.c.b16 %v2280, %v2280
        %v2291 = vpack.c.b16 %v2281, %v2281
        %2302 = vst.msk [vmem:[%s247] sm:$0xf] %vm498, %v2282
        %2303 = vst.msk [vmem:[%s247 + $0x4] sm:$0xf] %vm498, %v2283
        %2304 = vst.msk [vmem:[%s247 + $0x8] sm:$0xf] %vm498, %v2284
        %2305 = vst.msk [vmem:[%s247 + $0xc] sm:$0xf] %vm498, %v2285
        %2306 = vst.msk [vmem:[%s247 + $0x10] sm:$0xf] %vm498, %v2286
        %2307 = vst.msk [vmem:[%s247 + $0x14] sm:$0xf] %vm498, %v2287
        %2308 = vst.msk [vmem:[%s247 + $0x18] sm:$0xf] %vm498, %v2288
        %2309 = vst.msk [vmem:[%s247 + $0x1c] sm:$0xf] %vm498, %v2289
        %2310 = vst.msk [vmem:[%s247 + $0x20] sm:$0xf] %vm498, %v2290
        %2311 = vst.msk [vmem:[%s247 + $0x24] sm:$0xf] %vm498, %v2291
      $region44: #{classifier_forward.7} parent=35 // pred_fallthru
        _
      %p2312 = scmp.lt.s32.totalorder %s20, 1
      %s2313 = scalar_select %p2312, %s20, 1
      %p2314 = scmp.lt.s32.totalorder %s21, 7
      %s2315 = scalar_select %p2314, %s21, 7
      %s2316 = smul.addr %s2315, 10
      %s2317 = smul.addr %s2313, 80
      %s2318 = sadd.s32 %s2316, %s2317
      %s2319 = smul.addr %s2318, 4
      %s2320 = scalar_lea.vmem %s4, %s2319
      // Predicated region
      $region45: #{classifier_forward.7} parent=35 // pred_check
        %p2321 = pneg %p147
      $region46: #{classifier_forward.7} parent=35 // pred_check_branch
        %2323 = sbr.rel (%p2321) target = $region48
      $region47: #{classifier_forward.7} parent=35 // pred_region
        _
      $region48: #{classifier_forward.7} parent=35 // pred_fallthru
        _
    $region36: #{classifier_forward.7} parent=5 // pred_fallthru
      _
    %p2324 = scmp.le.s32.totalorder 2, %s10
    // Predicated region
    $region49: #{classifier_forward.7} parent=5 // pred_check
      %p2325 = pneg %p2324
    $region50: #{classifier_forward.7} parent=5 // pred_check_branch
      %2327 = sbr.rel (%p2325) target = $region52
    $region51: #{classifier_forward.7} parent=5 // pred_region
      %s2328 = ssub.s32 %s10, 2
      // Predicated region
      $region53: #{classifier_forward.7} parent=51 // pred_check
        %p2329 = pneg %p153
      $region54: #{classifier_forward.7} parent=51 // pred_check_branch
        %2331 = sbr.rel (%p2329) target = $region56
      $region55: #{classifier_forward.7} parent=51 // pred_region
        %p2332 = scmp.lt.s32.totalorder %s23, 1
        %s2333 = scalar_select %p2332, %s23, 1
        %p2334 = scmp.lt.s32.totalorder %s24, 7
        %s2335 = scalar_select %p2334, %s24, 7
        %s2336 = smul.addr %s2335, 10
        %s2337 = smul.addr %s2333, 80
        %s2338 = sadd.s32 %s2336, %s2337
        %s2339 = smul.addr %s2338, 4
        %s2340 = scalar_lea.vmem %s4, %s2339
      $region56: #{classifier_forward.7} parent=51 // pred_fallthru
        _
    $region52: #{classifier_forward.7} parent=5 // pred_fallthru
      _
  $region6: #{classifier_forward.7} parent=0 // loop_footer
    %s14 = sadd.s32 1, %s10
  $region7: #{classifier_forward.7} parent=0 // loop_footer_branch
    %9 = sbr.rel target = $region3
  $region8: #{classifier_forward.7} parent=0 // loop_exit
    _

// kernel: classifier_forward.8
$region0: #{classifier_forward.8}
  #allocation0 [shape = 'u32[]', space=smem, size = 0x4, offset = 0x4, fixed_abs, tag = 'smem constant byte address 0x4 - core index']
  #allocation1 [shape = 'u32[144,128]{1,0:T(1,128)}', space=vmem, size = 0x12000, scoped, tag = 'internal scratch']
  %s0 = inlined_call_operand.vmem [shape: bf16[2,8,8,5,128], index: 0, kind: input, shape index: {}]
  %s1 = inlined_call_operand.vmem [shape: bf16[2,4,4,4,64], index: 1, kind: output, shape index: {}]
  %s2 = sld [smem:[#allocation0]]
  $region37: #{classifier_forward.8} parent=0
    _
  %s4 = ssub.s32 1, %s2
  %s5 = scalar_select 0, %s4, %s2
  loop: start=0, step=1, limit=10
  $region2: #{classifier_forward.8} parent=0 // loop_pre_header
    _
  $region3: #{classifier_forward.8} parent=0 // loop_header
    %s7 = sphi 0, %s11
    %p8 = scmp.ge.s32.totalorder %s7, 10
    %s14 = sphi 0, %s26
    %s15 = sphi 0, %s22
    %s16 = sphi 0, %s14
    %s17 = sphi 0, %s15
    %s18 = sphi 0, %s16
    %s19 = sphi 0, %s17
    %s31 = sphi 0, %s33
    %s34 = sphi 0, %s31
    %s35 = sphi 0, %s34
    %s51 = sphi 0, %s35
    %s59 = sphi 0, %s61
    %s62 = sphi 0, %s59
    %s63 = sphi 0, %s62
    %s79 = sphi 0, %s63
  $region4: #{classifier_forward.8} parent=0 // loop_header_branch
    %10 = sbr.rel (%p8) target = $region8
  $region5: #{classifier_forward.8} parent=0 // loop_body
    %s12 = ssub.s32 %s7, 1
    %s13 = ssub.s32 %s7, 2
    %s20 = sadd.s32 1, %s15
    %p21 = scmp.ge.s32.totalorder %s20, 4
    %s22 = scalar_select %p21, 0, %s20
    %s23 = sadd.s32 1, %s14
    %s24 = scalar_select %p21, %s23, %s14
    %p25 = scmp.ge.s32.totalorder %s24, 2
    %s26 = scalar_select %p25, 0, %s24
    %s27 = ssub.s32 %s14, %s26
    %s28 = ssub.s32 %s15, %s22
    %s29 = sor.u32 %s27, %s28
    %p30 = scmp.eq.s32.totalorder %s29, 0
    %s32 = sadd.s32 %s31, 1
    %s33 = scalar_select %p30, %s31, %s32
    %p36 = pneg %p30
    %p37 = scmp.eq.s32.totalorder %s7, 7
    %p38 = por %p36, %p37
    %p39 = scmp.ne.s32.totalorder %s31, %s34
    %p40 = scmp.eq.s32.totalorder %s7, 0
    %p41 = por %p39, %p40
    %p42 = scmp.ne.s32.totalorder %s31, %s34
    %p43 = scmp.eq.s32.totalorder %s12, 7
    %p44 = por %p42, %p43
    %p45 = scmp.ne.s32.totalorder %s34, %s35
    %p46 = scmp.eq.s32.totalorder %s12, 0
    %p47 = por %p45, %p46
    %p48 = scmp.ne.s32.totalorder %s34, %s35
    %p49 = scmp.eq.s32.totalorder %s13, 7
    %p50 = por %p48, %p49
    %p52 = scmp.ne.s32.totalorder %s35, %s51
    %p53 = scmp.eq.s32.totalorder %s13, 0
    %p54 = por %p52, %p53
    %s55 = ssub.s32 %s14, %s26
    %s56 = ssub.s32 %s15, %s22
    %s57 = sor.u32 %s55, %s56
    %p58 = scmp.eq.s32.totalorder %s57, 0
    %s60 = sadd.s32 %s59, 1
    %s61 = scalar_select %p58, %s59, %s60
    %p64 = pneg %p58
    %p65 = scmp.eq.s32.totalorder %s7, 7
    %p66 = por %p64, %p65
    %p67 = scmp.ne.s32.totalorder %s59, %s62
    %p68 = scmp.eq.s32.totalorder %s7, 0
    %p69 = por %p67, %p68
    %p70 = scmp.ne.s32.totalorder %s59, %s62
    %p71 = scmp.eq.s32.totalorder %s12, 7
    %p72 = por %p70, %p71
    %p73 = scmp.ne.s32.totalorder %s62, %s63
    %p74 = scmp.eq.s32.totalorder %s12, 0
    %p75 = por %p73, %p74
    %p76 = scmp.ne.s32.totalorder %s62, %s63
    %p77 = scmp.eq.s32.totalorder %s13, 7
    %p78 = por %p76, %p77
    %p80 = scmp.ne.s32.totalorder %s63, %s79
    %p81 = scmp.eq.s32.totalorder %s13, 0
    %p82 = por %p80, %p81
    %p83 = scmp.le.s32.totalorder 1, %s7
    %p84 = scmp.lt.s32.totalorder %s7, 9
    %p85 = pnand %p83, %p84
    %p86 = pneg %p85
    // Predicated region
    $region9: #{classifier_forward.8} parent=5 // pred_check
      _
    $region10: #{classifier_forward.8} parent=5 // pred_check_branch
      %88 = sbr.rel (%p85) target = $region12
    $region11: #{classifier_forward.8} parent=5 // pred_region
      %s89 = ssub.s32 %s7, 1
    $region12: #{classifier_forward.8} parent=5 // pred_fallthru
      _
    %p90 = scmp.lt.s32.totalorder %s7, 8
    // Predicated region
    $region13: #{classifier_forward.8} parent=5 // pred_check
      %p91 = pneg %p90
    $region14: #{classifier_forward.8} parent=5 // pred_check_branch
      %93 = sbr.rel (%p91) target = $region16
    $region15: #{classifier_forward.8} parent=5 // pred_region
      // Predicated region
      $region17: #{classifier_forward.8} parent=15 // pred_check
        %p94 = pneg %p41
      $region18: #{classifier_forward.8} parent=15 // pred_check_branch
        %96 = sbr.rel (%p94) target = $region20
      $region19: #{classifier_forward.8} parent=15 // pred_region
        %s97 = smul.u32 2, %s15
        %p98 = scmp.lt.s32.totalorder %s14, 1
        %s99 = scalar_select %p98, %s14, 1
        %p100 = scmp.lt.s32.totalorder %s97, 7
        %s101 = scalar_select %p100, %s97, 7
        %s102 = smul.addr %s101, 8
        %s103 = smul.addr %s99, 64
        %s104 = sadd.s32 %s102, %s103
        %s105 = smul.addr %s104, 4
        %s106 = scalar_lea.vmem %s0, %s105
        %s107 = smul.u32 2, %s15
      $region20: #{classifier_forward.8} parent=15 // pred_fallthru
        _
    $region16: #{classifier_forward.8} parent=5 // pred_fallthru
      _
    %p108 = scmp.le.s32.totalorder 1, %s7
    %p109 = scmp.lt.s32.totalorder %s7, 9
    %p110 = pnand %p108, %p109
    %p111 = pneg %p110
    // Predicated region
    $region21: #{classifier_forward.8} parent=5 // pred_check
      _
    $region22: #{classifier_forward.8} parent=5 // pred_check_branch
      %113 = sbr.rel (%p110) target = $region24
    $region23: #{classifier_forward.8} parent=5 // pred_region
      %s114 = ssub.s32 %s7, 1
      %s115 = smul.u32 2, %s17
      %p116 = scmp.lt.s32.totalorder %s16, 1
      %s117 = scalar_select %p116, %s16, 1
      %p118 = scmp.lt.s32.totalorder %s115, 7
      %s119 = scalar_select %p118, %s115, 7
      %s120 = smul.addr %s119, 8
      %s121 = smul.addr %s117, 64
      %s122 = sadd.s32 %s120, %s121
      %s123 = smul.addr %s122, 4
      %s124 = scalar_lea.vmem %s0, %s123
      %p125 = pneg %p47
      %p126 = pneg %p44
      %p127 = pneg %p75
      %p128 = pneg %p72
      %p129 = scmp.lt.s32.totalorder %s16, 1
      %s130 = scalar_select %p129, %s16, 1
      %p131 = scmp.lt.s32.totalorder %s17, 3
      %s132 = scalar_select %p131, %s17, 3
      %s133 = smul.addr %s132, 4
      %s134 = smul.addr %s130, 16
      %s135 = sadd.s32 %s133, %s134
      %s136 = smul.addr %s135, 2
      %s137 = scalar_lea.vmem %s1, %s136
      %s138 = smul.u32 2, %s17
      %p139 = scmp.lt.s32.totalorder %s16, 1
      %s140 = scalar_select %p139, %s16, 1
      %p141 = scmp.lt.s32.totalorder %s138, 7
      %s142 = scalar_select %p141, %s138, 7
      %s143 = smul.addr %s142, 8
      %s144 = smul.addr %s140, 64
      %s145 = sadd.s32 %s143, %s144
      %s146 = smul.addr %s145, 4
      %s147 = scalar_lea.vmem %s0, %s146
      %s148 = smul.u32 2, %s17
      %p149 = scmp.lt.s32.totalorder %s16, 1
      %s150 = scalar_select %p149, %s16, 1
      %p151 = scmp.lt.s32.totalorder %s17, 3
      %s152 = scalar_select %p151, %s17, 3
      %s153 = smul.addr %s152, 4
      %s154 = smul.addr %s150, 16
      %s155 = sadd.s32 %s153, %s154
      %s156 = smul.addr %s155, 2
      %s157 = scalar_lea.vmem %s1, %s156
      %v158 = vld [vmem:[%s147] sm:$0x7]
      %v159 = vld [vmem:[%s147 + $0x4] sm:$0x7]
      %v160 = vld [vmem:[%s147 + $0x8] sm:$0x7]
      %v161 = vld [vmem:[%s147 + $0xc] sm:$0x7]
      %v162 = vld [vmem:[%s147 + $0x10] sm:$0x7]
      %v163 = vld [vmem:[%s147 + $0x14] sm:$0x7]
      %v164 = vld [vmem:[%s147 + $0x18] sm:$0x7]
      %v165 = vld [vmem:[%s147 + $0x1c] sm:$0x7]
      %s166 = scalar_lea.vmem %s147, 32
      %v167 = vld [vmem:[%s166] sm:$0x7]
      %v168 = vld [vmem:[%s166 + $0x4] sm:$0x7]
      %v169 = vld [vmem:[%s166 + $0x8] sm:$0x7]
      %v170 = vld [vmem:[%s166 + $0xc] sm:$0x7]
      %v171 = vld [vmem:[%s166 + $0x10] sm:$0x7]
      %v172 = vld [vmem:[%s166 + $0x14] sm:$0x7]
      %v173 = vld [vmem:[%s166 + $0x18] sm:$0x7]
      %v174 = vld [vmem:[%s166 + $0x1c] sm:$0x7]
      %v175 = vmax.bf16 %v158, %v167
      %v176 = vmax.bf16 %v159, %v168
      %v177 = vmax.bf16 %v160, %v169
      %v178 = vmax.bf16 %v161, %v170
      %v179 = vmax.bf16 %v162, %v171
      %v180 = vmax.bf16 %v163, %v172
      %v181 = vmax.bf16 %v164, %v173
      %v182 = vmax.bf16 %v165, %v174
      %v183 = vmax.bf16 %v175, %v176
      %v184 = vmax.bf16 %v177, %v178
      %v185 = vmax.bf16 %v179, %v180
      %v186 = vmax.bf16 %v181, %v182
      %191 = vrot.lane.b32.xlu0 %v183, 64
      %v192 = vpop.permute.xlu0 %191
      %193 = vrot.lane.b32.xlu0 %v184, 64
      %v194 = vpop.permute.xlu0 %193
      %195 = vrot.lane.b32.xlu0 %v185, 64
      %v196 = vpop.permute.xlu0 %195
      %197 = vrot.lane.b32.xlu0 %v186, 64
      %v198 = vpop.permute.xlu0 %197
      %v203 = vmax.bf16 %v183, %v192
      %v204 = vmax.bf16 %v184, %v194
      %v205 = vmax.bf16 %v185, %v196
      %v206 = vmax.bf16 %v186, %v198
      %vm207 = vcmask 517120
      %208 = vst.msk [vmem:[%s157] sm:$0x3] %vm207, %v203
      %209 = vst.msk [vmem:[%s157 + $0x2] sm:$0x3] %vm207, %v204
      %210 = vst.msk [vmem:[%s157 + $0x4] sm:$0x3] %vm207, %v205
      %211 = vst.msk [vmem:[%s157 + $0x6] sm:$0x3] %vm207, %v206
      %p212 = scmp.lt.s32.totalorder %s16, 1
      %s213 = scalar_select %p212, %s16, 1
      %p214 = scmp.lt.s32.totalorder %s17, 3
      %s215 = scalar_select %p214, %s17, 3
      %s216 = smul.addr %s215, 4
      %s217 = smul.addr %s213, 16
      %s218 = sadd.s32 %s216, %s217
      %s219 = smul.addr %s218, 2
      %s220 = scalar_lea.vmem %s1, %s219
      // Predicated region
      $region25: #{classifier_forward.8} parent=23 // pred_check
        %p221 = pneg %p72
      $region26: #{classifier_forward.8} parent=23 // pred_check_branch
        %223 = sbr.rel (%p221) target = $region28
      $region27: #{classifier_forward.8} parent=23 // pred_region
        _
      $region28: #{classifier_forward.8} parent=23 // pred_fallthru
        _
    $region24: #{classifier_forward.8} parent=5 // pred_fallthru
      _
    %p224 = scmp.le.s32.totalorder 2, %s7
    // Predicated region
    $region29: #{classifier_forward.8} parent=5 // pred_check
      %p225 = pneg %p224
    $region30: #{classifier_forward.8} parent=5 // pred_check_branch
      %227 = sbr.rel (%p225) target = $region32
    $region31: #{classifier_forward.8} parent=5 // pred_region
      %s228 = ssub.s32 %s7, 2
      // Predicated region
      $region33: #{classifier_forward.8} parent=31 // pred_check
        %p229 = pneg %p78
      $region34: #{classifier_forward.8} parent=31 // pred_check_branch
        %231 = sbr.rel (%p229) target = $region36
      $region35: #{classifier_forward.8} parent=31 // pred_region
        %p232 = scmp.lt.s32.totalorder %s18, 1
        %s233 = scalar_select %p232, %s18, 1
        %p234 = scmp.lt.s32.totalorder %s19, 3
        %s235 = scalar_select %p234, %s19, 3
        %s236 = smul.addr %s235, 4
        %s237 = smul.addr %s233, 16
        %s238 = sadd.s32 %s236, %s237
        %s239 = smul.addr %s238, 2
        %s240 = scalar_lea.vmem %s1, %s239
      $region36: #{classifier_forward.8} parent=31 // pred_fallthru
        _
    $region32: #{classifier_forward.8} parent=5 // pred_fallthru
      _
  $region6: #{classifier_forward.8} parent=0 // loop_footer
    %s11 = sadd.s32 1, %s7
  $region7: #{classifier_forward.8} parent=0 // loop_footer_branch
    %6 = sbr.rel target = $region3
  $region8: #{classifier_forward.8} parent=0 // loop_exit
    _

// kernel: classifier_forward.9
$region0: #{classifier_forward.9}
  #allocation0 [shape = 'u32[]', space=smem, size = 0x4, offset = 0x4, fixed_abs, tag = 'smem constant byte address 0x4 - core index']
  #allocation1 [shape = 'u32[144,128]{1,0:T(1,128)}', space=vmem, size = 0x12000, scoped, tag = 'internal scratch']
  %s0 = inlined_call_operand.vmem [shape: bf16[2,4096], index: 0, kind: input, shape index: {}]
  %s1 = inlined_call_operand.vmem [shape: bf16[4096,4], index: 1, kind: input, shape index: {}]
  %s2 = inlined_call_operand.vmem [shape: f32[1,4], index: 2, kind: input, shape index: {}]
  %s3 = inlined_call_operand.hbm [shape: f32[2,4], index: 3, kind: output, shape index: {}]
  %s4 = sld [smem:[#allocation0]]
  $region22: #{classifier_forward.9} parent=0
    _
  %s6 = ssub.s32 1, %s4
  %s7 = scalar_select 0, %s6, %s4
  $region1: #{classifier_forward.9} parent=0
    #allocation2 [shape = 'u8[1024]{0}', space=vmem, size = 0x400, scoped, tag = 'output window, operand 0, single buffered']
    #allocation3 [shape = 's32[1]{0}', space=sflag, size = 0x4, scoped, tag = 'scoped memory for classifier_forward.9']
    %8 = vsyncpa [#allocation3], 0
    // Predicated region
    $region2: #{classifier_forward.9} parent=1 // pred_check
      _
    $region3: #{classifier_forward.9} parent=1 // pred_check_branch
      %10 = sbr.rel (0) target = $region5
    $region4: #{classifier_forward.9} parent=1 // pred_region
      _
    $region5: #{classifier_forward.9} parent=1 // pred_fallthru
      _
    // Predicated region
    $region6: #{classifier_forward.9} parent=1 // pred_check
      _
    $region7: #{classifier_forward.9} parent=1 // pred_check_branch
      %12 = sbr.rel (0) target = $region9
    $region8: #{classifier_forward.9} parent=1 // pred_region
      _
    $region9: #{classifier_forward.9} parent=1 // pred_fallthru
      _
    // Predicated region
    $region10: #{classifier_forward.9} parent=1 // pred_check
      _
    $region11: #{classifier_forward.9} parent=1 // pred_check_branch
      %14 = sbr.rel (0) target = $region13
    $region12: #{classifier_forward.9} parent=1 // pred_region
      _
    $region13: #{classifier_forward.9} parent=1 // pred_fallthru
      _
    %v16 = vld [vmem:[%s0] sm:$0xff]
    %v17 = vld [vmem:[%s0 + $0x8] sm:$0xff]
    %v18 = vld [vmem:[%s0 + $0x10] sm:$0xff]
    %v19 = vld [vmem:[%s0 + $0x18] sm:$0xff]
    %v20 = vld [vmem:[%s1] sm:$0xf]
    %v21 = vld [vmem:[%s1 + $0x4] sm:$0xf]
    %v22 = vld [vmem:[%s1 + $0x8] sm:$0xf]
    %v23 = vld [vmem:[%s1 + $0xc] sm:$0xf]
    %v24 = vld [vmem:[%s1 + $0x10] sm:$0xf]
    %v25 = vld [vmem:[%s1 + $0x14] sm:$0xf]
    %v26 = vld [vmem:[%s1 + $0x18] sm:$0xf]
    %v27 = vld [vmem:[%s1 + $0x1c] sm:$0xf]
    %v28 = vld [vmem:[%s1 + $0x20] sm:$0xf]
    %v29 = vld [vmem:[%s1 + $0x24] sm:$0xf]
    %v30 = vld [vmem:[%s1 + $0x28] sm:$0xf]
    %v31 = vld [vmem:[%s1 + $0x2c] sm:$0xf]
    %v32 = vld [vmem:[%s1 + $0x30] sm:$0xf]
    %v33 = vld [vmem:[%s1 + $0x34] sm:$0xf]
    %v34 = vld [vmem:[%s1 + $0x38] sm:$0xf]
    %v35 = vld [vmem:[%s1 + $0x3c] sm:$0xf]
    %v36 = vld [vmem:[%s1 + $0x40] sm:$0xf]
    %v37 = vld [vmem:[%s1 + $0x44] sm:$0xf]
    %v38 = vld [vmem:[%s1 + $0x48] sm:$0xf]
    %v39 = vld [vmem:[%s1 + $0x4c] sm:$0xf]
    %v40 = vld [vmem:[%s1 + $0x50] sm:$0xf]
    %v41 = vld [vmem:[%s1 + $0x54] sm:$0xf]
    %v42 = vld [vmem:[%s1 + $0x58] sm:$0xf]
    %v43 = vld [vmem:[%s1 + $0x5c] sm:$0xf]
    %v44 = vld [vmem:[%s1 + $0x60] sm:$0xf]
    %v45 = vld [vmem:[%s1 + $0x64] sm:$0xf]
    %v46 = vld [vmem:[%s1 + $0x68] sm:$0xf]
    %v47 = vld [vmem:[%s1 + $0x6c] sm:$0xf]
    %v48 = vld [vmem:[%s1 + $0x70] sm:$0xf]
    %v49 = vld [vmem:[%s1 + $0x74] sm:$0xf]
    %v50 = vld [vmem:[%s1 + $0x78] sm:$0xf]
    %v51 = vld [vmem:[%s1 + $0x7c] sm:$0xf]
    %v52 = vld [vmem:[%s1 + $0x80] sm:$0xf]
    %v53 = vld [vmem:[%s1 + $0x84] sm:$0xf]
    %v54 = vld [vmem:[%s1 + $0x88] sm:$0xf]
    %v55 = vld [vmem:[%s1 + $0x8c] sm:$0xf]
    %v56 = vld [vmem:[%s1 + $0x90] sm:$0xf]
    %v57 = vld [vmem:[%s1 + $0x94] sm:$0xf]
    %v58 = vld [vmem:[%s1 + $0x98] sm:$0xf]
    %v59 = vld [vmem:[%s1 + $0x9c] sm:$0xf]
    %v60 = vld [vmem:[%s1 + $0xa0] sm:$0xf]
    %v61 = vld [vmem:[%s1 + $0xa4] sm:$0xf]
    %v62 = vld [vmem:[%s1 + $0xa8] sm:$0xf]
    %v63 = vld [vmem:[%s1 + $0xac] sm:$0xf]
    %v64 = vld [vmem:[%s1 + $0xb0] sm:$0xf]
    %v65 = vld [vmem:[%s1 + $0xb4] sm:$0xf]
    %v66 = vld [vmem:[%s1 + $0xb8] sm:$0xf]
    %v67 = vld [vmem:[%s1 + $0xbc] sm:$0xf]
    %v68 = vld [vmem:[%s1 + $0xc0] sm:$0xf]
    %v69 = vld [vmem:[%s1 + $0xc4] sm:$0xf]
    %v70 = vld [vmem:[%s1 + $0xc8] sm:$0xf]
    %v71 = vld [vmem:[%s1 + $0xcc] sm:$0xf]
    %v72 = vld [vmem:[%s1 + $0xd0] sm:$0xf]
    %v73 = vld [vmem:[%s1 + $0xd4] sm:$0xf]
    %v74 = vld [vmem:[%s1 + $0xd8] sm:$0xf]
    %v75 = vld [vmem:[%s1 + $0xdc] sm:$0xf]
    %v76 = vld [vmem:[%s1 + $0xe0] sm:$0xf]
    %v77 = vld [vmem:[%s1 + $0xe4] sm:$0xf]
    %v78 = vld [vmem:[%s1 + $0xe8] sm:$0xf]
    %v79 = vld [vmem:[%s1 + $0xec] sm:$0xf]
    %v80 = vld [vmem:[%s1 + $0xf0] sm:$0xf]
    %v81 = vld [vmem:[%s1 + $0xf4] sm:$0xf]
    %v82 = vld [vmem:[%s1 + $0xf8] sm:$0xf]
    %v83 = vld [vmem:[%s1 + $0xfc] sm:$0xf]
    %v84 = vld [vmem:[%s1 + $0x100] sm:$0xf]
    %v85 = vld [vmem:[%s1 + $0x104] sm:$0xf]
    %v86 = vld [vmem:[%s1 + $0x108] sm:$0xf]
    %v87 = vld [vmem:[%s1 + $0x10c] sm:$0xf]
    %v88 = vld [vmem:[%s1 + $0x110] sm:$0xf]
    %v89 = vld [vmem:[%s1 + $0x114] sm:$0xf]
    %v90 = vld [vmem:[%s1 + $0x118] sm:$0xf]
    %v91 = vld [vmem:[%s1 + $0x11c] sm:$0xf]
    %v92 = vld [vmem:[%s1 + $0x120] sm:$0xf]
    %v93 = vld [vmem:[%s1 + $0x124] sm:$0xf]
    %v94 = vld [vmem:[%s1 + $0x128] sm:$0xf]
    %v95 = vld [vmem:[%s1 + $0x12c] sm:$0xf]
    %v96 = vld [vmem:[%s1 + $0x130] sm:$0xf]
    %v97 = vld [vmem:[%s1 + $0x134] sm:$0xf]
    %v98 = vld [vmem:[%s1 + $0x138] sm:$0xf]
    %v99 = vld [vmem:[%s1 + $0x13c] sm:$0xf]
    %v100 = vld [vmem:[%s1 + $0x140] sm:$0xf]
    %v101 = vld [vmem:[%s1 + $0x144] sm:$0xf]
    %v102 = vld [vmem:[%s1 + $0x148] sm:$0xf]
    %v103 = vld [vmem:[%s1 + $0x14c] sm:$0xf]
    %v104 = vld [vmem:[%s1 + $0x150] sm:$0xf]
    %v105 = vld [vmem:[%s1 + $0x154] sm:$0xf]
    %v106 = vld [vmem:[%s1 + $0x158] sm:$0xf]
    %v107 = vld [vmem:[%s1 + $0x15c] sm:$0xf]
    %v108 = vld [vmem:[%s1 + $0x160] sm:$0xf]
    %v109 = vld [vmem:[%s1 + $0x164] sm:$0xf]
    %v110 = vld [vmem:[%s1 + $0x168] sm:$0xf]
    %v111 = vld [vmem:[%s1 + $0x16c] sm:$0xf]
    %v112 = vld [vmem:[%s1 + $0x170] sm:$0xf]
    %v113 = vld [vmem:[%s1 + $0x174] sm:$0xf]
    %v114 = vld [vmem:[%s1 + $0x178] sm:$0xf]
    %v115 = vld [vmem:[%s1 + $0x17c] sm:$0xf]
    %v116 = vld [vmem:[%s1 + $0x180] sm:$0xf]
    %v117 = vld [vmem:[%s1 + $0x184] sm:$0xf]
    %v118 = vld [vmem:[%s1 + $0x188] sm:$0xf]
    %v119 = vld [vmem:[%s1 + $0x18c] sm:$0xf]
    %v120 = vld [vmem:[%s1 + $0x190] sm:$0xf]
    %v121 = vld [vmem:[%s1 + $0x194] sm:$0xf]
    %v122 = vld [vmem:[%s1 + $0x198] sm:$0xf]
    %v123 = vld [vmem:[%s1 + $0x19c] sm:$0xf]
    %v124 = vld [vmem:[%s1 + $0x1a0] sm:$0xf]
    %v125 = vld [vmem:[%s1 + $0x1a4] sm:$0xf]
    %v126 = vld [vmem:[%s1 + $0x1a8] sm:$0xf]
    %v127 = vld [vmem:[%s1 + $0x1ac] sm:$0xf]
    %v128 = vld [vmem:[%s1 + $0x1b0] sm:$0xf]
    %v129 = vld [vmem:[%s1 + $0x1b4] sm:$0xf]
    %v130 = vld [vmem:[%s1 + $0x1b8] sm:$0xf]
    %v131 = vld [vmem:[%s1 + $0x1bc] sm:$0xf]
    %v132 = vld [vmem:[%s1 + $0x1c0] sm:$0xf]
    %v133 = vld [vmem:[%s1 + $0x1c4] sm:$0xf]
    %v134 = vld [vmem:[%s1 + $0x1c8] sm:$0xf]
    %v135 = vld [vmem:[%s1 + $0x1cc] sm:$0xf]
    %v136 = vld [vmem:[%s1 + $0x1d0] sm:$0xf]
    %v137 = vld [vmem:[%s1 + $0x1d4] sm:$0xf]
    %v138 = vld [vmem:[%s1 + $0x1d8] sm:$0xf]
    %v139 = vld [vmem:[%s1 + $0x1dc] sm:$0xf]
    %v140 = vld [vmem:[%s1 + $0x1e0] sm:$0xf]
    %v141 = vld [vmem:[%s1 + $0x1e4] sm:$0xf]
    %v142 = vld [vmem:[%s1 + $0x1e8] sm:$0xf]
    %v143 = vld [vmem:[%s1 + $0x1ec] sm:$0xf]
    %v144 = vld [vmem:[%s1 + $0x1f0] sm:$0xf]
    %v145 = vld [vmem:[%s1 + $0x1f4] sm:$0xf]
    %v146 = vld [vmem:[%s1 + $0x1f8] sm:$0xf]
    %v147 = vld [vmem:[%s1 + $0x1fc] sm:$0xf]
    %v148 = vld [vmem:[%s1 + $0x200] sm:$0xf]
    %v149 = vld [vmem:[%s1 + $0x204] sm:$0xf]
    %v150 = vld [vmem:[%s1 + $0x208] sm:$0xf]
    %v151 = vld [vmem:[%s1 + $0x20c] sm:$0xf]
    %v152 = vld [vmem:[%s1 + $0x210] sm:$0xf]
    %v153 = vld [vmem:[%s1 + $0x214] sm:$0xf]
    %v154 = vld [vmem:[%s1 + $0x218] sm:$0xf]
    %v155 = vld [vmem:[%s1 + $0x21c] sm:$0xf]
    %v156 = vld [vmem:[%s1 + $0x220] sm:$0xf]
    %v157 = vld [vmem:[%s1 + $0x224] sm:$0xf]
    %v158 = vld [vmem:[%s1 + $0x228] sm:$0xf]
    %v159 = vld [vmem:[%s1 + $0x22c] sm:$0xf]
    %v160 = vld [vmem:[%s1 + $0x230] sm:$0xf]
    %v161 = vld [vmem:[%s1 + $0x234] sm:$0xf]
    %v162 = vld [vmem:[%s1 + $0x238] sm:$0xf]
    %v163 = vld [vmem:[%s1 + $0x23c] sm:$0xf]
    %v164 = vld [vmem:[%s1 + $0x240] sm:$0xf]
    %v165 = vld [vmem:[%s1 + $0x244] sm:$0xf]
    %v166 = vld [vmem:[%s1 + $0x248] sm:$0xf]
    %v167 = vld [vmem:[%s1 + $0x24c] sm:$0xf]
    %v168 = vld [vmem:[%s1 + $0x250] sm:$0xf]
    %v169 = vld [vmem:[%s1 + $0x254] sm:$0xf]
    %v170 = vld [vmem:[%s1 + $0x258] sm:$0xf]
    %v171 = vld [vmem:[%s1 + $0x25c] sm:$0xf]
    %v172 = vld [vmem:[%s1 + $0x260] sm:$0xf]
    %v173 = vld [vmem:[%s1 + $0x264] sm:$0xf]
    %v174 = vld [vmem:[%s1 + $0x268] sm:$0xf]
    %v175 = vld [vmem:[%s1 + $0x26c] sm:$0xf]
    %v176 = vld [vmem:[%s1 + $0x270] sm:$0xf]
    %v177 = vld [vmem:[%s1 + $0x274] sm:$0xf]
    %v178 = vld [vmem:[%s1 + $0x278] sm:$0xf]
    %v179 = vld [vmem:[%s1 + $0x27c] sm:$0xf]
    %v180 = vld [vmem:[%s1 + $0x280] sm:$0xf]
    %v181 = vld [vmem:[%s1 + $0x284] sm:$0xf]
    %v182 = vld [vmem:[%s1 + $0x288] sm:$0xf]
    %v183 = vld [vmem:[%s1 + $0x28c] sm:$0xf]
    %v184 = vld [vmem:[%s1 + $0x290] sm:$0xf]
    %v185 = vld [vmem:[%s1 + $0x294] sm:$0xf]
    %v186 = vld [vmem:[%s1 + $0x298] sm:$0xf]
    %v187 = vld [vmem:[%s1 + $0x29c] sm:$0xf]
    %v188 = vld [vmem:[%s1 + $0x2a0] sm:$0xf]
    %v189 = vld [vmem:[%s1 + $0x2a4] sm:$0xf]
    %v190 = vld [vmem:[%s1 + $0x2a8] sm:$0xf]
    %v191 = vld [vmem:[%s1 + $0x2ac] sm:$0xf]
    %v192 = vld [vmem:[%s1 + $0x2b0] sm:$0xf]
    %v193 = vld [vmem:[%s1 + $0x2b4] sm:$0xf]
    %v194 = vld [vmem:[%s1 + $0x2b8] sm:$0xf]
    %v195 = vld [vmem:[%s1 + $0x2bc] sm:$0xf]
    %v196 = vld [vmem:[%s1 + $0x2c0] sm:$0xf]
    %v197 = vld [vmem:[%s1 + $0x2c4] sm:$0xf]
    %v198 = vld [vmem:[%s1 + $0x2c8] sm:$0xf]
    %v199 = vld [vmem:[%s1 + $0x2cc] sm:$0xf]
    %v200 = vld [vmem:[%s1 + $0x2d0] sm:$0xf]
    %v201 = vld [vmem:[%s1 + $0x2d4] sm:$0xf]
    %v202 = vld [vmem:[%s1 + $0x2d8] sm:$0xf]
    %v203 = vld [vmem:[%s1 + $0x2dc] sm:$0xf]
    %v204 = vld [vmem:[%s1 + $0x2e0] sm:$0xf]
    %v205 = vld [vmem:[%s1 + $0x2e4] sm:$0xf]
    %v206 = vld [vmem:[%s1 + $0x2e8] sm:$0xf]
    %v207 = vld [vmem:[%s1 + $0x2ec] sm:$0xf]
    %v208 = vld [vmem:[%s1 + $0x2f0] sm:$0xf]
    %v209 = vld [vmem:[%s1 + $0x2f4] sm:$0xf]
    %v210 = vld [vmem:[%s1 + $0x2f8] sm:$0xf]
    %v211 = vld [vmem:[%s1 + $0x2fc] sm:$0xf]
    %v212 = vld [vmem:[%s1 + $0x300] sm:$0xf]
    %v213 = vld [vmem:[%s1 + $0x304] sm:$0xf]
    %v214 = vld [vmem:[%s1 + $0x308] sm:$0xf]
    %v215 = vld [vmem:[%s1 + $0x30c] sm:$0xf]
    %v216 = vld [vmem:[%s1 + $0x310] sm:$0xf]
    %v217 = vld [vmem:[%s1 + $0x314] sm:$0xf]
    %v218 = vld [vmem:[%s1 + $0x318] sm:$0xf]
    %v219 = vld [vmem:[%s1 + $0x31c] sm:$0xf]
    %v220 = vld [vmem:[%s1 + $0x320] sm:$0xf]
    %v221 = vld [vmem:[%s1 + $0x324] sm:$0xf]
    %v222 = vld [vmem:[%s1 + $0x328] sm:$0xf]
    %v223 = vld [vmem:[%s1 + $0x32c] sm:$0xf]
    %v224 = vld [vmem:[%s1 + $0x330] sm:$0xf]
    %v225 = vld [vmem:[%s1 + $0x334] sm:$0xf]
    %v226 = vld [vmem:[%s1 + $0x338] sm:$0xf]
    %v227 = vld [vmem:[%s1 + $0x33c] sm:$0xf]
    %v228 = vld [vmem:[%s1 + $0x340] sm:$0xf]
    %v229 = vld [vmem:[%s1 + $0x344] sm:$0xf]
    %v230 = vld [vmem:[%s1 + $0x348] sm:$0xf]
    %v231 = vld [vmem:[%s1 + $0x34c] sm:$0xf]
    %v232 = vld [vmem:[%s1 + $0x350] sm:$0xf]
    %v233 = vld [vmem:[%s1 + $0x354] sm:$0xf]
    %v234 = vld [vmem:[%s1 + $0x358] sm:$0xf]
    %v235 = vld [vmem:[%s1 + $0x35c] sm:$0xf]
    %v236 = vld [vmem:[%s1 + $0x360] sm:$0xf]
    %v237 = vld [vmem:[%s1 + $0x364] sm:$0xf]
    %v238 = vld [vmem:[%s1 + $0x368] sm:$0xf]
    %v239 = vld [vmem:[%s1 + $0x36c] sm:$0xf]
    %v240 = vld [vmem:[%s1 + $0x370] sm:$0xf]
    %v241 = vld [vmem:[%s1 + $0x374] sm:$0xf]
    %v242 = vld [vmem:[%s1 + $0x378] sm:$0xf]
    %v243 = vld [vmem:[%s1 + $0x37c] sm:$0xf]
    %v244 = vld [vmem:[%s1 + $0x380] sm:$0xf]
    %v245 = vld [vmem:[%s1 + $0x384] sm:$0xf]
    %v246 = vld [vmem:[%s1 + $0x388] sm:$0xf]
    %v247 = vld [vmem:[%s1 + $0x38c] sm:$0xf]
    %v248 = vld [vmem:[%s1 + $0x390] sm:$0xf]
    %v249 = vld [vmem:[%s1 + $0x394] sm:$0xf]
    %v250 = vld [vmem:[%s1 + $0x398] sm:$0xf]
    %v251 = vld [vmem:[%s1 + $0x39c] sm:$0xf]
    %v252 = vld [vmem:[%s1 + $0x3a0] sm:$0xf]
    %v253 = vld [vmem:[%s1 + $0x3a4] sm:$0xf]
    %v254 = vld [vmem:[%s1 + $0x3a8] sm:$0xf]
    %v255 = vld [vmem:[%s1 + $0x3ac] sm:$0xf]
    %v256 = vld [vmem:[%s1 + $0x3b0] sm:$0xf]
    %v257 = vld [vmem:[%s1 + $0x3b4] sm:$0xf]
    %v258 = vld [vmem:[%s1 + $0x3b8] sm:$0xf]
    %v259 = vld [vmem:[%s1 + $0x3bc] sm:$0xf]
    %v260 = vld [vmem:[%s1 + $0x3c0] sm:$0xf]
    %v261 = vld [vmem:[%s1 + $0x3c4] sm:$0xf]
    %v262 = vld [vmem:[%s1 + $0x3c8] sm:$0xf]
    %v263 = vld [vmem:[%s1 + $0x3cc] sm:$0xf]
    %v264 = vld [vmem:[%s1 + $0x3d0] sm:$0xf]
    %v265 = vld [vmem:[%s1 + $0x3d4] sm:$0xf]
    %v266 = vld [vmem:[%s1 + $0x3d8] sm:$0xf]
    %v267 = vld [vmem:[%s1 + $0x3dc] sm:$0xf]
    %v268 = vld [vmem:[%s1 + $0x3e0] sm:$0xf]
    %v269 = vld [vmem:[%s1 + $0x3e4] sm:$0xf]
    %v270 = vld [vmem:[%s1 + $0x3e8] sm:$0xf]
    %v271 = vld [vmem:[%s1 + $0x3ec] sm:$0xf]
    %v272 = vld [vmem:[%s1 + $0x3f0] sm:$0xf]
    %v273 = vld [vmem:[%s1 + $0x3f4] sm:$0xf]
    %v274 = vld [vmem:[%s1 + $0x3f8] sm:$0xf]
    %v275 = vld [vmem:[%s1 + $0x3fc] sm:$0xf]
    %v276 = vld [vmem:[%s1 + $0x400] sm:$0xf]
    %v277 = vld [vmem:[%s1 + $0x404] sm:$0xf]
    %v278 = vld [vmem:[%s1 + $0x408] sm:$0xf]
    %v279 = vld [vmem:[%s1 + $0x40c] sm:$0xf]
    %v280 = vld [vmem:[%s1 + $0x410] sm:$0xf]
    %v281 = vld [vmem:[%s1 + $0x414] sm:$0xf]
    %v282 = vld [vmem:[%s1 + $0x418] sm:$0xf]
    %v283 = vld [vmem:[%s1 + $0x41c] sm:$0xf]
    %v284 = vld [vmem:[%s1 + $0x420] sm:$0xf]
    %v285 = vld [vmem:[%s1 + $0x424] sm:$0xf]
    %v286 = vld [vmem:[%s1 + $0x428] sm:$0xf]
    %v287 = vld [vmem:[%s1 + $0x42c] sm:$0xf]
    %v288 = vld [vmem:[%s1 + $0x430] sm:$0xf]
    %v289 = vld [vmem:[%s1 + $0x434] sm:$0xf]
    %v290 = vld [vmem:[%s1 + $0x438] sm:$0xf]
    %v291 = vld [vmem:[%s1 + $0x43c] sm:$0xf]
    %v292 = vld [vmem:[%s1 + $0x440] sm:$0xf]
    %v293 = vld [vmem:[%s1 + $0x444] sm:$0xf]
    %v294 = vld [vmem:[%s1 + $0x448] sm:$0xf]
    %v295 = vld [vmem:[%s1 + $0x44c] sm:$0xf]
    %v296 = vld [vmem:[%s1 + $0x450] sm:$0xf]
    %v297 = vld [vmem:[%s1 + $0x454] sm:$0xf]
    %v298 = vld [vmem:[%s1 + $0x458] sm:$0xf]
    %v299 = vld [vmem:[%s1 + $0x45c] sm:$0xf]
    %v300 = vld [vmem:[%s1 + $0x460] sm:$0xf]
    %v301 = vld [vmem:[%s1 + $0x464] sm:$0xf]
    %v302 = vld [vmem:[%s1 + $0x468] sm:$0xf]
    %v303 = vld [vmem:[%s1 + $0x46c] sm:$0xf]
    %v304 = vld [vmem:[%s1 + $0x470] sm:$0xf]
    %v305 = vld [vmem:[%s1 + $0x474] sm:$0xf]
    %v306 = vld [vmem:[%s1 + $0x478] sm:$0xf]
    %v307 = vld [vmem:[%s1 + $0x47c] sm:$0xf]
    %v308 = vld [vmem:[%s1 + $0x480] sm:$0xf]
    %v309 = vld [vmem:[%s1 + $0x484] sm:$0xf]
    %v310 = vld [vmem:[%s1 + $0x488] sm:$0xf]
    %v311 = vld [vmem:[%s1 + $0x48c] sm:$0xf]
    %v312 = vld [vmem:[%s1 + $0x490] sm:$0xf]
    %v313 = vld [vmem:[%s1 + $0x494] sm:$0xf]
    %v314 = vld [vmem:[%s1 + $0x498] sm:$0xf]
    %v315 = vld [vmem:[%s1 + $0x49c] sm:$0xf]
    %v316 = vld [vmem:[%s1 + $0x4a0] sm:$0xf]
    %v317 = vld [vmem:[%s1 + $0x4a4] sm:$0xf]
    %v318 = vld [vmem:[%s1 + $0x4a8] sm:$0xf]
    %v319 = vld [vmem:[%s1 + $0x4ac] sm:$0xf]
    %v320 = vld [vmem:[%s1 + $0x4b0] sm:$0xf]
    %v321 = vld [vmem:[%s1 + $0x4b4] sm:$0xf]
    %v322 = vld [vmem:[%s1 + $0x4b8] sm:$0xf]
    %v323 = vld [vmem:[%s1 + $0x4bc] sm:$0xf]
    %v324 = vld [vmem:[%s1 + $0x4c0] sm:$0xf]
    %v325 = vld [vmem:[%s1 + $0x4c4] sm:$0xf]
    %v326 = vld [vmem:[%s1 + $0x4c8] sm:$0xf]
    %v327 = vld [vmem:[%s1 + $0x4cc] sm:$0xf]
    %v328 = vld [vmem:[%s1 + $0x4d0] sm:$0xf]
    %v329 = vld [vmem:[%s1 + $0x4d4] sm:$0xf]
    %v330 = vld [vmem:[%s1 + $0x4d8] sm:$0xf]
    %v331 = vld [vmem:[%s1 + $0x4dc] sm:$0xf]
    %v332 = vld [vmem:[%s1 + $0x4e0] sm:$0xf]
    %v333 = vld [vmem:[%s1 + $0x4e4] sm:$0xf]
    %v334 = vld [vmem:[%s1 + $0x4e8] sm:$0xf]
    %v335 = vld [vmem:[%s1 + $0x4ec] sm:$0xf]
    %v336 = vld [vmem:[%s1 + $0x4f0] sm:$0xf]
    %v337 = vld [vmem:[%s1 + $0x4f4] sm:$0xf]
    %v338 = vld [vmem:[%s1 + $0x4f8] sm:$0xf]
    %v339 = vld [vmem:[%s1 + $0x4fc] sm:$0xf]
    %v340 = vld [vmem:[%s1 + $0x500] sm:$0xf]
    %v341 = vld [vmem:[%s1 + $0x504] sm:$0xf]
    %v342 = vld [vmem:[%s1 + $0x508] sm:$0xf]
    %v343 = vld [vmem:[%s1 + $0x50c] sm:$0xf]
    %v344 = vld [vmem:[%s1 + $0x510] sm:$0xf]
    %v345 = vld [vmem:[%s1 + $0x514] sm:$0xf]
    %v346 = vld [vmem:[%s1 + $0x518] sm:$0xf]
    %v347 = vld [vmem:[%s1 + $0x51c] sm:$0xf]
    %v348 = vld [vmem:[%s1 + $0x520] sm:$0xf]
    %v349 = vld [vmem:[%s1 + $0x524] sm:$0xf]
    %v350 = vld [vmem:[%s1 + $0x528] sm:$0xf]
    %v351 = vld [vmem:[%s1 + $0x52c] sm:$0xf]
    %v352 = vld [vmem:[%s1 + $0x530] sm:$0xf]
    %v353 = vld [vmem:[%s1 + $0x534] sm:$0xf]
    %v354 = vld [vmem:[%s1 + $0x538] sm:$0xf]
    %v355 = vld [vmem:[%s1 + $0x53c] sm:$0xf]
    %v356 = vld [vmem:[%s1 + $0x540] sm:$0xf]
    %v357 = vld [vmem:[%s1 + $0x544] sm:$0xf]
    %v358 = vld [vmem:[%s1 + $0x548] sm:$0xf]
    %v359 = vld [vmem:[%s1 + $0x54c] sm:$0xf]
    %v360 = vld [vmem:[%s1 + $0x550] sm:$0xf]
    %v361 = vld [vmem:[%s1 + $0x554] sm:$0xf]
    %v362 = vld [vmem:[%s1 + $0x558] sm:$0xf]
    %v363 = vld [vmem:[%s1 + $0x55c] sm:$0xf]
    %v364 = vld [vmem:[%s1 + $0x560] sm:$0xf]
    %v365 = vld [vmem:[%s1 + $0x564] sm:$0xf]
    %v366 = vld [vmem:[%s1 + $0x568] sm:$0xf]
    %v367 = vld [vmem:[%s1 + $0x56c] sm:$0xf]
    %v368 = vld [vmem:[%s1 + $0x570] sm:$0xf]
    %v369 = vld [vmem:[%s1 + $0x574] sm:$0xf]
    %v370 = vld [vmem:[%s1 + $0x578] sm:$0xf]
    %v371 = vld [vmem:[%s1 + $0x57c] sm:$0xf]
    %v372 = vld [vmem:[%s1 + $0x580] sm:$0xf]
    %v373 = vld [vmem:[%s1 + $0x584] sm:$0xf]
    %v374 = vld [vmem:[%s1 + $0x588] sm:$0xf]
    %v375 = vld [vmem:[%s1 + $0x58c] sm:$0xf]
    %v376 = vld [vmem:[%s1 + $0x590] sm:$0xf]
    %v377 = vld [vmem:[%s1 + $0x594] sm:$0xf]
    %v378 = vld [vmem:[%s1 + $0x598] sm:$0xf]
    %v379 = vld [vmem:[%s1 + $0x59c] sm:$0xf]
    %v380 = vld [vmem:[%s1 + $0x5a0] sm:$0xf]
    %v381 = vld [vmem:[%s1 + $0x5a4] sm:$0xf]
    %v382 = vld [vmem:[%s1 + $0x5a8] sm:$0xf]
    %v383 = vld [vmem:[%s1 + $0x5ac] sm:$0xf]
    %v384 = vld [vmem:[%s1 + $0x5b0] sm:$0xf]
    %v385 = vld [vmem:[%s1 + $0x5b4] sm:$0xf]
    %v386 = vld [vmem:[%s1 + $0x5b8] sm:$0xf]
    %v387 = vld [vmem:[%s1 + $0x5bc] sm:$0xf]
    %v388 = vld [vmem:[%s1 + $0x5c0] sm:$0xf]
    %v389 = vld [vmem:[%s1 + $0x5c4] sm:$0xf]
    %v390 = vld [vmem:[%s1 + $0x5c8] sm:$0xf]
    %v391 = vld [vmem:[%s1 + $0x5cc] sm:$0xf]
    %v392 = vld [vmem:[%s1 + $0x5d0] sm:$0xf]
    %v393 = vld [vmem:[%s1 + $0x5d4] sm:$0xf]
    %v394 = vld [vmem:[%s1 + $0x5d8] sm:$0xf]
    %v395 = vld [vmem:[%s1 + $0x5dc] sm:$0xf]
    %v396 = vld [vmem:[%s1 + $0x5e0] sm:$0xf]
    %v397 = vld [vmem:[%s1 + $0x5e4] sm:$0xf]
    %v398 = vld [vmem:[%s1 + $0x5e8] sm:$0xf]
    %v399 = vld [vmem:[%s1 + $0x5ec] sm:$0xf]
    %v400 = vld [vmem:[%s1 + $0x5f0] sm:$0xf]
    %v401 = vld [vmem:[%s1 + $0x5f4] sm:$0xf]
    %v402 = vld [vmem:[%s1 + $0x5f8] sm:$0xf]
    %v403 = vld [vmem:[%s1 + $0x5fc] sm:$0xf]
    %v404 = vld [vmem:[%s1 + $0x600] sm:$0xf]
    %v405 = vld [vmem:[%s1 + $0x604] sm:$0xf]
    %v406 = vld [vmem:[%s1 + $0x608] sm:$0xf]
    %v407 = vld [vmem:[%s1 + $0x60c] sm:$0xf]
    %v408 = vld [vmem:[%s1 + $0x610] sm:$0xf]
    %v409 = vld [vmem:[%s1 + $0x614] sm:$0xf]
    %v410 = vld [vmem:[%s1 + $0x618] sm:$0xf]
    %v411 = vld [vmem:[%s1 + $0x61c] sm:$0xf]
    %v412 = vld [vmem:[%s1 + $0x620] sm:$0xf]
    %v413 = vld [vmem:[%s1 + $0x624] sm:$0xf]
    %v414 = vld [vmem:[%s1 + $0x628] sm:$0xf]
    %v415 = vld [vmem:[%s1 + $0x62c] sm:$0xf]
    %v416 = vld [vmem:[%s1 + $0x630] sm:$0xf]
    %v417 = vld [vmem:[%s1 + $0x634] sm:$0xf]
    %v418 = vld [vmem:[%s1 + $0x638] sm:$0xf]
    %v419 = vld [vmem:[%s1 + $0x63c] sm:$0xf]
    %v420 = vld [vmem:[%s1 + $0x640] sm:$0xf]
    %v421 = vld [vmem:[%s1 + $0x644] sm:$0xf]
    %v422 = vld [vmem:[%s1 + $0x648] sm:$0xf]
    %v423 = vld [vmem:[%s1 + $0x64c] sm:$0xf]
    %v424 = vld [vmem:[%s1 + $0x650] sm:$0xf]
    %v425 = vld [vmem:[%s1 + $0x654] sm:$0xf]
    %v426 = vld [vmem:[%s1 + $0x658] sm:$0xf]
    %v427 = vld [vmem:[%s1 + $0x65c] sm:$0xf]
    %v428 = vld [vmem:[%s1 + $0x660] sm:$0xf]
    %v429 = vld [vmem:[%s1 + $0x664] sm:$0xf]
    %v430 = vld [vmem:[%s1 + $0x668] sm:$0xf]
    %v431 = vld [vmem:[%s1 + $0x66c] sm:$0xf]
    %v432 = vld [vmem:[%s1 + $0x670] sm:$0xf]
    %v433 = vld [vmem:[%s1 + $0x674] sm:$0xf]
    %v434 = vld [vmem:[%s1 + $0x678] sm:$0xf]
    %v435 = vld [vmem:[%s1 + $0x67c] sm:$0xf]
    %v436 = vld [vmem:[%s1 + $0x680] sm:$0xf]
    %v437 = vld [vmem:[%s1 + $0x684] sm:$0xf]
    %v438 = vld [vmem:[%s1 + $0x688] sm:$0xf]
    %v439 = vld [vmem:[%s1 + $0x68c] sm:$0xf]
    %v440 = vld [vmem:[%s1 + $0x690] sm:$0xf]
    %v441 = vld [vmem:[%s1 + $0x694] sm:$0xf]
    %v442 = vld [vmem:[%s1 + $0x698] sm:$0xf]
    %v443 = vld [vmem:[%s1 + $0x69c] sm:$0xf]
    %v444 = vld [vmem:[%s1 + $0x6a0] sm:$0xf]
    %v445 = vld [vmem:[%s1 + $0x6a4] sm:$0xf]
    %v446 = vld [vmem:[%s1 + $0x6a8] sm:$0xf]
    %v447 = vld [vmem:[%s1 + $0x6ac] sm:$0xf]
    %v448 = vld [vmem:[%s1 + $0x6b0] sm:$0xf]
    %v449 = vld [vmem:[%s1 + $0x6b4] sm:$0xf]
    %v450 = vld [vmem:[%s1 + $0x6b8] sm:$0xf]
    %v451 = vld [vmem:[%s1 + $0x6bc] sm:$0xf]
    %v452 = vld [vmem:[%s1 + $0x6c0] sm:$0xf]
    %v453 = vld [vmem:[%s1 + $0x6c4] sm:$0xf]
    %v454 = vld [vmem:[%s1 + $0x6c8] sm:$0xf]
    %v455 = vld [vmem:[%s1 + $0x6cc] sm:$0xf]
    %v456 = vld [vmem:[%s1 + $0x6d0] sm:$0xf]
    %v457 = vld [vmem:[%s1 + $0x6d4] sm:$0xf]
    %v458 = vld [vmem:[%s1 + $0x6d8] sm:$0xf]
    %v459 = vld [vmem:[%s1 + $0x6dc] sm:$0xf]
    %v460 = vld [vmem:[%s1 + $0x6e0] sm:$0xf]
    %v461 = vld [vmem:[%s1 + $0x6e4] sm:$0xf]
    %v462 = vld [vmem:[%s1 + $0x6e8] sm:$0xf]
    %v463 = vld [vmem:[%s1 + $0x6ec] sm:$0xf]
    %v464 = vld [vmem:[%s1 + $0x6f0] sm:$0xf]
    %v465 = vld [vmem:[%s1 + $0x6f4] sm:$0xf]
    %v466 = vld [vmem:[%s1 + $0x6f8] sm:$0xf]
    %v467 = vld [vmem:[%s1 + $0x6fc] sm:$0xf]
    %v468 = vld [vmem:[%s1 + $0x700] sm:$0xf]
    %v469 = vld [vmem:[%s1 + $0x704] sm:$0xf]
    %v470 = vld [vmem:[%s1 + $0x708] sm:$0xf]
    %v471 = vld [vmem:[%s1 + $0x70c] sm:$0xf]
    %v472 = vld [vmem:[%s1 + $0x710] sm:$0xf]
    %v473 = vld [vmem:[%s1 + $0x714] sm:$0xf]
    %v474 = vld [vmem:[%s1 + $0x718] sm:$0xf]
    %v475 = vld [vmem:[%s1 + $0x71c] sm:$0xf]
    %v476 = vld [vmem:[%s1 + $0x720] sm:$0xf]
    %v477 = vld [vmem:[%s1 + $0x724] sm:$0xf]
    %v478 = vld [vmem:[%s1 + $0x728] sm:$0xf]
    %v479 = vld [vmem:[%s1 + $0x72c] sm:$0xf]
    %v480 = vld [vmem:[%s1 + $0x730] sm:$0xf]
    %v481 = vld [vmem:[%s1 + $0x734] sm:$0xf]
    %v482 = vld [vmem:[%s1 + $0x738] sm:$0xf]
    %v483 = vld [vmem:[%s1 + $0x73c] sm:$0xf]
    %v484 = vld [vmem:[%s1 + $0x740] sm:$0xf]
    %v485 = vld [vmem:[%s1 + $0x744] sm:$0xf]
    %v486 = vld [vmem:[%s1 + $0x748] sm:$0xf]
    %v487 = vld [vmem:[%s1 + $0x74c] sm:$0xf]
    %v488 = vld [vmem:[%s1 + $0x750] sm:$0xf]
    %v489 = vld [vmem:[%s1 + $0x754] sm:$0xf]
    %v490 = vld [vmem:[%s1 + $0x758] sm:$0xf]
    %v491 = vld [vmem:[%s1 + $0x75c] sm:$0xf]
    %v492 = vld [vmem:[%s1 + $0x760] sm:$0xf]
    %v493 = vld [vmem:[%s1 + $0x764] sm:$0xf]
    %v494 = vld [vmem:[%s1 + $0x768] sm:$0xf]
    %v495 = vld [vmem:[%s1 + $0x76c] sm:$0xf]
    %v496 = vld [vmem:[%s1 + $0x770] sm:$0xf]
    %v497 = vld [vmem:[%s1 + $0x774] sm:$0xf]
    %v498 = vld [vmem:[%s1 + $0x778] sm:$0xf]
    %v499 = vld [vmem:[%s1 + $0x77c] sm:$0xf]
    %v500 = vld [vmem:[%s1 + $0x780] sm:$0xf]
    %v501 = vld [vmem:[%s1 + $0x784] sm:$0xf]
    %v502 = vld [vmem:[%s1 + $0x788] sm:$0xf]
    %v503 = vld [vmem:[%s1 + $0x78c] sm:$0xf]
    %v504 = vld [vmem:[%s1 + $0x790] sm:$0xf]
    %v505 = vld [vmem:[%s1 + $0x794] sm:$0xf]
    %v506 = vld [vmem:[%s1 + $0x798] sm:$0xf]
    %v507 = vld [vmem:[%s1 + $0x79c] sm:$0xf]
    %v508 = vld [vmem:[%s1 + $0x7a0] sm:$0xf]
    %v509 = vld [vmem:[%s1 + $0x7a4] sm:$0xf]
    %v510 = vld [vmem:[%s1 + $0x7a8] sm:$0xf]
    %v511 = vld [vmem:[%s1 + $0x7ac] sm:$0xf]
    %v512 = vld [vmem:[%s1 + $0x7b0] sm:$0xf]
    %v513 = vld [vmem:[%s1 + $0x7b4] sm:$0xf]
    %v514 = vld [vmem:[%s1 + $0x7b8] sm:$0xf]
    %v515 = vld [vmem:[%s1 + $0x7bc] sm:$0xf]
    %v516 = vld [vmem:[%s1 + $0x7c0] sm:$0xf]
    %v517 = vld [vmem:[%s1 + $0x7c4] sm:$0xf]
    %v518 = vld [vmem:[%s1 + $0x7c8] sm:$0xf]
    %v519 = vld [vmem:[%s1 + $0x7cc] sm:$0xf]
    %v520 = vld [vmem:[%s1 + $0x7d0] sm:$0xf]
    %v521 = vld [vmem:[%s1 + $0x7d4] sm:$0xf]
    %v522 = vld [vmem:[%s1 + $0x7d8] sm:$0xf]
    %v523 = vld [vmem:[%s1 + $0x7dc] sm:$0xf]
    %v524 = vld [vmem:[%s1 + $0x7e0] sm:$0xf]
    %v525 = vld [vmem:[%s1 + $0x7e4] sm:$0xf]
    %v526 = vld [vmem:[%s1 + $0x7e8] sm:$0xf]
    %v527 = vld [vmem:[%s1 + $0x7ec] sm:$0xf]
    %v528 = vld [vmem:[%s1 + $0x7f0] sm:$0xf]
    %v529 = vld [vmem:[%s1 + $0x7f4] sm:$0xf]
    %v530 = vld [vmem:[%s1 + $0x7f8] sm:$0xf]
    %v531 = vld [vmem:[%s1 + $0x7fc] sm:$0xf]
    %v532 = vld [vmem:[%s2] sm:$0x1]
    %v534 = vlaneseq
    %v535 = vshrl.u32 %v534, 7
    %v536 = vsub.s32 0, %v535
    %v537 = vrot.slane %v532, %v536
    %v543 = vcombine.high %v16, %v16
    %v545 = vunpack.c.l.s4 1966171168
    %v546 = vunpack.c.0.s8 %v545
    %v547 = vlaneseq
    %v548 = vshrl.u32 %v547, 7
    %v549 = vsub.s32 %v546, %v548
    %v550 = vrot.slane %v16, %v549
    %v552 = vunpack.c.l.s4 1966171168
    %v553 = vunpack.c.0.s8 %v552
    %v554 = vlaneseq
    %v555 = vshrl.u32 %v554, 7
    %v556 = vsub.s32 %v553, %v555
    %v557 = vrot.slane %v543, %v556
    %v558 = vcombine.high %v550, %v550
    %v559 = vcombine.high %v557, %v557
    %v561 = vunpack.c.l.s4 1966171168
    %v562 = vunpack.c.0.s8 %v561
    %v563 = vlaneseq
    %v564 = vshrl.u32 %v563, 7
    %v565 = vsub.s32 %v562, %v564
    %v566 = vrot.slane %v550, %v565
    %v568 = vunpack.c.l.s4 1966171168
    %v569 = vunpack.c.0.s8 %v568
    %v570 = vlaneseq
    %v571 = vshrl.u32 %v570, 7
    %v572 = vsub.s32 %v569, %v571
    %v573 = vrot.slane %v557, %v572
    %v575 = vunpack.c.l.s4 1966171168
    %v576 = vunpack.c.0.s8 %v575
    %v577 = vlaneseq
    %v578 = vshrl.u32 %v577, 7
    %v579 = vsub.s32 %v576, %v578
    %v580 = vrot.slane %v558, %v579
    %v582 = vunpack.c.l.s4 1966171168
    %v583 = vunpack.c.0.s8 %v582
    %v584 = vlaneseq
    %v585 = vshrl.u32 %v584, 7
    %v586 = vsub.s32 %v583, %v585
    %v587 = vrot.slane %v559, %v586
    %v588 = vcombine.high %v566, %v566
    %v589 = vcombine.high %v573, %v573
    %v590 = vcombine.high %v580, %v580
    %v591 = vcombine.high %v587, %v587
    %v592 = vcombine.high %v17, %v17
    %v594 = vunpack.c.l.s4 1966171168
    %v595 = vunpack.c.0.s8 %v594
    %v596 = vlaneseq
    %v597 = vshrl.u32 %v596, 7
    %v598 = vsub.s32 %v595, %v597
    %v599 = vrot.slane %v17, %v598
    %v601 = vunpack.c.l.s4 1966171168
    %v602 = vunpack.c.0.s8 %v601
    %v603 = vlaneseq
    %v604 = vshrl.u32 %v603, 7
    %v605 = vsub.s32 %v602, %v604
    %v606 = vrot.slane %v592, %v605
    %v607 = vcombine.high %v599, %v599
    %v608 = vcombine.high %v606, %v606
    %v610 = vunpack.c.l.s4 1966171168
    %v611 = vunpack.c.0.s8 %v610
    %v612 = vlaneseq
    %v613 = vshrl.u32 %v612, 7
    %v614 = vsub.s32 %v611, %v613
    %v615 = vrot.slane %v599, %v614
    %v617 = vunpack.c.l.s4 1966171168
    %v618 = vunpack.c.0.s8 %v617
    %v619 = vlaneseq
    %v620 = vshrl.u32 %v619, 7
    %v621 = vsub.s32 %v618, %v620
    %v622 = vrot.slane %v606, %v621
    %v624 = vunpack.c.l.s4 1966171168
    %v625 = vunpack.c.0.s8 %v624
    %v626 = vlaneseq
    %v627 = vshrl.u32 %v626, 7
    %v628 = vsub.s32 %v625, %v627
    %v629 = vrot.slane %v607, %v628
    %v631 = vunpack.c.l.s4 1966171168
    %v632 = vunpack.c.0.s8 %v631
    %v633 = vlaneseq
    %v634 = vshrl.u32 %v633, 7
    %v635 = vsub.s32 %v632, %v634
    %v636 = vrot.slane %v608, %v635
    %v637 = vcombine.high %v615, %v615
    %v638 = vcombine.high %v622, %v622
    %v639 = vcombine.high %v629, %v629
    %v640 = vcombine.high %v636, %v636
    %v641 = vcombine.high %v18, %v18
    %v643 = vunpack.c.l.s4 1966171168
    %v644 = vunpack.c.0.s8 %v643
    %v645 = vlaneseq
    %v646 = vshrl.u32 %v645, 7
    %v647 = vsub.s32 %v644, %v646
    %v648 = vrot.slane %v18, %v647
    %v650 = vunpack.c.l.s4 1966171168
    %v651 = vunpack.c.0.s8 %v650
    %v652 = vlaneseq
    %v653 = vshrl.u32 %v652, 7
    %v654 = vsub.s32 %v651, %v653
    %v655 = vrot.slane %v641, %v654
    %v656 = vcombine.high %v648, %v648
    %v657 = vcombine.high %v655, %v655
    %v659 = vunpack.c.l.s4 1966171168
    %v660 = vunpack.c.0.s8 %v659
    %v661 = vlaneseq
    %v662 = vshrl.u32 %v661, 7
    %v663 = vsub.s32 %v660, %v662
    %v664 = vrot.slane %v648, %v663
    %v666 = vunpack.c.l.s4 1966171168
    %v667 = vunpack.c.0.s8 %v666
    %v668 = vlaneseq
    %v669 = vshrl.u32 %v668, 7
    %v670 = vsub.s32 %v667, %v669
    %v671 = vrot.slane %v655, %v670
    %v673 = vunpack.c.l.s4 1966171168
    %v674 = vunpack.c.0.s8 %v673
    %v675 = vlaneseq
    %v676 = vshrl.u32 %v675, 7
    %v677 = vsub.s32 %v674, %v676
    %v678 = vrot.slane %v656, %v677
    %v680 = vunpack.c.l.s4 1966171168
    %v681 = vunpack.c.0.s8 %v680
    %v682 = vlaneseq
    %v683 = vshrl.u32 %v682, 7
    %v684 = vsub.s32 %v681, %v683
    %v685 = vrot.slane %v657, %v684
    %v686 = vcombine.high %v664, %v664
    %v687 = vcombine.high %v671, %v671
    %v688 = vcombine.high %v678, %v678
    %v689 = vcombine.high %v685, %v685
    %v690 = vcombine.high %v19, %v19
    %v692 = vunpack.c.l.s4 1966171168
    %v693 = vunpack.c.0.s8 %v692
    %v694 = vlaneseq
    %v695 = vshrl.u32 %v694, 7
    %v696 = vsub.s32 %v693, %v695
    %v697 = vrot.slane %v19, %v696
    %v699 = vunpack.c.l.s4 1966171168
    %v700 = vunpack.c.0.s8 %v699
    %v701 = vlaneseq
    %v702 = vshrl.u32 %v701, 7
    %v703 = vsub.s32 %v700, %v702
    %v704 = vrot.slane %v690, %v703
    %v705 = vcombine.high %v697, %v697
    %v706 = vcombine.high %v704, %v704
    %v708 = vunpack.c.l.s4 1966171168
    %v709 = vunpack.c.0.s8 %v708
    %v710 = vlaneseq
    %v711 = vshrl.u32 %v710, 7
    %v712 = vsub.s32 %v709, %v711
    %v713 = vrot.slane %v697, %v712
    %v715 = vunpack.c.l.s4 1966171168
    %v716 = vunpack.c.0.s8 %v715
    %v717 = vlaneseq
    %v718 = vshrl.u32 %v717, 7
    %v719 = vsub.s32 %v716, %v718
    %v720 = vrot.slane %v704, %v719
    %v722 = vunpack.c.l.s4 1966171168
    %v723 = vunpack.c.0.s8 %v722
    %v724 = vlaneseq
    %v725 = vshrl.u32 %v724, 7
    %v726 = vsub.s32 %v723, %v725
    %v727 = vrot.slane %v705, %v726
    %v729 = vunpack.c.l.s4 1966171168
    %v730 = vunpack.c.0.s8 %v729
    %v731 = vlaneseq
    %v732 = vshrl.u32 %v731, 7
    %v733 = vsub.s32 %v730, %v732
    %v734 = vrot.slane %v706, %v733
    %v735 = vcombine.high %v713, %v713
    %v736 = vcombine.high %v720, %v720
    %v737 = vcombine.high %v727, %v727
    %v738 = vcombine.high %v734, %v734
    %v1283 = vunpack.c.l.b16 %v20
    %v1284 = vunpack.c.l.b16 %v21
    %v1285 = vunpack.c.l.b16 %v22
    %v1286 = vunpack.c.l.b16 %v23
    %v1287 = vunpack.c.l.b16 %v24
    %v1288 = vunpack.c.l.b16 %v25
    %v1289 = vunpack.c.l.b16 %v26
    %v1290 = vunpack.c.l.b16 %v27
    %v1291 = vunpack.c.l.b16 %v28
    %v1292 = vunpack.c.l.b16 %v29
    %v1293 = vunpack.c.l.b16 %v30
    %v1294 = vunpack.c.l.b16 %v31
    %v1295 = vunpack.c.l.b16 %v32
    %v1296 = vunpack.c.l.b16 %v33
    %v1297 = vunpack.c.l.b16 %v34
    %v1298 = vunpack.c.l.b16 %v35
    %v1299 = vunpack.c.l.b16 %v36
    %v1300 = vunpack.c.l.b16 %v37
    %v1301 = vunpack.c.l.b16 %v38
    %v1302 = vunpack.c.l.b16 %v39
    %v1303 = vunpack.c.l.b16 %v40
    %v1304 = vunpack.c.l.b16 %v41
    %v1305 = vunpack.c.l.b16 %v42
    %v1306 = vunpack.c.l.b16 %v43
    %v1307 = vunpack.c.l.b16 %v44
    %v1308 = vunpack.c.l.b16 %v45
    %v1309 = vunpack.c.l.b16 %v46
    %v1310 = vunpack.c.l.b16 %v47
    %v1311 = vunpack.c.l.b16 %v48
    %v1312 = vunpack.c.l.b16 %v49
    %v1313 = vunpack.c.l.b16 %v50
    %v1314 = vunpack.c.l.b16 %v51
    %v1315 = vunpack.c.l.b16 %v52
    %v1316 = vunpack.c.l.b16 %v53
    %v1317 = vunpack.c.l.b16 %v54
    %v1318 = vunpack.c.l.b16 %v55
    %v1319 = vunpack.c.l.b16 %v56
    %v1320 = vunpack.c.l.b16 %v57
    %v1321 = vunpack.c.l.b16 %v58
    %v1322 = vunpack.c.l.b16 %v59
    %v1323 = vunpack.c.l.b16 %v60
    %v1324 = vunpack.c.l.b16 %v61
    %v1325 = vunpack.c.l.b16 %v62
    %v1326 = vunpack.c.l.b16 %v63
    %v1327 = vunpack.c.l.b16 %v64
    %v1328 = vunpack.c.l.b16 %v65
    %v1329 = vunpack.c.l.b16 %v66
    %v1330 = vunpack.c.l.b16 %v67
    %v1331 = vunpack.c.l.b16 %v68
    %v1332 = vunpack.c.l.b16 %v69
    %v1333 = vunpack.c.l.b16 %v70
    %v1334 = vunpack.c.l.b16 %v71
    %v1335 = vunpack.c.l.b16 %v72
    %v1336 = vunpack.c.l.b16 %v73
    %v1337 = vunpack.c.l.b16 %v74
    %v1338 = vunpack.c.l.b16 %v75
    %v1339 = vunpack.c.l.b16 %v76
    %v1340 = vunpack.c.l.b16 %v77
    %v1341 = vunpack.c.l.b16 %v78
    %v1342 = vunpack.c.l.b16 %v79
    %v1343 = vunpack.c.l.b16 %v80
    %v1344 = vunpack.c.l.b16 %v81
    %v1345 = vunpack.c.l.b16 %v82
    %v1346 = vunpack.c.l.b16 %v83
    %v1347 = vunpack.c.l.b16 %v84
    %v1348 = vunpack.c.l.b16 %v85
    %v1349 = vunpack.c.l.b16 %v86
    %v1350 = vunpack.c.l.b16 %v87
    %v1351 = vunpack.c.l.b16 %v88
    %v1352 = vunpack.c.l.b16 %v89
    %v1353 = vunpack.c.l.b16 %v90
    %v1354 = vunpack.c.l.b16 %v91
    %v1355 = vunpack.c.l.b16 %v92
    %v1356 = vunpack.c.l.b16 %v93
    %v1357 = vunpack.c.l.b16 %v94
    %v1358 = vunpack.c.l.b16 %v95
    %v1359 = vunpack.c.l.b16 %v96
    %v1360 = vunpack.c.l.b16 %v97
    %v1361 = vunpack.c.l.b16 %v98
    %v1362 = vunpack.c.l.b16 %v99
    %v1363 = vunpack.c.l.b16 %v100
    %v1364 = vunpack.c.l.b16 %v101
    %v1365 = vunpack.c.l.b16 %v102
    %v1366 = vunpack.c.l.b16 %v103
    %v1367 = vunpack.c.l.b16 %v104
    %v1368 = vunpack.c.l.b16 %v105
    %v1369 = vunpack.c.l.b16 %v106
    %v1370 = vunpack.c.l.b16 %v107
    %v1371 = vunpack.c.l.b16 %v108
    %v1372 = vunpack.c.l.b16 %v109
    %v1373 = vunpack.c.l.b16 %v110
    %v1374 = vunpack.c.l.b16 %v111
    %v1375 = vunpack.c.l.b16 %v112
    %v1376 = vunpack.c.l.b16 %v113
    %v1377 = vunpack.c.l.b16 %v114
    %v1378 = vunpack.c.l.b16 %v115
    %v1379 = vunpack.c.l.b16 %v116
    %v1380 = vunpack.c.l.b16 %v117
    %v1381 = vunpack.c.l.b16 %v118
    %v1382 = vunpack.c.l.b16 %v119
    %v1383 = vunpack.c.l.b16 %v120
    %v1384 = vunpack.c.l.b16 %v121
    %v1385 = vunpack.c.l.b16 %v122
    %v1386 = vunpack.c.l.b16 %v123
    %v1387 = vunpack.c.l.b16 %v124
    %v1388 = vunpack.c.l.b16 %v125
    %v1389 = vunpack.c.l.b16 %v126
    %v1390 = vunpack.c.l.b16 %v127
    %v1391 = vunpack.c.l.b16 %v128
    %v1392 = vunpack.c.l.b16 %v129
    %v1393 = vunpack.c.l.b16 %v130
    %v1394 = vunpack.c.l.b16 %v131
    %v1395 = vunpack.c.l.b16 %v132
    %v1396 = vunpack.c.l.b16 %v133
    %v1397 = vunpack.c.l.b16 %v134
    %v1398 = vunpack.c.l.b16 %v135
    %v1399 = vunpack.c.l.b16 %v136
    %v1400 = vunpack.c.l.b16 %v137
    %v1401 = vunpack.c.l.b16 %v138
    %v1402 = vunpack.c.l.b16 %v139
    %v1403 = vunpack.c.l.b16 %v140
    %v1404 = vunpack.c.l.b16 %v141
    %v1405 = vunpack.c.l.b16 %v142
    %v1406 = vunpack.c.l.b16 %v143
    %v1407 = vunpack.c.l.b16 %v144
    %v1408 = vunpack.c.l.b16 %v145
    %v1409 = vunpack.c.l.b16 %v146
    %v1410 = vunpack.c.l.b16 %v147
    %v1411 = vunpack.c.l.b16 %v148
    %v1412 = vunpack.c.l.b16 %v149
    %v1413 = vunpack.c.l.b16 %v150
    %v1414 = vunpack.c.l.b16 %v151
    %v1415 = vunpack.c.l.b16 %v152
    %v1416 = vunpack.c.l.b16 %v153
    %v1417 = vunpack.c.l.b16 %v154
    %v1418 = vunpack.c.l.b16 %v155
    %v1419 = vunpack.c.l.b16 %v156
    %v1420 = vunpack.c.l.b16 %v157
    %v1421 = vunpack.c.l.b16 %v158
    %v1422 = vunpack.c.l.b16 %v159
    %v1423 = vunpack.c.l.b16 %v160
    %v1424 = vunpack.c.l.b16 %v161
    %v1425 = vunpack.c.l.b16 %v162
    %v1426 = vunpack.c.l.b16 %v163
    %v1427 = vunpack.c.l.b16 %v164
    %v1428 = vunpack.c.l.b16 %v165
    %v1429 = vunpack.c.l.b16 %v166
    %v1430 = vunpack.c.l.b16 %v167
    %v1431 = vunpack.c.l.b16 %v168
    %v1432 = vunpack.c.l.b16 %v169
    %v1433 = vunpack.c.l.b16 %v170
    %v1434 = vunpack.c.l.b16 %v171
    %v1435 = vunpack.c.l.b16 %v172
    %v1436 = vunpack.c.l.b16 %v173
    %v1437 = vunpack.c.l.b16 %v174
    %v1438 = vunpack.c.l.b16 %v175
    %v1439 = vunpack.c.l.b16 %v176
    %v1440 = vunpack.c.l.b16 %v177
    %v1441 = vunpack.c.l.b16 %v178
    %v1442 = vunpack.c.l.b16 %v179
    %v1443 = vunpack.c.l.b16 %v180
    %v1444 = vunpack.c.l.b16 %v181
    %v1445 = vunpack.c.l.b16 %v182
    %v1446 = vunpack.c.l.b16 %v183
    %v1447 = vunpack.c.l.b16 %v184
    %v1448 = vunpack.c.l.b16 %v185
    %v1449 = vunpack.c.l.b16 %v186
    %v1450 = vunpack.c.l.b16 %v187
    %v1451 = vunpack.c.l.b16 %v188
    %v1452 = vunpack.c.l.b16 %v189
    %v1453 = vunpack.c.l.b16 %v190
    %v1454 = vunpack.c.l.b16 %v191
    %v1455 = vunpack.c.l.b16 %v192
    %v1456 = vunpack.c.l.b16 %v193
    %v1457 = vunpack.c.l.b16 %v194
    %v1458 = vunpack.c.l.b16 %v195
    %v1459 = vunpack.c.l.b16 %v196
    %v1460 = vunpack.c.l.b16 %v197
    %v1461 = vunpack.c.l.b16 %v198
    %v1462 = vunpack.c.l.b16 %v199
    %v1463 = vunpack.c.l.b16 %v200
    %v1464 = vunpack.c.l.b16 %v201
    %v1465 = vunpack.c.l.b16 %v202
    %v1466 = vunpack.c.l.b16 %v203
    %v1467 = vunpack.c.l.b16 %v204
    %v1468 = vunpack.c.l.b16 %v205
    %v1469 = vunpack.c.l.b16 %v206
    %v1470 = vunpack.c.l.b16 %v207
    %v1471 = vunpack.c.l.b16 %v208
    %v1472 = vunpack.c.l.b16 %v209
    %v1473 = vunpack.c.l.b16 %v210
    %v1474 = vunpack.c.l.b16 %v211
    %v1475 = vunpack.c.l.b16 %v212
    %v1476 = vunpack.c.l.b16 %v213
    %v1477 = vunpack.c.l.b16 %v214
    %v1478 = vunpack.c.l.b16 %v215
    %v1479 = vunpack.c.l.b16 %v216
    %v1480 = vunpack.c.l.b16 %v217
    %v1481 = vunpack.c.l.b16 %v218
    %v1482 = vunpack.c.l.b16 %v219
    %v1483 = vunpack.c.l.b16 %v220
    %v1484 = vunpack.c.l.b16 %v221
    %v1485 = vunpack.c.l.b16 %v222
    %v1486 = vunpack.c.l.b16 %v223
    %v1487 = vunpack.c.l.b16 %v224
    %v1488 = vunpack.c.l.b16 %v225
    %v1489 = vunpack.c.l.b16 %v226
    %v1490 = vunpack.c.l.b16 %v227
    %v1491 = vunpack.c.l.b16 %v228
    %v1492 = vunpack.c.l.b16 %v229
    %v1493 = vunpack.c.l.b16 %v230
    %v1494 = vunpack.c.l.b16 %v231
    %v1495 = vunpack.c.l.b16 %v232
    %v1496 = vunpack.c.l.b16 %v233
    %v1497 = vunpack.c.l.b16 %v234
    %v1498 = vunpack.c.l.b16 %v235
    %v1499 = vunpack.c.l.b16 %v236
    %v1500 = vunpack.c.l.b16 %v237
    %v1501 = vunpack.c.l.b16 %v238
    %v1502 = vunpack.c.l.b16 %v239
    %v1503 = vunpack.c.l.b16 %v240
    %v1504 = vunpack.c.l.b16 %v241
    %v1505 = vunpack.c.l.b16 %v242
    %v1506 = vunpack.c.l.b16 %v243
    %v1507 = vunpack.c.l.b16 %v244
    %v1508 = vunpack.c.l.b16 %v245
    %v1509 = vunpack.c.l.b16 %v246
    %v1510 = vunpack.c.l.b16 %v247
    %v1511 = vunpack.c.l.b16 %v248
    %v1512 = vunpack.c.l.b16 %v249
    %v1513 = vunpack.c.l.b16 %v250
    %v1514 = vunpack.c.l.b16 %v251
    %v1515 = vunpack.c.l.b16 %v252
    %v1516 = vunpack.c.l.b16 %v253
    %v1517 = vunpack.c.l.b16 %v254
    %v1518 = vunpack.c.l.b16 %v255
    %v1519 = vunpack.c.l.b16 %v256
    %v1520 = vunpack.c.l.b16 %v257
    %v1521 = vunpack.c.l.b16 %v258
    %v1522 = vunpack.c.l.b16 %v259
    %v1523 = vunpack.c.l.b16 %v260
    %v1524 = vunpack.c.l.b16 %v261
    %v1525 = vunpack.c.l.b16 %v262
    %v1526 = vunpack.c.l.b16 %v263
    %v1527 = vunpack.c.l.b16 %v264
    %v1528 = vunpack.c.l.b16 %v265
    %v1529 = vunpack.c.l.b16 %v266
    %v1530 = vunpack.c.l.b16 %v267
    %v1531 = vunpack.c.l.b16 %v268
    %v1532 = vunpack.c.l.b16 %v269
    %v1533 = vunpack.c.l.b16 %v270
    %v1534 = vunpack.c.l.b16 %v271
    %v1535 = vunpack.c.l.b16 %v272
    %v1536 = vunpack.c.l.b16 %v273
    %v1537 = vunpack.c.l.b16 %v274
    %v1538 = vunpack.c.l.b16 %v275
    %v1539 = vunpack.c.l.b16 %v276
    %v1540 = vunpack.c.l.b16 %v277
    %v1541 = vunpack.c.l.b16 %v278
    %v1542 = vunpack.c.l.b16 %v279
    %v1543 = vunpack.c.l.b16 %v280
    %v1544 = vunpack.c.l.b16 %v281
    %v1545 = vunpack.c.l.b16 %v282
    %v1546 = vunpack.c.l.b16 %v283
    %v1547 = vunpack.c.l.b16 %v284
    %v1548 = vunpack.c.l.b16 %v285
    %v1549 = vunpack.c.l.b16 %v286
    %v1550 = vunpack.c.l.b16 %v287
    %v1551 = vunpack.c.l.b16 %v288
    %v1552 = vunpack.c.l.b16 %v289
    %v1553 = vunpack.c.l.b16 %v290
    %v1554 = vunpack.c.l.b16 %v291
    %v1555 = vunpack.c.l.b16 %v292
    %v1556 = vunpack.c.l.b16 %v293
    %v1557 = vunpack.c.l.b16 %v294
    %v1558 = vunpack.c.l.b16 %v295
    %v1559 = vunpack.c.l.b16 %v296
    %v1560 = vunpack.c.l.b16 %v297
    %v1561 = vunpack.c.l.b16 %v298
    %v1562 = vunpack.c.l.b16 %v299
    %v1563 = vunpack.c.l.b16 %v300
    %v1564 = vunpack.c.l.b16 %v301
    %v1565 = vunpack.c.l.b16 %v302
    %v1566 = vunpack.c.l.b16 %v303
    %v1567 = vunpack.c.l.b16 %v304
    %v1568 = vunpack.c.l.b16 %v305
    %v1569 = vunpack.c.l.b16 %v306
    %v1570 = vunpack.c.l.b16 %v307
    %v1571 = vunpack.c.l.b16 %v308
    %v1572 = vunpack.c.l.b16 %v309
    %v1573 = vunpack.c.l.b16 %v310
    %v1574 = vunpack.c.l.b16 %v311
    %v1575 = vunpack.c.l.b16 %v312
    %v1576 = vunpack.c.l.b16 %v313
    %v1577 = vunpack.c.l.b16 %v314
    %v1578 = vunpack.c.l.b16 %v315
    %v1579 = vunpack.c.l.b16 %v316
    %v1580 = vunpack.c.l.b16 %v317
    %v1581 = vunpack.c.l.b16 %v318
    %v1582 = vunpack.c.l.b16 %v319
    %v1583 = vunpack.c.l.b16 %v320
    %v1584 = vunpack.c.l.b16 %v321
    %v1585 = vunpack.c.l.b16 %v322
    %v1586 = vunpack.c.l.b16 %v323
    %v1587 = vunpack.c.l.b16 %v324
    %v1588 = vunpack.c.l.b16 %v325
    %v1589 = vunpack.c.l.b16 %v326
    %v1590 = vunpack.c.l.b16 %v327
    %v1591 = vunpack.c.l.b16 %v328
    %v1592 = vunpack.c.l.b16 %v329
    %v1593 = vunpack.c.l.b16 %v330
    %v1594 = vunpack.c.l.b16 %v331
    %v1595 = vunpack.c.l.b16 %v332
    %v1596 = vunpack.c.l.b16 %v333
    %v1597 = vunpack.c.l.b16 %v334
    %v1598 = vunpack.c.l.b16 %v335
    %v1599 = vunpack.c.l.b16 %v336
    %v1600 = vunpack.c.l.b16 %v337
    %v1601 = vunpack.c.l.b16 %v338
    %v1602 = vunpack.c.l.b16 %v339
    %v1603 = vunpack.c.l.b16 %v340
    %v1604 = vunpack.c.l.b16 %v341
    %v1605 = vunpack.c.l.b16 %v342
    %v1606 = vunpack.c.l.b16 %v343
    %v1607 = vunpack.c.l.b16 %v344
    %v1608 = vunpack.c.l.b16 %v345
    %v1609 = vunpack.c.l.b16 %v346
    %v1610 = vunpack.c.l.b16 %v347
    %v1611 = vunpack.c.l.b16 %v348
    %v1612 = vunpack.c.l.b16 %v349
    %v1613 = vunpack.c.l.b16 %v350
    %v1614 = vunpack.c.l.b16 %v351
    %v1615 = vunpack.c.l.b16 %v352
    %v1616 = vunpack.c.l.b16 %v353
    %v1617 = vunpack.c.l.b16 %v354
    %v1618 = vunpack.c.l.b16 %v355
    %v1619 = vunpack.c.l.b16 %v356
    %v1620 = vunpack.c.l.b16 %v357
    %v1621 = vunpack.c.l.b16 %v358
    %v1622 = vunpack.c.l.b16 %v359
    %v1623 = vunpack.c.l.b16 %v360
    %v1624 = vunpack.c.l.b16 %v361
    %v1625 = vunpack.c.l.b16 %v362
    %v1626 = vunpack.c.l.b16 %v363
    %v1627 = vunpack.c.l.b16 %v364
    %v1628 = vunpack.c.l.b16 %v365
    %v1629 = vunpack.c.l.b16 %v366
    %v1630 = vunpack.c.l.b16 %v367
    %v1631 = vunpack.c.l.b16 %v368
    %v1632 = vunpack.c.l.b16 %v369
    %v1633 = vunpack.c.l.b16 %v370
    %v1634 = vunpack.c.l.b16 %v371
    %v1635 = vunpack.c.l.b16 %v372
    %v1636 = vunpack.c.l.b16 %v373
    %v1637 = vunpack.c.l.b16 %v374
    %v1638 = vunpack.c.l.b16 %v375
    %v1639 = vunpack.c.l.b16 %v376
    %v1640 = vunpack.c.l.b16 %v377
    %v1641 = vunpack.c.l.b16 %v378
    %v1642 = vunpack.c.l.b16 %v379
    %v1643 = vunpack.c.l.b16 %v380
    %v1644 = vunpack.c.l.b16 %v381
    %v1645 = vunpack.c.l.b16 %v382
    %v1646 = vunpack.c.l.b16 %v383
    %v1647 = vunpack.c.l.b16 %v384
    %v1648 = vunpack.c.l.b16 %v385
    %v1649 = vunpack.c.l.b16 %v386
    %v1650 = vunpack.c.l.b16 %v387
    %v1651 = vunpack.c.l.b16 %v388
    %v1652 = vunpack.c.l.b16 %v389
    %v1653 = vunpack.c.l.b16 %v390
    %v1654 = vunpack.c.l.b16 %v391
    %v1655 = vunpack.c.l.b16 %v392
    %v1656 = vunpack.c.l.b16 %v393
    %v1657 = vunpack.c.l.b16 %v394
    %v1658 = vunpack.c.l.b16 %v395
    %v1659 = vunpack.c.l.b16 %v396
    %v1660 = vunpack.c.l.b16 %v397
    %v1661 = vunpack.c.l.b16 %v398
    %v1662 = vunpack.c.l.b16 %v399
    %v1663 = vunpack.c.l.b16 %v400
    %v1664 = vunpack.c.l.b16 %v401
    %v1665 = vunpack.c.l.b16 %v402
    %v1666 = vunpack.c.l.b16 %v403
    %v1667 = vunpack.c.l.b16 %v404
    %v1668 = vunpack.c.l.b16 %v405
    %v1669 = vunpack.c.l.b16 %v406
    %v1670 = vunpack.c.l.b16 %v407
    %v1671 = vunpack.c.l.b16 %v408
    %v1672 = vunpack.c.l.b16 %v409
    %v1673 = vunpack.c.l.b16 %v410
    %v1674 = vunpack.c.l.b16 %v411
    %v1675 = vunpack.c.l.b16 %v412
    %v1676 = vunpack.c.l.b16 %v413
    %v1677 = vunpack.c.l.b16 %v414
    %v1678 = vunpack.c.l.b16 %v415
    %v1679 = vunpack.c.l.b16 %v416
    %v1680 = vunpack.c.l.b16 %v417
    %v1681 = vunpack.c.l.b16 %v418
    %v1682 = vunpack.c.l.b16 %v419
    %v1683 = vunpack.c.l.b16 %v420
    %v1684 = vunpack.c.l.b16 %v421
    %v1685 = vunpack.c.l.b16 %v422
    %v1686 = vunpack.c.l.b16 %v423
    %v1687 = vunpack.c.l.b16 %v424
    %v1688 = vunpack.c.l.b16 %v425
    %v1689 = vunpack.c.l.b16 %v426
    %v1690 = vunpack.c.l.b16 %v427
    %v1691 = vunpack.c.l.b16 %v428
    %v1692 = vunpack.c.l.b16 %v429
    %v1693 = vunpack.c.l.b16 %v430
    %v1694 = vunpack.c.l.b16 %v431
    %v1695 = vunpack.c.l.b16 %v432
    %v1696 = vunpack.c.l.b16 %v433
    %v1697 = vunpack.c.l.b16 %v434
    %v1698 = vunpack.c.l.b16 %v435
    %v1699 = vunpack.c.l.b16 %v436
    %v1700 = vunpack.c.l.b16 %v437
    %v1701 = vunpack.c.l.b16 %v438
    %v1702 = vunpack.c.l.b16 %v439
    %v1703 = vunpack.c.l.b16 %v440
    %v1704 = vunpack.c.l.b16 %v441
    %v1705 = vunpack.c.l.b16 %v442
    %v1706 = vunpack.c.l.b16 %v443
    %v1707 = vunpack.c.l.b16 %v444
    %v1708 = vunpack.c.l.b16 %v445
    %v1709 = vunpack.c.l.b16 %v446
    %v1710 = vunpack.c.l.b16 %v447
    %v1711 = vunpack.c.l.b16 %v448
    %v1712 = vunpack.c.l.b16 %v449
    %v1713 = vunpack.c.l.b16 %v450
    %v1714 = vunpack.c.l.b16 %v451
    %v1715 = vunpack.c.l.b16 %v452
    %v1716 = vunpack.c.l.b16 %v453
    %v1717 = vunpack.c.l.b16 %v454
    %v1718 = vunpack.c.l.b16 %v455
    %v1719 = vunpack.c.l.b16 %v456
    %v1720 = vunpack.c.l.b16 %v457
    %v1721 = vunpack.c.l.b16 %v458
    %v1722 = vunpack.c.l.b16 %v459
    %v1723 = vunpack.c.l.b16 %v460
    %v1724 = vunpack.c.l.b16 %v461
    %v1725 = vunpack.c.l.b16 %v462
    %v1726 = vunpack.c.l.b16 %v463
    %v1727 = vunpack.c.l.b16 %v464
    %v1728 = vunpack.c.l.b16 %v465
    %v1729 = vunpack.c.l.b16 %v466
    %v1730 = vunpack.c.l.b16 %v467
    %v1731 = vunpack.c.l.b16 %v468
    %v1732 = vunpack.c.l.b16 %v469
    %v1733 = vunpack.c.l.b16 %v470
    %v1734 = vunpack.c.l.b16 %v471
    %v1735 = vunpack.c.l.b16 %v472
    %v1736 = vunpack.c.l.b16 %v473
    %v1737 = vunpack.c.l.b16 %v474
    %v1738 = vunpack.c.l.b16 %v475
    %v1739 = vunpack.c.l.b16 %v476
    %v1740 = vunpack.c.l.b16 %v477
    %v1741 = vunpack.c.l.b16 %v478
    %v1742 = vunpack.c.l.b16 %v479
    %v1743 = vunpack.c.l.b16 %v480
    %v1744 = vunpack.c.l.b16 %v481
    %v1745 = vunpack.c.l.b16 %v482
    %v1746 = vunpack.c.l.b16 %v483
    %v1747 = vunpack.c.l.b16 %v484
    %v1748 = vunpack.c.l.b16 %v485
    %v1749 = vunpack.c.l.b16 %v486
    %v1750 = vunpack.c.l.b16 %v487
    %v1751 = vunpack.c.l.b16 %v488
    %v1752 = vunpack.c.l.b16 %v489
    %v1753 = vunpack.c.l.b16 %v490
    %v1754 = vunpack.c.l.b16 %v491
    %v1755 = vunpack.c.l.b16 %v492
    %v1756 = vunpack.c.l.b16 %v493
    %v1757 = vunpack.c.l.b16 %v494
    %v1758 = vunpack.c.l.b16 %v495
    %v1759 = vunpack.c.l.b16 %v496
    %v1760 = vunpack.c.l.b16 %v497
    %v1761 = vunpack.c.l.b16 %v498
    %v1762 = vunpack.c.l.b16 %v499
    %v1763 = vunpack.c.l.b16 %v500
    %v1764 = vunpack.c.l.b16 %v501
    %v1765 = vunpack.c.l.b16 %v502
    %v1766 = vunpack.c.l.b16 %v503
    %v1767 = vunpack.c.l.b16 %v504
    %v1768 = vunpack.c.l.b16 %v505
    %v1769 = vunpack.c.l.b16 %v506
    %v1770 = vunpack.c.l.b16 %v507
    %v1771 = vunpack.c.l.b16 %v508
    %v1772 = vunpack.c.l.b16 %v509
    %v1773 = vunpack.c.l.b16 %v510
    %v1774 = vunpack.c.l.b16 %v511
    %v1775 = vunpack.c.l.b16 %v512
    %v1776 = vunpack.c.l.b16 %v513
    %v1777 = vunpack.c.l.b16 %v514
    %v1778 = vunpack.c.l.b16 %v515
    %v1779 = vunpack.c.l.b16 %v516
    %v1780 = vunpack.c.l.b16 %v517
    %v1781 = vunpack.c.l.b16 %v518
    %v1782 = vunpack.c.l.b16 %v519
    %v1783 = vunpack.c.l.b16 %v520
    %v1784 = vunpack.c.l.b16 %v521
    %v1785 = vunpack.c.l.b16 %v522
    %v1786 = vunpack.c.l.b16 %v523
    %v1787 = vunpack.c.l.b16 %v524
    %v1788 = vunpack.c.l.b16 %v525
    %v1789 = vunpack.c.l.b16 %v526
    %v1790 = vunpack.c.l.b16 %v527
    %v1791 = vunpack.c.l.b16 %v528
    %v1792 = vunpack.c.l.b16 %v529
    %v1793 = vunpack.c.l.b16 %v530
    %v1794 = vunpack.c.l.b16 %v531
    %v1795 = vpack.c.b16 %v1284, %v1283
    %v1796 = vpack.c.b16 %v1286, %v1285
    %v1797 = vpack.c.b16 %v1288, %v1287
    %v1798 = vpack.c.b16 %v1290, %v1289
    %v1799 = vpack.c.b16 %v1292, %v1291
    %v1800 = vpack.c.b16 %v1294, %v1293
    %v1801 = vpack.c.b16 %v1296, %v1295
    %v1802 = vpack.c.b16 %v1298, %v1297
    %v1803 = vpack.c.b16 %v1300, %v1299
    %v1804 = vpack.c.b16 %v1302, %v1301
    %v1805 = vpack.c.b16 %v1304, %v1303
    %v1806 = vpack.c.b16 %v1306, %v1305
    %v1807 = vpack.c.b16 %v1308, %v1307
    %v1808 = vpack.c.b16 %v1310, %v1309
    %v1809 = vpack.c.b16 %v1312, %v1311
    %v1810 = vpack.c.b16 %v1314, %v1313
    %v1811 = vpack.c.b16 %v1316, %v1315
    %v1812 = vpack.c.b16 %v1318, %v1317
    %v1813 = vpack.c.b16 %v1320, %v1319
    %v1814 = vpack.c.b16 %v1322, %v1321
    %v1815 = vpack.c.b16 %v1324, %v1323
    %v1816 = vpack.c.b16 %v1326, %v1325
    %v1817 = vpack.c.b16 %v1328, %v1327
    %v1818 = vpack.c.b16 %v1330, %v1329
    %v1819 = vpack.c.b16 %v1332, %v1331
    %v1820 = vpack.c.b16 %v1334, %v1333
    %v1821 = vpack.c.b16 %v1336, %v1335
    %v1822 = vpack.c.b16 %v1338, %v1337
    %v1823 = vpack.c.b16 %v1340, %v1339
    %v1824 = vpack.c.b16 %v1342, %v1341
    %v1825 = vpack.c.b16 %v1344, %v1343
    %v1826 = vpack.c.b16 %v1346, %v1345
    %v1827 = vpack.c.b16 %v1348, %v1347
    %v1828 = vpack.c.b16 %v1350, %v1349
    %v1829 = vpack.c.b16 %v1352, %v1351
    %v1830 = vpack.c.b16 %v1354, %v1353
    %v1831 = vpack.c.b16 %v1356, %v1355
    %v1832 = vpack.c.b16 %v1358, %v1357
    %v1833 = vpack.c.b16 %v1360, %v1359
    %v1834 = vpack.c.b16 %v1362, %v1361
    %v1835 = vpack.c.b16 %v1364, %v1363
    %v1836 = vpack.c.b16 %v1366, %v1365
    %v1837 = vpack.c.b16 %v1368, %v1367
    %v1838 = vpack.c.b16 %v1370, %v1369
    %v1839 = vpack.c.b16 %v1372, %v1371
    %v1840 = vpack.c.b16 %v1374, %v1373
    %v1841 = vpack.c.b16 %v1376, %v1375
    %v1842 = vpack.c.b16 %v1378, %v1377
    %v1843 = vpack.c.b16 %v1380, %v1379
    %v1844 = vpack.c.b16 %v1382, %v1381
    %v1845 = vpack.c.b16 %v1384, %v1383
    %v1846 = vpack.c.b16 %v1386, %v1385
    %v1847 = vpack.c.b16 %v1388, %v1387
    %v1848 = vpack.c.b16 %v1390, %v1389
    %v1849 = vpack.c.b16 %v1392, %v1391
    %v1850 = vpack.c.b16 %v1394, %v1393
    %v1851 = vpack.c.b16 %v1396, %v1395
    %v1852 = vpack.c.b16 %v1398, %v1397
    %v1853 = vpack.c.b16 %v1400, %v1399
    %v1854 = vpack.c.b16 %v1402, %v1401
    %v1855 = vpack.c.b16 %v1404, %v1403
    %v1856 = vpack.c.b16 %v1406, %v1405
    %v1857 = vpack.c.b16 %v1408, %v1407
    %v1858 = vpack.c.b16 %v1410, %v1409
    %v1859 = vpack.c.b16 %v1412, %v1411
    %v1860 = vpack.c.b16 %v1414, %v1413
    %v1861 = vpack.c.b16 %v1416, %v1415
    %v1862 = vpack.c.b16 %v1418, %v1417
    %v1863 = vpack.c.b16 %v1420, %v1419
    %v1864 = vpack.c.b16 %v1422, %v1421
    %v1865 = vpack.c.b16 %v1424, %v1423
    %v1866 = vpack.c.b16 %v1426, %v1425
    %v1867 = vpack.c.b16 %v1428, %v1427
    %v1868 = vpack.c.b16 %v1430, %v1429
    %v1869 = vpack.c.b16 %v1432, %v1431
    %v1870 = vpack.c.b16 %v1434, %v1433
    %v1871 = vpack.c.b16 %v1436, %v1435
    %v1872 = vpack.c.b16 %v1438, %v1437
    %v1873 = vpack.c.b16 %v1440, %v1439
    %v1874 = vpack.c.b16 %v1442, %v1441
    %v1875 = vpack.c.b16 %v1444, %v1443
    %v1876 = vpack.c.b16 %v1446, %v1445
    %v1877 = vpack.c.b16 %v1448, %v1447
    %v1878 = vpack.c.b16 %v1450, %v1449
    %v1879 = vpack.c.b16 %v1452, %v1451
    %v1880 = vpack.c.b16 %v1454, %v1453
    %v1881 = vpack.c.b16 %v1456, %v1455
    %v1882 = vpack.c.b16 %v1458, %v1457
    %v1883 = vpack.c.b16 %v1460, %v1459
    %v1884 = vpack.c.b16 %v1462, %v1461
    %v1885 = vpack.c.b16 %v1464, %v1463
    %v1886 = vpack.c.b16 %v1466, %v1465
    %v1887 = vpack.c.b16 %v1468, %v1467
    %v1888 = vpack.c.b16 %v1470, %v1469
    %v1889 = vpack.c.b16 %v1472, %v1471
    %v1890 = vpack.c.b16 %v1474, %v1473
    %v1891 = vpack.c.b16 %v1476, %v1475
    %v1892 = vpack.c.b16 %v1478, %v1477
    %v1893 = vpack.c.b16 %v1480, %v1479
    %v1894 = vpack.c.b16 %v1482, %v1481
    %v1895 = vpack.c.b16 %v1484, %v1483
    %v1896 = vpack.c.b16 %v1486, %v1485
    %v1897 = vpack.c.b16 %v1488, %v1487
    %v1898 = vpack.c.b16 %v1490, %v1489
    %v1899 = vpack.c.b16 %v1492, %v1491
    %v1900 = vpack.c.b16 %v1494, %v1493
    %v1901 = vpack.c.b16 %v1496, %v1495
    %v1902 = vpack.c.b16 %v1498, %v1497
    %v1903 = vpack.c.b16 %v1500, %v1499
    %v1904 = vpack.c.b16 %v1502, %v1501
    %v1905 = vpack.c.b16 %v1504, %v1503
    %v1906 = vpack.c.b16 %v1506, %v1505
    %v1907 = vpack.c.b16 %v1508, %v1507
    %v1908 = vpack.c.b16 %v1510, %v1509
    %v1909 = vpack.c.b16 %v1512, %v1511
    %v1910 = vpack.c.b16 %v1514, %v1513
    %v1911 = vpack.c.b16 %v1516, %v1515
    %v1912 = vpack.c.b16 %v1518, %v1517
    %v1913 = vpack.c.b16 %v1520, %v1519
    %v1914 = vpack.c.b16 %v1522, %v1521
    %v1915 = vpack.c.b16 %v1524, %v1523
    %v1916 = vpack.c.b16 %v1526, %v1525
    %v1917 = vpack.c.b16 %v1528, %v1527
    %v1918 = vpack.c.b16 %v1530, %v1529
    %v1919 = vpack.c.b16 %v1532, %v1531
    %v1920 = vpack.c.b16 %v1534, %v1533
    %v1921 = vpack.c.b16 %v1536, %v1535
    %v1922 = vpack.c.b16 %v1538, %v1537
    %v1923 = vpack.c.b16 %v1540, %v1539
    %v1924 = vpack.c.b16 %v1542, %v1541
    %v1925 = vpack.c.b16 %v1544, %v1543
    %v1926 = vpack.c.b16 %v1546, %v1545
    %v1927 = vpack.c.b16 %v1548, %v1547
    %v1928 = vpack.c.b16 %v1550, %v1549
    %v1929 = vpack.c.b16 %v1552, %v1551
    %v1930 = vpack.c.b16 %v1554, %v1553
    %v1931 = vpack.c.b16 %v1556, %v1555
    %v1932 = vpack.c.b16 %v1558, %v1557
    %v1933 = vpack.c.b16 %v1560, %v1559
    %v1934 = vpack.c.b16 %v1562, %v1561
    %v1935 = vpack.c.b16 %v1564, %v1563
    %v1936 = vpack.c.b16 %v1566, %v1565
    %v1937 = vpack.c.b16 %v1568, %v1567
    %v1938 = vpack.c.b16 %v1570, %v1569
    %v1939 = vpack.c.b16 %v1572, %v1571
    %v1940 = vpack.c.b16 %v1574, %v1573
    %v1941 = vpack.c.b16 %v1576, %v1575
    %v1942 = vpack.c.b16 %v1578, %v1577
    %v1943 = vpack.c.b16 %v1580, %v1579
    %v1944 = vpack.c.b16 %v1582, %v1581
    %v1945 = vpack.c.b16 %v1584, %v1583
    %v1946 = vpack.c.b16 %v1586, %v1585
    %v1947 = vpack.c.b16 %v1588, %v1587
    %v1948 = vpack.c.b16 %v1590, %v1589
    %v1949 = vpack.c.b16 %v1592, %v1591
    %v1950 = vpack.c.b16 %v1594, %v1593
    %v1951 = vpack.c.b16 %v1596, %v1595
    %v1952 = vpack.c.b16 %v1598, %v1597
    %v1953 = vpack.c.b16 %v1600, %v1599
    %v1954 = vpack.c.b16 %v1602, %v1601
    %v1955 = vpack.c.b16 %v1604, %v1603
    %v1956 = vpack.c.b16 %v1606, %v1605
    %v1957 = vpack.c.b16 %v1608, %v1607
    %v1958 = vpack.c.b16 %v1610, %v1609
    %v1959 = vpack.c.b16 %v1612, %v1611
    %v1960 = vpack.c.b16 %v1614, %v1613
    %v1961 = vpack.c.b16 %v1616, %v1615
    %v1962 = vpack.c.b16 %v1618, %v1617
    %v1963 = vpack.c.b16 %v1620, %v1619
    %v1964 = vpack.c.b16 %v1622, %v1621
    %v1965 = vpack.c.b16 %v1624, %v1623
    %v1966 = vpack.c.b16 %v1626, %v1625
    %v1967 = vpack.c.b16 %v1628, %v1627
    %v1968 = vpack.c.b16 %v1630, %v1629
    %v1969 = vpack.c.b16 %v1632, %v1631
    %v1970 = vpack.c.b16 %v1634, %v1633
    %v1971 = vpack.c.b16 %v1636, %v1635
    %v1972 = vpack.c.b16 %v1638, %v1637
    %v1973 = vpack.c.b16 %v1640, %v1639
    %v1974 = vpack.c.b16 %v1642, %v1641
    %v1975 = vpack.c.b16 %v1644, %v1643
    %v1976 = vpack.c.b16 %v1646, %v1645
    %v1977 = vpack.c.b16 %v1648, %v1647
    %v1978 = vpack.c.b16 %v1650, %v1649
    %v1979 = vpack.c.b16 %v1652, %v1651
    %v1980 = vpack.c.b16 %v1654, %v1653
    %v1981 = vpack.c.b16 %v1656, %v1655
    %v1982 = vpack.c.b16 %v1658, %v1657
    %v1983 = vpack.c.b16 %v1660, %v1659
    %v1984 = vpack.c.b16 %v1662, %v1661
    %v1985 = vpack.c.b16 %v1664, %v1663
    %v1986 = vpack.c.b16 %v1666, %v1665
    %v1987 = vpack.c.b16 %v1668, %v1667
    %v1988 = vpack.c.b16 %v1670, %v1669
    %v1989 = vpack.c.b16 %v1672, %v1671
    %v1990 = vpack.c.b16 %v1674, %v1673
    %v1991 = vpack.c.b16 %v1676, %v1675
    %v1992 = vpack.c.b16 %v1678, %v1677
    %v1993 = vpack.c.b16 %v1680, %v1679
    %v1994 = vpack.c.b16 %v1682, %v1681
    %v1995 = vpack.c.b16 %v1684, %v1683
    %v1996 = vpack.c.b16 %v1686, %v1685
    %v1997 = vpack.c.b16 %v1688, %v1687
    %v1998 = vpack.c.b16 %v1690, %v1689
    %v1999 = vpack.c.b16 %v1692, %v1691
    %v2000 = vpack.c.b16 %v1694, %v1693
    %v2001 = vpack.c.b16 %v1696, %v1695
    %v2002 = vpack.c.b16 %v1698, %v1697
    %v2003 = vpack.c.b16 %v1700, %v1699
    %v2004 = vpack.c.b16 %v1702, %v1701
    %v2005 = vpack.c.b16 %v1704, %v1703
    %v2006 = vpack.c.b16 %v1706, %v1705
    %v2007 = vpack.c.b16 %v1708, %v1707
    %v2008 = vpack.c.b16 %v1710, %v1709
    %v2009 = vpack.c.b16 %v1712, %v1711
    %v2010 = vpack.c.b16 %v1714, %v1713
    %v2011 = vpack.c.b16 %v1716, %v1715
    %v2012 = vpack.c.b16 %v1718, %v1717
    %v2013 = vpack.c.b16 %v1720, %v1719
    %v2014 = vpack.c.b16 %v1722, %v1721
    %v2015 = vpack.c.b16 %v1724, %v1723
    %v2016 = vpack.c.b16 %v1726, %v1725
    %v2017 = vpack.c.b16 %v1728, %v1727
    %v2018 = vpack.c.b16 %v1730, %v1729
    %v2019 = vpack.c.b16 %v1732, %v1731
    %v2020 = vpack.c.b16 %v1734, %v1733
    %v2021 = vpack.c.b16 %v1736, %v1735
    %v2022 = vpack.c.b16 %v1738, %v1737
    %v2023 = vpack.c.b16 %v1740, %v1739
    %v2024 = vpack.c.b16 %v1742, %v1741
    %v2025 = vpack.c.b16 %v1744, %v1743
    %v2026 = vpack.c.b16 %v1746, %v1745
    %v2027 = vpack.c.b16 %v1748, %v1747
    %v2028 = vpack.c.b16 %v1750, %v1749
    %v2029 = vpack.c.b16 %v1752, %v1751
    %v2030 = vpack.c.b16 %v1754, %v1753
    %v2031 = vpack.c.b16 %v1756, %v1755
    %v2032 = vpack.c.b16 %v1758, %v1757
    %v2033 = vpack.c.b16 %v1760, %v1759
    %v2034 = vpack.c.b16 %v1762, %v1761
    %v2035 = vpack.c.b16 %v1764, %v1763
    %v2036 = vpack.c.b16 %v1766, %v1765
    %v2037 = vpack.c.b16 %v1768, %v1767
    %v2038 = vpack.c.b16 %v1770, %v1769
    %v2039 = vpack.c.b16 %v1772, %v1771
    %v2040 = vpack.c.b16 %v1774, %v1773
    %v2041 = vpack.c.b16 %v1776, %v1775
    %v2042 = vpack.c.b16 %v1778, %v1777
    %v2043 = vpack.c.b16 %v1780, %v1779
    %v2044 = vpack.c.b16 %v1782, %v1781
    %v2045 = vpack.c.b16 %v1784, %v1783
    %v2046 = vpack.c.b16 %v1786, %v1785
    %v2047 = vpack.c.b16 %v1788, %v1787
    %v2048 = vpack.c.b16 %v1790, %v1789
    %v2049 = vpack.c.b16 %v1792, %v1791
    %v2050 = vpack.c.b16 %v1794, %v1793
    %2307 = vmatprep.subr.bf16.mxu0 0
    %2308 = vmatpush1.bf16.msra.mxu0 %v1802
    %2309 = vmatprep.subr.bf16.mxu0 0
    %2310 = vmatpush1.bf16.msra.mxu0 %v1801
    %2311 = vmatprep.subr.bf16.mxu0 0
    %2312 = vmatpush1.bf16.msra.mxu0 %v1800
    %2313 = vmatprep.subr.bf16.mxu0 0
    %2314 = vmatpush1.bf16.msra.mxu0 %v1799
    %2315 = vmatprep.subr.bf16.mxu0 0
    %2316 = vmatpush1.bf16.msra.mxu0 %v1798
    %2317 = vmatprep.subr.bf16.mxu0 0
    %2318 = vmatpush1.bf16.msra.mxu0 %v1797
    %2319 = vmatprep.subr.bf16.mxu0 0
    %2320 = vmatpush1.bf16.msra.mxu0 %v1796
    %2321 = vmatprep.subr.bf16.mxu0 0
    %2322 = vmatpush1.bf16.msra.mxu0 %v1795
    %2323 = vmatprep.subr.bf16.mxu0 0
    %2324 = vmatpush2.bf16.msra.mxu0 %v1810
    %2325 = vmatprep.subr.bf16.mxu0 0
    %2326 = vmatpush2.bf16.msra.mxu0 %v1809
    %2327 = vmatprep.subr.bf16.mxu0 0
    %2328 = vmatpush2.bf16.msra.mxu0 %v1808
    %2329 = vmatprep.subr.bf16.mxu0 0
    %2330 = vmatpush2.bf16.msra.mxu0 %v1807
    %2331 = vmatprep.subr.bf16.mxu0 0
    %2332 = vmatpush2.bf16.msra.mxu0 %v1806
    %2333 = vmatprep.subr.bf16.mxu0 0
    %2334 = vmatpush2.bf16.msra.mxu0 %v1805
    %2335 = vmatprep.subr.bf16.mxu0 0
    %2336 = vmatpush2.bf16.msra.mxu0 %v1804
    %2337 = vmatprep.subr.bf16.mxu0 0
    %2338 = vmatpush2.bf16.msra.mxu0 %v1803
    %2339 = vmatprep.mubr.bf16.mxu0 %v580
    %2340 = vmatmul.mubr.bf16.gmra.mxu0 %v566
    %v2341 = vpop.f32.mrf.mxu0
    %v2342 = vadd.f32 %v537, %v2341
    %v2343 = vpop.f32.mrf.mxu0
    %v2344 = vpop.f32.mrf.mxu0
    %v2345 = vpop.f32.mrf.mxu0
    %2346 = vdwg.mxu0
    %2347 = vmatprep.subr.bf16.mxu0 0
    %2348 = vmatpush1.bf16.msra.mxu0 %v1818
    %2349 = vmatprep.subr.bf16.mxu0 0
    %2350 = vmatpush1.bf16.msra.mxu0 %v1817
    %2351 = vmatprep.subr.bf16.mxu0 0
    %2352 = vmatpush1.bf16.msra.mxu0 %v1816
    %2353 = vmatprep.subr.bf16.mxu0 0
    %2354 = vmatpush1.bf16.msra.mxu0 %v1815
    %2355 = vmatprep.subr.bf16.mxu0 0
    %2356 = vmatpush1.bf16.msra.mxu0 %v1814
    %2357 = vmatprep.subr.bf16.mxu0 0
    %2358 = vmatpush1.bf16.msra.mxu0 %v1813
    %2359 = vmatprep.subr.bf16.mxu0 0
    %2360 = vmatpush1.bf16.msra.mxu0 %v1812
    %2361 = vmatprep.subr.bf16.mxu0 0
    %2362 = vmatpush1.bf16.msra.mxu0 %v1811
    %2363 = vmatprep.subr.bf16.mxu0 0
    %2364 = vmatpush2.bf16.msra.mxu0 %v1826
    %2365 = vmatprep.subr.bf16.mxu0 0
    %2366 = vmatpush2.bf16.msra.mxu0 %v1825
    %2367 = vmatprep.subr.bf16.mxu0 0
    %2368 = vmatpush2.bf16.msra.mxu0 %v1824
    %2369 = vmatprep.subr.bf16.mxu0 0
    %2370 = vmatpush2.bf16.msra.mxu0 %v1823
    %2371 = vmatprep.subr.bf16.mxu0 0
    %2372 = vmatpush2.bf16.msra.mxu0 %v1822
    %2373 = vmatprep.subr.bf16.mxu0 0
    %2374 = vmatpush2.bf16.msra.mxu0 %v1821
    %2375 = vmatprep.subr.bf16.mxu0 0
    %2376 = vmatpush2.bf16.msra.mxu0 %v1820
    %2377 = vmatprep.subr.bf16.mxu0 0
    %2378 = vmatpush2.bf16.msra.mxu0 %v1819
    %2379 = vmatprep.mubr.bf16.mxu0 %v590
    %2380 = vmatmul.mubr.bf16.gmra.mxu0 %v588
    %v2381 = vpop.f32.mrf.mxu0
    %v2382 = vadd.f32 %v2342, %v2381
    %v2383 = vpop.f32.mrf.mxu0
    %v2384 = vpop.f32.mrf.mxu0
    %v2385 = vpop.f32.mrf.mxu0
    %2386 = vdwg.mxu0
    %2387 = vmatprep.subr.bf16.mxu0 0
    %2388 = vmatpush1.bf16.msra.mxu0 %v1834
    %2389 = vmatprep.subr.bf16.mxu0 0
    %2390 = vmatpush1.bf16.msra.mxu0 %v1833
    %2391 = vmatprep.subr.bf16.mxu0 0
    %2392 = vmatpush1.bf16.msra.mxu0 %v1832
    %2393 = vmatprep.subr.bf16.mxu0 0
    %2394 = vmatpush1.bf16.msra.mxu0 %v1831
    %2395 = vmatprep.subr.bf16.mxu0 0
    %2396 = vmatpush1.bf16.msra.mxu0 %v1830
    %2397 = vmatprep.subr.bf16.mxu0 0
    %2398 = vmatpush1.bf16.msra.mxu0 %v1829
    %2399 = vmatprep.subr.bf16.mxu0 0
    %2400 = vmatpush1.bf16.msra.mxu0 %v1828
    %2401 = vmatprep.subr.bf16.mxu0 0
    %2402 = vmatpush1.bf16.msra.mxu0 %v1827
    %2403 = vmatprep.subr.bf16.mxu0 0
    %2404 = vmatpush2.bf16.msra.mxu0 %v1842
    %2405 = vmatprep.subr.bf16.mxu0 0
    %2406 = vmatpush2.bf16.msra.mxu0 %v1841
    %2407 = vmatprep.subr.bf16.mxu0 0
    %2408 = vmatpush2.bf16.msra.mxu0 %v1840
    %2409 = vmatprep.subr.bf16.mxu0 0
    %2410 = vmatpush2.bf16.msra.mxu0 %v1839
    %2411 = vmatprep.subr.bf16.mxu0 0
    %2412 = vmatpush2.bf16.msra.mxu0 %v1838
    %2413 = vmatprep.subr.bf16.mxu0 0
    %2414 = vmatpush2.bf16.msra.mxu0 %v1837
    %2415 = vmatprep.subr.bf16.mxu0 0
    %2416 = vmatpush2.bf16.msra.mxu0 %v1836
    %2417 = vmatprep.subr.bf16.mxu0 0
    %2418 = vmatpush2.bf16.msra.mxu0 %v1835
    %2419 = vmatprep.mubr.bf16.mxu0 %v587
    %2420 = vmatmul.mubr.bf16.gmra.mxu0 %v573
    %v2421 = vpop.f32.mrf.mxu0
    %v2422 = vadd.f32 %v2382, %v2421
    %v2423 = vpop.f32.mrf.mxu0
    %v2424 = vpop.f32.mrf.mxu0
    %v2425 = vpop.f32.mrf.mxu0
    %2426 = vdwg.mxu0
    %2427 = vmatprep.subr.bf16.mxu0 0
    %2428 = vmatpush1.bf16.msra.mxu0 %v1850
    %2429 = vmatprep.subr.bf16.mxu0 0
    %2430 = vmatpush1.bf16.msra.mxu0 %v1849
    %2431 = vmatprep.subr.bf16.mxu0 0
    %2432 = vmatpush1.bf16.msra.mxu0 %v1848
    %2433 = vmatprep.subr.bf16.mxu0 0
    %2434 = vmatpush1.bf16.msra.mxu0 %v1847
    %2435 = vmatprep.subr.bf16.mxu0 0
    %2436 = vmatpush1.bf16.msra.mxu0 %v1846
    %2437 = vmatprep.subr.bf16.mxu0 0
    %2438 = vmatpush1.bf16.msra.mxu0 %v1845
    %2439 = vmatprep.subr.bf16.mxu0 0
    %2440 = vmatpush1.bf16.msra.mxu0 %v1844
    %2441 = vmatprep.subr.bf16.mxu0 0
    %2442 = vmatpush1.bf16.msra.mxu0 %v1843
    %2443 = vmatprep.subr.bf16.mxu0 0
    %2444 = vmatpush2.bf16.msra.mxu0 %v1858
    %2445 = vmatprep.subr.bf16.mxu0 0
    %2446 = vmatpush2.bf16.msra.mxu0 %v1857
    %2447 = vmatprep.subr.bf16.mxu0 0
    %2448 = vmatpush2.bf16.msra.mxu0 %v1856
    %2449 = vmatprep.subr.bf16.mxu0 0
    %2450 = vmatpush2.bf16.msra.mxu0 %v1855
    %2451 = vmatprep.subr.bf16.mxu0 0
    %2452 = vmatpush2.bf16.msra.mxu0 %v1854
    %2453 = vmatprep.subr.bf16.mxu0 0
    %2454 = vmatpush2.bf16.msra.mxu0 %v1853
    %2455 = vmatprep.subr.bf16.mxu0 0
    %2456 = vmatpush2.bf16.msra.mxu0 %v1852
    %2457 = vmatprep.subr.bf16.mxu0 0
    %2458 = vmatpush2.bf16.msra.mxu0 %v1851
    %2459 = vmatprep.mubr.bf16.mxu0 %v591
    %2460 = vmatmul.mubr.bf16.gmra.mxu0 %v589
    %v2461 = vpop.f32.mrf.mxu0
    %v2462 = vadd.f32 %v2422, %v2461
    %v2463 = vpop.f32.mrf.mxu0
    %v2464 = vpop.f32.mrf.mxu0
    %v2465 = vpop.f32.mrf.mxu0
    %2466 = vdwg.mxu0
    %2467 = vmatprep.subr.bf16.mxu0 0
    %2468 = vmatpush1.bf16.msra.mxu0 %v1866
    %2469 = vmatprep.subr.bf16.mxu0 0
    %2470 = vmatpush1.bf16.msra.mxu0 %v1865
    %2471 = vmatprep.subr.bf16.mxu0 0
    %2472 = vmatpush1.bf16.msra.mxu0 %v1864
    %2473 = vmatprep.subr.bf16.mxu0 0
    %2474 = vmatpush1.bf16.msra.mxu0 %v1863
    %2475 = vmatprep.subr.bf16.mxu0 0
    %2476 = vmatpush1.bf16.msra.mxu0 %v1862
    %2477 = vmatprep.subr.bf16.mxu0 0
    %2478 = vmatpush1.bf16.msra.mxu0 %v1861
    %2479 = vmatprep.subr.bf16.mxu0 0
    %2480 = vmatpush1.bf16.msra.mxu0 %v1860
    %2481 = vmatprep.subr.bf16.mxu0 0
    %2482 = vmatpush1.bf16.msra.mxu0 %v1859
    %2483 = vmatprep.subr.bf16.mxu0 0
    %2484 = vmatpush2.bf16.msra.mxu0 %v1874
    %2485 = vmatprep.subr.bf16.mxu0 0
    %2486 = vmatpush2.bf16.msra.mxu0 %v1873
    %2487 = vmatprep.subr.bf16.mxu0 0
    %2488 = vmatpush2.bf16.msra.mxu0 %v1872
    %2489 = vmatprep.subr.bf16.mxu0 0
    %2490 = vmatpush2.bf16.msra.mxu0 %v1871
    %2491 = vmatprep.subr.bf16.mxu0 0
    %2492 = vmatpush2.bf16.msra.mxu0 %v1870
    %2493 = vmatprep.subr.bf16.mxu0 0
    %2494 = vmatpush2.bf16.msra.mxu0 %v1869
    %2495 = vmatprep.subr.bf16.mxu0 0
    %2496 = vmatpush2.bf16.msra.mxu0 %v1868
    %2497 = vmatprep.subr.bf16.mxu0 0
    %2498 = vmatpush2.bf16.msra.mxu0 %v1867
    %2499 = vmatprep.mubr.bf16.mxu0 %v629
    %2500 = vmatmul.mubr.bf16.gmra.mxu0 %v615
    %v2501 = vpop.f32.mrf.mxu0
    %v2502 = vadd.f32 %v2462, %v2501
    %v2503 = vpop.f32.mrf.mxu0
    %v2504 = vpop.f32.mrf.mxu0
    %v2505 = vpop.f32.mrf.mxu0
    %2506 = vdwg.mxu0
    %2507 = vmatprep.subr.bf16.mxu0 0
    %2508 = vmatpush1.bf16.msra.mxu0 %v1882
    %2509 = vmatprep.subr.bf16.mxu0 0
    %2510 = vmatpush1.bf16.msra.mxu0 %v1881
    %2511 = vmatprep.subr.bf16.mxu0 0
    %2512 = vmatpush1.bf16.msra.mxu0 %v1880
    %2513 = vmatprep.subr.bf16.mxu0 0
    %2514 = vmatpush1.bf16.msra.mxu0 %v1879
    %2515 = vmatprep.subr.bf16.mxu0 0
    %2516 = vmatpush1.bf16.msra.mxu0 %v1878
    %2517 = vmatprep.subr.bf16.mxu0 0
    %2518 = vmatpush1.bf16.msra.mxu0 %v1877
    %2519 = vmatprep.subr.bf16.mxu0 0
    %2520 = vmatpush1.bf16.msra.mxu0 %v1876
    %2521 = vmatprep.subr.bf16.mxu0 0
    %2522 = vmatpush1.bf16.msra.mxu0 %v1875
    %2523 = vmatprep.subr.bf16.mxu0 0
    %2524 = vmatpush2.bf16.msra.mxu0 %v1890
    %2525 = vmatprep.subr.bf16.mxu0 0
    %2526 = vmatpush2.bf16.msra.mxu0 %v1889
    %2527 = vmatprep.subr.bf16.mxu0 0
    %2528 = vmatpush2.bf16.msra.mxu0 %v1888
    %2529 = vmatprep.subr.bf16.mxu0 0
    %2530 = vmatpush2.bf16.msra.mxu0 %v1887
    %2531 = vmatprep.subr.bf16.mxu0 0
    %2532 = vmatpush2.bf16.msra.mxu0 %v1886
    %2533 = vmatprep.subr.bf16.mxu0 0
    %2534 = vmatpush2.bf16.msra.mxu0 %v1885
    %2535 = vmatprep.subr.bf16.mxu0 0
    %2536 = vmatpush2.bf16.msra.mxu0 %v1884
    %2537 = vmatprep.subr.bf16.mxu0 0
    %2538 = vmatpush2.bf16.msra.mxu0 %v1883
    %2539 = vmatprep.mubr.bf16.mxu0 %v639
    %2540 = vmatmul.mubr.bf16.gmra.mxu0 %v637
    %v2541 = vpop.f32.mrf.mxu0
    %v2542 = vadd.f32 %v2502, %v2541
    %v2543 = vpop.f32.mrf.mxu0
    %v2544 = vpop.f32.mrf.mxu0
    %v2545 = vpop.f32.mrf.mxu0
    %2546 = vdwg.mxu0
    %2547 = vmatprep.subr.bf16.mxu0 0
    %2548 = vmatpush1.bf16.msra.mxu0 %v1898
    %2549 = vmatprep.subr.bf16.mxu0 0
    %2550 = vmatpush1.bf16.msra.mxu0 %v1897
    %2551 = vmatprep.subr.bf16.mxu0 0
    %2552 = vmatpush1.bf16.msra.mxu0 %v1896
    %2553 = vmatprep.subr.bf16.mxu0 0
    %2554 = vmatpush1.bf16.msra.mxu0 %v1895
    %2555 = vmatprep.subr.bf16.mxu0 0
    %2556 = vmatpush1.bf16.msra.mxu0 %v1894
    %2557 = vmatprep.subr.bf16.mxu0 0
    %2558 = vmatpush1.bf16.msra.mxu0 %v1893
    %2559 = vmatprep.subr.bf16.mxu0 0
    %2560 = vmatpush1.bf16.msra.mxu0 %v1892
    %2561 = vmatprep.subr.bf16.mxu0 0
    %2562 = vmatpush1.bf16.msra.mxu0 %v1891
    %2563 = vmatprep.subr.bf16.mxu0 0
    %2564 = vmatpush2.bf16.msra.mxu0 %v1906
    %2565 = vmatprep.subr.bf16.mxu0 0
    %2566 = vmatpush2.bf16.msra.mxu0 %v1905
    %2567 = vmatprep.subr.bf16.mxu0 0
    %2568 = vmatpush2.bf16.msra.mxu0 %v1904
    %2569 = vmatprep.subr.bf16.mxu0 0
    %2570 = vmatpush2.bf16.msra.mxu0 %v1903
    %2571 = vmatprep.subr.bf16.mxu0 0
    %2572 = vmatpush2.bf16.msra.mxu0 %v1902
    %2573 = vmatprep.subr.bf16.mxu0 0
    %2574 = vmatpush2.bf16.msra.mxu0 %v1901
    %2575 = vmatprep.subr.bf16.mxu0 0
    %2576 = vmatpush2.bf16.msra.mxu0 %v1900
    %2577 = vmatprep.subr.bf16.mxu0 0
    %2578 = vmatpush2.bf16.msra.mxu0 %v1899
    %2579 = vmatprep.mubr.bf16.mxu0 %v636
    %2580 = vmatmul.mubr.bf16.gmra.mxu0 %v622
    %v2581 = vpop.f32.mrf.mxu0
    %v2582 = vadd.f32 %v2542, %v2581
    %v2583 = vpop.f32.mrf.mxu0
    %v2584 = vpop.f32.mrf.mxu0
    %v2585 = vpop.f32.mrf.mxu0
    %2586 = vdwg.mxu0
    %2587 = vmatprep.subr.bf16.mxu0 0
    %2588 = vmatpush1.bf16.msra.mxu0 %v1914
    %2589 = vmatprep.subr.bf16.mxu0 0
    %2590 = vmatpush1.bf16.msra.mxu0 %v1913
    %2591 = vmatprep.subr.bf16.mxu0 0
    %2592 = vmatpush1.bf16.msra.mxu0 %v1912
    %2593 = vmatprep.subr.bf16.mxu0 0
    %2594 = vmatpush1.bf16.msra.mxu0 %v1911
    %2595 = vmatprep.subr.bf16.mxu0 0
    %2596 = vmatpush1.bf16.msra.mxu0 %v1910
    %2597 = vmatprep.subr.bf16.mxu0 0
    %2598 = vmatpush1.bf16.msra.mxu0 %v1909
    %2599 = vmatprep.subr.bf16.mxu0 0
    %2600 = vmatpush1.bf16.msra.mxu0 %v1908
    %2601 = vmatprep.subr.bf16.mxu0 0
    %2602 = vmatpush1.bf16.msra.mxu0 %v1907
    %2603 = vmatprep.subr.bf16.mxu0 0
    %2604 = vmatpush2.bf16.msra.mxu0 %v1922
    %2605 = vmatprep.subr.bf16.mxu0 0
    %2606 = vmatpush2.bf16.msra.mxu0 %v1921
    %2607 = vmatprep.subr.bf16.mxu0 0
    %2608 = vmatpush2.bf16.msra.mxu0 %v1920
    %2609 = vmatprep.subr.bf16.mxu0 0
    %2610 = vmatpush2.bf16.msra.mxu0 %v1919
    %2611 = vmatprep.subr.bf16.mxu0 0
    %2612 = vmatpush2.bf16.msra.mxu0 %v1918
    %2613 = vmatprep.subr.bf16.mxu0 0
    %2614 = vmatpush2.bf16.msra.mxu0 %v1917
    %2615 = vmatprep.subr.bf16.mxu0 0
    %2616 = vmatpush2.bf16.msra.mxu0 %v1916
    %2617 = vmatprep.subr.bf16.mxu0 0
    %2618 = vmatpush2.bf16.msra.mxu0 %v1915
    %2619 = vmatprep.mubr.bf16.mxu0 %v640
    %2620 = vmatmul.mubr.bf16.gmra.mxu0 %v638
    %v2621 = vpop.f32.mrf.mxu0
    %v2622 = vadd.f32 %v2582, %v2621
    %v2623 = vpop.f32.mrf.mxu0
    %v2624 = vpop.f32.mrf.mxu0
    %v2625 = vpop.f32.mrf.mxu0
    %2626 = vdwg.mxu0
    %2627 = vmatprep.subr.bf16.mxu0 0
    %2628 = vmatpush1.bf16.msra.mxu0 %v1930
    %2629 = vmatprep.subr.bf16.mxu0 0
    %2630 = vmatpush1.bf16.msra.mxu0 %v1929
    %2631 = vmatprep.subr.bf16.mxu0 0
    %2632 = vmatpush1.bf16.msra.mxu0 %v1928
    %2633 = vmatprep.subr.bf16.mxu0 0
    %2634 = vmatpush1.bf16.msra.mxu0 %v1927
    %2635 = vmatprep.subr.bf16.mxu0 0
    %2636 = vmatpush1.bf16.msra.mxu0 %v1926
    %2637 = vmatprep.subr.bf16.mxu0 0
    %2638 = vmatpush1.bf16.msra.mxu0 %v1925
    %2639 = vmatprep.subr.bf16.mxu0 0
    %2640 = vmatpush1.bf16.msra.mxu0 %v1924
    %2641 = vmatprep.subr.bf16.mxu0 0
    %2642 = vmatpush1.bf16.msra.mxu0 %v1923
    %2643 = vmatprep.subr.bf16.mxu0 0
    %2644 = vmatpush2.bf16.msra.mxu0 %v1938
    %2645 = vmatprep.subr.bf16.mxu0 0
    %2646 = vmatpush2.bf16.msra.mxu0 %v1937
    %2647 = vmatprep.subr.bf16.mxu0 0
    %2648 = vmatpush2.bf16.msra.mxu0 %v1936
    %2649 = vmatprep.subr.bf16.mxu0 0
    %2650 = vmatpush2.bf16.msra.mxu0 %v1935
    %2651 = vmatprep.subr.bf16.mxu0 0
    %2652 = vmatpush2.bf16.msra.mxu0 %v1934
    %2653 = vmatprep.subr.bf16.mxu0 0
    %2654 = vmatpush2.bf16.msra.mxu0 %v1933
    %2655 = vmatprep.subr.bf16.mxu0 0
    %2656 = vmatpush2.bf16.msra.mxu0 %v1932
    %2657 = vmatprep.subr.bf16.mxu0 0
    %2658 = vmatpush2.bf16.msra.mxu0 %v1931
    %2659 = vmatprep.mubr.bf16.mxu0 %v678
    %2660 = vmatmul.mubr.bf16.gmra.mxu0 %v664
    %v2661 = vpop.f32.mrf.mxu0
    %v2662 = vadd.f32 %v2622, %v2661
    %v2663 = vpop.f32.mrf.mxu0
    %v2664 = vpop.f32.mrf.mxu0
    %v2665 = vpop.f32.mrf.mxu0
    %2666 = vdwg.mxu0
    %2667 = vmatprep.subr.bf16.mxu0 0
    %2668 = vmatpush1.bf16.msra.mxu0 %v1946
    %2669 = vmatprep.subr.bf16.mxu0 0
    %2670 = vmatpush1.bf16.msra.mxu0 %v1945
    %2671 = vmatprep.subr.bf16.mxu0 0
    %2672 = vmatpush1.bf16.msra.mxu0 %v1944
    %2673 = vmatprep.subr.bf16.mxu0 0
    %2674 = vmatpush1.bf16.msra.mxu0 %v1943
    %2675 = vmatprep.subr.bf16.mxu0 0
    %2676 = vmatpush1.bf16.msra.mxu0 %v1942
    %2677 = vmatprep.subr.bf16.mxu0 0
    %2678 = vmatpush1.bf16.msra.mxu0 %v1941
    %2679 = vmatprep.subr.bf16.mxu0 0
    %2680 = vmatpush1.bf16.msra.mxu0 %v1940
    %2681 = vmatprep.subr.bf16.mxu0 0
    %2682 = vmatpush1.bf16.msra.mxu0 %v1939
    %2683 = vmatprep.subr.bf16.mxu0 0
    %2684 = vmatpush2.bf16.msra.mxu0 %v1954
    %2685 = vmatprep.subr.bf16.mxu0 0
    %2686 = vmatpush2.bf16.msra.mxu0 %v1953
    %2687 = vmatprep.subr.bf16.mxu0 0
    %2688 = vmatpush2.bf16.msra.mxu0 %v1952
    %2689 = vmatprep.subr.bf16.mxu0 0
    %2690 = vmatpush2.bf16.msra.mxu0 %v1951
    %2691 = vmatprep.subr.bf16.mxu0 0
    %2692 = vmatpush2.bf16.msra.mxu0 %v1950
    %2693 = vmatprep.subr.bf16.mxu0 0
    %2694 = vmatpush2.bf16.msra.mxu0 %v1949
    %2695 = vmatprep.subr.bf16.mxu0 0
    %2696 = vmatpush2.bf16.msra.mxu0 %v1948
    %2697 = vmatprep.subr.bf16.mxu0 0
    %2698 = vmatpush2.bf16.msra.mxu0 %v1947
    %2699 = vmatprep.mubr.bf16.mxu0 %v688
    %2700 = vmatmul.mubr.bf16.gmra.mxu0 %v686
    %v2701 = vpop.f32.mrf.mxu0
    %v2702 = vadd.f32 %v2662, %v2701
    %v2703 = vpop.f32.mrf.mxu0
    %v2704 = vpop.f32.mrf.mxu0
    %v2705 = vpop.f32.mrf.mxu0
    %2706 = vdwg.mxu0
    %2707 = vmatprep.subr.bf16.mxu0 0
    %2708 = vmatpush1.bf16.msra.mxu0 %v1962
    %2709 = vmatprep.subr.bf16.mxu0 0
    %2710 = vmatpush1.bf16.msra.mxu0 %v1961
    %2711 = vmatprep.subr.bf16.mxu0 0
    %2712 = vmatpush1.bf16.msra.mxu0 %v1960
    %2713 = vmatprep.subr.bf16.mxu0 0
    %2714 = vmatpush1.bf16.msra.mxu0 %v1959
    %2715 = vmatprep.subr.bf16.mxu0 0
    %2716 = vmatpush1.bf16.msra.mxu0 %v1958
    %2717 = vmatprep.subr.bf16.mxu0 0
    %2718 = vmatpush1.bf16.msra.mxu0 %v1957
    %2719 = vmatprep.subr.bf16.mxu0 0
    %2720 = vmatpush1.bf16.msra.mxu0 %v1956
    %2721 = vmatprep.subr.bf16.mxu0 0
    %2722 = vmatpush1.bf16.msra.mxu0 %v1955
    %2723 = vmatprep.subr.bf16.mxu0 0
    %2724 = vmatpush2.bf16.msra.mxu0 %v1970
    %2725 = vmatprep.subr.bf16.mxu0 0
    %2726 = vmatpush2.bf16.msra.mxu0 %v1969
    %2727 = vmatprep.subr.bf16.mxu0 0
    %2728 = vmatpush2.bf16.msra.mxu0 %v1968
    %2729 = vmatprep.subr.bf16.mxu0 0
    %2730 = vmatpush2.bf16.msra.mxu0 %v1967
    %2731 = vmatprep.subr.bf16.mxu0 0
    %2732 = vmatpush2.bf16.msra.mxu0 %v1966
    %2733 = vmatprep.subr.bf16.mxu0 0
    %2734 = vmatpush2.bf16.msra.mxu0 %v1965
    %2735 = vmatprep.subr.bf16.mxu0 0
    %2736 = vmatpush2.bf16.msra.mxu0 %v1964
    %2737 = vmatprep.subr.bf16.mxu0 0
    %2738 = vmatpush2.bf16.msra.mxu0 %v1963
    %2739 = vmatprep.mubr.bf16.mxu0 %v685
    %2740 = vmatmul.mubr.bf16.gmra.mxu0 %v671
    %v2741 = vpop.f32.mrf.mxu0
    %v2742 = vadd.f32 %v2702, %v2741
    %v2743 = vpop.f32.mrf.mxu0
    %v2744 = vpop.f32.mrf.mxu0
    %v2745 = vpop.f32.mrf.mxu0
    %2746 = vdwg.mxu0
    %2747 = vmatprep.subr.bf16.mxu0 0
    %2748 = vmatpush1.bf16.msra.mxu0 %v1978
    %2749 = vmatprep.subr.bf16.mxu0 0
    %2750 = vmatpush1.bf16.msra.mxu0 %v1977
    %2751 = vmatprep.subr.bf16.mxu0 0
    %2752 = vmatpush1.bf16.msra.mxu0 %v1976
    %2753 = vmatprep.subr.bf16.mxu0 0
    %2754 = vmatpush1.bf16.msra.mxu0 %v1975
    %2755 = vmatprep.subr.bf16.mxu0 0
    %2756 = vmatpush1.bf16.msra.mxu0 %v1974
    %2757 = vmatprep.subr.bf16.mxu0 0
    %2758 = vmatpush1.bf16.msra.mxu0 %v1973
    %2759 = vmatprep.subr.bf16.mxu0 0
    %2760 = vmatpush1.bf16.msra.mxu0 %v1972
    %2761 = vmatprep.subr.bf16.mxu0 0
    %2762 = vmatpush1.bf16.msra.mxu0 %v1971
    %2763 = vmatprep.subr.bf16.mxu0 0
    %2764 = vmatpush2.bf16.msra.mxu0 %v1986
    %2765 = vmatprep.subr.bf16.mxu0 0
    %2766 = vmatpush2.bf16.msra.mxu0 %v1985
    %2767 = vmatprep.subr.bf16.mxu0 0
    %2768 = vmatpush2.bf16.msra.mxu0 %v1984
    %2769 = vmatprep.subr.bf16.mxu0 0
    %2770 = vmatpush2.bf16.msra.mxu0 %v1983
    %2771 = vmatprep.subr.bf16.mxu0 0
    %2772 = vmatpush2.bf16.msra.mxu0 %v1982
    %2773 = vmatprep.subr.bf16.mxu0 0
    %2774 = vmatpush2.bf16.msra.mxu0 %v1981
    %2775 = vmatprep.subr.bf16.mxu0 0
    %2776 = vmatpush2.bf16.msra.mxu0 %v1980
    %2777 = vmatprep.subr.bf16.mxu0 0
    %2778 = vmatpush2.bf16.msra.mxu0 %v1979
    %2779 = vmatprep.mubr.bf16.mxu0 %v689
    %2780 = vmatmul.mubr.bf16.gmra.mxu0 %v687
    %v2781 = vpop.f32.mrf.mxu0
    %v2782 = vadd.f32 %v2742, %v2781
    %v2783 = vpop.f32.mrf.mxu0
    %v2784 = vpop.f32.mrf.mxu0
    %v2785 = vpop.f32.mrf.mxu0
    %2786 = vdwg.mxu0
    %2787 = vmatprep.subr.bf16.mxu0 0
    %2788 = vmatpush1.bf16.msra.mxu0 %v1994
    %2789 = vmatprep.subr.bf16.mxu0 0
    %2790 = vmatpush1.bf16.msra.mxu0 %v1993
    %2791 = vmatprep.subr.bf16.mxu0 0
    %2792 = vmatpush1.bf16.msra.mxu0 %v1992
    %2793 = vmatprep.subr.bf16.mxu0 0
    %2794 = vmatpush1.bf16.msra.mxu0 %v1991
    %2795 = vmatprep.subr.bf16.mxu0 0
    %2796 = vmatpush1.bf16.msra.mxu0 %v1990
    %2797 = vmatprep.subr.bf16.mxu0 0
    %2798 = vmatpush1.bf16.msra.mxu0 %v1989
    %2799 = vmatprep.subr.bf16.mxu0 0
    %2800 = vmatpush1.bf16.msra.mxu0 %v1988
    %2801 = vmatprep.subr.bf16.mxu0 0
    %2802 = vmatpush1.bf16.msra.mxu0 %v1987
    %2803 = vmatprep.subr.bf16.mxu0 0
    %2804 = vmatpush2.bf16.msra.mxu0 %v2002
    %2805 = vmatprep.subr.bf16.mxu0 0
    %2806 = vmatpush2.bf16.msra.mxu0 %v2001
    %2807 = vmatprep.subr.bf16.mxu0 0
    %2808 = vmatpush2.bf16.msra.mxu0 %v2000
    %2809 = vmatprep.subr.bf16.mxu0 0
    %2810 = vmatpush2.bf16.msra.mxu0 %v1999
    %2811 = vmatprep.subr.bf16.mxu0 0
    %2812 = vmatpush2.bf16.msra.mxu0 %v1998
    %2813 = vmatprep.subr.bf16.mxu0 0
    %2814 = vmatpush2.bf16.msra.mxu0 %v1997
    %2815 = vmatprep.subr.bf16.mxu0 0
    %2816 = vmatpush2.bf16.msra.mxu0 %v1996
    %2817 = vmatprep.subr.bf16.mxu0 0
    %2818 = vmatpush2.bf16.msra.mxu0 %v1995
    %2819 = vmatprep.mubr.bf16.mxu0 %v727
    %2820 = vmatmul.mubr.bf16.gmra.mxu0 %v713
    %v2821 = vpop.f32.mrf.mxu0
    %v2822 = vadd.f32 %v2782, %v2821
    %v2823 = vpop.f32.mrf.mxu0
    %v2824 = vpop.f32.mrf.mxu0
    %v2825 = vpop.f32.mrf.mxu0
    %2826 = vdwg.mxu0
    %2827 = vmatprep.subr.bf16.mxu0 0
    %2828 = vmatpush1.bf16.msra.mxu0 %v2010
    %2829 = vmatprep.subr.bf16.mxu0 0
    %2830 = vmatpush1.bf16.msra.mxu0 %v2009
    %2831 = vmatprep.subr.bf16.mxu0 0
    %2832 = vmatpush1.bf16.msra.mxu0 %v2008
    %2833 = vmatprep.subr.bf16.mxu0 0
    %2834 = vmatpush1.bf16.msra.mxu0 %v2007
    %2835 = vmatprep.subr.bf16.mxu0 0
    %2836 = vmatpush1.bf16.msra.mxu0 %v2006
    %2837 = vmatprep.subr.bf16.mxu0 0
    %2838 = vmatpush1.bf16.msra.mxu0 %v2005
    %2839 = vmatprep.subr.bf16.mxu0 0
    %2840 = vmatpush1.bf16.msra.mxu0 %v2004
    %2841 = vmatprep.subr.bf16.mxu0 0
    %2842 = vmatpush1.bf16.msra.mxu0 %v2003
    %2843 = vmatprep.subr.bf16.mxu0 0
    %2844 = vmatpush2.bf16.msra.mxu0 %v2018
    %2845 = vmatprep.subr.bf16.mxu0 0
    %2846 = vmatpush2.bf16.msra.mxu0 %v2017
    %2847 = vmatprep.subr.bf16.mxu0 0
    %2848 = vmatpush2.bf16.msra.mxu0 %v2016
    %2849 = vmatprep.subr.bf16.mxu0 0
    %2850 = vmatpush2.bf16.msra.mxu0 %v2015
    %2851 = vmatprep.subr.bf16.mxu0 0
    %2852 = vmatpush2.bf16.msra.mxu0 %v2014
    %2853 = vmatprep.subr.bf16.mxu0 0
    %2854 = vmatpush2.bf16.msra.mxu0 %v2013
    %2855 = vmatprep.subr.bf16.mxu0 0
    %2856 = vmatpush2.bf16.msra.mxu0 %v2012
    %2857 = vmatprep.subr.bf16.mxu0 0
    %2858 = vmatpush2.bf16.msra.mxu0 %v2011
    %2859 = vmatprep.mubr.bf16.mxu0 %v737
    %2860 = vmatmul.mubr.bf16.gmra.mxu0 %v735
    %v2861 = vpop.f32.mrf.mxu0
    %v2862 = vadd.f32 %v2822, %v2861
    %v2863 = vpop.f32.mrf.mxu0
    %v2864 = vpop.f32.mrf.mxu0
    %v2865 = vpop.f32.mrf.mxu0
    %2866 = vdwg.mxu0
    %2867 = vmatprep.subr.bf16.mxu0 0
    %2868 = vmatpush1.bf16.msra.mxu0 %v2026
    %2869 = vmatprep.subr.bf16.mxu0 0
    %2870 = vmatpush1.bf16.msra.mxu0 %v2025
    %2871 = vmatprep.subr.bf16.mxu0 0
    %2872 = vmatpush1.bf16.msra.mxu0 %v2024
    %2873 = vmatprep.subr.bf16.mxu0 0
    %2874 = vmatpush1.bf16.msra.mxu0 %v2023
    %2875 = vmatprep.subr.bf16.mxu0 0
    %2876 = vmatpush1.bf16.msra.mxu0 %v2022
    %2877 = vmatprep.subr.bf16.mxu0 0
    %2878 = vmatpush1.bf16.msra.mxu0 %v2021
    %2879 = vmatprep.subr.bf16.mxu0 0
    %2880 = vmatpush1.bf16.msra.mxu0 %v2020
    %2881 = vmatprep.subr.bf16.mxu0 0
    %2882 = vmatpush1.bf16.msra.mxu0 %v2019
    %2883 = vmatprep.subr.bf16.mxu0 0
    %2884 = vmatpush2.bf16.msra.mxu0 %v2034
    %2885 = vmatprep.subr.bf16.mxu0 0
    %2886 = vmatpush2.bf16.msra.mxu0 %v2033
    %2887 = vmatprep.subr.bf16.mxu0 0
    %2888 = vmatpush2.bf16.msra.mxu0 %v2032
    %2889 = vmatprep.subr.bf16.mxu0 0
    %2890 = vmatpush2.bf16.msra.mxu0 %v2031
    %2891 = vmatprep.subr.bf16.mxu0 0
    %2892 = vmatpush2.bf16.msra.mxu0 %v2030
    %2893 = vmatprep.subr.bf16.mxu0 0
    %2894 = vmatpush2.bf16.msra.mxu0 %v2029
    %2895 = vmatprep.subr.bf16.mxu0 0
    %2896 = vmatpush2.bf16.msra.mxu0 %v2028
    %2897 = vmatprep.subr.bf16.mxu0 0
    %2898 = vmatpush2.bf16.msra.mxu0 %v2027
    %2899 = vmatprep.mubr.bf16.mxu0 %v734
    %2900 = vmatmul.mubr.bf16.gmra.mxu0 %v720
    %v2901 = vpop.f32.mrf.mxu0
    %v2902 = vadd.f32 %v2862, %v2901
    %v2903 = vpop.f32.mrf.mxu0
    %v2904 = vpop.f32.mrf.mxu0
    %v2905 = vpop.f32.mrf.mxu0
    %2906 = vdwg.mxu0
    %2907 = vmatprep.subr.bf16.mxu0 0
    %2908 = vmatpush1.bf16.msra.mxu0 %v2042
    %2909 = vmatprep.subr.bf16.mxu0 0
    %2910 = vmatpush1.bf16.msra.mxu0 %v2041
    %2911 = vmatprep.subr.bf16.mxu0 0
    %2912 = vmatpush1.bf16.msra.mxu0 %v2040
    %2913 = vmatprep.subr.bf16.mxu0 0
    %2914 = vmatpush1.bf16.msra.mxu0 %v2039
    %2915 = vmatprep.subr.bf16.mxu0 0
    %2916 = vmatpush1.bf16.msra.mxu0 %v2038
    %2917 = vmatprep.subr.bf16.mxu0 0
    %2918 = vmatpush1.bf16.msra.mxu0 %v2037
    %2919 = vmatprep.subr.bf16.mxu0 0
    %2920 = vmatpush1.bf16.msra.mxu0 %v2036
    %2921 = vmatprep.subr.bf16.mxu0 0
    %2922 = vmatpush1.bf16.msra.mxu0 %v2035
    %2923 = vmatprep.subr.bf16.mxu0 0
    %2924 = vmatpush2.bf16.msra.mxu0 %v2050
    %2925 = vmatprep.subr.bf16.mxu0 0
    %2926 = vmatpush2.bf16.msra.mxu0 %v2049
    %2927 = vmatprep.subr.bf16.mxu0 0
    %2928 = vmatpush2.bf16.msra.mxu0 %v2048
    %2929 = vmatprep.subr.bf16.mxu0 0
    %2930 = vmatpush2.bf16.msra.mxu0 %v2047
    %2931 = vmatprep.subr.bf16.mxu0 0
    %2932 = vmatpush2.bf16.msra.mxu0 %v2046
    %2933 = vmatprep.subr.bf16.mxu0 0
    %2934 = vmatpush2.bf16.msra.mxu0 %v2045
    %2935 = vmatprep.subr.bf16.mxu0 0
    %2936 = vmatpush2.bf16.msra.mxu0 %v2044
    %2937 = vmatprep.subr.bf16.mxu0 0
    %2938 = vmatpush2.bf16.msra.mxu0 %v2043
    %2939 = vmatprep.mubr.bf16.mxu0 %v738
    %2940 = vmatmul.mubr.bf16.gmra.mxu0 %v736
    %v2941 = vpop.f32.mrf.mxu0
    %v2942 = vadd.f32 %v2902, %v2941
    %v2943 = vpop.f32.mrf.mxu0
    %v2944 = vpop.f32.mrf.mxu0
    %v2945 = vpop.f32.mrf.mxu0
    %2946 = vdwg.mxu0
    %vm2947 = vcmask 25600
    %2948 = vst.msk [vmem:[#allocation2] sm:$0x3] %vm2947, %v2942
    // Predicated region
    $region14: #{classifier_forward.9} parent=1 // pred_check
      _
    $region15: #{classifier_forward.9} parent=1 // pred_check_branch
      %2950 = sbr.rel (0) target = $region17
    $region16: #{classifier_forward.9} parent=1 // pred_region
      %s2952 = ssub.s32 32, 32
      %2953 = vsyncadd [#allocation3], %s2952
      %s2955 = sshll.u32 [#allocation2], 4
      %s2956 = int_to_ptr.vmem [resolvable:$true] %s2955
      %2958 = dma.vmem_to_hbm [thread:$0]  %s2956, 32, %s3, [#allocation3]
    $region17: #{classifier_forward.9} parent=1 // pred_fallthru
      _
    // Predicated region
    $region18: #{classifier_forward.9} parent=1 // pred_check
      _
    $region19: #{classifier_forward.9} parent=1 // pred_check_branch
      %2960 = sbr.rel (0) target = $region21
    $region20: #{classifier_forward.9} parent=1 // pred_region
      %2961 = dma.done [#allocation3], 32
    $region21: #{classifier_forward.9} parent=1 // pred_fallthru
      _
    %2962 = vsyncpa [#allocation3], 1

</llo_original>
